<compile_context>
chip_gen: v7x
topology: tpu7x:2x2x1
jax: 0.10.0
libtpu: 0.0.40
codegen_flags: <defaults>
</compile_context>

<pallas_src>
import jax
import jax.numpy as jnp
from jax import lax
from jax.experimental import pallas as pl
from jax.experimental.pallas import tpu as pltpu

# ----- small hyperparameters consistent with the module structure -----
N_EMBD = 128          # n_embd
N_HEAD = 4            # n_head   (head_size = 32)
N_LAYER = 2           # n_layer
BLOCK_SIZE = 32       # block_size (max context), power of 2
VOCAB_SIZE = 128      # len(words)
HEAD_SIZE = N_EMBD // N_HEAD
LN_EPS = 1e-5


# --------------------------------------------------------------------------
# in-kernel helpers
# --------------------------------------------------------------------------
def _layernorm(x, gamma, beta):
    # x: (M, E) f32; gamma/beta: (1, E) broadcast over rows
    mu = jnp.mean(x, axis=-1, keepdims=True)
    xc = x - mu
    var = jnp.mean(xc * xc, axis=-1, keepdims=True)
    return xc * lax.rsqrt(var + LN_EPS) * gamma + beta


# --------------------------------------------------------------------------
# Fused GPT forward kernel: BB batch elements per grid step, all layers inside
# --------------------------------------------------------------------------
def _gpt_kernel(idx_ref, tok_ref, pos_ref,
                ln1g_ref, ln1b_ref, wqkv_ref, wo_ref, bo_ref,
                ln2g_ref, ln2b_ref, w1_ref, b1_ref, w2_ref, b2_ref,
                lnfg_ref, lnfb_ref, wlm_ref, blm_ref,
                o_ref):
    f32 = jnp.float32
    bf16 = jnp.bfloat16

    BB, T, _ = idx_ref.shape          # batch elements blocked into this step
    M = BB * T                        # flattened row count for all matmuls
    E = pos_ref.shape[-1]
    V = tok_ref.shape[0]
    L = wqkv_ref.shape[0]
    H = N_HEAD
    hs = E // H

    # ---- embedding: bf16 one-hot(idx) @ token table (MXU gather) + pos ----
    vocab_ids = lax.broadcasted_iota(jnp.int32, (BB, T, V), 2)
    one_hot = (idx_ref[...] == vocab_ids).astype(bf16).reshape(M, V)
    x = jnp.dot(one_hot, tok_ref[...], preferred_element_type=f32) + pos_ref[...]

    # ---- block-diagonal(same batch) AND causal additive bias, built once ----
    r = lax.broadcasted_iota(jnp.int32, (M, M), 0)
    c = lax.broadcasted_iota(jnp.int32, (M, M), 1)
    if BB == 1:
        keep = r >= c
    else:
        shift = T.bit_length() - 1                 # T is a power of 2
        same_batch = (r >> shift) == (c >> shift)
        causal = (r & (T - 1)) >= (c & (T - 1))
        keep = same_batch & causal
    bias = jnp.where(keep, 0.0, -1e30).astype(f32)
    scale = jnp.float32(hs) ** -0.5

    # ---- transformer layers (static unroll; weights are VMEM-resident) ----
    for l in range(L):
        # --- self-attention branch: x + W_o(concat_heads(softmax(q k^T) v)) ---
        h = _layernorm(x, ln1g_ref[l], ln1b_ref[l]).astype(bf16)        # (M, E)
        qkv = jnp.dot(h, wqkv_ref[l],
                      preferred_element_type=f32).astype(bf16)          # (M, 3E) bf16
        heads = []
        for hh in range(H):                                             # static unroll
            lo = hh * hs
            qh = qkv[:, lo:lo + hs]                                     # bf16 (M, hs)
            kh = qkv[:, E + lo:E + lo + hs]
            vh = qkv[:, 2 * E + lo:2 * E + lo + hs]
            # scores = q_h @ k_h^T (bf16 operands, f32 accumulate)
            s = lax.dot_general(qh, kh, (((1,), (1,)), ((), ())),
                                preferred_element_type=f32) * scale + bias
            m = jnp.max(s, axis=-1, keepdims=True)
            e = jnp.exp(s - m)
            p = (e * pl.reciprocal(jnp.sum(e, axis=-1, keepdims=True),
                                   approx=True)).astype(bf16)
            heads.append(jnp.dot(p, vh,
                                 preferred_element_type=f32).astype(bf16))
        sa_in = jnp.concatenate(heads, axis=-1)          # (M, E) bf16 lane concat
        x = x + jnp.dot(sa_in, wo_ref[l], preferred_element_type=f32) + bo_ref[l]

        # --- feed-forward branch: x + W2(relu(W1(LN2(x)))) ---
        h2 = _layernorm(x, ln2g_ref[l], ln2b_ref[l]).astype(bf16)
        ff = jnp.dot(h2, w1_ref[l], preferred_element_type=f32) + b1_ref[l]
        ff = jnp.maximum(ff, 0.0).astype(bf16)                          # ReLU
        x = x + jnp.dot(ff, w2_ref[l], preferred_element_type=f32) + b2_ref[l]

    # ---- final LayerNorm + lm_head ----
    hf = _layernorm(x, lnfg_ref[...], lnfb_ref[...]).astype(bf16)
    logits = jnp.dot(hf, wlm_ref[...], preferred_element_type=f32) + blm_ref[...]
    o_ref[...] = logits.reshape(BB, T, V)


def _rep_spec(shape):
    # whole-array block, replicated (same block index) across the batch grid.
    # NOTE: if E/T/vocab are ever scaled up, consider pipeline_mode=pl.Buffered(1)
    # and an explicit vmem_limit_bytes (v7x has only 64 MiB VMEM).
    nd = len(shape)
    return pl.BlockSpec(shape, lambda b, _nd=nd: (0,) * _nd)


def _pick_batch_block(B):
    """Batch elements per grid step.

    v5e/v6e have a single TensorCore: collapse the grid (bigger matmul M beats
    serial 0.35us steps). v7x has 2 TCs: keep >= 2 grid steps so both get work.
    Cap M = BB*T at 128 rows so score matrices / redundant cross-batch FLOPs
    stay small.
    """
    n_cores = 1
    try:
        kind = jax.devices()[0].device_kind.lower()
        if ("v7" in kind) or ("7x" in kind):
            n_cores = 2
    except Exception:
        pass
    target_steps = max(1, min(B, n_cores))
    bb = max(1, min(B // target_steps, max(1, 128 // BLOCK_SIZE)))
    while B % bb:
        bb -= 1
    return bb


def _cost_estimate(operands, B, T):
    E, V, L, H, hs, F = N_EMBD, VOCAB_SIZE, N_LAYER, N_HEAD, HEAD_SIZE, 4 * N_EMBD
    rows = B * T
    mm = lambda m, k, n: 2 * m * k * n
    flops = mm(rows, V, E)                                   # one-hot embedding
    flops += L * (mm(rows, E, 3 * E)                         # fused QKV
                  + H * (mm(rows, hs, T) + mm(rows, T, hs))  # scores + PV
                  + mm(rows, E, E)                           # W_o
                  + mm(rows, E, F) + mm(rows, F, E))         # FFN
    flops += mm(rows, E, V)                                  # lm_head
    transcendentals = L * H * rows * T                       # softmax exp
    bytes_accessed = sum(int(a.size) * a.dtype.itemsize for a in operands) \
        + rows * V * 4
    return pl.CostEstimate(flops=int(flops),
                           transcendentals=int(transcendentals),
                           bytes_accessed=int(bytes_accessed))


def gpt_forward_fused(idx, params):
    """idx: (B, T) int32 -> logits (B, T, V) float32."""
    B, T = idx.shape
    V = VOCAB_SIZE
    BB = _pick_batch_block(B)
    idx3 = idx.astype(jnp.int32)[:, :, None]                 # (B, T, 1)
    # position embeddings pre-tiled to the blocked-row layout (glue, outside kernel)
    pos = jnp.tile(params["pos_emb"][:T], (BB, 1))           # (BB*T, E) f32

    operands = (idx3, params["tok_emb"], pos,
                params["ln1_g"], params["ln1_b"], params["wqkv"],
                params["wo"], params["bo"],
                params["ln2_g"], params["ln2_b"], params["w1"], params["b1"],
                params["w2"], params["b2"],
                params["lnf_g"], params["lnf_b"], params["wlm"], params["blm"])

    in_specs = [pl.BlockSpec((BB, T, 1), lambda b: (b, 0, 0))] + \
               [_rep_spec(a.shape) for a in operands[1:]]

    # Resident state is ~1 MB of bf16 weights -> far under default scoped-VMEM
    # limits on v5e/v6e/v7x; no vmem_limit_bytes override needed at this size.
    return pl.pallas_call(
        _gpt_kernel,
        out_shape=jax.ShapeDtypeStruct((B, T, V), jnp.float32),
        grid=(B // BB,),
        in_specs=in_specs,
        out_specs=pl.BlockSpec((BB, T, V), lambda b: (b, 0, 0)),
        compiler_params=pltpu.CompilerParams(
            dimension_semantics=("parallel",)),
        cost_estimate=_cost_estimate(operands, B, T),
    )(*operands)


# --------------------------------------------------------------------------
# Parameter init (mirrors _init_weights: Linear/Embedding ~ N(0, 0.02), bias = 0,
# LayerNorm gamma = 1, beta = 0).  Layer weights are stacked along a leading L axis;
# matmul weights are stored bf16 (f32 accumulation in-kernel), LN/bias stay f32.
# --------------------------------------------------------------------------
def init_params(key):
    def normal(k, shape, dtype=jnp.float32):
        return (0.02 * jax.random.normal(k, shape, dtype=jnp.float32)).astype(dtype)

    L, E, V = N_LAYER, N_EMBD, VOCAB_SIZE
    bf = jnp.bfloat16
    keys = jax.random.split(key, 7)
    params = {
        "tok_emb": normal(keys[0], (V, E), bf),
        "pos_emb": normal(keys[1], (BLOCK_SIZE, E), jnp.float32),
        "ln1_g": jnp.ones((L, 1, E), jnp.float32),
        "ln1_b": jnp.zeros((L, 1, E), jnp.float32),
        # per-head K/Q/V Linears fused into one (E, 3E) weight per layer
        "wqkv": normal(keys[2], (L, E, 3 * E), bf),
        "wo":   normal(keys[3], (L, E, E), bf),
        "bo":   jnp.zeros((L, 1, E), jnp.float32),
        "ln2_g": jnp.ones((L, 1, E), jnp.float32),
        "ln2_b": jnp.zeros((L, 1, E), jnp.float32),
        "w1":   normal(keys[4], (L, E, 4 * E), bf),
        "b1":   jnp.zeros((L, 1, 4 * E), jnp.float32),
        "w2":   normal(keys[5], (L, 4 * E, E), bf),
        "b2":   jnp.zeros((L, 1, E), jnp.float32),
        "lnf_g": jnp.ones((1, E), jnp.float32),
        "lnf_b": jnp.zeros((1, E), jnp.float32),
        "wlm":  normal(keys[6], (E, V), bf),
        "blm":  jnp.zeros((1, V), jnp.float32),
    }
    return params


# --------------------------------------------------------------------------
# Full forward (targets=None path of GPTLanguageModel.forward)
# --------------------------------------------------------------------------
@jax.jit
def gpt_forward(idx, params):
    return gpt_forward_fused(idx, params)            # (B, T, V); loss=None


if __name__ == "__main__":
    key = jax.random.PRNGKey(0)
    pkey, ikey = jax.random.split(key)
    params = init_params(pkey)

    B, T = 2, BLOCK_SIZE                              # (2, 32)
    idx = jax.random.randint(ikey, (B, T), 0, VOCAB_SIZE, dtype=jnp.int32)

    logits = gpt_forward(idx, params)
    jax.block_until_ready(logits)
    assert logits.shape == (B, T, VOCAB_SIZE)
    assert bool(jnp.all(jnp.isfinite(logits)))
    print("KERNEL_OK")
</pallas_src>

<mosaic_0001>
module attributes {stable_mosaic.version = 11 : i64} {
  func.func @_gpt_kernel(%arg0: i32, %arg1: memref<2x32x1xi32, #tpu.memory_space<vmem>>, %arg2: memref<128x128xbf16, #tpu.memory_space<vmem>>, %arg3: memref<64x128xf32, #tpu.memory_space<vmem>>, %arg4: memref<2x1x128xf32, #tpu.memory_space<vmem>>, %arg5: memref<2x1x128xf32, #tpu.memory_space<vmem>>, %arg6: memref<2x128x384xbf16, #tpu.memory_space<vmem>>, %arg7: memref<2x128x128xbf16, #tpu.memory_space<vmem>>, %arg8: memref<2x1x128xf32, #tpu.memory_space<vmem>>, %arg9: memref<2x1x128xf32, #tpu.memory_space<vmem>>, %arg10: memref<2x1x128xf32, #tpu.memory_space<vmem>>, %arg11: memref<2x128x512xbf16, #tpu.memory_space<vmem>>, %arg12: memref<2x1x512xf32, #tpu.memory_space<vmem>>, %arg13: memref<2x512x128xbf16, #tpu.memory_space<vmem>>, %arg14: memref<2x1x128xf32, #tpu.memory_space<vmem>>, %arg15: memref<1x128xf32, #tpu.memory_space<vmem>>, %arg16: memref<1x128xf32, #tpu.memory_space<vmem>>, %arg17: memref<128x128xbf16, #tpu.memory_space<vmem>>, %arg18: memref<1x128xf32, #tpu.memory_space<vmem>>, %arg19: memref<2x32x128xf32, #tpu.memory_space<vmem>>) attributes {dimension_semantics = [#tpu.dimension_semantics<parallel>], iteration_bounds = array<i64: 1>, scalar_prefetch = 0 : i64, scratch_operands = 0 : i64, tpu.core_type = #tpu.core_type<tc>, window_params = [{transform_indices = @transform_0, window_bounds = array<i64: 2, 32, 1>}, {pipeline_mode = #tpu.pipeline_mode<synchronous>, transform_indices = @transform_1, window_bounds = array<i64: 128, 128>}, {pipeline_mode = #tpu.pipeline_mode<synchronous>, transform_indices = @transform_2, window_bounds = array<i64: 64, 128>}, {pipeline_mode = #tpu.pipeline_mode<synchronous>, transform_indices = @transform_3, window_bounds = array<i64: 2, 1, 128>}, {pipeline_mode = #tpu.pipeline_mode<synchronous>, transform_indices = @transform_4, window_bounds = array<i64: 2, 1, 128>}, {pipeline_mode = #tpu.pipeline_mode<synchronous>, transform_indices = @transform_5, window_bounds = array<i64: 2, 128, 384>}, {pipeline_mode = #tpu.pipeline_mode<synchronous>, transform_indices = @transform_6, window_bounds = array<i64: 2, 128, 128>}, {pipeline_mode = #tpu.pipeline_mode<synchronous>, transform_indices = @transform_7, window_bounds = array<i64: 2, 1, 128>}, {pipeline_mode = #tpu.pipeline_mode<synchronous>, transform_indices = @transform_8, window_bounds = array<i64: 2, 1, 128>}, {pipeline_mode = #tpu.pipeline_mode<synchronous>, transform_indices = @transform_9, window_bounds = array<i64: 2, 1, 128>}, {pipeline_mode = #tpu.pipeline_mode<synchronous>, transform_indices = @transform_10, window_bounds = array<i64: 2, 128, 512>}, {pipeline_mode = #tpu.pipeline_mode<synchronous>, transform_indices = @transform_11, window_bounds = array<i64: 2, 1, 512>}, {pipeline_mode = #tpu.pipeline_mode<synchronous>, transform_indices = @transform_12, window_bounds = array<i64: 2, 512, 128>}, {pipeline_mode = #tpu.pipeline_mode<synchronous>, transform_indices = @transform_13, window_bounds = array<i64: 2, 1, 128>}, {pipeline_mode = #tpu.pipeline_mode<synchronous>, transform_indices = @transform_14, window_bounds = array<i64: 1, 128>}, {pipeline_mode = #tpu.pipeline_mode<synchronous>, transform_indices = @transform_15, window_bounds = array<i64: 1, 128>}, {pipeline_mode = #tpu.pipeline_mode<synchronous>, transform_indices = @transform_16, window_bounds = array<i64: 128, 128>}, {pipeline_mode = #tpu.pipeline_mode<synchronous>, transform_indices = @transform_17, window_bounds = array<i64: 1, 128>}, {transform_indices = @transform_18, window_bounds = array<i64: 2, 32, 128>}]} {
    %0 = tpu.iota {dimensions = array<i32: 2>} : vector<2x32x128xi32>
    %c0 = arith.constant 0 : index
    %c0_0 = arith.constant 0 : index
    %c0_1 = arith.constant 0 : index
    %1 = vector.load %arg1[%c0, %c0_0, %c0_1] : memref<2x32x1xi32, #tpu.memory_space<vmem>>, vector<2x32x1xi32>
    %2 = vector.broadcast %1 : vector<2x32x1xi32> to vector<2x32x128xi32>
    %3 = arith.cmpi eq, %2, %0 : vector<2x32x128xi32>
    %4 = arith.extui %3 : vector<2x32x128xi1> to vector<2x32x128xi32>
    %5 = arith.sitofp %4 : vector<2x32x128xi32> to vector<2x32x128xf32>
    %6 = arith.truncf %5 : vector<2x32x128xf32> to vector<2x32x128xbf16>
    %7 = vector.shape_cast %6 : vector<2x32x128xbf16> to vector<64x128xbf16>
    %c0_2 = arith.constant 0 : index
    %c0_3 = arith.constant 0 : index
    %8 = vector.load %arg2[%c0_2, %c0_3] : memref<128x128xbf16, #tpu.memory_space<vmem>>, vector<128x128xbf16>
    %cst = arith.constant dense<0.000000e+00> : vector<64x128xf32>
    %9 = tpu.matmul %7, %8, %cst {dimension_numbers = #tpu.dot_dimension_numbers<[1], [0], [0], [1], [0, 0, 1, 1], [], []>} : vector<64x128xbf16>, vector<128x128xbf16>, vector<64x128xf32> -> vector<64x128xf32>
    %c0_4 = arith.constant 0 : index
    %c0_5 = arith.constant 0 : index
    %10 = vector.load %arg3[%c0_4, %c0_5] : memref<64x128xf32, #tpu.memory_space<vmem>>, vector<64x128xf32>
    %11 = arith.addf %9, %10 : vector<64x128xf32>
    %12 = tpu.iota {dimensions = array<i32: 0>} : vector<64x64xi32>
    %13 = tpu.iota {dimensions = array<i32: 1>} : vector<64x64xi32>
    %c5_i32 = arith.constant 5 : i32
    %14 = vector.broadcast %c5_i32 : i32 to vector<64x64xi32>
    %15 = arith.shrsi %12, %14 : vector<64x64xi32>
    %c5_i32_6 = arith.constant 5 : i32
    %16 = vector.broadcast %c5_i32_6 : i32 to vector<64x64xi32>
    %17 = arith.shrsi %13, %16 : vector<64x64xi32>
    %18 = arith.cmpi eq, %15, %17 : vector<64x64xi32>
    %c31_i32 = arith.constant 31 : i32
    %19 = vector.broadcast %c31_i32 : i32 to vector<64x64xi32>
    %20 = arith.andi %12, %19 : vector<64x64xi32>
    %c31_i32_7 = arith.constant 31 : i32
    %21 = vector.broadcast %c31_i32_7 : i32 to vector<64x64xi32>
    %22 = arith.andi %13, %21 : vector<64x64xi32>
    %23 = arith.cmpi sge, %20, %22 : vector<64x64xi32>
    %24 = arith.andi %18, %23 : vector<64x64xi1>
    %cst_8 = arith.constant 0.000000e+00 : f32
    %cst_9 = arith.constant -1.000000e+30 : f32
    %25 = vector.broadcast %cst_8 : f32 to vector<64x64xf32>
    %26 = vector.broadcast %cst_9 : f32 to vector<64x64xf32>
    %27 = arith.select %24, %25, %26 : vector<64x64xi1>, vector<64x64xf32>
    %cst_10 = arith.constant 3.200000e+01 : f32
    %cst_11 = arith.constant -5.000000e-01 : f32
    %28 = math.powf %cst_10, %cst_11 : f32
    %c0_12 = arith.constant 0 : index
    %c0_13 = arith.constant 0 : index
    %c0_14 = arith.constant 0 : index
    %29 = vector.load %arg4[%c0_12, %c0_13, %c0_14] : memref<2x1x128xf32, #tpu.memory_space<vmem>>, vector<1x1x128xf32>
    %30 = vector.shape_cast %29 : vector<1x1x128xf32> to vector<1x128xf32>
    %c0_15 = arith.constant 0 : index
    %c0_16 = arith.constant 0 : index
    %c0_17 = arith.constant 0 : index
    %31 = vector.load %arg5[%c0_15, %c0_16, %c0_17] : memref<2x1x128xf32, #tpu.memory_space<vmem>>, vector<1x1x128xf32>
    %32 = vector.shape_cast %31 : vector<1x1x128xf32> to vector<1x128xf32>
    %cst_18 = arith.constant dense<0.000000e+00> : vector<64xf32>
    %33 = vector.multi_reduction <add>, %11, %cst_18 [1] : vector<64x128xf32> to vector<64xf32>
    %34 = vector.shape_cast %33 : vector<64xf32> to vector<64x1xf32>
    %cst_19 = arith.constant 1.280000e+02 : f32
    %35 = vector.broadcast %cst_19 : f32 to vector<64x1xf32>
    %36 = arith.divf %34, %35 : vector<64x1xf32>
    %37 = vector.broadcast %36 : vector<64x1xf32> to vector<64x128xf32>
    %38 = arith.subf %11, %37 : vector<64x128xf32>
    %39 = arith.mulf %38, %38 : vector<64x128xf32>
    %cst_20 = arith.constant dense<0.000000e+00> : vector<64xf32>
    %40 = vector.multi_reduction <add>, %39, %cst_20 [1] : vector<64x128xf32> to vector<64xf32>
    %41 = vector.shape_cast %40 : vector<64xf32> to vector<64x1xf32>
    %cst_21 = arith.constant 1.280000e+02 : f32
    %42 = vector.broadcast %cst_21 : f32 to vector<64x1xf32>
    %43 = arith.divf %41, %42 : vector<64x1xf32>
    %cst_22 = arith.constant 9.99999974E-6 : f32
    %44 = vector.broadcast %cst_22 : f32 to vector<64x1xf32>
    %45 = arith.addf %43, %44 : vector<64x1xf32>
    %46 = math.rsqrt %45 : vector<64x1xf32>
    %47 = vector.broadcast %46 : vector<64x1xf32> to vector<64x128xf32>
    %48 = arith.mulf %38, %47 : vector<64x128xf32>
    %49 = vector.broadcast %30 : vector<1x128xf32> to vector<64x128xf32>
    %50 = arith.mulf %48, %49 : vector<64x128xf32>
    %51 = vector.broadcast %32 : vector<1x128xf32> to vector<64x128xf32>
    %52 = arith.addf %50, %51 : vector<64x128xf32>
    %53 = arith.truncf %52 : vector<64x128xf32> to vector<64x128xbf16>
    %c0_23 = arith.constant 0 : index
    %c0_24 = arith.constant 0 : index
    %c0_25 = arith.constant 0 : index
    %54 = vector.load %arg6[%c0_23, %c0_24, %c0_25] : memref<2x128x384xbf16, #tpu.memory_space<vmem>>, vector<1x128x384xbf16>
    %55 = vector.shape_cast %54 : vector<1x128x384xbf16> to vector<128x384xbf16>
    %cst_26 = arith.constant dense<0.000000e+00> : vector<64x384xf32>
    %56 = tpu.matmul %53, %55, %cst_26 {dimension_numbers = #tpu.dot_dimension_numbers<[1], [0], [0], [1], [0, 0, 1, 1], [], []>} : vector<64x128xbf16>, vector<128x384xbf16>, vector<64x384xf32> -> vector<64x384xf32>
    %57 = arith.truncf %56 : vector<64x384xf32> to vector<64x384xbf16>
    %58 = vector.extract_strided_slice %57 {offsets = [0, 0], sizes = [64, 32], strides = [1, 1]} : vector<64x384xbf16> to vector<64x32xbf16>
    %59 = vector.extract_strided_slice %57 {offsets = [0, 128], sizes = [64, 32], strides = [1, 1]} : vector<64x384xbf16> to vector<64x32xbf16>
    %60 = vector.extract_strided_slice %57 {offsets = [0, 256], sizes = [64, 32], strides = [1, 1]} : vector<64x384xbf16> to vector<64x32xbf16>
    %cst_27 = arith.constant dense<0.000000e+00> : vector<64x64xf32>
    %61 = tpu.matmul %58, %59, %cst_27 {dimension_numbers = #tpu.dot_dimension_numbers<[1], [1], [0], [0], [0, 0, 1, 0], [], []>} : vector<64x32xbf16>, vector<64x32xbf16>, vector<64x64xf32> -> vector<64x64xf32>
    %62 = vector.broadcast %28 : f32 to vector<64x64xf32>
    %63 = arith.mulf %61, %62 : vector<64x64xf32>
    %64 = arith.addf %63, %27 : vector<64x64xf32>
    %cst_28 = arith.constant dense<0xFF800000> : vector<64xf32>
    %65 = vector.multi_reduction <maximumf>, %64, %cst_28 [1] : vector<64x64xf32> to vector<64xf32>
    %66 = vector.shape_cast %65 : vector<64xf32> to vector<64x1xf32>
    %67 = vector.broadcast %66 : vector<64x1xf32> to vector<64x64xf32>
    %68 = arith.subf %64, %67 : vector<64x64xf32>
    %69 = math.exp %68 : vector<64x64xf32>
    %cst_29 = arith.constant dense<0.000000e+00> : vector<64xf32>
    %70 = vector.multi_reduction <add>, %69, %cst_29 [1] : vector<64x64xf32> to vector<64xf32>
    %71 = vector.shape_cast %70 : vector<64xf32> to vector<64x1xf32>
    %72 = tpu.reciprocal %71 {approx = true} : vector<64x1xf32> -> vector<64x1xf32>
    %73 = vector.broadcast %72 : vector<64x1xf32> to vector<64x64xf32>
    %74 = arith.mulf %69, %73 : vector<64x64xf32>
    %75 = arith.truncf %74 : vector<64x64xf32> to vector<64x64xbf16>
    %cst_30 = arith.constant dense<0.000000e+00> : vector<64x32xf32>
    %76 = tpu.matmul %75, %60, %cst_30 {dimension_numbers = #tpu.dot_dimension_numbers<[1], [0], [0], [1], [0, 0, 1, 1], [], []>} : vector<64x64xbf16>, vector<64x32xbf16>, vector<64x32xf32> -> vector<64x32xf32>
    %77 = arith.truncf %76 : vector<64x32xf32> to vector<64x32xbf16>
    %78 = vector.extract_strided_slice %57 {offsets = [0, 32], sizes = [64, 32], strides = [1, 1]} : vector<64x384xbf16> to vector<64x32xbf16>
    %79 = vector.extract_strided_slice %57 {offsets = [0, 160], sizes = [64, 32], strides = [1, 1]} : vector<64x384xbf16> to vector<64x32xbf16>
    %80 = vector.extract_strided_slice %57 {offsets = [0, 288], sizes = [64, 32], strides = [1, 1]} : vector<64x384xbf16> to vector<64x32xbf16>
    %cst_31 = arith.constant dense<0.000000e+00> : vector<64x64xf32>
    %81 = tpu.matmul %78, %79, %cst_31 {dimension_numbers = #tpu.dot_dimension_numbers<[1], [1], [0], [0], [0, 0, 1, 0], [], []>} : vector<64x32xbf16>, vector<64x32xbf16>, vector<64x64xf32> -> vector<64x64xf32>
    %82 = vector.broadcast %28 : f32 to vector<64x64xf32>
    %83 = arith.mulf %81, %82 : vector<64x64xf32>
    %84 = arith.addf %83, %27 : vector<64x64xf32>
    %cst_32 = arith.constant dense<0xFF800000> : vector<64xf32>
    %85 = vector.multi_reduction <maximumf>, %84, %cst_32 [1] : vector<64x64xf32> to vector<64xf32>
    %86 = vector.shape_cast %85 : vector<64xf32> to vector<64x1xf32>
    %87 = vector.broadcast %86 : vector<64x1xf32> to vector<64x64xf32>
    %88 = arith.subf %84, %87 : vector<64x64xf32>
    %89 = math.exp %88 : vector<64x64xf32>
    %cst_33 = arith.constant dense<0.000000e+00> : vector<64xf32>
    %90 = vector.multi_reduction <add>, %89, %cst_33 [1] : vector<64x64xf32> to vector<64xf32>
    %91 = vector.shape_cast %90 : vector<64xf32> to vector<64x1xf32>
    %92 = tpu.reciprocal %91 {approx = true} : vector<64x1xf32> -> vector<64x1xf32>
    %93 = vector.broadcast %92 : vector<64x1xf32> to vector<64x64xf32>
    %94 = arith.mulf %89, %93 : vector<64x64xf32>
    %95 = arith.truncf %94 : vector<64x64xf32> to vector<64x64xbf16>
    %cst_34 = arith.constant dense<0.000000e+00> : vector<64x32xf32>
    %96 = tpu.matmul %95, %80, %cst_34 {dimension_numbers = #tpu.dot_dimension_numbers<[1], [0], [0], [1], [0, 0, 1, 1], [], []>} : vector<64x64xbf16>, vector<64x32xbf16>, vector<64x32xf32> -> vector<64x32xf32>
    %97 = arith.truncf %96 : vector<64x32xf32> to vector<64x32xbf16>
    %98 = vector.extract_strided_slice %57 {offsets = [0, 64], sizes = [64, 32], strides = [1, 1]} : vector<64x384xbf16> to vector<64x32xbf16>
    %99 = vector.extract_strided_slice %57 {offsets = [0, 192], sizes = [64, 32], strides = [1, 1]} : vector<64x384xbf16> to vector<64x32xbf16>
    %100 = vector.extract_strided_slice %57 {offsets = [0, 320], sizes = [64, 32], strides = [1, 1]} : vector<64x384xbf16> to vector<64x32xbf16>
    %cst_35 = arith.constant dense<0.000000e+00> : vector<64x64xf32>
    %101 = tpu.matmul %98, %99, %cst_35 {dimension_numbers = #tpu.dot_dimension_numbers<[1], [1], [0], [0], [0, 0, 1, 0], [], []>} : vector<64x32xbf16>, vector<64x32xbf16>, vector<64x64xf32> -> vector<64x64xf32>
    %102 = vector.broadcast %28 : f32 to vector<64x64xf32>
    %103 = arith.mulf %101, %102 : vector<64x64xf32>
    %104 = arith.addf %103, %27 : vector<64x64xf32>
    %cst_36 = arith.constant dense<0xFF800000> : vector<64xf32>
    %105 = vector.multi_reduction <maximumf>, %104, %cst_36 [1] : vector<64x64xf32> to vector<64xf32>
    %106 = vector.shape_cast %105 : vector<64xf32> to vector<64x1xf32>
    %107 = vector.broadcast %106 : vector<64x1xf32> to vector<64x64xf32>
    %108 = arith.subf %104, %107 : vector<64x64xf32>
    %109 = math.exp %108 : vector<64x64xf32>
    %cst_37 = arith.constant dense<0.000000e+00> : vector<64xf32>
    %110 = vector.multi_reduction <add>, %109, %cst_37 [1] : vector<64x64xf32> to vector<64xf32>
    %111 = vector.shape_cast %110 : vector<64xf32> to vector<64x1xf32>
    %112 = tpu.reciprocal %111 {approx = true} : vector<64x1xf32> -> vector<64x1xf32>
    %113 = vector.broadcast %112 : vector<64x1xf32> to vector<64x64xf32>
    %114 = arith.mulf %109, %113 : vector<64x64xf32>
    %115 = arith.truncf %114 : vector<64x64xf32> to vector<64x64xbf16>
    %cst_38 = arith.constant dense<0.000000e+00> : vector<64x32xf32>
    %116 = tpu.matmul %115, %100, %cst_38 {dimension_numbers = #tpu.dot_dimension_numbers<[1], [0], [0], [1], [0, 0, 1, 1], [], []>} : vector<64x64xbf16>, vector<64x32xbf16>, vector<64x32xf32> -> vector<64x32xf32>
    %117 = arith.truncf %116 : vector<64x32xf32> to vector<64x32xbf16>
    %118 = vector.extract_strided_slice %57 {offsets = [0, 96], sizes = [64, 32], strides = [1, 1]} : vector<64x384xbf16> to vector<64x32xbf16>
    %119 = vector.extract_strided_slice %57 {offsets = [0, 224], sizes = [64, 32], strides = [1, 1]} : vector<64x384xbf16> to vector<64x32xbf16>
    %120 = vector.extract_strided_slice %57 {offsets = [0, 352], sizes = [64, 32], strides = [1, 1]} : vector<64x384xbf16> to vector<64x32xbf16>
    %cst_39 = arith.constant dense<0.000000e+00> : vector<64x64xf32>
    %121 = tpu.matmul %118, %119, %cst_39 {dimension_numbers = #tpu.dot_dimension_numbers<[1], [1], [0], [0], [0, 0, 1, 0], [], []>} : vector<64x32xbf16>, vector<64x32xbf16>, vector<64x64xf32> -> vector<64x64xf32>
    %122 = vector.broadcast %28 : f32 to vector<64x64xf32>
    %123 = arith.mulf %121, %122 : vector<64x64xf32>
    %124 = arith.addf %123, %27 : vector<64x64xf32>
    %cst_40 = arith.constant dense<0xFF800000> : vector<64xf32>
    %125 = vector.multi_reduction <maximumf>, %124, %cst_40 [1] : vector<64x64xf32> to vector<64xf32>
    %126 = vector.shape_cast %125 : vector<64xf32> to vector<64x1xf32>
    %127 = vector.broadcast %126 : vector<64x1xf32> to vector<64x64xf32>
    %128 = arith.subf %124, %127 : vector<64x64xf32>
    %129 = math.exp %128 : vector<64x64xf32>
    %cst_41 = arith.constant dense<0.000000e+00> : vector<64xf32>
    %130 = vector.multi_reduction <add>, %129, %cst_41 [1] : vector<64x64xf32> to vector<64xf32>
    %131 = vector.shape_cast %130 : vector<64xf32> to vector<64x1xf32>
    %132 = tpu.reciprocal %131 {approx = true} : vector<64x1xf32> -> vector<64x1xf32>
    %133 = vector.broadcast %132 : vector<64x1xf32> to vector<64x64xf32>
    %134 = arith.mulf %129, %133 : vector<64x64xf32>
    %135 = arith.truncf %134 : vector<64x64xf32> to vector<64x64xbf16>
    %cst_42 = arith.constant dense<0.000000e+00> : vector<64x32xf32>
    %136 = tpu.matmul %135, %120, %cst_42 {dimension_numbers = #tpu.dot_dimension_numbers<[1], [0], [0], [1], [0, 0, 1, 1], [], []>} : vector<64x64xbf16>, vector<64x32xbf16>, vector<64x32xf32> -> vector<64x32xf32>
    %137 = arith.truncf %136 : vector<64x32xf32> to vector<64x32xbf16>
    %138 = tpu.concatenate %77, %97, %117, %137 in 1 : vector<64x32xbf16>, vector<64x32xbf16>, vector<64x32xbf16>, vector<64x32xbf16> -> vector<64x128xbf16>
    %c0_43 = arith.constant 0 : index
    %c0_44 = arith.constant 0 : index
    %c0_45 = arith.constant 0 : index
    %139 = vector.load %arg7[%c0_43, %c0_44, %c0_45] : memref<2x128x128xbf16, #tpu.memory_space<vmem>>, vector<1x128x128xbf16>
    %140 = vector.shape_cast %139 : vector<1x128x128xbf16> to vector<128x128xbf16>
    %cst_46 = arith.constant dense<0.000000e+00> : vector<64x128xf32>
    %141 = tpu.matmul %138, %140, %cst_46 {dimension_numbers = #tpu.dot_dimension_numbers<[1], [0], [0], [1], [0, 0, 1, 1], [], []>} : vector<64x128xbf16>, vector<128x128xbf16>, vector<64x128xf32> -> vector<64x128xf32>
    %142 = arith.addf %11, %141 : vector<64x128xf32>
    %c0_47 = arith.constant 0 : index
    %c0_48 = arith.constant 0 : index
    %c0_49 = arith.constant 0 : index
    %143 = vector.load %arg8[%c0_47, %c0_48, %c0_49] : memref<2x1x128xf32, #tpu.memory_space<vmem>>, vector<1x1x128xf32>
    %144 = vector.shape_cast %143 : vector<1x1x128xf32> to vector<1x128xf32>
    %145 = vector.broadcast %144 : vector<1x128xf32> to vector<64x128xf32>
    %146 = arith.addf %142, %145 : vector<64x128xf32>
    %c0_50 = arith.constant 0 : index
    %c0_51 = arith.constant 0 : index
    %c0_52 = arith.constant 0 : index
    %147 = vector.load %arg9[%c0_50, %c0_51, %c0_52] : memref<2x1x128xf32, #tpu.memory_space<vmem>>, vector<1x1x128xf32>
    %148 = vector.shape_cast %147 : vector<1x1x128xf32> to vector<1x128xf32>
    %c0_53 = arith.constant 0 : index
    %c0_54 = arith.constant 0 : index
    %c0_55 = arith.constant 0 : index
    %149 = vector.load %arg10[%c0_53, %c0_54, %c0_55] : memref<2x1x128xf32, #tpu.memory_space<vmem>>, vector<1x1x128xf32>
    %150 = vector.shape_cast %149 : vector<1x1x128xf32> to vector<1x128xf32>
    %cst_56 = arith.constant dense<0.000000e+00> : vector<64xf32>
    %151 = vector.multi_reduction <add>, %146, %cst_56 [1] : vector<64x128xf32> to vector<64xf32>
    %152 = vector.shape_cast %151 : vector<64xf32> to vector<64x1xf32>
    %cst_57 = arith.constant 1.280000e+02 : f32
    %153 = vector.broadcast %cst_57 : f32 to vector<64x1xf32>
    %154 = arith.divf %152, %153 : vector<64x1xf32>
    %155 = vector.broadcast %154 : vector<64x1xf32> to vector<64x128xf32>
    %156 = arith.subf %146, %155 : vector<64x128xf32>
    %157 = arith.mulf %156, %156 : vector<64x128xf32>
    %cst_58 = arith.constant dense<0.000000e+00> : vector<64xf32>
    %158 = vector.multi_reduction <add>, %157, %cst_58 [1] : vector<64x128xf32> to vector<64xf32>
    %159 = vector.shape_cast %158 : vector<64xf32> to vector<64x1xf32>
    %cst_59 = arith.constant 1.280000e+02 : f32
    %160 = vector.broadcast %cst_59 : f32 to vector<64x1xf32>
    %161 = arith.divf %159, %160 : vector<64x1xf32>
    %cst_60 = arith.constant 9.99999974E-6 : f32
    %162 = vector.broadcast %cst_60 : f32 to vector<64x1xf32>
    %163 = arith.addf %161, %162 : vector<64x1xf32>
    %164 = math.rsqrt %163 : vector<64x1xf32>
    %165 = vector.broadcast %164 : vector<64x1xf32> to vector<64x128xf32>
    %166 = arith.mulf %156, %165 : vector<64x128xf32>
    %167 = vector.broadcast %148 : vector<1x128xf32> to vector<64x128xf32>
    %168 = arith.mulf %166, %167 : vector<64x128xf32>
    %169 = vector.broadcast %150 : vector<1x128xf32> to vector<64x128xf32>
    %170 = arith.addf %168, %169 : vector<64x128xf32>
    %171 = arith.truncf %170 : vector<64x128xf32> to vector<64x128xbf16>
    %c0_61 = arith.constant 0 : index
    %c0_62 = arith.constant 0 : index
    %c0_63 = arith.constant 0 : index
    %172 = vector.load %arg11[%c0_61, %c0_62, %c0_63] : memref<2x128x512xbf16, #tpu.memory_space<vmem>>, vector<1x128x512xbf16>
    %173 = vector.shape_cast %172 : vector<1x128x512xbf16> to vector<128x512xbf16>
    %cst_64 = arith.constant dense<0.000000e+00> : vector<64x512xf32>
    %174 = tpu.matmul %171, %173, %cst_64 {dimension_numbers = #tpu.dot_dimension_numbers<[1], [0], [0], [1], [0, 0, 1, 1], [], []>} : vector<64x128xbf16>, vector<128x512xbf16>, vector<64x512xf32> -> vector<64x512xf32>
    %c0_65 = arith.constant 0 : index
    %c0_66 = arith.constant 0 : index
    %c0_67 = arith.constant 0 : index
    %175 = vector.load %arg12[%c0_65, %c0_66, %c0_67] : memref<2x1x512xf32, #tpu.memory_space<vmem>>, vector<1x1x512xf32>
    %176 = vector.shape_cast %175 : vector<1x1x512xf32> to vector<1x512xf32>
    %177 = vector.broadcast %176 : vector<1x512xf32> to vector<64x512xf32>
    %178 = arith.addf %174, %177 : vector<64x512xf32>
    %cst_68 = arith.constant 0.000000e+00 : f32
    %179 = vector.broadcast %cst_68 : f32 to vector<64x512xf32>
    %180 = arith.maximumf %178, %179 : vector<64x512xf32>
    %181 = arith.truncf %180 : vector<64x512xf32> to vector<64x512xbf16>
    %c0_69 = arith.constant 0 : index
    %c0_70 = arith.constant 0 : index
    %c0_71 = arith.constant 0 : index
    %182 = vector.load %arg13[%c0_69, %c0_70, %c0_71] : memref<2x512x128xbf16, #tpu.memory_space<vmem>>, vector<1x512x128xbf16>
    %183 = vector.shape_cast %182 : vector<1x512x128xbf16> to vector<512x128xbf16>
    %cst_72 = arith.constant dense<0.000000e+00> : vector<64x128xf32>
    %184 = tpu.matmul %181, %183, %cst_72 {dimension_numbers = #tpu.dot_dimension_numbers<[1], [0], [0], [1], [0, 0, 1, 1], [], []>} : vector<64x512xbf16>, vector<512x128xbf16>, vector<64x128xf32> -> vector<64x128xf32>
    %185 = arith.addf %146, %184 : vector<64x128xf32>
    %c0_73 = arith.constant 0 : index
    %c0_74 = arith.constant 0 : index
    %c0_75 = arith.constant 0 : index
    %186 = vector.load %arg14[%c0_73, %c0_74, %c0_75] : memref<2x1x128xf32, #tpu.memory_space<vmem>>, vector<1x1x128xf32>
    %187 = vector.shape_cast %186 : vector<1x1x128xf32> to vector<1x128xf32>
    %188 = vector.broadcast %187 : vector<1x128xf32> to vector<64x128xf32>
    %189 = arith.addf %185, %188 : vector<64x128xf32>
    %c1 = arith.constant 1 : index
    %c0_76 = arith.constant 0 : index
    %c0_77 = arith.constant 0 : index
    %190 = vector.load %arg4[%c1, %c0_76, %c0_77] : memref<2x1x128xf32, #tpu.memory_space<vmem>>, vector<1x1x128xf32>
    %191 = vector.shape_cast %190 : vector<1x1x128xf32> to vector<1x128xf32>
    %c1_78 = arith.constant 1 : index
    %c0_79 = arith.constant 0 : index
    %c0_80 = arith.constant 0 : index
    %192 = vector.load %arg5[%c1_78, %c0_79, %c0_80] : memref<2x1x128xf32, #tpu.memory_space<vmem>>, vector<1x1x128xf32>
    %193 = vector.shape_cast %192 : vector<1x1x128xf32> to vector<1x128xf32>
    %cst_81 = arith.constant dense<0.000000e+00> : vector<64xf32>
    %194 = vector.multi_reduction <add>, %189, %cst_81 [1] : vector<64x128xf32> to vector<64xf32>
    %195 = vector.shape_cast %194 : vector<64xf32> to vector<64x1xf32>
    %cst_82 = arith.constant 1.280000e+02 : f32
    %196 = vector.broadcast %cst_82 : f32 to vector<64x1xf32>
    %197 = arith.divf %195, %196 : vector<64x1xf32>
    %198 = vector.broadcast %197 : vector<64x1xf32> to vector<64x128xf32>
    %199 = arith.subf %189, %198 : vector<64x128xf32>
    %200 = arith.mulf %199, %199 : vector<64x128xf32>
    %cst_83 = arith.constant dense<0.000000e+00> : vector<64xf32>
    %201 = vector.multi_reduction <add>, %200, %cst_83 [1] : vector<64x128xf32> to vector<64xf32>
    %202 = vector.shape_cast %201 : vector<64xf32> to vector<64x1xf32>
    %cst_84 = arith.constant 1.280000e+02 : f32
    %203 = vector.broadcast %cst_84 : f32 to vector<64x1xf32>
    %204 = arith.divf %202, %203 : vector<64x1xf32>
    %cst_85 = arith.constant 9.99999974E-6 : f32
    %205 = vector.broadcast %cst_85 : f32 to vector<64x1xf32>
    %206 = arith.addf %204, %205 : vector<64x1xf32>
    %207 = math.rsqrt %206 : vector<64x1xf32>
    %208 = vector.broadcast %207 : vector<64x1xf32> to vector<64x128xf32>
    %209 = arith.mulf %199, %208 : vector<64x128xf32>
    %210 = vector.broadcast %191 : vector<1x128xf32> to vector<64x128xf32>
    %211 = arith.mulf %209, %210 : vector<64x128xf32>
    %212 = vector.broadcast %193 : vector<1x128xf32> to vector<64x128xf32>
    %213 = arith.addf %211, %212 : vector<64x128xf32>
    %214 = arith.truncf %213 : vector<64x128xf32> to vector<64x128xbf16>
    %c1_86 = arith.constant 1 : index
    %c0_87 = arith.constant 0 : index
    %c0_88 = arith.constant 0 : index
    %215 = vector.load %arg6[%c1_86, %c0_87, %c0_88] : memref<2x128x384xbf16, #tpu.memory_space<vmem>>, vector<1x128x384xbf16>
    %216 = vector.shape_cast %215 : vector<1x128x384xbf16> to vector<128x384xbf16>
    %cst_89 = arith.constant dense<0.000000e+00> : vector<64x384xf32>
    %217 = tpu.matmul %214, %216, %cst_89 {dimension_numbers = #tpu.dot_dimension_numbers<[1], [0], [0], [1], [0, 0, 1, 1], [], []>} : vector<64x128xbf16>, vector<128x384xbf16>, vector<64x384xf32> -> vector<64x384xf32>
    %218 = arith.truncf %217 : vector<64x384xf32> to vector<64x384xbf16>
    %219 = vector.extract_strided_slice %218 {offsets = [0, 0], sizes = [64, 32], strides = [1, 1]} : vector<64x384xbf16> to vector<64x32xbf16>
    %220 = vector.extract_strided_slice %218 {offsets = [0, 128], sizes = [64, 32], strides = [1, 1]} : vector<64x384xbf16> to vector<64x32xbf16>
    %221 = vector.extract_strided_slice %218 {offsets = [0, 256], sizes = [64, 32], strides = [1, 1]} : vector<64x384xbf16> to vector<64x32xbf16>
    %cst_90 = arith.constant dense<0.000000e+00> : vector<64x64xf32>
    %222 = tpu.matmul %219, %220, %cst_90 {dimension_numbers = #tpu.dot_dimension_numbers<[1], [1], [0], [0], [0, 0, 1, 0], [], []>} : vector<64x32xbf16>, vector<64x32xbf16>, vector<64x64xf32> -> vector<64x64xf32>
    %223 = vector.broadcast %28 : f32 to vector<64x64xf32>
    %224 = arith.mulf %222, %223 : vector<64x64xf32>
    %225 = arith.addf %224, %27 : vector<64x64xf32>
    %cst_91 = arith.constant dense<0xFF800000> : vector<64xf32>
    %226 = vector.multi_reduction <maximumf>, %225, %cst_91 [1] : vector<64x64xf32> to vector<64xf32>
    %227 = vector.shape_cast %226 : vector<64xf32> to vector<64x1xf32>
    %228 = vector.broadcast %227 : vector<64x1xf32> to vector<64x64xf32>
    %229 = arith.subf %225, %228 : vector<64x64xf32>
    %230 = math.exp %229 : vector<64x64xf32>
    %cst_92 = arith.constant dense<0.000000e+00> : vector<64xf32>
    %231 = vector.multi_reduction <add>, %230, %cst_92 [1] : vector<64x64xf32> to vector<64xf32>
    %232 = vector.shape_cast %231 : vector<64xf32> to vector<64x1xf32>
    %233 = tpu.reciprocal %232 {approx = true} : vector<64x1xf32> -> vector<64x1xf32>
    %234 = vector.broadcast %233 : vector<64x1xf32> to vector<64x64xf32>
    %235 = arith.mulf %230, %234 : vector<64x64xf32>
    %236 = arith.truncf %235 : vector<64x64xf32> to vector<64x64xbf16>
    %cst_93 = arith.constant dense<0.000000e+00> : vector<64x32xf32>
    %237 = tpu.matmul %236, %221, %cst_93 {dimension_numbers = #tpu.dot_dimension_numbers<[1], [0], [0], [1], [0, 0, 1, 1], [], []>} : vector<64x64xbf16>, vector<64x32xbf16>, vector<64x32xf32> -> vector<64x32xf32>
    %238 = arith.truncf %237 : vector<64x32xf32> to vector<64x32xbf16>
    %239 = vector.extract_strided_slice %218 {offsets = [0, 32], sizes = [64, 32], strides = [1, 1]} : vector<64x384xbf16> to vector<64x32xbf16>
    %240 = vector.extract_strided_slice %218 {offsets = [0, 160], sizes = [64, 32], strides = [1, 1]} : vector<64x384xbf16> to vector<64x32xbf16>
    %241 = vector.extract_strided_slice %218 {offsets = [0, 288], sizes = [64, 32], strides = [1, 1]} : vector<64x384xbf16> to vector<64x32xbf16>
    %cst_94 = arith.constant dense<0.000000e+00> : vector<64x64xf32>
    %242 = tpu.matmul %239, %240, %cst_94 {dimension_numbers = #tpu.dot_dimension_numbers<[1], [1], [0], [0], [0, 0, 1, 0], [], []>} : vector<64x32xbf16>, vector<64x32xbf16>, vector<64x64xf32> -> vector<64x64xf32>
    %243 = vector.broadcast %28 : f32 to vector<64x64xf32>
    %244 = arith.mulf %242, %243 : vector<64x64xf32>
    %245 = arith.addf %244, %27 : vector<64x64xf32>
    %cst_95 = arith.constant dense<0xFF800000> : vector<64xf32>
    %246 = vector.multi_reduction <maximumf>, %245, %cst_95 [1] : vector<64x64xf32> to vector<64xf32>
    %247 = vector.shape_cast %246 : vector<64xf32> to vector<64x1xf32>
    %248 = vector.broadcast %247 : vector<64x1xf32> to vector<64x64xf32>
    %249 = arith.subf %245, %248 : vector<64x64xf32>
    %250 = math.exp %249 : vector<64x64xf32>
    %cst_96 = arith.constant dense<0.000000e+00> : vector<64xf32>
    %251 = vector.multi_reduction <add>, %250, %cst_96 [1] : vector<64x64xf32> to vector<64xf32>
    %252 = vector.shape_cast %251 : vector<64xf32> to vector<64x1xf32>
    %253 = tpu.reciprocal %252 {approx = true} : vector<64x1xf32> -> vector<64x1xf32>
    %254 = vector.broadcast %253 : vector<64x1xf32> to vector<64x64xf32>
    %255 = arith.mulf %250, %254 : vector<64x64xf32>
    %256 = arith.truncf %255 : vector<64x64xf32> to vector<64x64xbf16>
    %cst_97 = arith.constant dense<0.000000e+00> : vector<64x32xf32>
    %257 = tpu.matmul %256, %241, %cst_97 {dimension_numbers = #tpu.dot_dimension_numbers<[1], [0], [0], [1], [0, 0, 1, 1], [], []>} : vector<64x64xbf16>, vector<64x32xbf16>, vector<64x32xf32> -> vector<64x32xf32>
    %258 = arith.truncf %257 : vector<64x32xf32> to vector<64x32xbf16>
    %259 = vector.extract_strided_slice %218 {offsets = [0, 64], sizes = [64, 32], strides = [1, 1]} : vector<64x384xbf16> to vector<64x32xbf16>
    %260 = vector.extract_strided_slice %218 {offsets = [0, 192], sizes = [64, 32], strides = [1, 1]} : vector<64x384xbf16> to vector<64x32xbf16>
    %261 = vector.extract_strided_slice %218 {offsets = [0, 320], sizes = [64, 32], strides = [1, 1]} : vector<64x384xbf16> to vector<64x32xbf16>
    %cst_98 = arith.constant dense<0.000000e+00> : vector<64x64xf32>
    %262 = tpu.matmul %259, %260, %cst_98 {dimension_numbers = #tpu.dot_dimension_numbers<[1], [1], [0], [0], [0, 0, 1, 0], [], []>} : vector<64x32xbf16>, vector<64x32xbf16>, vector<64x64xf32> -> vector<64x64xf32>
    %263 = vector.broadcast %28 : f32 to vector<64x64xf32>
    %264 = arith.mulf %262, %263 : vector<64x64xf32>
    %265 = arith.addf %264, %27 : vector<64x64xf32>
    %cst_99 = arith.constant dense<0xFF800000> : vector<64xf32>
    %266 = vector.multi_reduction <maximumf>, %265, %cst_99 [1] : vector<64x64xf32> to vector<64xf32>
    %267 = vector.shape_cast %266 : vector<64xf32> to vector<64x1xf32>
    %268 = vector.broadcast %267 : vector<64x1xf32> to vector<64x64xf32>
    %269 = arith.subf %265, %268 : vector<64x64xf32>
    %270 = math.exp %269 : vector<64x64xf32>
    %cst_100 = arith.constant dense<0.000000e+00> : vector<64xf32>
    %271 = vector.multi_reduction <add>, %270, %cst_100 [1] : vector<64x64xf32> to vector<64xf32>
    %272 = vector.shape_cast %271 : vector<64xf32> to vector<64x1xf32>
    %273 = tpu.reciprocal %272 {approx = true} : vector<64x1xf32> -> vector<64x1xf32>
    %274 = vector.broadcast %273 : vector<64x1xf32> to vector<64x64xf32>
    %275 = arith.mulf %270, %274 : vector<64x64xf32>
    %276 = arith.truncf %275 : vector<64x64xf32> to vector<64x64xbf16>
    %cst_101 = arith.constant dense<0.000000e+00> : vector<64x32xf32>
    %277 = tpu.matmul %276, %261, %cst_101 {dimension_numbers = #tpu.dot_dimension_numbers<[1], [0], [0], [1], [0, 0, 1, 1], [], []>} : vector<64x64xbf16>, vector<64x32xbf16>, vector<64x32xf32> -> vector<64x32xf32>
    %278 = arith.truncf %277 : vector<64x32xf32> to vector<64x32xbf16>
    %279 = vector.extract_strided_slice %218 {offsets = [0, 96], sizes = [64, 32], strides = [1, 1]} : vector<64x384xbf16> to vector<64x32xbf16>
    %280 = vector.extract_strided_slice %218 {offsets = [0, 224], sizes = [64, 32], strides = [1, 1]} : vector<64x384xbf16> to vector<64x32xbf16>
    %281 = vector.extract_strided_slice %218 {offsets = [0, 352], sizes = [64, 32], strides = [1, 1]} : vector<64x384xbf16> to vector<64x32xbf16>
    %cst_102 = arith.constant dense<0.000000e+00> : vector<64x64xf32>
    %282 = tpu.matmul %279, %280, %cst_102 {dimension_numbers = #tpu.dot_dimension_numbers<[1], [1], [0], [0], [0, 0, 1, 0], [], []>} : vector<64x32xbf16>, vector<64x32xbf16>, vector<64x64xf32> -> vector<64x64xf32>
    %283 = vector.broadcast %28 : f32 to vector<64x64xf32>
    %284 = arith.mulf %282, %283 : vector<64x64xf32>
    %285 = arith.addf %284, %27 : vector<64x64xf32>
    %cst_103 = arith.constant dense<0xFF800000> : vector<64xf32>
    %286 = vector.multi_reduction <maximumf>, %285, %cst_103 [1] : vector<64x64xf32> to vector<64xf32>
    %287 = vector.shape_cast %286 : vector<64xf32> to vector<64x1xf32>
    %288 = vector.broadcast %287 : vector<64x1xf32> to vector<64x64xf32>
    %289 = arith.subf %285, %288 : vector<64x64xf32>
    %290 = math.exp %289 : vector<64x64xf32>
    %cst_104 = arith.constant dense<0.000000e+00> : vector<64xf32>
    %291 = vector.multi_reduction <add>, %290, %cst_104 [1] : vector<64x64xf32> to vector<64xf32>
    %292 = vector.shape_cast %291 : vector<64xf32> to vector<64x1xf32>
    %293 = tpu.reciprocal %292 {approx = true} : vector<64x1xf32> -> vector<64x1xf32>
    %294 = vector.broadcast %293 : vector<64x1xf32> to vector<64x64xf32>
    %295 = arith.mulf %290, %294 : vector<64x64xf32>
    %296 = arith.truncf %295 : vector<64x64xf32> to vector<64x64xbf16>
    %cst_105 = arith.constant dense<0.000000e+00> : vector<64x32xf32>
    %297 = tpu.matmul %296, %281, %cst_105 {dimension_numbers = #tpu.dot_dimension_numbers<[1], [0], [0], [1], [0, 0, 1, 1], [], []>} : vector<64x64xbf16>, vector<64x32xbf16>, vector<64x32xf32> -> vector<64x32xf32>
    %298 = arith.truncf %297 : vector<64x32xf32> to vector<64x32xbf16>
    %299 = tpu.concatenate %238, %258, %278, %298 in 1 : vector<64x32xbf16>, vector<64x32xbf16>, vector<64x32xbf16>, vector<64x32xbf16> -> vector<64x128xbf16>
    %c1_106 = arith.constant 1 : index
    %c0_107 = arith.constant 0 : index
    %c0_108 = arith.constant 0 : index
    %300 = vector.load %arg7[%c1_106, %c0_107, %c0_108] : memref<2x128x128xbf16, #tpu.memory_space<vmem>>, vector<1x128x128xbf16>
    %301 = vector.shape_cast %300 : vector<1x128x128xbf16> to vector<128x128xbf16>
    %cst_109 = arith.constant dense<0.000000e+00> : vector<64x128xf32>
    %302 = tpu.matmul %299, %301, %cst_109 {dimension_numbers = #tpu.dot_dimension_numbers<[1], [0], [0], [1], [0, 0, 1, 1], [], []>} : vector<64x128xbf16>, vector<128x128xbf16>, vector<64x128xf32> -> vector<64x128xf32>
    %303 = arith.addf %189, %302 : vector<64x128xf32>
    %c1_110 = arith.constant 1 : index
    %c0_111 = arith.constant 0 : index
    %c0_112 = arith.constant 0 : index
    %304 = vector.load %arg8[%c1_110, %c0_111, %c0_112] : memref<2x1x128xf32, #tpu.memory_space<vmem>>, vector<1x1x128xf32>
    %305 = vector.shape_cast %304 : vector<1x1x128xf32> to vector<1x128xf32>
    %306 = vector.broadcast %305 : vector<1x128xf32> to vector<64x128xf32>
    %307 = arith.addf %303, %306 : vector<64x128xf32>
    %c1_113 = arith.constant 1 : index
    %c0_114 = arith.constant 0 : index
    %c0_115 = arith.constant 0 : index
    %308 = vector.load %arg9[%c1_113, %c0_114, %c0_115] : memref<2x1x128xf32, #tpu.memory_space<vmem>>, vector<1x1x128xf32>
    %309 = vector.shape_cast %308 : vector<1x1x128xf32> to vector<1x128xf32>
    %c1_116 = arith.constant 1 : index
    %c0_117 = arith.constant 0 : index
    %c0_118 = arith.constant 0 : index
    %310 = vector.load %arg10[%c1_116, %c0_117, %c0_118] : memref<2x1x128xf32, #tpu.memory_space<vmem>>, vector<1x1x128xf32>
    %311 = vector.shape_cast %310 : vector<1x1x128xf32> to vector<1x128xf32>
    %cst_119 = arith.constant dense<0.000000e+00> : vector<64xf32>
    %312 = vector.multi_reduction <add>, %307, %cst_119 [1] : vector<64x128xf32> to vector<64xf32>
    %313 = vector.shape_cast %312 : vector<64xf32> to vector<64x1xf32>
    %cst_120 = arith.constant 1.280000e+02 : f32
    %314 = vector.broadcast %cst_120 : f32 to vector<64x1xf32>
    %315 = arith.divf %313, %314 : vector<64x1xf32>
    %316 = vector.broadcast %315 : vector<64x1xf32> to vector<64x128xf32>
    %317 = arith.subf %307, %316 : vector<64x128xf32>
    %318 = arith.mulf %317, %317 : vector<64x128xf32>
    %cst_121 = arith.constant dense<0.000000e+00> : vector<64xf32>
    %319 = vector.multi_reduction <add>, %318, %cst_121 [1] : vector<64x128xf32> to vector<64xf32>
    %320 = vector.shape_cast %319 : vector<64xf32> to vector<64x1xf32>
    %cst_122 = arith.constant 1.280000e+02 : f32
    %321 = vector.broadcast %cst_122 : f32 to vector<64x1xf32>
    %322 = arith.divf %320, %321 : vector<64x1xf32>
    %cst_123 = arith.constant 9.99999974E-6 : f32
    %323 = vector.broadcast %cst_123 : f32 to vector<64x1xf32>
    %324 = arith.addf %322, %323 : vector<64x1xf32>
    %325 = math.rsqrt %324 : vector<64x1xf32>
    %326 = vector.broadcast %325 : vector<64x1xf32> to vector<64x128xf32>
    %327 = arith.mulf %317, %326 : vector<64x128xf32>
    %328 = vector.broadcast %309 : vector<1x128xf32> to vector<64x128xf32>
    %329 = arith.mulf %327, %328 : vector<64x128xf32>
    %330 = vector.broadcast %311 : vector<1x128xf32> to vector<64x128xf32>
    %331 = arith.addf %329, %330 : vector<64x128xf32>
    %332 = arith.truncf %331 : vector<64x128xf32> to vector<64x128xbf16>
    %c1_124 = arith.constant 1 : index
    %c0_125 = arith.constant 0 : index
    %c0_126 = arith.constant 0 : index
    %333 = vector.load %arg11[%c1_124, %c0_125, %c0_126] : memref<2x128x512xbf16, #tpu.memory_space<vmem>>, vector<1x128x512xbf16>
    %334 = vector.shape_cast %333 : vector<1x128x512xbf16> to vector<128x512xbf16>
    %cst_127 = arith.constant dense<0.000000e+00> : vector<64x512xf32>
    %335 = tpu.matmul %332, %334, %cst_127 {dimension_numbers = #tpu.dot_dimension_numbers<[1], [0], [0], [1], [0, 0, 1, 1], [], []>} : vector<64x128xbf16>, vector<128x512xbf16>, vector<64x512xf32> -> vector<64x512xf32>
    %c1_128 = arith.constant 1 : index
    %c0_129 = arith.constant 0 : index
    %c0_130 = arith.constant 0 : index
    %336 = vector.load %arg12[%c1_128, %c0_129, %c0_130] : memref<2x1x512xf32, #tpu.memory_space<vmem>>, vector<1x1x512xf32>
    %337 = vector.shape_cast %336 : vector<1x1x512xf32> to vector<1x512xf32>
    %338 = vector.broadcast %337 : vector<1x512xf32> to vector<64x512xf32>
    %339 = arith.addf %335, %338 : vector<64x512xf32>
    %cst_131 = arith.constant 0.000000e+00 : f32
    %340 = vector.broadcast %cst_131 : f32 to vector<64x512xf32>
    %341 = arith.maximumf %339, %340 : vector<64x512xf32>
    %342 = arith.truncf %341 : vector<64x512xf32> to vector<64x512xbf16>
    %c1_132 = arith.constant 1 : index
    %c0_133 = arith.constant 0 : index
    %c0_134 = arith.constant 0 : index
    %343 = vector.load %arg13[%c1_132, %c0_133, %c0_134] : memref<2x512x128xbf16, #tpu.memory_space<vmem>>, vector<1x512x128xbf16>
    %344 = vector.shape_cast %343 : vector<1x512x128xbf16> to vector<512x128xbf16>
    %cst_135 = arith.constant dense<0.000000e+00> : vector<64x128xf32>
    %345 = tpu.matmul %342, %344, %cst_135 {dimension_numbers = #tpu.dot_dimension_numbers<[1], [0], [0], [1], [0, 0, 1, 1], [], []>} : vector<64x512xbf16>, vector<512x128xbf16>, vector<64x128xf32> -> vector<64x128xf32>
    %346 = arith.addf %307, %345 : vector<64x128xf32>
    %c1_136 = arith.constant 1 : index
    %c0_137 = arith.constant 0 : index
    %c0_138 = arith.constant 0 : index
    %347 = vector.load %arg14[%c1_136, %c0_137, %c0_138] : memref<2x1x128xf32, #tpu.memory_space<vmem>>, vector<1x1x128xf32>
    %348 = vector.shape_cast %347 : vector<1x1x128xf32> to vector<1x128xf32>
    %349 = vector.broadcast %348 : vector<1x128xf32> to vector<64x128xf32>
    %350 = arith.addf %346, %349 : vector<64x128xf32>
    %c0_139 = arith.constant 0 : index
    %c0_140 = arith.constant 0 : index
    %351 = vector.load %arg15[%c0_139, %c0_140] : memref<1x128xf32, #tpu.memory_space<vmem>>, vector<1x128xf32>
    %c0_141 = arith.constant 0 : index
    %c0_142 = arith.constant 0 : index
    %352 = vector.load %arg16[%c0_141, %c0_142] : memref<1x128xf32, #tpu.memory_space<vmem>>, vector<1x128xf32>
    %cst_143 = arith.constant dense<0.000000e+00> : vector<64xf32>
    %353 = vector.multi_reduction <add>, %350, %cst_143 [1] : vector<64x128xf32> to vector<64xf32>
    %354 = vector.shape_cast %353 : vector<64xf32> to vector<64x1xf32>
    %cst_144 = arith.constant 1.280000e+02 : f32
    %355 = vector.broadcast %cst_144 : f32 to vector<64x1xf32>
    %356 = arith.divf %354, %355 : vector<64x1xf32>
    %357 = vector.broadcast %356 : vector<64x1xf32> to vector<64x128xf32>
    %358 = arith.subf %350, %357 : vector<64x128xf32>
    %359 = arith.mulf %358, %358 : vector<64x128xf32>
    %cst_145 = arith.constant dense<0.000000e+00> : vector<64xf32>
    %360 = vector.multi_reduction <add>, %359, %cst_145 [1] : vector<64x128xf32> to vector<64xf32>
    %361 = vector.shape_cast %360 : vector<64xf32> to vector<64x1xf32>
    %cst_146 = arith.constant 1.280000e+02 : f32
    %362 = vector.broadcast %cst_146 : f32 to vector<64x1xf32>
    %363 = arith.divf %361, %362 : vector<64x1xf32>
    %cst_147 = arith.constant 9.99999974E-6 : f32
    %364 = vector.broadcast %cst_147 : f32 to vector<64x1xf32>
    %365 = arith.addf %363, %364 : vector<64x1xf32>
    %366 = math.rsqrt %365 : vector<64x1xf32>
    %367 = vector.broadcast %366 : vector<64x1xf32> to vector<64x128xf32>
    %368 = arith.mulf %358, %367 : vector<64x128xf32>
    %369 = vector.broadcast %351 : vector<1x128xf32> to vector<64x128xf32>
    %370 = arith.mulf %368, %369 : vector<64x128xf32>
    %371 = vector.broadcast %352 : vector<1x128xf32> to vector<64x128xf32>
    %372 = arith.addf %370, %371 : vector<64x128xf32>
    %373 = arith.truncf %372 : vector<64x128xf32> to vector<64x128xbf16>
    %c0_148 = arith.constant 0 : index
    %c0_149 = arith.constant 0 : index
    %374 = vector.load %arg17[%c0_148, %c0_149] : memref<128x128xbf16, #tpu.memory_space<vmem>>, vector<128x128xbf16>
    %cst_150 = arith.constant dense<0.000000e+00> : vector<64x128xf32>
    %375 = tpu.matmul %373, %374, %cst_150 {dimension_numbers = #tpu.dot_dimension_numbers<[1], [0], [0], [1], [0, 0, 1, 1], [], []>} : vector<64x128xbf16>, vector<128x128xbf16>, vector<64x128xf32> -> vector<64x128xf32>
    %c0_151 = arith.constant 0 : index
    %c0_152 = arith.constant 0 : index
    %376 = vector.load %arg18[%c0_151, %c0_152] : memref<1x128xf32, #tpu.memory_space<vmem>>, vector<1x128xf32>
    %377 = vector.broadcast %376 : vector<1x128xf32> to vector<64x128xf32>
    %378 = arith.addf %375, %377 : vector<64x128xf32>
    %379 = vector.shape_cast %378 : vector<64x128xf32> to vector<2x32x128xf32>
    %c0_153 = arith.constant 0 : index
    %c0_154 = arith.constant 0 : index
    %c0_155 = arith.constant 0 : index
    %380 = vector.load %arg19[%c0_153, %c0_154, %c0_155] : memref<2x32x128xf32, #tpu.memory_space<vmem>>, vector<2x32x128xf32>
    tpu.vector_store %arg19[%c0_153, %c0_154, %c0_155], %379 {strides = array<i32>} : memref<2x32x128xf32, #tpu.memory_space<vmem>>, vector<2x32x128xf32>,
    return
  }
  func.func @transform_0(%arg0: i32) -> (i32, i32, i32) {
    %c0_i32 = arith.constant 0 : i32
    %c0_i32_0 = arith.constant 0 : i32
    %c0_i32_1 = arith.constant 0 : i32
    return %arg0, %c0_i32, %c0_i32_0 : i32, i32, i32
  }
  func.func @transform_1(%arg0: i32) -> (i32, i32) {
    %c0_i32 = arith.constant 0 : i32
    %c0_i32_0 = arith.constant 0 : i32
    %c0_i32_1 = arith.constant 0 : i32
    return %c0_i32, %c0_i32_0 : i32, i32
  }
  func.func @transform_2(%arg0: i32) -> (i32, i32) {
    %c0_i32 = arith.constant 0 : i32
    %c0_i32_0 = arith.constant 0 : i32
    %c0_i32_1 = arith.constant 0 : i32
    return %c0_i32, %c0_i32_0 : i32, i32
  }
  func.func @transform_3(%arg0: i32) -> (i32, i32, i32) {
    %c0_i32 = arith.constant 0 : i32
    %c0_i32_0 = arith.constant 0 : i32
    %c0_i32_1 = arith.constant 0 : i32
    %c0_i32_2 = arith.constant 0 : i32
    return %c0_i32, %c0_i32_0, %c0_i32_1 : i32, i32, i32
  }
  func.func @transform_4(%arg0: i32) -> (i32, i32, i32) {
    %c0_i32 = arith.constant 0 : i32
    %c0_i32_0 = arith.constant 0 : i32
    %c0_i32_1 = arith.constant 0 : i32
    %c0_i32_2 = arith.constant 0 : i32
    return %c0_i32, %c0_i32_0, %c0_i32_1 : i32, i32, i32
  }
  func.func @transform_5(%arg0: i32) -> (i32, i32, i32) {
    %c0_i32 = arith.constant 0 : i32
    %c0_i32_0 = arith.constant 0 : i32
    %c0_i32_1 = arith.constant 0 : i32
    %c0_i32_2 = arith.constant 0 : i32
    return %c0_i32, %c0_i32_0, %c0_i32_1 : i32, i32, i32
  }
  func.func @transform_6(%arg0: i32) -> (i32, i32, i32) {
    %c0_i32 = arith.constant 0 : i32
    %c0_i32_0 = arith.constant 0 : i32
    %c0_i32_1 = arith.constant 0 : i32
    %c0_i32_2 = arith.constant 0 : i32
    return %c0_i32, %c0_i32_0, %c0_i32_1 : i32, i32, i32
  }
  func.func @transform_7(%arg0: i32) -> (i32, i32, i32) {
    %c0_i32 = arith.constant 0 : i32
    %c0_i32_0 = arith.constant 0 : i32
    %c0_i32_1 = arith.constant 0 : i32
    %c0_i32_2 = arith.constant 0 : i32
    return %c0_i32, %c0_i32_0, %c0_i32_1 : i32, i32, i32
  }
  func.func @transform_8(%arg0: i32) -> (i32, i32, i32) {
    %c0_i32 = arith.constant 0 : i32
    %c0_i32_0 = arith.constant 0 : i32
    %c0_i32_1 = arith.constant 0 : i32
    %c0_i32_2 = arith.constant 0 : i32
    return %c0_i32, %c0_i32_0, %c0_i32_1 : i32, i32, i32
  }
  func.func @transform_9(%arg0: i32) -> (i32, i32, i32) {
    %c0_i32 = arith.constant 0 : i32
    %c0_i32_0 = arith.constant 0 : i32
    %c0_i32_1 = arith.constant 0 : i32
    %c0_i32_2 = arith.constant 0 : i32
    return %c0_i32, %c0_i32_0, %c0_i32_1 : i32, i32, i32
  }
  func.func @transform_10(%arg0: i32) -> (i32, i32, i32) {
    %c0_i32 = arith.constant 0 : i32
    %c0_i32_0 = arith.constant 0 : i32
    %c0_i32_1 = arith.constant 0 : i32
    %c0_i32_2 = arith.constant 0 : i32
    return %c0_i32, %c0_i32_0, %c0_i32_1 : i32, i32, i32
  }
  func.func @transform_11(%arg0: i32) -> (i32, i32, i32) {
    %c0_i32 = arith.constant 0 : i32
    %c0_i32_0 = arith.constant 0 : i32
    %c0_i32_1 = arith.constant 0 : i32
    %c0_i32_2 = arith.constant 0 : i32
    return %c0_i32, %c0_i32_0, %c0_i32_1 : i32, i32, i32
  }
  func.func @transform_12(%arg0: i32) -> (i32, i32, i32) {
    %c0_i32 = arith.constant 0 : i32
    %c0_i32_0 = arith.constant 0 : i32
    %c0_i32_1 = arith.constant 0 : i32
    %c0_i32_2 = arith.constant 0 : i32
    return %c0_i32, %c0_i32_0, %c0_i32_1 : i32, i32, i32
  }
  func.func @transform_13(%arg0: i32) -> (i32, i32, i32) {
    %c0_i32 = arith.constant 0 : i32
    %c0_i32_0 = arith.constant 0 : i32
    %c0_i32_1 = arith.constant 0 : i32
    %c0_i32_2 = arith.constant 0 : i32
    return %c0_i32, %c0_i32_0, %c0_i32_1 : i32, i32, i32
  }
  func.func @transform_14(%arg0: i32) -> (i32, i32) {
    %c0_i32 = arith.constant 0 : i32
    %c0_i32_0 = arith.constant 0 : i32
    %c0_i32_1 = arith.constant 0 : i32
    return %c0_i32, %c0_i32_0 : i32, i32
  }
  func.func @transform_15(%arg0: i32) -> (i32, i32) {
    %c0_i32 = arith.constant 0 : i32
    %c0_i32_0 = arith.constant 0 : i32
    %c0_i32_1 = arith.constant 0 : i32
    return %c0_i32, %c0_i32_0 : i32, i32
  }
  func.func @transform_16(%arg0: i32) -> (i32, i32) {
    %c0_i32 = arith.constant 0 : i32
    %c0_i32_0 = arith.constant 0 : i32
    %c0_i32_1 = arith.constant 0 : i32
    return %c0_i32, %c0_i32_0 : i32, i32
  }
  func.func @transform_17(%arg0: i32) -> (i32, i32) {
    %c0_i32 = arith.constant 0 : i32
    %c0_i32_0 = arith.constant 0 : i32
    %c0_i32_1 = arith.constant 0 : i32
    return %c0_i32, %c0_i32_0 : i32, i32
  }
  func.func @transform_18(%arg0: i32) -> (i32, i32, i32) {
    %c0_i32 = arith.constant 0 : i32
    %c0_i32_0 = arith.constant 0 : i32
    %c0_i32_1 = arith.constant 0 : i32
    return %arg0, %c0_i32, %c0_i32_0 : i32, i32, i32
  }
}

</mosaic_0001>

<llo_original>
// kernel: gpt_forward.1
$region0: #{gpt_forward.1}
  #allocation0 [shape = 'u32[]', space=smem, size = 0x4, offset = 0x4, fixed_abs, tag = 'smem constant byte address 0x4 - core index']
  #allocation1 [shape = 'u32[144,128]{1,0:T(1,128)}', space=vmem, size = 0x12000, scoped, tag = 'internal scratch']
  %s0 = inlined_call_operand.vmem [shape: s32[2,32,1], index: 0, kind: input, shape index: {}]
  %s1 = inlined_call_operand.vmem [shape: bf16[128,128], index: 1, kind: input, shape index: {}]
  %s2 = inlined_call_operand.vmem [shape: f32[64,128], index: 2, kind: input, shape index: {}]
  %s3 = inlined_call_operand.vmem [shape: f32[2,1,128], index: 3, kind: input, shape index: {}]
  %s4 = inlined_call_operand.vmem [shape: f32[2,1,128], index: 4, kind: input, shape index: {}]
  %s5 = inlined_call_operand.hbm [shape: bf16[2,128,384], index: 5, kind: input, shape index: {}]
  %s6 = inlined_call_operand.vmem [shape: bf16[2,128,128], index: 6, kind: input, shape index: {}]
  %s7 = inlined_call_operand.vmem [shape: f32[2,1,128], index: 7, kind: input, shape index: {}]
  %s8 = inlined_call_operand.vmem [shape: f32[2,1,128], index: 8, kind: input, shape index: {}]
  %s9 = inlined_call_operand.vmem [shape: f32[2,1,128], index: 9, kind: input, shape index: {}]
  %s10 = inlined_call_operand.hbm [shape: bf16[2,128,512], index: 10, kind: input, shape index: {}]
  %s11 = inlined_call_operand.vmem [shape: f32[2,1,512], index: 11, kind: input, shape index: {}]
  %s12 = inlined_call_operand.hbm [shape: bf16[2,512,128], index: 12, kind: input, shape index: {}]
  %s13 = inlined_call_operand.vmem [shape: f32[2,1,128], index: 13, kind: input, shape index: {}]
  %s14 = inlined_call_operand.vmem [shape: f32[1,128], index: 14, kind: input, shape index: {}]
  %s15 = inlined_call_operand.vmem [shape: f32[1,128], index: 15, kind: input, shape index: {}]
  %s16 = inlined_call_operand.hbm [shape: bf16[128,128], index: 16, kind: input, shape index: {}]
  %s17 = inlined_call_operand.vmem [shape: f32[1,128], index: 17, kind: input, shape index: {}]
  %s18 = inlined_call_operand.hbm [shape: f32[2,32,128], index: 18, kind: output, shape index: {}]
  %s19 = sld [smem:[#allocation0]]
  $region98: #{gpt_forward.1} parent=0
    _
  %s21 = ssub.s32 1, %s19
  %s22 = scalar_select 0, %s21, %s19
  $region1: #{gpt_forward.1} parent=0
    #allocation2 [shape = 'u8[196608]{0}', space=vmem, size = 0x30000, scoped, tag = 'input window, operand 5, single buffered']
    #allocation3 [shape = 's32[1]{0}', space=sflag, size = 0x4, scoped, tag = 'scoped memory for gpt_forward.1']
    #allocation4 [shape = 's32[1]{0}', space=sflag, size = 0x4, scoped, tag = 'scoped memory for gpt_forward.1']
    #allocation5 [shape = 'u8[262144]{0}', space=vmem, size = 0x40000, scoped, tag = 'input window, operand 10, single buffered']
    #allocation6 [shape = 's32[1]{0}', space=sflag, size = 0x4, scoped, tag = 'scoped memory for gpt_forward.1']
    #allocation7 [shape = 'u8[262144]{0}', space=vmem, size = 0x40000, scoped, tag = 'input window, operand 12, single buffered']
    #allocation8 [shape = 'u8[32768]{0}', space=vmem, size = 0x8000, scoped, tag = 'input window, operand 16, single buffered']
    #allocation9 [shape = 's32[1]{0}', space=sflag, size = 0x4, scoped, tag = 'scoped memory for gpt_forward.1']
    #allocation10 [shape = 'u8[32768]{0}', space=vmem, size = 0x8000, scoped, tag = 'output window, operand 0, single buffered']
    %23 = vsyncpa [#allocation3], 0
    %24 = vsyncpa [#allocation6], 0
    %25 = vsyncpa [#allocation9], 0
    %26 = vsyncpa [#allocation4], 0
    // Predicated region
    $region2: #{gpt_forward.1} parent=1 // pred_check
      _
    $region3: #{gpt_forward.1} parent=1 // pred_check_branch
      %28 = sbr.rel (0) target = $region5
    $region4: #{gpt_forward.1} parent=1 // pred_region
      _
    $region5: #{gpt_forward.1} parent=1 // pred_fallthru
      _
    // Predicated region
    $region6: #{gpt_forward.1} parent=1 // pred_check
      _
    $region7: #{gpt_forward.1} parent=1 // pred_check_branch
      %30 = sbr.rel (0) target = $region9
    $region8: #{gpt_forward.1} parent=1 // pred_region
      _
    $region9: #{gpt_forward.1} parent=1 // pred_fallthru
      _
    // Predicated region
    $region10: #{gpt_forward.1} parent=1 // pred_check
      _
    $region11: #{gpt_forward.1} parent=1 // pred_check_branch
      %32 = sbr.rel (0) target = $region13
    $region12: #{gpt_forward.1} parent=1 // pred_region
      _
    $region13: #{gpt_forward.1} parent=1 // pred_fallthru
      _
    // Predicated region
    $region14: #{gpt_forward.1} parent=1 // pred_check
      _
    $region15: #{gpt_forward.1} parent=1 // pred_check_branch
      %34 = sbr.rel (0) target = $region17
    $region16: #{gpt_forward.1} parent=1 // pred_region
      _
    $region17: #{gpt_forward.1} parent=1 // pred_fallthru
      _
    // Predicated region
    $region18: #{gpt_forward.1} parent=1 // pred_check
      _
    $region19: #{gpt_forward.1} parent=1 // pred_check_branch
      %36 = sbr.rel (0) target = $region21
    $region20: #{gpt_forward.1} parent=1 // pred_region
      _
    $region21: #{gpt_forward.1} parent=1 // pred_fallthru
      _
    // Predicated region
    $region22: #{gpt_forward.1} parent=1 // pred_check
      _
    $region23: #{gpt_forward.1} parent=1 // pred_check_branch
      %38 = sbr.rel (0) target = $region25
    $region24: #{gpt_forward.1} parent=1 // pred_region
      %s40 = ssub.s32 6144, 6144
      %41 = vsyncadd [#allocation3], %s40
      %s42 = sshll.u32 [#allocation2], 4
      %s43 = int_to_ptr.vmem [resolvable:$true] %s42
      %48 = dma.hbm_to_vmem [thread:$0]  %s5, 6144, %s43, [#allocation3], 192, 192, 12
    $region25: #{gpt_forward.1} parent=1 // pred_fallthru
      _
    // Predicated region
    $region26: #{gpt_forward.1} parent=1 // pred_check
      _
    $region27: #{gpt_forward.1} parent=1 // pred_check_branch
      %50 = sbr.rel (0) target = $region29
    $region28: #{gpt_forward.1} parent=1 // pred_region
      _
    $region29: #{gpt_forward.1} parent=1 // pred_fallthru
      _
    // Predicated region
    $region30: #{gpt_forward.1} parent=1 // pred_check
      _
    $region31: #{gpt_forward.1} parent=1 // pred_check_branch
      %52 = sbr.rel (0) target = $region33
    $region32: #{gpt_forward.1} parent=1 // pred_region
      _
    $region33: #{gpt_forward.1} parent=1 // pred_fallthru
      _
    // Predicated region
    $region34: #{gpt_forward.1} parent=1 // pred_check
      _
    $region35: #{gpt_forward.1} parent=1 // pred_check_branch
      %54 = sbr.rel (0) target = $region37
    $region36: #{gpt_forward.1} parent=1 // pred_region
      _
    $region37: #{gpt_forward.1} parent=1 // pred_fallthru
      _
    // Predicated region
    $region38: #{gpt_forward.1} parent=1 // pred_check
      _
    $region39: #{gpt_forward.1} parent=1 // pred_check_branch
      %56 = sbr.rel (0) target = $region41
    $region40: #{gpt_forward.1} parent=1 // pred_region
      _
    $region41: #{gpt_forward.1} parent=1 // pred_fallthru
      _
    // Predicated region
    $region42: #{gpt_forward.1} parent=1 // pred_check
      _
    $region43: #{gpt_forward.1} parent=1 // pred_check_branch
      %58 = sbr.rel (0) target = $region45
    $region44: #{gpt_forward.1} parent=1 // pred_region
      %s60 = ssub.s32 8192, 8192
      %61 = vsyncadd [#allocation6], %s60
      %s62 = sshll.u32 [#allocation5], 4
      %s63 = int_to_ptr.vmem [resolvable:$true] %s62
      %68 = dma.hbm_to_vmem [thread:$0]  %s10, 8192, %s63, [#allocation6], 256, 256, 16
    $region45: #{gpt_forward.1} parent=1 // pred_fallthru
      _
    // Predicated region
    $region46: #{gpt_forward.1} parent=1 // pred_check
      _
    $region47: #{gpt_forward.1} parent=1 // pred_check_branch
      %70 = sbr.rel (0) target = $region49
    $region48: #{gpt_forward.1} parent=1 // pred_region
      _
    $region49: #{gpt_forward.1} parent=1 // pred_fallthru
      _
    // Predicated region
    $region50: #{gpt_forward.1} parent=1 // pred_check
      _
    $region51: #{gpt_forward.1} parent=1 // pred_check_branch
      %72 = sbr.rel (0) target = $region53
    $region52: #{gpt_forward.1} parent=1 // pred_region
      %s74 = ssub.s32 8192, 8192
      %75 = vsyncadd [#allocation6], %s74
      %s76 = sshll.u32 [#allocation7], 4
      %s77 = int_to_ptr.vmem [resolvable:$true] %s76
      %82 = dma.hbm_to_vmem [thread:$0]  %s12, 8192, %s77, [#allocation6], 64, 64, 4
    $region53: #{gpt_forward.1} parent=1 // pred_fallthru
      _
    // Predicated region
    $region54: #{gpt_forward.1} parent=1 // pred_check
      _
    $region55: #{gpt_forward.1} parent=1 // pred_check_branch
      %84 = sbr.rel (0) target = $region57
    $region56: #{gpt_forward.1} parent=1 // pred_region
      _
    $region57: #{gpt_forward.1} parent=1 // pred_fallthru
      _
    // Predicated region
    $region58: #{gpt_forward.1} parent=1 // pred_check
      _
    $region59: #{gpt_forward.1} parent=1 // pred_check_branch
      %86 = sbr.rel (0) target = $region61
    $region60: #{gpt_forward.1} parent=1 // pred_region
      _
    $region61: #{gpt_forward.1} parent=1 // pred_fallthru
      _
    // Predicated region
    $region62: #{gpt_forward.1} parent=1 // pred_check
      _
    $region63: #{gpt_forward.1} parent=1 // pred_check_branch
      %88 = sbr.rel (0) target = $region65
    $region64: #{gpt_forward.1} parent=1 // pred_region
      _
    $region65: #{gpt_forward.1} parent=1 // pred_fallthru
      _
    // Predicated region
    $region66: #{gpt_forward.1} parent=1 // pred_check
      _
    $region67: #{gpt_forward.1} parent=1 // pred_check_branch
      %90 = sbr.rel (0) target = $region69
    $region68: #{gpt_forward.1} parent=1 // pred_region
      %s92 = ssub.s32 1024, 1024
      %93 = vsyncadd [#allocation9], %s92
      %s94 = sshll.u32 [#allocation8], 4
      %s95 = int_to_ptr.vmem [resolvable:$true] %s94
      %100 = dma.hbm_to_vmem [thread:$0]  %s16, 1024, %s95, [#allocation9], 64, 64, 4
    $region69: #{gpt_forward.1} parent=1 // pred_fallthru
      _
    // Predicated region
    $region70: #{gpt_forward.1} parent=1 // pred_check
      _
    $region71: #{gpt_forward.1} parent=1 // pred_check_branch
      %102 = sbr.rel (0) target = $region73
    $region72: #{gpt_forward.1} parent=1 // pred_region
      _
    $region73: #{gpt_forward.1} parent=1 // pred_fallthru
      _
    // Predicated region
    $region74: #{gpt_forward.1} parent=1 // pred_check
      _
    $region75: #{gpt_forward.1} parent=1 // pred_check_branch
      %104 = sbr.rel (0) target = $region77
    $region76: #{gpt_forward.1} parent=1 // pred_region
      %105 = dma.done [#allocation3], 6144
    $region77: #{gpt_forward.1} parent=1 // pred_fallthru
      _
    // Predicated region
    $region78: #{gpt_forward.1} parent=1 // pred_check
      _
    $region79: #{gpt_forward.1} parent=1 // pred_check_branch
      %107 = sbr.rel (0) target = $region81
    $region80: #{gpt_forward.1} parent=1 // pred_region
      %108 = dma.done [#allocation6], 8192
    $region81: #{gpt_forward.1} parent=1 // pred_fallthru
      _
    // Predicated region
    $region82: #{gpt_forward.1} parent=1 // pred_check
      _
    $region83: #{gpt_forward.1} parent=1 // pred_check_branch
      %110 = sbr.rel (0) target = $region85
    $region84: #{gpt_forward.1} parent=1 // pred_region
      %111 = dma.done [#allocation6], 8192
    $region85: #{gpt_forward.1} parent=1 // pred_fallthru
      _
    // Predicated region
    $region86: #{gpt_forward.1} parent=1 // pred_check
      _
    $region87: #{gpt_forward.1} parent=1 // pred_check_branch
      %113 = sbr.rel (0) target = $region89
    $region88: #{gpt_forward.1} parent=1 // pred_region
      %114 = dma.done [#allocation9], 1024
    $region89: #{gpt_forward.1} parent=1 // pred_fallthru
      _
    %v116 = vlaneseq
    %v117 = vand.u32 %v116, 127
    %v118 = vld [vmem:[%s0] sm:$0xff]
    %v119 = vld [vmem:[%s0 + $0x8] sm:$0xff]
    %v120 = vld [vmem:[%s0 + $0x10] sm:$0xff]
    %v121 = vld [vmem:[%s0 + $0x18] sm:$0xff]
    %v122 = vld [vmem:[%s0 + $0x20] sm:$0xff]
    %v123 = vld [vmem:[%s0 + $0x28] sm:$0xff]
    %v124 = vld [vmem:[%s0 + $0x30] sm:$0xff]
    %v125 = vld [vmem:[%s0 + $0x38] sm:$0xff]
    %126 = vset.pattern.permute.xlu0 0
    %127 = vperm.xlu0 %126, %v118
    %v128 = vpop.permute.xlu0 %127
    %129 = vset.pattern.permute.xlu0 0
    %130 = vperm.xlu0 %129, %v119
    %v131 = vpop.permute.xlu0 %130
    %132 = vset.pattern.permute.xlu0 0
    %133 = vperm.xlu0 %132, %v120
    %v134 = vpop.permute.xlu0 %133
    %135 = vset.pattern.permute.xlu0 0
    %136 = vperm.xlu0 %135, %v121
    %v137 = vpop.permute.xlu0 %136
    %138 = vset.pattern.permute.xlu0 0
    %139 = vperm.xlu0 %138, %v122
    %v140 = vpop.permute.xlu0 %139
    %141 = vset.pattern.permute.xlu0 0
    %142 = vperm.xlu0 %141, %v123
    %v143 = vpop.permute.xlu0 %142
    %144 = vset.pattern.permute.xlu0 0
    %145 = vperm.xlu0 %144, %v124
    %v146 = vpop.permute.xlu0 %145
    %147 = vset.pattern.permute.xlu0 0
    %148 = vperm.xlu0 %147, %v125
    %v149 = vpop.permute.xlu0 %148
    %vm150 = vcmp.eq.s32.totalorder %v128, %v117
    %vm151 = vcmp.eq.s32.totalorder %v131, %v117
    %vm152 = vcmp.eq.s32.totalorder %v134, %v117
    %vm153 = vcmp.eq.s32.totalorder %v137, %v117
    %vm154 = vcmp.eq.s32.totalorder %v140, %v117
    %vm155 = vcmp.eq.s32.totalorder %v143, %v117
    %vm156 = vcmp.eq.s32.totalorder %v146, %v117
    %vm157 = vcmp.eq.s32.totalorder %v149, %v117
    %v158 = vsel %vm150, 1, 0
    %v159 = vsel %vm151, 1, 0
    %v160 = vsel %vm152, 1, 0
    %v161 = vsel %vm153, 1, 0
    %v162 = vsel %vm154, 1, 0
    %v163 = vsel %vm155, 1, 0
    %v164 = vsel %vm156, 1, 0
    %v165 = vsel %vm157, 1, 0
    %v166 = vcvt.s32.f32 %v158
    %v167 = vcvt.s32.f32 %v159
    %v168 = vcvt.s32.f32 %v160
    %v169 = vcvt.s32.f32 %v161
    %v170 = vcvt.s32.f32 %v162
    %v171 = vcvt.s32.f32 %v163
    %v172 = vcvt.s32.f32 %v164
    %v173 = vcvt.s32.f32 %v165
    %v174 = vpack.c.bf16 %v167, %v166
    %v175 = vpack.c.bf16 %v169, %v168
    %v176 = vpack.c.bf16 %v171, %v170
    %v177 = vpack.c.bf16 %v173, %v172
    %v178 = vld [vmem:[%s1] sm:$0xf]
    %v179 = vld [vmem:[%s1 + $0x4] sm:$0xf]
    %v180 = vld [vmem:[%s1 + $0x8] sm:$0xf]
    %v181 = vld [vmem:[%s1 + $0xc] sm:$0xf]
    %v182 = vld [vmem:[%s1 + $0x10] sm:$0xf]
    %v183 = vld [vmem:[%s1 + $0x14] sm:$0xf]
    %v184 = vld [vmem:[%s1 + $0x18] sm:$0xf]
    %v185 = vld [vmem:[%s1 + $0x1c] sm:$0xf]
    %v186 = vld [vmem:[%s1 + $0x20] sm:$0xf]
    %v187 = vld [vmem:[%s1 + $0x24] sm:$0xf]
    %v188 = vld [vmem:[%s1 + $0x28] sm:$0xf]
    %v189 = vld [vmem:[%s1 + $0x2c] sm:$0xf]
    %v190 = vld [vmem:[%s1 + $0x30] sm:$0xf]
    %v191 = vld [vmem:[%s1 + $0x34] sm:$0xf]
    %v192 = vld [vmem:[%s1 + $0x38] sm:$0xf]
    %v193 = vld [vmem:[%s1 + $0x3c] sm:$0xf]
    %v194 = vld [vmem:[%s2] sm:$0xff]
    %v195 = vld [vmem:[%s2 + $0x8] sm:$0xff]
    %v196 = vld [vmem:[%s2 + $0x10] sm:$0xff]
    %v197 = vld [vmem:[%s2 + $0x18] sm:$0xff]
    %v198 = vld [vmem:[%s2 + $0x20] sm:$0xff]
    %v199 = vld [vmem:[%s2 + $0x28] sm:$0xff]
    %v200 = vld [vmem:[%s2 + $0x30] sm:$0xff]
    %v201 = vld [vmem:[%s2 + $0x38] sm:$0xff]
    %v218 = vunpack.c.l.b16 %v178
    %v219 = vunpack.c.l.b16 %v179
    %v220 = vunpack.c.l.b16 %v180
    %v221 = vunpack.c.l.b16 %v181
    %v222 = vunpack.c.l.b16 %v182
    %v223 = vunpack.c.l.b16 %v183
    %v224 = vunpack.c.l.b16 %v184
    %v225 = vunpack.c.l.b16 %v185
    %v226 = vunpack.c.l.b16 %v186
    %v227 = vunpack.c.l.b16 %v187
    %v228 = vunpack.c.l.b16 %v188
    %v229 = vunpack.c.l.b16 %v189
    %v230 = vunpack.c.l.b16 %v190
    %v231 = vunpack.c.l.b16 %v191
    %v232 = vunpack.c.l.b16 %v192
    %v233 = vunpack.c.l.b16 %v193
    %v234 = vpack.c.b16 %v219, %v218
    %v235 = vpack.c.b16 %v221, %v220
    %v236 = vpack.c.b16 %v223, %v222
    %v237 = vpack.c.b16 %v225, %v224
    %v238 = vpack.c.b16 %v227, %v226
    %v239 = vpack.c.b16 %v229, %v228
    %v240 = vpack.c.b16 %v231, %v230
    %v241 = vpack.c.b16 %v233, %v232
    %250 = vmatprep.subr.bf16.mxu0 0
    %251 = vmatpush1.bf16.msra.mxu0 %v234
    %252 = vmatprep.subr.bf16.mxu0 0
    %253 = vmatpush1.bf16.msra.mxu0 %v235
    %254 = vmatprep.subr.bf16.mxu0 0
    %255 = vmatpush1.bf16.msra.mxu0 %v236
    %256 = vmatprep.subr.bf16.mxu0 0
    %257 = vmatpush1.bf16.msra.mxu0 %v237
    %258 = vmatprep.subr.bf16.mxu0 0
    %259 = vmatpush1.bf16.msra.mxu0 %v238
    %260 = vmatprep.subr.bf16.mxu0 0
    %261 = vmatpush1.bf16.msra.mxu0 %v239
    %262 = vmatprep.subr.bf16.mxu0 0
    %263 = vmatpush1.bf16.msra.mxu0 %v240
    %264 = vmatprep.subr.bf16.mxu0 0
    %265 = vmatpush1.bf16.msra.mxu0 %v241
    %266 = vmatprep.subr.bf16.mxu0 0
    %267 = vmatpush1.bf16.msra.mxu0 0
    %268 = vmatprep.subr.bf16.mxu0 0
    %269 = vmatpush1.bf16.msra.mxu0 0
    %270 = vmatprep.subr.bf16.mxu0 0
    %271 = vmatpush1.bf16.msra.mxu0 0
    %272 = vmatprep.subr.bf16.mxu0 0
    %273 = vmatpush1.bf16.msra.mxu0 0
    %274 = vmatprep.subr.bf16.mxu0 0
    %275 = vmatpush1.bf16.msra.mxu0 0
    %276 = vmatprep.subr.bf16.mxu0 0
    %277 = vmatpush1.bf16.msra.mxu0 0
    %278 = vmatprep.subr.bf16.mxu0 0
    %279 = vmatpush1.bf16.msra.mxu0 0
    %280 = vmatprep.subr.bf16.mxu0 0
    %281 = vmatpush1.bf16.msra.mxu0 0
    %282 = vmatprep.mubr.bf16.mxu0 0
    %283 = vmatmul.mubr.bf16.gmra.mrb[0].mxu0 %v174
    %v284 = vpop.f32.mrb[0].mxu0
    %v285 = vadd.f32 %v194, %v284
    %v286 = vpop.f32.mrb[0].mxu0
    %v287 = vpop.f32.mrb[0].mxu0
    %v288 = vadd.f32 %v195, %v287
    %v289 = vpop.f32.mrb[0].mxu0
    %290 = vmatprep.mubr.bf16.mxu0 0
    %291 = vmatmul.mubr.bf16.gmra.mrb[0].mxu0 %v175
    %v292 = vpop.f32.mrb[0].mxu0
    %v293 = vadd.f32 %v196, %v292
    %v294 = vpop.f32.mrb[0].mxu0
    %v295 = vpop.f32.mrb[0].mxu0
    %v296 = vadd.f32 %v197, %v295
    %v297 = vpop.f32.mrb[0].mxu0
    %298 = vmatprep.mubr.bf16.mxu0 0
    %299 = vmatmul.mubr.bf16.gmra.mrb[0].mxu0 %v176
    %v300 = vpop.f32.mrb[0].mxu0
    %v301 = vadd.f32 %v198, %v300
    %v302 = vpop.f32.mrb[0].mxu0
    %v303 = vpop.f32.mrb[0].mxu0
    %v304 = vadd.f32 %v199, %v303
    %v305 = vpop.f32.mrb[0].mxu0
    %306 = vmatprep.mubr.bf16.mxu0 0
    %307 = vmatmul.mubr.bf16.gmra.mrb[0].mxu0 %v177
    %v308 = vpop.f32.mrb[0].mxu0
    %v309 = vadd.f32 %v200, %v308
    %v310 = vpop.f32.mrb[0].mxu0
    %v311 = vpop.f32.mrb[0].mxu0
    %v312 = vadd.f32 %v201, %v311
    %v313 = vpop.f32.mrb[0].mxu0
    %314 = vdwg.mxu0
    %v315 = vlaneseq
    %v316 = vshrl.u32 %v315, 7
    %v317 = vadd.s32 %v316, 8
    %v318 = vadd.s32 %v316, 16
    %v319 = vadd.s32 %v316, 24
    %v320 = vadd.s32 %v316, 32
    %v321 = vadd.s32 %v316, 40
    %v322 = vadd.s32 %v316, 48
    %v323 = vadd.s32 %v316, 56
    %v324 = vshra.s32 %v316, 5
    %v325 = vshra.s32 %v317, 5
    %v326 = vshra.s32 %v318, 5
    %v327 = vshra.s32 %v319, 5
    %v328 = vshra.s32 %v320, 5
    %v329 = vshra.s32 %v321, 5
    %v330 = vshra.s32 %v322, 5
    %v331 = vshra.s32 %v323, 5
    %v332 = vshra.s32 %v117, 5
    %vm333 = vcmp.eq.s32.totalorder %v324, %v332
    %vm334 = vcmp.eq.s32.totalorder %v325, %v332
    %vm335 = vcmp.eq.s32.totalorder %v326, %v332
    %vm336 = vcmp.eq.s32.totalorder %v327, %v332
    %vm337 = vcmp.eq.s32.totalorder %v328, %v332
    %vm338 = vcmp.eq.s32.totalorder %v329, %v332
    %vm339 = vcmp.eq.s32.totalorder %v330, %v332
    %vm340 = vcmp.eq.s32.totalorder %v331, %v332
    %v341 = vand.u32 %v316, 31
    %v342 = vand.u32 %v317, 31
    %v343 = vand.u32 %v318, 31
    %v344 = vand.u32 %v319, 31
    %v345 = vand.u32 %v320, 31
    %v346 = vand.u32 %v321, 31
    %v347 = vand.u32 %v322, 31
    %v348 = vand.u32 %v323, 31
    %v349 = vand.u32 %v117, 31
    %vm350 = vcmp.ge.s32.totalorder %v341, %v349
    %vm351 = vcmp.ge.s32.totalorder %v342, %v349
    %vm352 = vcmp.ge.s32.totalorder %v343, %v349
    %vm353 = vcmp.ge.s32.totalorder %v344, %v349
    %vm354 = vcmp.ge.s32.totalorder %v345, %v349
    %vm355 = vcmp.ge.s32.totalorder %v346, %v349
    %vm356 = vcmp.ge.s32.totalorder %v347, %v349
    %vm357 = vcmp.ge.s32.totalorder %v348, %v349
    %vm358 = vmand %vm333, %vm350
    %vm359 = vmand %vm334, %vm351
    %vm360 = vmand %vm335, %vm352
    %vm361 = vmand %vm336, %vm353
    %vm362 = vmand %vm337, %vm354
    %vm363 = vmand %vm338, %vm355
    %vm364 = vmand %vm339, %vm356
    %vm365 = vmand %vm340, %vm357
    %v366 = vsel %vm358, 0.0, -1e+30
    %v367 = vsel %vm359, 0.0, -1e+30
    %v368 = vsel %vm360, 0.0, -1e+30
    %v369 = vsel %vm361, 0.0, -1e+30
    %v370 = vsel %vm362, 0.0, -1e+30
    %v371 = vsel %vm363, 0.0, -1e+30
    %v372 = vsel %vm364, 0.0, -1e+30
    %v373 = vsel %vm365, 0.0, -1e+30
    %v374 = vld [vmem:[%s3] sm:$0x1]
    %v375 = vld [vmem:[%s4] sm:$0x1]
    %376 = vadd.xlane.f32.xlu0 %v285
    %v377 = vpop.xlane.xlu0 %376
    %378 = vadd.xlane.f32.xlu0 %v288
    %v379 = vpop.xlane.xlu0 %378
    %380 = vadd.xlane.f32.xlu0 %v293
    %v381 = vpop.xlane.xlu0 %380
    %382 = vadd.xlane.f32.xlu0 %v296
    %v383 = vpop.xlane.xlu0 %382
    %384 = vadd.xlane.f32.xlu0 %v301
    %v385 = vpop.xlane.xlu0 %384
    %386 = vadd.xlane.f32.xlu0 %v304
    %v387 = vpop.xlane.xlu0 %386
    %388 = vadd.xlane.f32.xlu0 %v309
    %v389 = vpop.xlane.xlu0 %388
    %390 = vadd.xlane.f32.xlu0 %v312
    %v391 = vpop.xlane.xlu0 %390
    %v392 = vrcp.pop 128.0
    %v393 = vmul.f32 %v377, %v392
    %v394 = vmul.f32 %v379, %v392
    %v395 = vmul.f32 %v381, %v392
    %v396 = vmul.f32 %v383, %v392
    %v397 = vmul.f32 %v385, %v392
    %v398 = vmul.f32 %v387, %v392
    %v399 = vmul.f32 %v389, %v392
    %v400 = vmul.f32 %v391, %v392
    %v401 = vsub.f32 %v285, %v393
    %v402 = vsub.f32 %v288, %v394
    %v403 = vsub.f32 %v293, %v395
    %v404 = vsub.f32 %v296, %v396
    %v405 = vsub.f32 %v301, %v397
    %v406 = vsub.f32 %v304, %v398
    %v407 = vsub.f32 %v309, %v399
    %v408 = vsub.f32 %v312, %v400
    %v409 = vmul.f32 %v401, %v401
    %v410 = vmul.f32 %v402, %v402
    %v411 = vmul.f32 %v403, %v403
    %v412 = vmul.f32 %v404, %v404
    %v413 = vmul.f32 %v405, %v405
    %v414 = vmul.f32 %v406, %v406
    %v415 = vmul.f32 %v407, %v407
    %v416 = vmul.f32 %v408, %v408
    %417 = vadd.xlane.f32.xlu0 %v409
    %v418 = vpop.xlane.xlu0 %417
    %419 = vadd.xlane.f32.xlu0 %v410
    %v420 = vpop.xlane.xlu0 %419
    %421 = vadd.xlane.f32.xlu0 %v411
    %v422 = vpop.xlane.xlu0 %421
    %423 = vadd.xlane.f32.xlu0 %v412
    %v424 = vpop.xlane.xlu0 %423
    %425 = vadd.xlane.f32.xlu0 %v413
    %v426 = vpop.xlane.xlu0 %425
    %427 = vadd.xlane.f32.xlu0 %v414
    %v428 = vpop.xlane.xlu0 %427
    %429 = vadd.xlane.f32.xlu0 %v415
    %v430 = vpop.xlane.xlu0 %429
    %431 = vadd.xlane.f32.xlu0 %v416
    %v432 = vpop.xlane.xlu0 %431
    %v433 = vmul.f32 %v418, %v392
    %v434 = vmul.f32 %v420, %v392
    %v435 = vmul.f32 %v422, %v392
    %v436 = vmul.f32 %v424, %v392
    %v437 = vmul.f32 %v426, %v392
    %v438 = vmul.f32 %v428, %v392
    %v439 = vmul.f32 %v430, %v392
    %v440 = vmul.f32 %v432, %v392
    %v441 = vadd.f32 %v433, 1e-05
    %v442 = vadd.f32 %v434, 1e-05
    %v443 = vadd.f32 %v435, 1e-05
    %v444 = vadd.f32 %v436, 1e-05
    %v445 = vadd.f32 %v437, 1e-05
    %v446 = vadd.f32 %v438, 1e-05
    %v447 = vadd.f32 %v439, 1e-05
    %v448 = vadd.f32 %v440, 1e-05
    %v449 = vrsqrt.pop %v441
    %v450 = vrsqrt.pop %v442
    %v451 = vrsqrt.pop %v443
    %v452 = vrsqrt.pop %v444
    %v453 = vrsqrt.pop %v445
    %v454 = vrsqrt.pop %v446
    %v455 = vrsqrt.pop %v447
    %v456 = vrsqrt.pop %v448
    %v457 = vmul.f32 %v401, %v449
    %v458 = vmul.f32 %v402, %v450
    %v459 = vmul.f32 %v403, %v451
    %v460 = vmul.f32 %v404, %v452
    %v461 = vmul.f32 %v405, %v453
    %v462 = vmul.f32 %v406, %v454
    %v463 = vmul.f32 %v407, %v455
    %v464 = vmul.f32 %v408, %v456
    %v466 = vlaneseq
    %v467 = vshrl.u32 %v466, 7
    %v468 = vsub.s32 0, %v467
    %v469 = vrot.slane %v374, %v468
    %v471 = vmul.f32 %v457, %v469
    %v472 = vmul.f32 %v458, %v469
    %v473 = vmul.f32 %v459, %v469
    %v474 = vmul.f32 %v460, %v469
    %v475 = vmul.f32 %v461, %v469
    %v476 = vmul.f32 %v462, %v469
    %v477 = vmul.f32 %v463, %v469
    %v478 = vmul.f32 %v464, %v469
    %v480 = vlaneseq
    %v481 = vshrl.u32 %v480, 7
    %v482 = vsub.s32 0, %v481
    %v483 = vrot.slane %v375, %v482
    %v485 = vadd.f32 %v471, %v483
    %v486 = vadd.f32 %v472, %v483
    %v487 = vadd.f32 %v473, %v483
    %v488 = vadd.f32 %v474, %v483
    %v489 = vadd.f32 %v475, %v483
    %v490 = vadd.f32 %v476, %v483
    %v491 = vadd.f32 %v477, %v483
    %v492 = vadd.f32 %v478, %v483
    %v493 = vpack.c.bf16 %v486, %v485
    %v494 = vpack.c.bf16 %v488, %v487
    %v495 = vpack.c.bf16 %v490, %v489
    %v496 = vpack.c.bf16 %v492, %v491
    %v497 = vld [vmem:[#allocation2] sm:$0xff]
    %v498 = vld [vmem:[#allocation2 + $0x8] sm:$0xf]
    %v499 = vld [vmem:[#allocation2 + $0xc] sm:$0xff]
    %v500 = vld [vmem:[#allocation2 + $0x14] sm:$0xf]
    %v501 = vld [vmem:[#allocation2 + $0x18] sm:$0xff]
    %v502 = vld [vmem:[#allocation2 + $0x20] sm:$0xf]
    %v503 = vld [vmem:[#allocation2 + $0x24] sm:$0xff]
    %v504 = vld [vmem:[#allocation2 + $0x2c] sm:$0xf]
    %v505 = vld [vmem:[#allocation2 + $0x30] sm:$0xff]
    %v506 = vld [vmem:[#allocation2 + $0x38] sm:$0xf]
    %v507 = vld [vmem:[#allocation2 + $0x3c] sm:$0xff]
    %v508 = vld [vmem:[#allocation2 + $0x44] sm:$0xf]
    %v509 = vld [vmem:[#allocation2 + $0x48] sm:$0xff]
    %v510 = vld [vmem:[#allocation2 + $0x50] sm:$0xf]
    %v511 = vld [vmem:[#allocation2 + $0x54] sm:$0xff]
    %v512 = vld [vmem:[#allocation2 + $0x5c] sm:$0xf]
    %v513 = vld [vmem:[#allocation2 + $0x60] sm:$0xff]
    %v514 = vld [vmem:[#allocation2 + $0x68] sm:$0xf]
    %v515 = vld [vmem:[#allocation2 + $0x6c] sm:$0xff]
    %v516 = vld [vmem:[#allocation2 + $0x74] sm:$0xf]
    %v517 = vld [vmem:[#allocation2 + $0x78] sm:$0xff]
    %v518 = vld [vmem:[#allocation2 + $0x80] sm:$0xf]
    %v519 = vld [vmem:[#allocation2 + $0x84] sm:$0xff]
    %v520 = vld [vmem:[#allocation2 + $0x8c] sm:$0xf]
    %v521 = vld [vmem:[#allocation2 + $0x90] sm:$0xff]
    %v522 = vld [vmem:[#allocation2 + $0x98] sm:$0xf]
    %v523 = vld [vmem:[#allocation2 + $0x9c] sm:$0xff]
    %v524 = vld [vmem:[#allocation2 + $0xa4] sm:$0xf]
    %v525 = vld [vmem:[#allocation2 + $0xa8] sm:$0xff]
    %v526 = vld [vmem:[#allocation2 + $0xb0] sm:$0xf]
    %v527 = vld [vmem:[#allocation2 + $0xb4] sm:$0xff]
    %v528 = vld [vmem:[#allocation2 + $0xbc] sm:$0xf]
    %v561 = vunpack.c.l.b16 %v497
    %v562 = vunpack.c.h.b16 %v497
    %v563 = vunpack.c.l.b16 %v498
    %v564 = vunpack.c.l.b16 %v499
    %v565 = vunpack.c.h.b16 %v499
    %v566 = vunpack.c.l.b16 %v500
    %v567 = vunpack.c.l.b16 %v501
    %v568 = vunpack.c.h.b16 %v501
    %v569 = vunpack.c.l.b16 %v502
    %v570 = vunpack.c.l.b16 %v503
    %v571 = vunpack.c.h.b16 %v503
    %v572 = vunpack.c.l.b16 %v504
    %v573 = vunpack.c.l.b16 %v505
    %v574 = vunpack.c.h.b16 %v505
    %v575 = vunpack.c.l.b16 %v506
    %v576 = vunpack.c.l.b16 %v507
    %v577 = vunpack.c.h.b16 %v507
    %v578 = vunpack.c.l.b16 %v508
    %v579 = vunpack.c.l.b16 %v509
    %v580 = vunpack.c.h.b16 %v509
    %v581 = vunpack.c.l.b16 %v510
    %v582 = vunpack.c.l.b16 %v511
    %v583 = vunpack.c.h.b16 %v511
    %v584 = vunpack.c.l.b16 %v512
    %v585 = vunpack.c.l.b16 %v513
    %v586 = vunpack.c.h.b16 %v513
    %v587 = vunpack.c.l.b16 %v514
    %v588 = vunpack.c.l.b16 %v515
    %v589 = vunpack.c.h.b16 %v515
    %v590 = vunpack.c.l.b16 %v516
    %v591 = vunpack.c.l.b16 %v517
    %v592 = vunpack.c.h.b16 %v517
    %v593 = vunpack.c.l.b16 %v518
    %v594 = vunpack.c.l.b16 %v519
    %v595 = vunpack.c.h.b16 %v519
    %v596 = vunpack.c.l.b16 %v520
    %v597 = vunpack.c.l.b16 %v521
    %v598 = vunpack.c.h.b16 %v521
    %v599 = vunpack.c.l.b16 %v522
    %v600 = vunpack.c.l.b16 %v523
    %v601 = vunpack.c.h.b16 %v523
    %v602 = vunpack.c.l.b16 %v524
    %v603 = vunpack.c.l.b16 %v525
    %v604 = vunpack.c.h.b16 %v525
    %v605 = vunpack.c.l.b16 %v526
    %v606 = vunpack.c.l.b16 %v527
    %v607 = vunpack.c.h.b16 %v527
    %v608 = vunpack.c.l.b16 %v528
    %v609 = vpack.c.b16 %v564, %v561
    %v610 = vpack.c.b16 %v565, %v562
    %v611 = vpack.c.b16 %v566, %v563
    %v612 = vpack.c.b16 %v570, %v567
    %v613 = vpack.c.b16 %v571, %v568
    %v614 = vpack.c.b16 %v572, %v569
    %v615 = vpack.c.b16 %v576, %v573
    %v616 = vpack.c.b16 %v577, %v574
    %v617 = vpack.c.b16 %v578, %v575
    %v618 = vpack.c.b16 %v582, %v579
    %v619 = vpack.c.b16 %v583, %v580
    %v620 = vpack.c.b16 %v584, %v581
    %v621 = vpack.c.b16 %v588, %v585
    %v622 = vpack.c.b16 %v589, %v586
    %v623 = vpack.c.b16 %v590, %v587
    %v624 = vpack.c.b16 %v594, %v591
    %v625 = vpack.c.b16 %v595, %v592
    %v626 = vpack.c.b16 %v596, %v593
    %v627 = vpack.c.b16 %v600, %v597
    %v628 = vpack.c.b16 %v601, %v598
    %v629 = vpack.c.b16 %v602, %v599
    %v630 = vpack.c.b16 %v606, %v603
    %v631 = vpack.c.b16 %v607, %v604
    %v632 = vpack.c.b16 %v608, %v605
    %657 = vmatprep.subr.bf16.mxu0 %v610
    %658 = vmatpush1.bf16.msra.mxu0 %v609
    %659 = vmatprep.subr.bf16.mxu0 %v613
    %660 = vmatpush1.bf16.msra.mxu0 %v612
    %661 = vmatprep.subr.bf16.mxu0 %v616
    %662 = vmatpush1.bf16.msra.mxu0 %v615
    %663 = vmatprep.subr.bf16.mxu0 %v619
    %664 = vmatpush1.bf16.msra.mxu0 %v618
    %665 = vmatprep.subr.bf16.mxu0 %v622
    %666 = vmatpush1.bf16.msra.mxu0 %v621
    %667 = vmatprep.subr.bf16.mxu0 %v625
    %668 = vmatpush1.bf16.msra.mxu0 %v624
    %669 = vmatprep.subr.bf16.mxu0 %v628
    %670 = vmatpush1.bf16.msra.mxu0 %v627
    %671 = vmatprep.subr.bf16.mxu0 %v631
    %672 = vmatpush1.bf16.msra.mxu0 %v630
    %673 = vmatprep.subr.bf16.mxu0 0
    %674 = vmatpush1.bf16.msra.mxu0 0
    %675 = vmatprep.subr.bf16.mxu0 0
    %676 = vmatpush1.bf16.msra.mxu0 0
    %677 = vmatprep.subr.bf16.mxu0 0
    %678 = vmatpush1.bf16.msra.mxu0 0
    %679 = vmatprep.subr.bf16.mxu0 0
    %680 = vmatpush1.bf16.msra.mxu0 0
    %681 = vmatprep.subr.bf16.mxu0 0
    %682 = vmatpush1.bf16.msra.mxu0 0
    %683 = vmatprep.subr.bf16.mxu0 0
    %684 = vmatpush1.bf16.msra.mxu0 0
    %685 = vmatprep.subr.bf16.mxu0 0
    %686 = vmatpush1.bf16.msra.mxu0 0
    %687 = vmatprep.subr.bf16.mxu0 0
    %688 = vmatpush1.bf16.msra.mxu0 0
    %689 = vmatprep.mubr.bf16.mxu0 0
    %690 = vmatmul.mubr.bf16.gmra.mrb[0].mxu0 %v493
    %v691 = vpop.f32.mrb[0].mxu0
    %v692 = vadd.f32 0.0, %v691
    %v693 = vpop.f32.mrb[0].mxu0
    %v694 = vadd.f32 0.0, %v693
    %v695 = vpop.f32.mrb[0].mxu0
    %v696 = vadd.f32 0.0, %v695
    %v697 = vpop.f32.mrb[0].mxu0
    %v698 = vadd.f32 0.0, %v697
    %699 = vmatprep.mubr.bf16.mxu0 0
    %700 = vmatmul.mubr.bf16.gmra.mrb[0].mxu0 %v494
    %v701 = vpop.f32.mrb[0].mxu0
    %v702 = vadd.f32 0.0, %v701
    %v703 = vpop.f32.mrb[0].mxu0
    %v704 = vadd.f32 0.0, %v703
    %v705 = vpop.f32.mrb[0].mxu0
    %v706 = vadd.f32 0.0, %v705
    %v707 = vpop.f32.mrb[0].mxu0
    %v708 = vadd.f32 0.0, %v707
    %709 = vmatprep.mubr.bf16.mxu0 0
    %710 = vmatmul.mubr.bf16.gmra.mrb[0].mxu0 %v495
    %v711 = vpop.f32.mrb[0].mxu0
    %v712 = vadd.f32 0.0, %v711
    %v713 = vpop.f32.mrb[0].mxu0
    %v714 = vadd.f32 0.0, %v713
    %v715 = vpop.f32.mrb[0].mxu0
    %v716 = vadd.f32 0.0, %v715
    %v717 = vpop.f32.mrb[0].mxu0
    %v718 = vadd.f32 0.0, %v717
    %719 = vmatprep.mubr.bf16.mxu0 0
    %720 = vmatmul.mubr.bf16.gmra.mrb[0].mxu0 %v496
    %v721 = vpop.f32.mrb[0].mxu0
    %v722 = vadd.f32 0.0, %v721
    %v723 = vpop.f32.mrb[0].mxu0
    %v724 = vadd.f32 0.0, %v723
    %v725 = vpop.f32.mrb[0].mxu0
    %v726 = vadd.f32 0.0, %v725
    %v727 = vpop.f32.mrb[0].mxu0
    %v728 = vadd.f32 0.0, %v727
    %729 = vdwg.mxu0
    %730 = vmatprep.subr.bf16.mxu0 0
    %731 = vmatpush1.bf16.msra.mxu0 %v611
    %732 = vmatprep.subr.bf16.mxu0 0
    %733 = vmatpush1.bf16.msra.mxu0 %v614
    %734 = vmatprep.subr.bf16.mxu0 0
    %735 = vmatpush1.bf16.msra.mxu0 %v617
    %736 = vmatprep.subr.bf16.mxu0 0
    %737 = vmatpush1.bf16.msra.mxu0 %v620
    %738 = vmatprep.subr.bf16.mxu0 0
    %739 = vmatpush1.bf16.msra.mxu0 %v623
    %740 = vmatprep.subr.bf16.mxu0 0
    %741 = vmatpush1.bf16.msra.mxu0 %v626
    %742 = vmatprep.subr.bf16.mxu0 0
    %743 = vmatpush1.bf16.msra.mxu0 %v629
    %744 = vmatprep.subr.bf16.mxu0 0
    %745 = vmatpush1.bf16.msra.mxu0 %v632
    %746 = vmatprep.subr.bf16.mxu0 0
    %747 = vmatpush1.bf16.msra.mxu0 0
    %748 = vmatprep.subr.bf16.mxu0 0
    %749 = vmatpush1.bf16.msra.mxu0 0
    %750 = vmatprep.subr.bf16.mxu0 0
    %751 = vmatpush1.bf16.msra.mxu0 0
    %752 = vmatprep.subr.bf16.mxu0 0
    %753 = vmatpush1.bf16.msra.mxu0 0
    %754 = vmatprep.subr.bf16.mxu0 0
    %755 = vmatpush1.bf16.msra.mxu0 0
    %756 = vmatprep.subr.bf16.mxu0 0
    %757 = vmatpush1.bf16.msra.mxu0 0
    %758 = vmatprep.subr.bf16.mxu0 0
    %759 = vmatpush1.bf16.msra.mxu0 0
    %760 = vmatprep.subr.bf16.mxu0 0
    %761 = vmatpush1.bf16.msra.mxu0 0
    %762 = vmatprep.mubr.bf16.mxu0 0
    %763 = vmatmul.mubr.bf16.gmra.mrb[0].mxu0 %v493
    %v764 = vpop.f32.mrb[0].mxu0
    %v765 = vadd.f32 0.0, %v764
    %v766 = vpop.f32.mrb[0].mxu0
    %v767 = vpop.f32.mrb[0].mxu0
    %v768 = vadd.f32 0.0, %v767
    %v769 = vpop.f32.mrb[0].mxu0
    %770 = vmatprep.mubr.bf16.mxu0 0
    %771 = vmatmul.mubr.bf16.gmra.mrb[0].mxu0 %v494
    %v772 = vpop.f32.mrb[0].mxu0
    %v773 = vadd.f32 0.0, %v772
    %v774 = vpop.f32.mrb[0].mxu0
    %v775 = vpop.f32.mrb[0].mxu0
    %v776 = vadd.f32 0.0, %v775
    %v777 = vpop.f32.mrb[0].mxu0
    %778 = vmatprep.mubr.bf16.mxu0 0
    %779 = vmatmul.mubr.bf16.gmra.mrb[0].mxu0 %v495
    %v780 = vpop.f32.mrb[0].mxu0
    %v781 = vadd.f32 0.0, %v780
    %v782 = vpop.f32.mrb[0].mxu0
    %v783 = vpop.f32.mrb[0].mxu0
    %v784 = vadd.f32 0.0, %v783
    %v785 = vpop.f32.mrb[0].mxu0
    %786 = vmatprep.mubr.bf16.mxu0 0
    %787 = vmatmul.mubr.bf16.gmra.mrb[0].mxu0 %v496
    %v788 = vpop.f32.mrb[0].mxu0
    %v789 = vadd.f32 0.0, %v788
    %v790 = vpop.f32.mrb[0].mxu0
    %v791 = vpop.f32.mrb[0].mxu0
    %v792 = vadd.f32 0.0, %v791
    %v793 = vpop.f32.mrb[0].mxu0
    %794 = vdwg.mxu0
    %v795 = vpack.c.bf16 %v696, %v692
    %v796 = vpack.c.bf16 %v698, %v694
    %v797 = vpack.c.bf16 %v768, %v765
    %v798 = vpack.c.bf16 %v706, %v702
    %v799 = vpack.c.bf16 %v708, %v704
    %v800 = vpack.c.bf16 %v776, %v773
    %v801 = vpack.c.bf16 %v716, %v712
    %v802 = vpack.c.bf16 %v718, %v714
    %v803 = vpack.c.bf16 %v784, %v781
    %v804 = vpack.c.bf16 %v726, %v722
    %v805 = vpack.c.bf16 %v728, %v724
    %v806 = vpack.c.bf16 %v792, %v789
    %vm807 = vcmask 261120
    %v809 = vsel %vm807, %v795, 0
    %v812 = vsel %vm807, %v798, 0
    %v815 = vsel %vm807, %v801, 0
    %v818 = vsel %vm807, %v804, 0
    %v821 = vsel %vm807, %v796, 0
    %v824 = vsel %vm807, %v799, 0
    %v827 = vsel %vm807, %v802, 0
    %v830 = vsel %vm807, %v805, 0
    %832 = vmatprep.subr.bf16.mxu0 0
    %833 = vmatpush1.bf16.xpose.msra.mxu0 %v821
    %834 = vmatprep.subr.bf16.mxu0 0
    %835 = vmatpush1.bf16.xpose.msra.mxu0 %v824
    %836 = vmatprep.subr.bf16.mxu0 0
    %837 = vmatpush1.bf16.xpose.msra.mxu0 %v827
    %838 = vmatprep.subr.bf16.mxu0 0
    %839 = vmatpush1.bf16.xpose.msra.mxu0 %v830
    %840 = vmatprep.subr.bf16.mxu0 0
    %841 = vmatpush1.bf16.xpose.msra.mxu0 0
    %842 = vmatprep.subr.bf16.mxu0 0
    %843 = vmatpush1.bf16.xpose.msra.mxu0 0
    %844 = vmatprep.subr.bf16.mxu0 0
    %845 = vmatpush1.bf16.xpose.msra.mxu0 0
    %846 = vmatprep.subr.bf16.mxu0 0
    %847 = vmatpush1.bf16.xpose.msra.mxu0 0
    %848 = vmatprep.subr.bf16.mxu0 0
    %849 = vmatpush1.bf16.xpose.msra.mxu0 0
    %850 = vmatprep.subr.bf16.mxu0 0
    %851 = vmatpush1.bf16.xpose.msra.mxu0 0
    %852 = vmatprep.subr.bf16.mxu0 0
    %853 = vmatpush1.bf16.xpose.msra.mxu0 0
    %854 = vmatprep.subr.bf16.mxu0 0
    %855 = vmatpush1.bf16.xpose.msra.mxu0 0
    %856 = vmatprep.subr.bf16.mxu0 0
    %857 = vmatpush1.bf16.xpose.msra.mxu0 0
    %858 = vmatprep.subr.bf16.mxu0 0
    %859 = vmatpush1.bf16.xpose.msra.mxu0 0
    %860 = vmatprep.subr.bf16.mxu0 0
    %861 = vmatpush1.bf16.xpose.msra.mxu0 0
    %862 = vmatprep.subr.bf16.mxu0 0
    %863 = vmatpush1.bf16.xpose.msra.mxu0 0
    %864 = vmatprep.mubr.bf16.mxu0 0
    %865 = vmatmul.mubr.bf16.gmra.mrb[0].mxu0 %v809
    %v866 = vpop.f32.mrb[0].mxu0
    %v867 = vadd.f32 0.0, %v866
    %v868 = vpop.f32.mrb[0].mxu0
    %v869 = vpop.f32.mrb[0].mxu0
    %v870 = vadd.f32 0.0, %v869
    %v871 = vpop.f32.mrb[0].mxu0
    %872 = vmatprep.mubr.bf16.mxu0 0
    %873 = vmatmul.mubr.bf16.gmra.mrb[0].mxu0 %v812
    %v874 = vpop.f32.mrb[0].mxu0
    %v875 = vadd.f32 0.0, %v874
    %v876 = vpop.f32.mrb[0].mxu0
    %v877 = vpop.f32.mrb[0].mxu0
    %v878 = vadd.f32 0.0, %v877
    %v879 = vpop.f32.mrb[0].mxu0
    %880 = vmatprep.mubr.bf16.mxu0 0
    %881 = vmatmul.mubr.bf16.gmra.mrb[0].mxu0 %v815
    %v882 = vpop.f32.mrb[0].mxu0
    %v883 = vadd.f32 0.0, %v882
    %v884 = vpop.f32.mrb[0].mxu0
    %v885 = vpop.f32.mrb[0].mxu0
    %v886 = vadd.f32 0.0, %v885
    %v887 = vpop.f32.mrb[0].mxu0
    %888 = vmatprep.mubr.bf16.mxu0 0
    %889 = vmatmul.mubr.bf16.gmra.mrb[0].mxu0 %v818
    %v890 = vpop.f32.mrb[0].mxu0
    %v891 = vadd.f32 0.0, %v890
    %v892 = vpop.f32.mrb[0].mxu0
    %v893 = vpop.f32.mrb[0].mxu0
    %v894 = vadd.f32 0.0, %v893
    %v895 = vpop.f32.mrb[0].mxu0
    %896 = vdwg.mxu0
    %v897 = vmul.f32 %v867, 0.17677669
    %v898 = vmul.f32 %v870, 0.17677669
    %v899 = vmul.f32 %v875, 0.17677669
    %v900 = vmul.f32 %v878, 0.17677669
    %v901 = vmul.f32 %v883, 0.17677669
    %v902 = vmul.f32 %v886, 0.17677669
    %v903 = vmul.f32 %v891, 0.17677669
    %v904 = vmul.f32 %v894, 0.17677669
    %v905 = vadd.f32 %v897, %v366
    %v906 = vadd.f32 %v898, %v367
    %v907 = vadd.f32 %v899, %v368
    %v908 = vadd.f32 %v900, %v369
    %v909 = vadd.f32 %v901, %v370
    %v910 = vadd.f32 %v902, %v371
    %v911 = vadd.f32 %v903, %v372
    %v912 = vadd.f32 %v904, %v373
    %vm913 = vcmask 523264
    %v914 = vsel %vm913, %v905, -inf
    %915 = vmax.xlane.f32.xlu0 %v914
    %v916 = vpop.xlane.xlu0 %915
    %v917 = vsel %vm913, %v906, -inf
    %918 = vmax.xlane.f32.xlu0 %v917
    %v919 = vpop.xlane.xlu0 %918
    %v920 = vsel %vm913, %v907, -inf
    %921 = vmax.xlane.f32.xlu0 %v920
    %v922 = vpop.xlane.xlu0 %921
    %v923 = vsel %vm913, %v908, -inf
    %924 = vmax.xlane.f32.xlu0 %v923
    %v925 = vpop.xlane.xlu0 %924
    %v926 = vsel %vm913, %v909, -inf
    %927 = vmax.xlane.f32.xlu0 %v926
    %v928 = vpop.xlane.xlu0 %927
    %v929 = vsel %vm913, %v910, -inf
    %930 = vmax.xlane.f32.xlu0 %v929
    %v931 = vpop.xlane.xlu0 %930
    %v932 = vsel %vm913, %v911, -inf
    %933 = vmax.xlane.f32.xlu0 %v932
    %v934 = vpop.xlane.xlu0 %933
    %v935 = vsel %vm913, %v912, -inf
    %936 = vmax.xlane.f32.xlu0 %v935
    %v937 = vpop.xlane.xlu0 %936
    %v938 = vsub.f32 %v905, %v916
    %v939 = vsub.f32 %v906, %v919
    %v940 = vsub.f32 %v907, %v922
    %v941 = vsub.f32 %v908, %v925
    %v942 = vsub.f32 %v909, %v928
    %v943 = vsub.f32 %v910, %v931
    %v944 = vsub.f32 %v911, %v934
    %v945 = vsub.f32 %v912, %v937
    %v946 = vmul.f32 %v938, 1.442695
    %v947 = vpow.pop %v946
    %v948 = vmul.f32 %v939, 1.442695
    %v949 = vpow.pop %v948
    %v950 = vmul.f32 %v940, 1.442695
    %v951 = vpow.pop %v950
    %v952 = vmul.f32 %v941, 1.442695
    %v953 = vpow.pop %v952
    %v954 = vmul.f32 %v942, 1.442695
    %v955 = vpow.pop %v954
    %v956 = vmul.f32 %v943, 1.442695
    %v957 = vpow.pop %v956
    %v958 = vmul.f32 %v944, 1.442695
    %v959 = vpow.pop %v958
    %v960 = vmul.f32 %v945, 1.442695
    %v961 = vpow.pop %v960
    %v962 = vsel %vm913, %v947, 0.0
    %963 = vadd.xlane.f32.xlu0 %v962
    %v964 = vpop.xlane.xlu0 %963
    %v965 = vsel %vm913, %v949, 0.0
    %966 = vadd.xlane.f32.xlu0 %v965
    %v967 = vpop.xlane.xlu0 %966
    %v968 = vsel %vm913, %v951, 0.0
    %969 = vadd.xlane.f32.xlu0 %v968
    %v970 = vpop.xlane.xlu0 %969
    %v971 = vsel %vm913, %v953, 0.0
    %972 = vadd.xlane.f32.xlu0 %v971
    %v973 = vpop.xlane.xlu0 %972
    %v974 = vsel %vm913, %v955, 0.0
    %975 = vadd.xlane.f32.xlu0 %v974
    %v976 = vpop.xlane.xlu0 %975
    %v977 = vsel %vm913, %v957, 0.0
    %978 = vadd.xlane.f32.xlu0 %v977
    %v979 = vpop.xlane.xlu0 %978
    %v980 = vsel %vm913, %v959, 0.0
    %981 = vadd.xlane.f32.xlu0 %v980
    %v982 = vpop.xlane.xlu0 %981
    %v983 = vsel %vm913, %v961, 0.0
    %984 = vadd.xlane.f32.xlu0 %v983
    %v985 = vpop.xlane.xlu0 %984
    %v986 = vrcp.pop %v964
    %v987 = vrcp.pop %v967
    %v988 = vrcp.pop %v970
    %v989 = vrcp.pop %v973
    %v990 = vrcp.pop %v976
    %v991 = vrcp.pop %v979
    %v992 = vrcp.pop %v982
    %v993 = vrcp.pop %v985
    %v994 = vmul.f32 %v947, %v986
    %v995 = vmul.f32 %v949, %v987
    %v996 = vmul.f32 %v951, %v988
    %v997 = vmul.f32 %v953, %v989
    %v998 = vmul.f32 %v955, %v990
    %v999 = vmul.f32 %v957, %v991
    %v1000 = vmul.f32 %v959, %v992
    %v1001 = vmul.f32 %v961, %v993
    %v1002 = vpack.c.bf16 %v995, %v994
    %v1003 = vpack.c.bf16 %v997, %v996
    %v1004 = vpack.c.bf16 %v999, %v998
    %v1005 = vpack.c.bf16 %v1001, %v1000
    %v1007 = vsel %vm913, %v1002, 0
    %v1010 = vsel %vm913, %v1003, 0
    %v1013 = vsel %vm913, %v1004, 0
    %v1016 = vsel %vm913, %v1005, 0
    %1018 = vmatprep.subr.bf16.mxu0 0
    %1019 = vmatpush1.bf16.msra.mxu0 %v797
    %1020 = vmatprep.subr.bf16.mxu0 0
    %1021 = vmatpush1.bf16.msra.mxu0 %v800
    %1022 = vmatprep.subr.bf16.mxu0 0
    %1023 = vmatpush1.bf16.msra.mxu0 %v803
    %1024 = vmatprep.subr.bf16.mxu0 0
    %1025 = vmatpush1.bf16.msra.mxu0 %v806
    %1026 = vmatprep.subr.bf16.mxu0 0
    %1027 = vmatpush1.bf16.msra.mxu0 0
    %1028 = vmatprep.subr.bf16.mxu0 0
    %1029 = vmatpush1.bf16.msra.mxu0 0
    %1030 = vmatprep.subr.bf16.mxu0 0
    %1031 = vmatpush1.bf16.msra.mxu0 0
    %1032 = vmatprep.subr.bf16.mxu0 0
    %1033 = vmatpush1.bf16.msra.mxu0 0
    %1034 = vmatprep.subr.bf16.mxu0 0
    %1035 = vmatpush1.bf16.msra.mxu0 0
    %1036 = vmatprep.subr.bf16.mxu0 0
    %1037 = vmatpush1.bf16.msra.mxu0 0
    %1038 = vmatprep.subr.bf16.mxu0 0
    %1039 = vmatpush1.bf16.msra.mxu0 0
    %1040 = vmatprep.subr.bf16.mxu0 0
    %1041 = vmatpush1.bf16.msra.mxu0 0
    %1042 = vmatprep.subr.bf16.mxu0 0
    %1043 = vmatpush1.bf16.msra.mxu0 0
    %1044 = vmatprep.subr.bf16.mxu0 0
    %1045 = vmatpush1.bf16.msra.mxu0 0
    %1046 = vmatprep.subr.bf16.mxu0 0
    %1047 = vmatpush1.bf16.msra.mxu0 0
    %1048 = vmatprep.subr.bf16.mxu0 0
    %1049 = vmatpush1.bf16.msra.mxu0 0
    %1050 = vmatprep.mubr.bf16.mxu0 0
    %1051 = vmatmul.mubr.bf16.gmra.mrb[0].mxu0 %v1007
    %v1052 = vpop.f32.mrb[0].mxu0
    %v1053 = vadd.f32 0.0, %v1052
    %v1054 = vpop.f32.mrb[0].mxu0
    %v1055 = vpop.f32.mrb[0].mxu0
    %v1056 = vadd.f32 0.0, %v1055
    %v1057 = vpop.f32.mrb[0].mxu0
    %1058 = vmatprep.mubr.bf16.mxu0 0
    %1059 = vmatmul.mubr.bf16.gmra.mrb[0].mxu0 %v1010
    %v1060 = vpop.f32.mrb[0].mxu0
    %v1061 = vadd.f32 0.0, %v1060
    %v1062 = vpop.f32.mrb[0].mxu0
    %v1063 = vpop.f32.mrb[0].mxu0
    %v1064 = vadd.f32 0.0, %v1063
    %v1065 = vpop.f32.mrb[0].mxu0
    %1066 = vmatprep.mubr.bf16.mxu0 0
    %1067 = vmatmul.mubr.bf16.gmra.mrb[0].mxu0 %v1013
    %v1068 = vpop.f32.mrb[0].mxu0
    %v1069 = vadd.f32 0.0, %v1068
    %v1070 = vpop.f32.mrb[0].mxu0
    %v1071 = vpop.f32.mrb[0].mxu0
    %v1072 = vadd.f32 0.0, %v1071
    %v1073 = vpop.f32.mrb[0].mxu0
    %1074 = vmatprep.mubr.bf16.mxu0 0
    %1075 = vmatmul.mubr.bf16.gmra.mrb[0].mxu0 %v1016
    %v1076 = vpop.f32.mrb[0].mxu0
    %v1077 = vadd.f32 0.0, %v1076
    %v1078 = vpop.f32.mrb[0].mxu0
    %v1079 = vpop.f32.mrb[0].mxu0
    %v1080 = vadd.f32 0.0, %v1079
    %v1081 = vpop.f32.mrb[0].mxu0
    %1082 = vdwg.mxu0
    %v1083 = vpack.c.bf16 %v1056, %v1053
    %v1084 = vpack.c.bf16 %v1064, %v1061
    %v1085 = vpack.c.bf16 %v1072, %v1069
    %v1086 = vpack.c.bf16 %v1080, %v1077
    %1091 = vrot.lane.b32.xlu0 %v795, 96
    %v1092 = vpop.permute.xlu0 %1091
    %1093 = vrot.lane.b32.xlu0 %v798, 96
    %v1094 = vpop.permute.xlu0 %1093
    %1095 = vrot.lane.b32.xlu0 %v801, 96
    %v1096 = vpop.permute.xlu0 %1095
    %1097 = vrot.lane.b32.xlu0 %v804, 96
    %v1098 = vpop.permute.xlu0 %1097
    %1103 = vrot.lane.b32.xlu0 %v796, 96
    %v1104 = vpop.permute.xlu0 %1103
    %1105 = vrot.lane.b32.xlu0 %v799, 96
    %v1106 = vpop.permute.xlu0 %1105
    %1107 = vrot.lane.b32.xlu0 %v802, 96
    %v1108 = vpop.permute.xlu0 %1107
    %1109 = vrot.lane.b32.xlu0 %v805, 96
    %v1110 = vpop.permute.xlu0 %1109
    %v1112 = vsel %vm807, %v1092, 0
    %v1115 = vsel %vm807, %v1094, 0
    %v1118 = vsel %vm807, %v1096, 0
    %v1121 = vsel %vm807, %v1098, 0
    %v1124 = vsel %vm807, %v1104, 0
    %v1127 = vsel %vm807, %v1106, 0
    %v1130 = vsel %vm807, %v1108, 0
    %v1133 = vsel %vm807, %v1110, 0
    %1135 = vmatprep.subr.bf16.mxu0 0
    %1136 = vmatpush1.bf16.xpose.msra.mxu0 %v1124
    %1137 = vmatprep.subr.bf16.mxu0 0
    %1138 = vmatpush1.bf16.xpose.msra.mxu0 %v1127
    %1139 = vmatprep.subr.bf16.mxu0 0
    %1140 = vmatpush1.bf16.xpose.msra.mxu0 %v1130
    %1141 = vmatprep.subr.bf16.mxu0 0
    %1142 = vmatpush1.bf16.xpose.msra.mxu0 %v1133
    %1143 = vmatprep.subr.bf16.mxu0 0
    %1144 = vmatpush1.bf16.xpose.msra.mxu0 0
    %1145 = vmatprep.subr.bf16.mxu0 0
    %1146 = vmatpush1.bf16.xpose.msra.mxu0 0
    %1147 = vmatprep.subr.bf16.mxu0 0
    %1148 = vmatpush1.bf16.xpose.msra.mxu0 0
    %1149 = vmatprep.subr.bf16.mxu0 0
    %1150 = vmatpush1.bf16.xpose.msra.mxu0 0
    %1151 = vmatprep.subr.bf16.mxu0 0
    %1152 = vmatpush1.bf16.xpose.msra.mxu0 0
    %1153 = vmatprep.subr.bf16.mxu0 0
    %1154 = vmatpush1.bf16.xpose.msra.mxu0 0
    %1155 = vmatprep.subr.bf16.mxu0 0
    %1156 = vmatpush1.bf16.xpose.msra.mxu0 0
    %1157 = vmatprep.subr.bf16.mxu0 0
    %1158 = vmatpush1.bf16.xpose.msra.mxu0 0
    %1159 = vmatprep.subr.bf16.mxu0 0
    %1160 = vmatpush1.bf16.xpose.msra.mxu0 0
    %1161 = vmatprep.subr.bf16.mxu0 0
    %1162 = vmatpush1.bf16.xpose.msra.mxu0 0
    %1163 = vmatprep.subr.bf16.mxu0 0
    %1164 = vmatpush1.bf16.xpose.msra.mxu0 0
    %1165 = vmatprep.subr.bf16.mxu0 0
    %1166 = vmatpush1.bf16.xpose.msra.mxu0 0
    %1167 = vmatprep.mubr.bf16.mxu0 0
    %1168 = vmatmul.mubr.bf16.gmra.mrb[0].mxu0 %v1112
    %v1169 = vpop.f32.mrb[0].mxu0
    %v1170 = vadd.f32 0.0, %v1169
    %v1171 = vpop.f32.mrb[0].mxu0
    %v1172 = vpop.f32.mrb[0].mxu0
    %v1173 = vadd.f32 0.0, %v1172
    %v1174 = vpop.f32.mrb[0].mxu0
    %1175 = vmatprep.mubr.bf16.mxu0 0
    %1176 = vmatmul.mubr.bf16.gmra.mrb[0].mxu0 %v1115
    %v1177 = vpop.f32.mrb[0].mxu0
    %v1178 = vadd.f32 0.0, %v1177
    %v1179 = vpop.f32.mrb[0].mxu0
    %v1180 = vpop.f32.mrb[0].mxu0
    %v1181 = vadd.f32 0.0, %v1180
    %v1182 = vpop.f32.mrb[0].mxu0
    %1183 = vmatprep.mubr.bf16.mxu0 0
    %1184 = vmatmul.mubr.bf16.gmra.mrb[0].mxu0 %v1118
    %v1185 = vpop.f32.mrb[0].mxu0
    %v1186 = vadd.f32 0.0, %v1185
    %v1187 = vpop.f32.mrb[0].mxu0
    %v1188 = vpop.f32.mrb[0].mxu0
    %v1189 = vadd.f32 0.0, %v1188
    %v1190 = vpop.f32.mrb[0].mxu0
    %1191 = vmatprep.mubr.bf16.mxu0 0
    %1192 = vmatmul.mubr.bf16.gmra.mrb[0].mxu0 %v1121
    %v1193 = vpop.f32.mrb[0].mxu0
    %v1194 = vadd.f32 0.0, %v1193
    %v1195 = vpop.f32.mrb[0].mxu0
    %v1196 = vpop.f32.mrb[0].mxu0
    %v1197 = vadd.f32 0.0, %v1196
    %v1198 = vpop.f32.mrb[0].mxu0
    %1199 = vdwg.mxu0
    %v1200 = vmul.f32 %v1170, 0.17677669
    %v1201 = vmul.f32 %v1173, 0.17677669
    %v1202 = vmul.f32 %v1178, 0.17677669
    %v1203 = vmul.f32 %v1181, 0.17677669
    %v1204 = vmul.f32 %v1186, 0.17677669
    %v1205 = vmul.f32 %v1189, 0.17677669
    %v1206 = vmul.f32 %v1194, 0.17677669
    %v1207 = vmul.f32 %v1197, 0.17677669
    %v1208 = vadd.f32 %v1200, %v366
    %v1209 = vadd.f32 %v1201, %v367
    %v1210 = vadd.f32 %v1202, %v368
    %v1211 = vadd.f32 %v1203, %v369
    %v1212 = vadd.f32 %v1204, %v370
    %v1213 = vadd.f32 %v1205, %v371
    %v1214 = vadd.f32 %v1206, %v372
    %v1215 = vadd.f32 %v1207, %v373
    %v1216 = vsel %vm913, %v1208, -inf
    %1217 = vmax.xlane.f32.xlu0 %v1216
    %v1218 = vpop.xlane.xlu0 %1217
    %v1219 = vsel %vm913, %v1209, -inf
    %1220 = vmax.xlane.f32.xlu0 %v1219
    %v1221 = vpop.xlane.xlu0 %1220
    %v1222 = vsel %vm913, %v1210, -inf
    %1223 = vmax.xlane.f32.xlu0 %v1222
    %v1224 = vpop.xlane.xlu0 %1223
    %v1225 = vsel %vm913, %v1211, -inf
    %1226 = vmax.xlane.f32.xlu0 %v1225
    %v1227 = vpop.xlane.xlu0 %1226
    %v1228 = vsel %vm913, %v1212, -inf
    %1229 = vmax.xlane.f32.xlu0 %v1228
    %v1230 = vpop.xlane.xlu0 %1229
    %v1231 = vsel %vm913, %v1213, -inf
    %1232 = vmax.xlane.f32.xlu0 %v1231
    %v1233 = vpop.xlane.xlu0 %1232
    %v1234 = vsel %vm913, %v1214, -inf
    %1235 = vmax.xlane.f32.xlu0 %v1234
    %v1236 = vpop.xlane.xlu0 %1235
    %v1237 = vsel %vm913, %v1215, -inf
    %1238 = vmax.xlane.f32.xlu0 %v1237
    %v1239 = vpop.xlane.xlu0 %1238
    %v1240 = vsub.f32 %v1208, %v1218
    %v1241 = vsub.f32 %v1209, %v1221
    %v1242 = vsub.f32 %v1210, %v1224
    %v1243 = vsub.f32 %v1211, %v1227
    %v1244 = vsub.f32 %v1212, %v1230
    %v1245 = vsub.f32 %v1213, %v1233
    %v1246 = vsub.f32 %v1214, %v1236
    %v1247 = vsub.f32 %v1215, %v1239
    %v1248 = vmul.f32 %v1240, 1.442695
    %v1249 = vpow.pop %v1248
    %v1250 = vmul.f32 %v1241, 1.442695
    %v1251 = vpow.pop %v1250
    %v1252 = vmul.f32 %v1242, 1.442695
    %v1253 = vpow.pop %v1252
    %v1254 = vmul.f32 %v1243, 1.442695
    %v1255 = vpow.pop %v1254
    %v1256 = vmul.f32 %v1244, 1.442695
    %v1257 = vpow.pop %v1256
    %v1258 = vmul.f32 %v1245, 1.442695
    %v1259 = vpow.pop %v1258
    %v1260 = vmul.f32 %v1246, 1.442695
    %v1261 = vpow.pop %v1260
    %v1262 = vmul.f32 %v1247, 1.442695
    %v1263 = vpow.pop %v1262
    %v1264 = vsel %vm913, %v1249, 0.0
    %1265 = vadd.xlane.f32.xlu0 %v1264
    %v1266 = vpop.xlane.xlu0 %1265
    %v1267 = vsel %vm913, %v1251, 0.0
    %1268 = vadd.xlane.f32.xlu0 %v1267
    %v1269 = vpop.xlane.xlu0 %1268
    %v1270 = vsel %vm913, %v1253, 0.0
    %1271 = vadd.xlane.f32.xlu0 %v1270
    %v1272 = vpop.xlane.xlu0 %1271
    %v1273 = vsel %vm913, %v1255, 0.0
    %1274 = vadd.xlane.f32.xlu0 %v1273
    %v1275 = vpop.xlane.xlu0 %1274
    %v1276 = vsel %vm913, %v1257, 0.0
    %1277 = vadd.xlane.f32.xlu0 %v1276
    %v1278 = vpop.xlane.xlu0 %1277
    %v1279 = vsel %vm913, %v1259, 0.0
    %1280 = vadd.xlane.f32.xlu0 %v1279
    %v1281 = vpop.xlane.xlu0 %1280
    %v1282 = vsel %vm913, %v1261, 0.0
    %1283 = vadd.xlane.f32.xlu0 %v1282
    %v1284 = vpop.xlane.xlu0 %1283
    %v1285 = vsel %vm913, %v1263, 0.0
    %1286 = vadd.xlane.f32.xlu0 %v1285
    %v1287 = vpop.xlane.xlu0 %1286
    %v1288 = vrcp.pop %v1266
    %v1289 = vrcp.pop %v1269
    %v1290 = vrcp.pop %v1272
    %v1291 = vrcp.pop %v1275
    %v1292 = vrcp.pop %v1278
    %v1293 = vrcp.pop %v1281
    %v1294 = vrcp.pop %v1284
    %v1295 = vrcp.pop %v1287
    %v1296 = vmul.f32 %v1249, %v1288
    %v1297 = vmul.f32 %v1251, %v1289
    %v1298 = vmul.f32 %v1253, %v1290
    %v1299 = vmul.f32 %v1255, %v1291
    %v1300 = vmul.f32 %v1257, %v1292
    %v1301 = vmul.f32 %v1259, %v1293
    %v1302 = vmul.f32 %v1261, %v1294
    %v1303 = vmul.f32 %v1263, %v1295
    %v1304 = vpack.c.bf16 %v1297, %v1296
    %v1305 = vpack.c.bf16 %v1299, %v1298
    %v1306 = vpack.c.bf16 %v1301, %v1300
    %v1307 = vpack.c.bf16 %v1303, %v1302
    %1312 = vrot.lane.b32.xlu0 %v797, 96
    %v1313 = vpop.permute.xlu0 %1312
    %1314 = vrot.lane.b32.xlu0 %v800, 96
    %v1315 = vpop.permute.xlu0 %1314
    %1316 = vrot.lane.b32.xlu0 %v803, 96
    %v1317 = vpop.permute.xlu0 %1316
    %1318 = vrot.lane.b32.xlu0 %v806, 96
    %v1319 = vpop.permute.xlu0 %1318
    %v1325 = vsel %vm913, %v1304, 0
    %v1328 = vsel %vm913, %v1305, 0
    %v1331 = vsel %vm913, %v1306, 0
    %v1334 = vsel %vm913, %v1307, 0
    %1336 = vmatprep.subr.bf16.mxu0 0
    %1337 = vmatpush1.bf16.msra.mxu0 %v1313
    %1338 = vmatprep.subr.bf16.mxu0 0
    %1339 = vmatpush1.bf16.msra.mxu0 %v1315
    %1340 = vmatprep.subr.bf16.mxu0 0
    %1341 = vmatpush1.bf16.msra.mxu0 %v1317
    %1342 = vmatprep.subr.bf16.mxu0 0
    %1343 = vmatpush1.bf16.msra.mxu0 %v1319
    %1344 = vmatprep.subr.bf16.mxu0 0
    %1345 = vmatpush1.bf16.msra.mxu0 0
    %1346 = vmatprep.subr.bf16.mxu0 0
    %1347 = vmatpush1.bf16.msra.mxu0 0
    %1348 = vmatprep.subr.bf16.mxu0 0
    %1349 = vmatpush1.bf16.msra.mxu0 0
    %1350 = vmatprep.subr.bf16.mxu0 0
    %1351 = vmatpush1.bf16.msra.mxu0 0
    %1352 = vmatprep.subr.bf16.mxu0 0
    %1353 = vmatpush1.bf16.msra.mxu0 0
    %1354 = vmatprep.subr.bf16.mxu0 0
    %1355 = vmatpush1.bf16.msra.mxu0 0
    %1356 = vmatprep.subr.bf16.mxu0 0
    %1357 = vmatpush1.bf16.msra.mxu0 0
    %1358 = vmatprep.subr.bf16.mxu0 0
    %1359 = vmatpush1.bf16.msra.mxu0 0
    %1360 = vmatprep.subr.bf16.mxu0 0
    %1361 = vmatpush1.bf16.msra.mxu0 0
    %1362 = vmatprep.subr.bf16.mxu0 0
    %1363 = vmatpush1.bf16.msra.mxu0 0
    %1364 = vmatprep.subr.bf16.mxu0 0
    %1365 = vmatpush1.bf16.msra.mxu0 0
    %1366 = vmatprep.subr.bf16.mxu0 0
    %1367 = vmatpush1.bf16.msra.mxu0 0
    %1368 = vmatprep.mubr.bf16.mxu0 0
    %1369 = vmatmul.mubr.bf16.gmra.mrb[0].mxu0 %v1325
    %v1370 = vpop.f32.mrb[0].mxu0
    %v1371 = vadd.f32 0.0, %v1370
    %v1372 = vpop.f32.mrb[0].mxu0
    %v1373 = vpop.f32.mrb[0].mxu0
    %v1374 = vadd.f32 0.0, %v1373
    %v1375 = vpop.f32.mrb[0].mxu0
    %1376 = vmatprep.mubr.bf16.mxu0 0
    %1377 = vmatmul.mubr.bf16.gmra.mrb[0].mxu0 %v1328
    %v1378 = vpop.f32.mrb[0].mxu0
    %v1379 = vadd.f32 0.0, %v1378
    %v1380 = vpop.f32.mrb[0].mxu0
    %v1381 = vpop.f32.mrb[0].mxu0
    %v1382 = vadd.f32 0.0, %v1381
    %v1383 = vpop.f32.mrb[0].mxu0
    %1384 = vmatprep.mubr.bf16.mxu0 0
    %1385 = vmatmul.mubr.bf16.gmra.mrb[0].mxu0 %v1331
    %v1386 = vpop.f32.mrb[0].mxu0
    %v1387 = vadd.f32 0.0, %v1386
    %v1388 = vpop.f32.mrb[0].mxu0
    %v1389 = vpop.f32.mrb[0].mxu0
    %v1390 = vadd.f32 0.0, %v1389
    %v1391 = vpop.f32.mrb[0].mxu0
    %1392 = vmatprep.mubr.bf16.mxu0 0
    %1393 = vmatmul.mubr.bf16.gmra.mrb[0].mxu0 %v1334
    %v1394 = vpop.f32.mrb[0].mxu0
    %v1395 = vadd.f32 0.0, %v1394
    %v1396 = vpop.f32.mrb[0].mxu0
    %v1397 = vpop.f32.mrb[0].mxu0
    %v1398 = vadd.f32 0.0, %v1397
    %v1399 = vpop.f32.mrb[0].mxu0
    %1400 = vdwg.mxu0
    %v1401 = vpack.c.bf16 %v1374, %v1371
    %v1402 = vpack.c.bf16 %v1382, %v1379
    %v1403 = vpack.c.bf16 %v1390, %v1387
    %v1404 = vpack.c.bf16 %v1398, %v1395
    %1405 = vrot.lane.b32.xlu0 %v795, 64
    %v1406 = vpop.permute.xlu0 %1405
    %1407 = vrot.lane.b32.xlu0 %v798, 64
    %v1408 = vpop.permute.xlu0 %1407
    %1409 = vrot.lane.b32.xlu0 %v801, 64
    %v1410 = vpop.permute.xlu0 %1409
    %1411 = vrot.lane.b32.xlu0 %v804, 64
    %v1412 = vpop.permute.xlu0 %1411
    %1413 = vrot.lane.b32.xlu0 %v796, 64
    %v1414 = vpop.permute.xlu0 %1413
    %1415 = vrot.lane.b32.xlu0 %v799, 64
    %v1416 = vpop.permute.xlu0 %1415
    %1417 = vrot.lane.b32.xlu0 %v802, 64
    %v1418 = vpop.permute.xlu0 %1417
    %1419 = vrot.lane.b32.xlu0 %v805, 64
    %v1420 = vpop.permute.xlu0 %1419
    %v1422 = vsel %vm807, %v1406, 0
    %v1425 = vsel %vm807, %v1408, 0
    %v1428 = vsel %vm807, %v1410, 0
    %v1431 = vsel %vm807, %v1412, 0
    %v1434 = vsel %vm807, %v1414, 0
    %v1437 = vsel %vm807, %v1416, 0
    %v1440 = vsel %vm807, %v1418, 0
    %v1443 = vsel %vm807, %v1420, 0
    %1445 = vmatprep.subr.bf16.mxu0 0
    %1446 = vmatpush1.bf16.xpose.msra.mxu0 %v1434
    %1447 = vmatprep.subr.bf16.mxu0 0
    %1448 = vmatpush1.bf16.xpose.msra.mxu0 %v1437
    %1449 = vmatprep.subr.bf16.mxu0 0
    %1450 = vmatpush1.bf16.xpose.msra.mxu0 %v1440
    %1451 = vmatprep.subr.bf16.mxu0 0
    %1452 = vmatpush1.bf16.xpose.msra.mxu0 %v1443
    %1453 = vmatprep.subr.bf16.mxu0 0
    %1454 = vmatpush1.bf16.xpose.msra.mxu0 0
    %1455 = vmatprep.subr.bf16.mxu0 0
    %1456 = vmatpush1.bf16.xpose.msra.mxu0 0
    %1457 = vmatprep.subr.bf16.mxu0 0
    %1458 = vmatpush1.bf16.xpose.msra.mxu0 0
    %1459 = vmatprep.subr.bf16.mxu0 0
    %1460 = vmatpush1.bf16.xpose.msra.mxu0 0
    %1461 = vmatprep.subr.bf16.mxu0 0
    %1462 = vmatpush1.bf16.xpose.msra.mxu0 0
    %1463 = vmatprep.subr.bf16.mxu0 0
    %1464 = vmatpush1.bf16.xpose.msra.mxu0 0
    %1465 = vmatprep.subr.bf16.mxu0 0
    %1466 = vmatpush1.bf16.xpose.msra.mxu0 0
    %1467 = vmatprep.subr.bf16.mxu0 0
    %1468 = vmatpush1.bf16.xpose.msra.mxu0 0
    %1469 = vmatprep.subr.bf16.mxu0 0
    %1470 = vmatpush1.bf16.xpose.msra.mxu0 0
    %1471 = vmatprep.subr.bf16.mxu0 0
    %1472 = vmatpush1.bf16.xpose.msra.mxu0 0
    %1473 = vmatprep.subr.bf16.mxu0 0
    %1474 = vmatpush1.bf16.xpose.msra.mxu0 0
    %1475 = vmatprep.subr.bf16.mxu0 0
    %1476 = vmatpush1.bf16.xpose.msra.mxu0 0
    %1477 = vmatprep.mubr.bf16.mxu0 0
    %1478 = vmatmul.mubr.bf16.gmra.mrb[0].mxu0 %v1422
    %v1479 = vpop.f32.mrb[0].mxu0
    %v1480 = vadd.f32 0.0, %v1479
    %v1481 = vpop.f32.mrb[0].mxu0
    %v1482 = vpop.f32.mrb[0].mxu0
    %v1483 = vadd.f32 0.0, %v1482
    %v1484 = vpop.f32.mrb[0].mxu0
    %1485 = vmatprep.mubr.bf16.mxu0 0
    %1486 = vmatmul.mubr.bf16.gmra.mrb[0].mxu0 %v1425
    %v1487 = vpop.f32.mrb[0].mxu0
    %v1488 = vadd.f32 0.0, %v1487
    %v1489 = vpop.f32.mrb[0].mxu0
    %v1490 = vpop.f32.mrb[0].mxu0
    %v1491 = vadd.f32 0.0, %v1490
    %v1492 = vpop.f32.mrb[0].mxu0
    %1493 = vmatprep.mubr.bf16.mxu0 0
    %1494 = vmatmul.mubr.bf16.gmra.mrb[0].mxu0 %v1428
    %v1495 = vpop.f32.mrb[0].mxu0
    %v1496 = vadd.f32 0.0, %v1495
    %v1497 = vpop.f32.mrb[0].mxu0
    %v1498 = vpop.f32.mrb[0].mxu0
    %v1499 = vadd.f32 0.0, %v1498
    %v1500 = vpop.f32.mrb[0].mxu0
    %1501 = vmatprep.mubr.bf16.mxu0 0
    %1502 = vmatmul.mubr.bf16.gmra.mrb[0].mxu0 %v1431
    %v1503 = vpop.f32.mrb[0].mxu0
    %v1504 = vadd.f32 0.0, %v1503
    %v1505 = vpop.f32.mrb[0].mxu0
    %v1506 = vpop.f32.mrb[0].mxu0
    %v1507 = vadd.f32 0.0, %v1506
    %v1508 = vpop.f32.mrb[0].mxu0
    %1509 = vdwg.mxu0
    %v1510 = vmul.f32 %v1480, 0.17677669
    %v1511 = vmul.f32 %v1483, 0.17677669
    %v1512 = vmul.f32 %v1488, 0.17677669
    %v1513 = vmul.f32 %v1491, 0.17677669
    %v1514 = vmul.f32 %v1496, 0.17677669
    %v1515 = vmul.f32 %v1499, 0.17677669
    %v1516 = vmul.f32 %v1504, 0.17677669
    %v1517 = vmul.f32 %v1507, 0.17677669
    %v1518 = vadd.f32 %v1510, %v366
    %v1519 = vadd.f32 %v1511, %v367
    %v1520 = vadd.f32 %v1512, %v368
    %v1521 = vadd.f32 %v1513, %v369
    %v1522 = vadd.f32 %v1514, %v370
    %v1523 = vadd.f32 %v1515, %v371
    %v1524 = vadd.f32 %v1516, %v372
    %v1525 = vadd.f32 %v1517, %v373
    %v1526 = vsel %vm913, %v1518, -inf
    %1527 = vmax.xlane.f32.xlu0 %v1526
    %v1528 = vpop.xlane.xlu0 %1527
    %v1529 = vsel %vm913, %v1519, -inf
    %1530 = vmax.xlane.f32.xlu0 %v1529
    %v1531 = vpop.xlane.xlu0 %1530
    %v1532 = vsel %vm913, %v1520, -inf
    %1533 = vmax.xlane.f32.xlu0 %v1532
    %v1534 = vpop.xlane.xlu0 %1533
    %v1535 = vsel %vm913, %v1521, -inf
    %1536 = vmax.xlane.f32.xlu0 %v1535
    %v1537 = vpop.xlane.xlu0 %1536
    %v1538 = vsel %vm913, %v1522, -inf
    %1539 = vmax.xlane.f32.xlu0 %v1538
    %v1540 = vpop.xlane.xlu0 %1539
    %v1541 = vsel %vm913, %v1523, -inf
    %1542 = vmax.xlane.f32.xlu0 %v1541
    %v1543 = vpop.xlane.xlu0 %1542
    %v1544 = vsel %vm913, %v1524, -inf
    %1545 = vmax.xlane.f32.xlu0 %v1544
    %v1546 = vpop.xlane.xlu0 %1545
    %v1547 = vsel %vm913, %v1525, -inf
    %1548 = vmax.xlane.f32.xlu0 %v1547
    %v1549 = vpop.xlane.xlu0 %1548
    %v1550 = vsub.f32 %v1518, %v1528
    %v1551 = vsub.f32 %v1519, %v1531
    %v1552 = vsub.f32 %v1520, %v1534
    %v1553 = vsub.f32 %v1521, %v1537
    %v1554 = vsub.f32 %v1522, %v1540
    %v1555 = vsub.f32 %v1523, %v1543
    %v1556 = vsub.f32 %v1524, %v1546
    %v1557 = vsub.f32 %v1525, %v1549
    %v1558 = vmul.f32 %v1550, 1.442695
    %v1559 = vpow.pop %v1558
    %v1560 = vmul.f32 %v1551, 1.442695
    %v1561 = vpow.pop %v1560
    %v1562 = vmul.f32 %v1552, 1.442695
    %v1563 = vpow.pop %v1562
    %v1564 = vmul.f32 %v1553, 1.442695
    %v1565 = vpow.pop %v1564
    %v1566 = vmul.f32 %v1554, 1.442695
    %v1567 = vpow.pop %v1566
    %v1568 = vmul.f32 %v1555, 1.442695
    %v1569 = vpow.pop %v1568
    %v1570 = vmul.f32 %v1556, 1.442695
    %v1571 = vpow.pop %v1570
    %v1572 = vmul.f32 %v1557, 1.442695
    %v1573 = vpow.pop %v1572
    %v1574 = vsel %vm913, %v1559, 0.0
    %1575 = vadd.xlane.f32.xlu0 %v1574
    %v1576 = vpop.xlane.xlu0 %1575
    %v1577 = vsel %vm913, %v1561, 0.0
    %1578 = vadd.xlane.f32.xlu0 %v1577
    %v1579 = vpop.xlane.xlu0 %1578
    %v1580 = vsel %vm913, %v1563, 0.0
    %1581 = vadd.xlane.f32.xlu0 %v1580
    %v1582 = vpop.xlane.xlu0 %1581
    %v1583 = vsel %vm913, %v1565, 0.0
    %1584 = vadd.xlane.f32.xlu0 %v1583
    %v1585 = vpop.xlane.xlu0 %1584
    %v1586 = vsel %vm913, %v1567, 0.0
    %1587 = vadd.xlane.f32.xlu0 %v1586
    %v1588 = vpop.xlane.xlu0 %1587
    %v1589 = vsel %vm913, %v1569, 0.0
    %1590 = vadd.xlane.f32.xlu0 %v1589
    %v1591 = vpop.xlane.xlu0 %1590
    %v1592 = vsel %vm913, %v1571, 0.0
    %1593 = vadd.xlane.f32.xlu0 %v1592
    %v1594 = vpop.xlane.xlu0 %1593
    %v1595 = vsel %vm913, %v1573, 0.0
    %1596 = vadd.xlane.f32.xlu0 %v1595
    %v1597 = vpop.xlane.xlu0 %1596
    %v1598 = vrcp.pop %v1576
    %v1599 = vrcp.pop %v1579
    %v1600 = vrcp.pop %v1582
    %v1601 = vrcp.pop %v1585
    %v1602 = vrcp.pop %v1588
    %v1603 = vrcp.pop %v1591
    %v1604 = vrcp.pop %v1594
    %v1605 = vrcp.pop %v1597
    %v1606 = vmul.f32 %v1559, %v1598
    %v1607 = vmul.f32 %v1561, %v1599
    %v1608 = vmul.f32 %v1563, %v1600
    %v1609 = vmul.f32 %v1565, %v1601
    %v1610 = vmul.f32 %v1567, %v1602
    %v1611 = vmul.f32 %v1569, %v1603
    %v1612 = vmul.f32 %v1571, %v1604
    %v1613 = vmul.f32 %v1573, %v1605
    %v1614 = vpack.c.bf16 %v1607, %v1606
    %v1615 = vpack.c.bf16 %v1609, %v1608
    %v1616 = vpack.c.bf16 %v1611, %v1610
    %v1617 = vpack.c.bf16 %v1613, %v1612
    %1618 = vrot.lane.b32.xlu0 %v797, 64
    %v1619 = vpop.permute.xlu0 %1618
    %1620 = vrot.lane.b32.xlu0 %v800, 64
    %v1621 = vpop.permute.xlu0 %1620
    %1622 = vrot.lane.b32.xlu0 %v803, 64
    %v1623 = vpop.permute.xlu0 %1622
    %1624 = vrot.lane.b32.xlu0 %v806, 64
    %v1625 = vpop.permute.xlu0 %1624
    %v1631 = vsel %vm913, %v1614, 0
    %v1634 = vsel %vm913, %v1615, 0
    %v1637 = vsel %vm913, %v1616, 0
    %v1640 = vsel %vm913, %v1617, 0
    %1642 = vmatprep.subr.bf16.mxu0 0
    %1643 = vmatpush1.bf16.msra.mxu0 %v1619
    %1644 = vmatprep.subr.bf16.mxu0 0
    %1645 = vmatpush1.bf16.msra.mxu0 %v1621
    %1646 = vmatprep.subr.bf16.mxu0 0
    %1647 = vmatpush1.bf16.msra.mxu0 %v1623
    %1648 = vmatprep.subr.bf16.mxu0 0
    %1649 = vmatpush1.bf16.msra.mxu0 %v1625
    %1650 = vmatprep.subr.bf16.mxu0 0
    %1651 = vmatpush1.bf16.msra.mxu0 0
    %1652 = vmatprep.subr.bf16.mxu0 0
    %1653 = vmatpush1.bf16.msra.mxu0 0
    %1654 = vmatprep.subr.bf16.mxu0 0
    %1655 = vmatpush1.bf16.msra.mxu0 0
    %1656 = vmatprep.subr.bf16.mxu0 0
    %1657 = vmatpush1.bf16.msra.mxu0 0
    %1658 = vmatprep.subr.bf16.mxu0 0
    %1659 = vmatpush1.bf16.msra.mxu0 0
    %1660 = vmatprep.subr.bf16.mxu0 0
    %1661 = vmatpush1.bf16.msra.mxu0 0
    %1662 = vmatprep.subr.bf16.mxu0 0
    %1663 = vmatpush1.bf16.msra.mxu0 0
    %1664 = vmatprep.subr.bf16.mxu0 0
    %1665 = vmatpush1.bf16.msra.mxu0 0
    %1666 = vmatprep.subr.bf16.mxu0 0
    %1667 = vmatpush1.bf16.msra.mxu0 0
    %1668 = vmatprep.subr.bf16.mxu0 0
    %1669 = vmatpush1.bf16.msra.mxu0 0
    %1670 = vmatprep.subr.bf16.mxu0 0
    %1671 = vmatpush1.bf16.msra.mxu0 0
    %1672 = vmatprep.subr.bf16.mxu0 0
    %1673 = vmatpush1.bf16.msra.mxu0 0
    %1674 = vmatprep.mubr.bf16.mxu0 0
    %1675 = vmatmul.mubr.bf16.gmra.mrb[0].mxu0 %v1631
    %v1676 = vpop.f32.mrb[0].mxu0
    %v1677 = vadd.f32 0.0, %v1676
    %v1678 = vpop.f32.mrb[0].mxu0
    %v1679 = vpop.f32.mrb[0].mxu0
    %v1680 = vadd.f32 0.0, %v1679
    %v1681 = vpop.f32.mrb[0].mxu0
    %1682 = vmatprep.mubr.bf16.mxu0 0
    %1683 = vmatmul.mubr.bf16.gmra.mrb[0].mxu0 %v1634
    %v1684 = vpop.f32.mrb[0].mxu0
    %v1685 = vadd.f32 0.0, %v1684
    %v1686 = vpop.f32.mrb[0].mxu0
    %v1687 = vpop.f32.mrb[0].mxu0
    %v1688 = vadd.f32 0.0, %v1687
    %v1689 = vpop.f32.mrb[0].mxu0
    %1690 = vmatprep.mubr.bf16.mxu0 0
    %1691 = vmatmul.mubr.bf16.gmra.mrb[0].mxu0 %v1637
    %v1692 = vpop.f32.mrb[0].mxu0
    %v1693 = vadd.f32 0.0, %v1692
    %v1694 = vpop.f32.mrb[0].mxu0
    %v1695 = vpop.f32.mrb[0].mxu0
    %v1696 = vadd.f32 0.0, %v1695
    %v1697 = vpop.f32.mrb[0].mxu0
    %1698 = vmatprep.mubr.bf16.mxu0 0
    %1699 = vmatmul.mubr.bf16.gmra.mrb[0].mxu0 %v1640
    %v1700 = vpop.f32.mrb[0].mxu0
    %v1701 = vadd.f32 0.0, %v1700
    %v1702 = vpop.f32.mrb[0].mxu0
    %v1703 = vpop.f32.mrb[0].mxu0
    %v1704 = vadd.f32 0.0, %v1703
    %v1705 = vpop.f32.mrb[0].mxu0
    %1706 = vdwg.mxu0
    %v1707 = vpack.c.bf16 %v1680, %v1677
    %v1708 = vpack.c.bf16 %v1688, %v1685
    %v1709 = vpack.c.bf16 %v1696, %v1693
    %v1710 = vpack.c.bf16 %v1704, %v1701
    %1711 = vrot.lane.b32.xlu0 %v795, 32
    %v1712 = vpop.permute.xlu0 %1711
    %1713 = vrot.lane.b32.xlu0 %v798, 32
    %v1714 = vpop.permute.xlu0 %1713
    %1715 = vrot.lane.b32.xlu0 %v801, 32
    %v1716 = vpop.permute.xlu0 %1715
    %1717 = vrot.lane.b32.xlu0 %v804, 32
    %v1718 = vpop.permute.xlu0 %1717
    %1719 = vrot.lane.b32.xlu0 %v796, 32
    %v1720 = vpop.permute.xlu0 %1719
    %1721 = vrot.lane.b32.xlu0 %v799, 32
    %v1722 = vpop.permute.xlu0 %1721
    %1723 = vrot.lane.b32.xlu0 %v802, 32
    %v1724 = vpop.permute.xlu0 %1723
    %1725 = vrot.lane.b32.xlu0 %v805, 32
    %v1726 = vpop.permute.xlu0 %1725
    %v1728 = vsel %vm807, %v1712, 0
    %v1731 = vsel %vm807, %v1714, 0
    %v1734 = vsel %vm807, %v1716, 0
    %v1737 = vsel %vm807, %v1718, 0
    %v1740 = vsel %vm807, %v1720, 0
    %v1743 = vsel %vm807, %v1722, 0
    %v1746 = vsel %vm807, %v1724, 0
    %v1749 = vsel %vm807, %v1726, 0
    %1751 = vmatprep.subr.bf16.mxu0 0
    %1752 = vmatpush1.bf16.xpose.msra.mxu0 %v1740
    %1753 = vmatprep.subr.bf16.mxu0 0
    %1754 = vmatpush1.bf16.xpose.msra.mxu0 %v1743
    %1755 = vmatprep.subr.bf16.mxu0 0
    %1756 = vmatpush1.bf16.xpose.msra.mxu0 %v1746
    %1757 = vmatprep.subr.bf16.mxu0 0
    %1758 = vmatpush1.bf16.xpose.msra.mxu0 %v1749
    %1759 = vmatprep.subr.bf16.mxu0 0
    %1760 = vmatpush1.bf16.xpose.msra.mxu0 0
    %1761 = vmatprep.subr.bf16.mxu0 0
    %1762 = vmatpush1.bf16.xpose.msra.mxu0 0
    %1763 = vmatprep.subr.bf16.mxu0 0
    %1764 = vmatpush1.bf16.xpose.msra.mxu0 0
    %1765 = vmatprep.subr.bf16.mxu0 0
    %1766 = vmatpush1.bf16.xpose.msra.mxu0 0
    %1767 = vmatprep.subr.bf16.mxu0 0
    %1768 = vmatpush1.bf16.xpose.msra.mxu0 0
    %1769 = vmatprep.subr.bf16.mxu0 0
    %1770 = vmatpush1.bf16.xpose.msra.mxu0 0
    %1771 = vmatprep.subr.bf16.mxu0 0
    %1772 = vmatpush1.bf16.xpose.msra.mxu0 0
    %1773 = vmatprep.subr.bf16.mxu0 0
    %1774 = vmatpush1.bf16.xpose.msra.mxu0 0
    %1775 = vmatprep.subr.bf16.mxu0 0
    %1776 = vmatpush1.bf16.xpose.msra.mxu0 0
    %1777 = vmatprep.subr.bf16.mxu0 0
    %1778 = vmatpush1.bf16.xpose.msra.mxu0 0
    %1779 = vmatprep.subr.bf16.mxu0 0
    %1780 = vmatpush1.bf16.xpose.msra.mxu0 0
    %1781 = vmatprep.subr.bf16.mxu0 0
    %1782 = vmatpush1.bf16.xpose.msra.mxu0 0
    %1783 = vmatprep.mubr.bf16.mxu0 0
    %1784 = vmatmul.mubr.bf16.gmra.mrb[0].mxu0 %v1728
    %v1785 = vpop.f32.mrb[0].mxu0
    %v1786 = vadd.f32 0.0, %v1785
    %v1787 = vpop.f32.mrb[0].mxu0
    %v1788 = vpop.f32.mrb[0].mxu0
    %v1789 = vadd.f32 0.0, %v1788
    %v1790 = vpop.f32.mrb[0].mxu0
    %1791 = vmatprep.mubr.bf16.mxu0 0
    %1792 = vmatmul.mubr.bf16.gmra.mrb[0].mxu0 %v1731
    %v1793 = vpop.f32.mrb[0].mxu0
    %v1794 = vadd.f32 0.0, %v1793
    %v1795 = vpop.f32.mrb[0].mxu0
    %v1796 = vpop.f32.mrb[0].mxu0
    %v1797 = vadd.f32 0.0, %v1796
    %v1798 = vpop.f32.mrb[0].mxu0
    %1799 = vmatprep.mubr.bf16.mxu0 0
    %1800 = vmatmul.mubr.bf16.gmra.mrb[0].mxu0 %v1734
    %v1801 = vpop.f32.mrb[0].mxu0
    %v1802 = vadd.f32 0.0, %v1801
    %v1803 = vpop.f32.mrb[0].mxu0
    %v1804 = vpop.f32.mrb[0].mxu0
    %v1805 = vadd.f32 0.0, %v1804
    %v1806 = vpop.f32.mrb[0].mxu0
    %1807 = vmatprep.mubr.bf16.mxu0 0
    %1808 = vmatmul.mubr.bf16.gmra.mrb[0].mxu0 %v1737
    %v1809 = vpop.f32.mrb[0].mxu0
    %v1810 = vadd.f32 0.0, %v1809
    %v1811 = vpop.f32.mrb[0].mxu0
    %v1812 = vpop.f32.mrb[0].mxu0
    %v1813 = vadd.f32 0.0, %v1812
    %v1814 = vpop.f32.mrb[0].mxu0
    %1815 = vdwg.mxu0
    %v1816 = vmul.f32 %v1786, 0.17677669
    %v1817 = vmul.f32 %v1789, 0.17677669
    %v1818 = vmul.f32 %v1794, 0.17677669
    %v1819 = vmul.f32 %v1797, 0.17677669
    %v1820 = vmul.f32 %v1802, 0.17677669
    %v1821 = vmul.f32 %v1805, 0.17677669
    %v1822 = vmul.f32 %v1810, 0.17677669
    %v1823 = vmul.f32 %v1813, 0.17677669
    %v1824 = vadd.f32 %v1816, %v366
    %v1825 = vadd.f32 %v1817, %v367
    %v1826 = vadd.f32 %v1818, %v368
    %v1827 = vadd.f32 %v1819, %v369
    %v1828 = vadd.f32 %v1820, %v370
    %v1829 = vadd.f32 %v1821, %v371
    %v1830 = vadd.f32 %v1822, %v372
    %v1831 = vadd.f32 %v1823, %v373
    %v1832 = vsel %vm913, %v1824, -inf
    %1833 = vmax.xlane.f32.xlu0 %v1832
    %v1834 = vpop.xlane.xlu0 %1833
    %v1835 = vsel %vm913, %v1825, -inf
    %1836 = vmax.xlane.f32.xlu0 %v1835
    %v1837 = vpop.xlane.xlu0 %1836
    %v1838 = vsel %vm913, %v1826, -inf
    %1839 = vmax.xlane.f32.xlu0 %v1838
    %v1840 = vpop.xlane.xlu0 %1839
    %v1841 = vsel %vm913, %v1827, -inf
    %1842 = vmax.xlane.f32.xlu0 %v1841
    %v1843 = vpop.xlane.xlu0 %1842
    %v1844 = vsel %vm913, %v1828, -inf
    %1845 = vmax.xlane.f32.xlu0 %v1844
    %v1846 = vpop.xlane.xlu0 %1845
    %v1847 = vsel %vm913, %v1829, -inf
    %1848 = vmax.xlane.f32.xlu0 %v1847
    %v1849 = vpop.xlane.xlu0 %1848
    %v1850 = vsel %vm913, %v1830, -inf
    %1851 = vmax.xlane.f32.xlu0 %v1850
    %v1852 = vpop.xlane.xlu0 %1851
    %v1853 = vsel %vm913, %v1831, -inf
    %1854 = vmax.xlane.f32.xlu0 %v1853
    %v1855 = vpop.xlane.xlu0 %1854
    %v1856 = vsub.f32 %v1824, %v1834
    %v1857 = vsub.f32 %v1825, %v1837
    %v1858 = vsub.f32 %v1826, %v1840
    %v1859 = vsub.f32 %v1827, %v1843
    %v1860 = vsub.f32 %v1828, %v1846
    %v1861 = vsub.f32 %v1829, %v1849
    %v1862 = vsub.f32 %v1830, %v1852
    %v1863 = vsub.f32 %v1831, %v1855
    %v1864 = vmul.f32 %v1856, 1.442695
    %v1865 = vpow.pop %v1864
    %v1866 = vmul.f32 %v1857, 1.442695
    %v1867 = vpow.pop %v1866
    %v1868 = vmul.f32 %v1858, 1.442695
    %v1869 = vpow.pop %v1868
    %v1870 = vmul.f32 %v1859, 1.442695
    %v1871 = vpow.pop %v1870
    %v1872 = vmul.f32 %v1860, 1.442695
    %v1873 = vpow.pop %v1872
    %v1874 = vmul.f32 %v1861, 1.442695
    %v1875 = vpow.pop %v1874
    %v1876 = vmul.f32 %v1862, 1.442695
    %v1877 = vpow.pop %v1876
    %v1878 = vmul.f32 %v1863, 1.442695
    %v1879 = vpow.pop %v1878
    %v1880 = vsel %vm913, %v1865, 0.0
    %1881 = vadd.xlane.f32.xlu0 %v1880
    %v1882 = vpop.xlane.xlu0 %1881
    %v1883 = vsel %vm913, %v1867, 0.0
    %1884 = vadd.xlane.f32.xlu0 %v1883
    %v1885 = vpop.xlane.xlu0 %1884
    %v1886 = vsel %vm913, %v1869, 0.0
    %1887 = vadd.xlane.f32.xlu0 %v1886
    %v1888 = vpop.xlane.xlu0 %1887
    %v1889 = vsel %vm913, %v1871, 0.0
    %1890 = vadd.xlane.f32.xlu0 %v1889
    %v1891 = vpop.xlane.xlu0 %1890
    %v1892 = vsel %vm913, %v1873, 0.0
    %1893 = vadd.xlane.f32.xlu0 %v1892
    %v1894 = vpop.xlane.xlu0 %1893
    %v1895 = vsel %vm913, %v1875, 0.0
    %1896 = vadd.xlane.f32.xlu0 %v1895
    %v1897 = vpop.xlane.xlu0 %1896
    %v1898 = vsel %vm913, %v1877, 0.0
    %1899 = vadd.xlane.f32.xlu0 %v1898
    %v1900 = vpop.xlane.xlu0 %1899
    %v1901 = vsel %vm913, %v1879, 0.0
    %1902 = vadd.xlane.f32.xlu0 %v1901
    %v1903 = vpop.xlane.xlu0 %1902
    %v1904 = vrcp.pop %v1882
    %v1905 = vrcp.pop %v1885
    %v1906 = vrcp.pop %v1888
    %v1907 = vrcp.pop %v1891
    %v1908 = vrcp.pop %v1894
    %v1909 = vrcp.pop %v1897
    %v1910 = vrcp.pop %v1900
    %v1911 = vrcp.pop %v1903
    %v1912 = vmul.f32 %v1865, %v1904
    %v1913 = vmul.f32 %v1867, %v1905
    %v1914 = vmul.f32 %v1869, %v1906
    %v1915 = vmul.f32 %v1871, %v1907
    %v1916 = vmul.f32 %v1873, %v1908
    %v1917 = vmul.f32 %v1875, %v1909
    %v1918 = vmul.f32 %v1877, %v1910
    %v1919 = vmul.f32 %v1879, %v1911
    %v1920 = vpack.c.bf16 %v1913, %v1912
    %v1921 = vpack.c.bf16 %v1915, %v1914
    %v1922 = vpack.c.bf16 %v1917, %v1916
    %v1923 = vpack.c.bf16 %v1919, %v1918
    %1924 = vrot.lane.b32.xlu0 %v797, 32
    %v1925 = vpop.permute.xlu0 %1924
    %1926 = vrot.lane.b32.xlu0 %v800, 32
    %v1927 = vpop.permute.xlu0 %1926
    %1928 = vrot.lane.b32.xlu0 %v803, 32
    %v1929 = vpop.permute.xlu0 %1928
    %1930 = vrot.lane.b32.xlu0 %v806, 32
    %v1931 = vpop.permute.xlu0 %1930
    %v1937 = vsel %vm913, %v1920, 0
    %v1940 = vsel %vm913, %v1921, 0
    %v1943 = vsel %vm913, %v1922, 0
    %v1946 = vsel %vm913, %v1923, 0
    %1948 = vmatprep.subr.bf16.mxu0 0
    %1949 = vmatpush1.bf16.msra.mxu0 %v1925
    %1950 = vmatprep.subr.bf16.mxu0 0
    %1951 = vmatpush1.bf16.msra.mxu0 %v1927
    %1952 = vmatprep.subr.bf16.mxu0 0
    %1953 = vmatpush1.bf16.msra.mxu0 %v1929
    %1954 = vmatprep.subr.bf16.mxu0 0
    %1955 = vmatpush1.bf16.msra.mxu0 %v1931
    %1956 = vmatprep.subr.bf16.mxu0 0
    %1957 = vmatpush1.bf16.msra.mxu0 0
    %1958 = vmatprep.subr.bf16.mxu0 0
    %1959 = vmatpush1.bf16.msra.mxu0 0
    %1960 = vmatprep.subr.bf16.mxu0 0
    %1961 = vmatpush1.bf16.msra.mxu0 0
    %1962 = vmatprep.subr.bf16.mxu0 0
    %1963 = vmatpush1.bf16.msra.mxu0 0
    %1964 = vmatprep.subr.bf16.mxu0 0
    %1965 = vmatpush1.bf16.msra.mxu0 0
    %1966 = vmatprep.subr.bf16.mxu0 0
    %1967 = vmatpush1.bf16.msra.mxu0 0
    %1968 = vmatprep.subr.bf16.mxu0 0
    %1969 = vmatpush1.bf16.msra.mxu0 0
    %1970 = vmatprep.subr.bf16.mxu0 0
    %1971 = vmatpush1.bf16.msra.mxu0 0
    %1972 = vmatprep.subr.bf16.mxu0 0
    %1973 = vmatpush1.bf16.msra.mxu0 0
    %1974 = vmatprep.subr.bf16.mxu0 0
    %1975 = vmatpush1.bf16.msra.mxu0 0
    %1976 = vmatprep.subr.bf16.mxu0 0
    %1977 = vmatpush1.bf16.msra.mxu0 0
    %1978 = vmatprep.subr.bf16.mxu0 0
    %1979 = vmatpush1.bf16.msra.mxu0 0
    %1980 = vmatprep.mubr.bf16.mxu0 0
    %1981 = vmatmul.mubr.bf16.gmra.mrb[0].mxu0 %v1937
    %v1982 = vpop.f32.mrb[0].mxu0
    %v1983 = vadd.f32 0.0, %v1982
    %v1984 = vpop.f32.mrb[0].mxu0
    %v1985 = vpop.f32.mrb[0].mxu0
    %v1986 = vadd.f32 0.0, %v1985
    %v1987 = vpop.f32.mrb[0].mxu0
    %1988 = vmatprep.mubr.bf16.mxu0 0
    %1989 = vmatmul.mubr.bf16.gmra.mrb[0].mxu0 %v1940
    %v1990 = vpop.f32.mrb[0].mxu0
    %v1991 = vadd.f32 0.0, %v1990
    %v1992 = vpop.f32.mrb[0].mxu0
    %v1993 = vpop.f32.mrb[0].mxu0
    %v1994 = vadd.f32 0.0, %v1993
    %v1995 = vpop.f32.mrb[0].mxu0
    %1996 = vmatprep.mubr.bf16.mxu0 0
    %1997 = vmatmul.mubr.bf16.gmra.mrb[0].mxu0 %v1943
    %v1998 = vpop.f32.mrb[0].mxu0
    %v1999 = vadd.f32 0.0, %v1998
    %v2000 = vpop.f32.mrb[0].mxu0
    %v2001 = vpop.f32.mrb[0].mxu0
    %v2002 = vadd.f32 0.0, %v2001
    %v2003 = vpop.f32.mrb[0].mxu0
    %2004 = vmatprep.mubr.bf16.mxu0 0
    %2005 = vmatmul.mubr.bf16.gmra.mrb[0].mxu0 %v1946
    %v2006 = vpop.f32.mrb[0].mxu0
    %v2007 = vadd.f32 0.0, %v2006
    %v2008 = vpop.f32.mrb[0].mxu0
    %v2009 = vpop.f32.mrb[0].mxu0
    %v2010 = vadd.f32 0.0, %v2009
    %v2011 = vpop.f32.mrb[0].mxu0
    %2012 = vdwg.mxu0
    %v2013 = vpack.c.bf16 %v1986, %v1983
    %v2014 = vpack.c.bf16 %v1994, %v1991
    %v2015 = vpack.c.bf16 %v2002, %v1999
    %v2016 = vpack.c.bf16 %v2010, %v2007
    %2021 = vrot.lane.b32.xlu0 %v1401, 32
    %v2022 = vpop.permute.xlu0 %2021
    %2023 = vrot.lane.b32.xlu0 %v1402, 32
    %v2024 = vpop.permute.xlu0 %2023
    %2025 = vrot.lane.b32.xlu0 %v1403, 32
    %v2026 = vpop.permute.xlu0 %2025
    %2027 = vrot.lane.b32.xlu0 %v1404, 32
    %v2028 = vpop.permute.xlu0 %2027
    %2033 = vrot.lane.b32.xlu0 %v1707, 64
    %v2034 = vpop.permute.xlu0 %2033
    %2035 = vrot.lane.b32.xlu0 %v1708, 64
    %v2036 = vpop.permute.xlu0 %2035
    %2037 = vrot.lane.b32.xlu0 %v1709, 64
    %v2038 = vpop.permute.xlu0 %2037
    %2039 = vrot.lane.b32.xlu0 %v1710, 64
    %v2040 = vpop.permute.xlu0 %2039
    %2045 = vrot.lane.b32.xlu0 %v2013, 96
    %v2046 = vpop.permute.xlu0 %2045
    %2047 = vrot.lane.b32.xlu0 %v2014, 96
    %v2048 = vpop.permute.xlu0 %2047
    %2049 = vrot.lane.b32.xlu0 %v2015, 96
    %v2050 = vpop.permute.xlu0 %2049
    %2051 = vrot.lane.b32.xlu0 %v2016, 96
    %v2052 = vpop.permute.xlu0 %2051
    %v2055 = vsel %vm807, %v1083, %v2022
    %v2058 = vsel %vm807, %v1084, %v2024
    %v2061 = vsel %vm807, %v1085, %v2026
    %v2064 = vsel %vm807, %v1086, %v2028
    %v2066 = vsel %vm913, %v2055, %v2034
    %v2068 = vsel %vm913, %v2058, %v2036
    %v2070 = vsel %vm913, %v2061, %v2038
    %v2072 = vsel %vm913, %v2064, %v2040
    %vm2073 = vcmask 785408
    %v2075 = vsel %vm2073, %v2066, %v2046
    %v2078 = vsel %vm2073, %v2068, %v2048
    %v2081 = vsel %vm2073, %v2070, %v2050
    %v2084 = vsel %vm2073, %v2072, %v2052
    %v2086 = vld [vmem:[%s6] sm:$0xf]
    %v2087 = vld [vmem:[%s6 + $0x4] sm:$0xf]
    %v2088 = vld [vmem:[%s6 + $0x8] sm:$0xf]
    %v2089 = vld [vmem:[%s6 + $0xc] sm:$0xf]
    %v2090 = vld [vmem:[%s6 + $0x10] sm:$0xf]
    %v2091 = vld [vmem:[%s6 + $0x14] sm:$0xf]
    %v2092 = vld [vmem:[%s6 + $0x18] sm:$0xf]
    %v2093 = vld [vmem:[%s6 + $0x1c] sm:$0xf]
    %v2094 = vld [vmem:[%s6 + $0x20] sm:$0xf]
    %v2095 = vld [vmem:[%s6 + $0x24] sm:$0xf]
    %v2096 = vld [vmem:[%s6 + $0x28] sm:$0xf]
    %v2097 = vld [vmem:[%s6 + $0x2c] sm:$0xf]
    %v2098 = vld [vmem:[%s6 + $0x30] sm:$0xf]
    %v2099 = vld [vmem:[%s6 + $0x34] sm:$0xf]
    %v2100 = vld [vmem:[%s6 + $0x38] sm:$0xf]
    %v2101 = vld [vmem:[%s6 + $0x3c] sm:$0xf]
    %v2118 = vunpack.c.l.b16 %v2086
    %v2119 = vunpack.c.l.b16 %v2087
    %v2120 = vunpack.c.l.b16 %v2088
    %v2121 = vunpack.c.l.b16 %v2089
    %v2122 = vunpack.c.l.b16 %v2090
    %v2123 = vunpack.c.l.b16 %v2091
    %v2124 = vunpack.c.l.b16 %v2092
    %v2125 = vunpack.c.l.b16 %v2093
    %v2126 = vunpack.c.l.b16 %v2094
    %v2127 = vunpack.c.l.b16 %v2095
    %v2128 = vunpack.c.l.b16 %v2096
    %v2129 = vunpack.c.l.b16 %v2097
    %v2130 = vunpack.c.l.b16 %v2098
    %v2131 = vunpack.c.l.b16 %v2099
    %v2132 = vunpack.c.l.b16 %v2100
    %v2133 = vunpack.c.l.b16 %v2101
    %v2134 = vpack.c.b16 %v2119, %v2118
    %v2135 = vpack.c.b16 %v2121, %v2120
    %v2136 = vpack.c.b16 %v2123, %v2122
    %v2137 = vpack.c.b16 %v2125, %v2124
    %v2138 = vpack.c.b16 %v2127, %v2126
    %v2139 = vpack.c.b16 %v2129, %v2128
    %v2140 = vpack.c.b16 %v2131, %v2130
    %v2141 = vpack.c.b16 %v2133, %v2132
    %2150 = vmatprep.subr.bf16.mxu0 0
    %2151 = vmatpush1.bf16.msra.mxu0 %v2134
    %2152 = vmatprep.subr.bf16.mxu0 0
    %2153 = vmatpush1.bf16.msra.mxu0 %v2135
    %2154 = vmatprep.subr.bf16.mxu0 0
    %2155 = vmatpush1.bf16.msra.mxu0 %v2136
    %2156 = vmatprep.subr.bf16.mxu0 0
    %2157 = vmatpush1.bf16.msra.mxu0 %v2137
    %2158 = vmatprep.subr.bf16.mxu0 0
    %2159 = vmatpush1.bf16.msra.mxu0 %v2138
    %2160 = vmatprep.subr.bf16.mxu0 0
    %2161 = vmatpush1.bf16.msra.mxu0 %v2139
    %2162 = vmatprep.subr.bf16.mxu0 0
    %2163 = vmatpush1.bf16.msra.mxu0 %v2140
    %2164 = vmatprep.subr.bf16.mxu0 0
    %2165 = vmatpush1.bf16.msra.mxu0 %v2141
    %2166 = vmatprep.subr.bf16.mxu0 0
    %2167 = vmatpush1.bf16.msra.mxu0 0
    %2168 = vmatprep.subr.bf16.mxu0 0
    %2169 = vmatpush1.bf16.msra.mxu0 0
    %2170 = vmatprep.subr.bf16.mxu0 0
    %2171 = vmatpush1.bf16.msra.mxu0 0
    %2172 = vmatprep.subr.bf16.mxu0 0
    %2173 = vmatpush1.bf16.msra.mxu0 0
    %2174 = vmatprep.subr.bf16.mxu0 0
    %2175 = vmatpush1.bf16.msra.mxu0 0
    %2176 = vmatprep.subr.bf16.mxu0 0
    %2177 = vmatpush1.bf16.msra.mxu0 0
    %2178 = vmatprep.subr.bf16.mxu0 0
    %2179 = vmatpush1.bf16.msra.mxu0 0
    %2180 = vmatprep.subr.bf16.mxu0 0
    %2181 = vmatpush1.bf16.msra.mxu0 0
    %2182 = vmatprep.mubr.bf16.mxu0 0
    %2183 = vmatmul.mubr.bf16.gmra.mrb[0].mxu0 %v2075
    %v2184 = vpop.f32.mrb[0].mxu0
    %v2185 = vadd.f32 0.0, %v2184
    %v2186 = vpop.f32.mrb[0].mxu0
    %v2187 = vpop.f32.mrb[0].mxu0
    %v2188 = vadd.f32 0.0, %v2187
    %v2189 = vpop.f32.mrb[0].mxu0
    %2190 = vmatprep.mubr.bf16.mxu0 0
    %2191 = vmatmul.mubr.bf16.gmra.mrb[0].mxu0 %v2078
    %v2192 = vpop.f32.mrb[0].mxu0
    %v2193 = vadd.f32 0.0, %v2192
    %v2194 = vpop.f32.mrb[0].mxu0
    %v2195 = vpop.f32.mrb[0].mxu0
    %v2196 = vadd.f32 0.0, %v2195
    %v2197 = vpop.f32.mrb[0].mxu0
    %2198 = vmatprep.mubr.bf16.mxu0 0
    %2199 = vmatmul.mubr.bf16.gmra.mrb[0].mxu0 %v2081
    %v2200 = vpop.f32.mrb[0].mxu0
    %v2201 = vadd.f32 0.0, %v2200
    %v2202 = vpop.f32.mrb[0].mxu0
    %v2203 = vpop.f32.mrb[0].mxu0
    %v2204 = vadd.f32 0.0, %v2203
    %v2205 = vpop.f32.mrb[0].mxu0
    %2206 = vmatprep.mubr.bf16.mxu0 0
    %2207 = vmatmul.mubr.bf16.gmra.mrb[0].mxu0 %v2084
    %v2208 = vpop.f32.mrb[0].mxu0
    %v2209 = vadd.f32 0.0, %v2208
    %v2210 = vpop.f32.mrb[0].mxu0
    %v2211 = vpop.f32.mrb[0].mxu0
    %v2212 = vadd.f32 0.0, %v2211
    %v2213 = vpop.f32.mrb[0].mxu0
    %2214 = vdwg.mxu0
    %v2215 = vadd.f32 %v285, %v2185
    %v2216 = vadd.f32 %v288, %v2188
    %v2217 = vadd.f32 %v293, %v2193
    %v2218 = vadd.f32 %v296, %v2196
    %v2219 = vadd.f32 %v301, %v2201
    %v2220 = vadd.f32 %v304, %v2204
    %v2221 = vadd.f32 %v309, %v2209
    %v2222 = vadd.f32 %v312, %v2212
    %v2223 = vld [vmem:[%s7] sm:$0x1]
    %v2225 = vlaneseq
    %v2226 = vshrl.u32 %v2225, 7
    %v2227 = vsub.s32 0, %v2226
    %v2228 = vrot.slane %v2223, %v2227
    %v2230 = vadd.f32 %v2215, %v2228
    %v2231 = vadd.f32 %v2216, %v2228
    %v2232 = vadd.f32 %v2217, %v2228
    %v2233 = vadd.f32 %v2218, %v2228
    %v2234 = vadd.f32 %v2219, %v2228
    %v2235 = vadd.f32 %v2220, %v2228
    %v2236 = vadd.f32 %v2221, %v2228
    %v2237 = vadd.f32 %v2222, %v2228
    %v2238 = vld [vmem:[%s8] sm:$0x1]
    %v2239 = vld [vmem:[%s9] sm:$0x1]
    %2240 = vadd.xlane.f32.xlu0 %v2230
    %v2241 = vpop.xlane.xlu0 %2240
    %2242 = vadd.xlane.f32.xlu0 %v2231
    %v2243 = vpop.xlane.xlu0 %2242
    %2244 = vadd.xlane.f32.xlu0 %v2232
    %v2245 = vpop.xlane.xlu0 %2244
    %2246 = vadd.xlane.f32.xlu0 %v2233
    %v2247 = vpop.xlane.xlu0 %2246
    %2248 = vadd.xlane.f32.xlu0 %v2234
    %v2249 = vpop.xlane.xlu0 %2248
    %2250 = vadd.xlane.f32.xlu0 %v2235
    %v2251 = vpop.xlane.xlu0 %2250
    %2252 = vadd.xlane.f32.xlu0 %v2236
    %v2253 = vpop.xlane.xlu0 %2252
    %2254 = vadd.xlane.f32.xlu0 %v2237
    %v2255 = vpop.xlane.xlu0 %2254
    %v2256 = vmul.f32 %v2241, %v392
    %v2257 = vmul.f32 %v2243, %v392
    %v2258 = vmul.f32 %v2245, %v392
    %v2259 = vmul.f32 %v2247, %v392
    %v2260 = vmul.f32 %v2249, %v392
    %v2261 = vmul.f32 %v2251, %v392
    %v2262 = vmul.f32 %v2253, %v392
    %v2263 = vmul.f32 %v2255, %v392
    %v2264 = vsub.f32 %v2230, %v2256
    %v2265 = vsub.f32 %v2231, %v2257
    %v2266 = vsub.f32 %v2232, %v2258
    %v2267 = vsub.f32 %v2233, %v2259
    %v2268 = vsub.f32 %v2234, %v2260
    %v2269 = vsub.f32 %v2235, %v2261
    %v2270 = vsub.f32 %v2236, %v2262
    %v2271 = vsub.f32 %v2237, %v2263
    %v2272 = vmul.f32 %v2264, %v2264
    %v2273 = vmul.f32 %v2265, %v2265
    %v2274 = vmul.f32 %v2266, %v2266
    %v2275 = vmul.f32 %v2267, %v2267
    %v2276 = vmul.f32 %v2268, %v2268
    %v2277 = vmul.f32 %v2269, %v2269
    %v2278 = vmul.f32 %v2270, %v2270
    %v2279 = vmul.f32 %v2271, %v2271
    %2280 = vadd.xlane.f32.xlu0 %v2272
    %v2281 = vpop.xlane.xlu0 %2280
    %2282 = vadd.xlane.f32.xlu0 %v2273
    %v2283 = vpop.xlane.xlu0 %2282
    %2284 = vadd.xlane.f32.xlu0 %v2274
    %v2285 = vpop.xlane.xlu0 %2284
    %2286 = vadd.xlane.f32.xlu0 %v2275
    %v2287 = vpop.xlane.xlu0 %2286
    %2288 = vadd.xlane.f32.xlu0 %v2276
    %v2289 = vpop.xlane.xlu0 %2288
    %2290 = vadd.xlane.f32.xlu0 %v2277
    %v2291 = vpop.xlane.xlu0 %2290
    %2292 = vadd.xlane.f32.xlu0 %v2278
    %v2293 = vpop.xlane.xlu0 %2292
    %2294 = vadd.xlane.f32.xlu0 %v2279
    %v2295 = vpop.xlane.xlu0 %2294
    %v2296 = vmul.f32 %v2281, %v392
    %v2297 = vmul.f32 %v2283, %v392
    %v2298 = vmul.f32 %v2285, %v392
    %v2299 = vmul.f32 %v2287, %v392
    %v2300 = vmul.f32 %v2289, %v392
    %v2301 = vmul.f32 %v2291, %v392
    %v2302 = vmul.f32 %v2293, %v392
    %v2303 = vmul.f32 %v2295, %v392
    %v2304 = vadd.f32 %v2296, 1e-05
    %v2305 = vadd.f32 %v2297, 1e-05
    %v2306 = vadd.f32 %v2298, 1e-05
    %v2307 = vadd.f32 %v2299, 1e-05
    %v2308 = vadd.f32 %v2300, 1e-05
    %v2309 = vadd.f32 %v2301, 1e-05
    %v2310 = vadd.f32 %v2302, 1e-05
    %v2311 = vadd.f32 %v2303, 1e-05
    %v2312 = vrsqrt.pop %v2304
    %v2313 = vrsqrt.pop %v2305
    %v2314 = vrsqrt.pop %v2306
    %v2315 = vrsqrt.pop %v2307
    %v2316 = vrsqrt.pop %v2308
    %v2317 = vrsqrt.pop %v2309
    %v2318 = vrsqrt.pop %v2310
    %v2319 = vrsqrt.pop %v2311
    %v2320 = vmul.f32 %v2264, %v2312
    %v2321 = vmul.f32 %v2265, %v2313
    %v2322 = vmul.f32 %v2266, %v2314
    %v2323 = vmul.f32 %v2267, %v2315
    %v2324 = vmul.f32 %v2268, %v2316
    %v2325 = vmul.f32 %v2269, %v2317
    %v2326 = vmul.f32 %v2270, %v2318
    %v2327 = vmul.f32 %v2271, %v2319
    %v2329 = vlaneseq
    %v2330 = vshrl.u32 %v2329, 7
    %v2331 = vsub.s32 0, %v2330
    %v2332 = vrot.slane %v2238, %v2331
    %v2334 = vmul.f32 %v2320, %v2332
    %v2335 = vmul.f32 %v2321, %v2332
    %v2336 = vmul.f32 %v2322, %v2332
    %v2337 = vmul.f32 %v2323, %v2332
    %v2338 = vmul.f32 %v2324, %v2332
    %v2339 = vmul.f32 %v2325, %v2332
    %v2340 = vmul.f32 %v2326, %v2332
    %v2341 = vmul.f32 %v2327, %v2332
    %v2343 = vlaneseq
    %v2344 = vshrl.u32 %v2343, 7
    %v2345 = vsub.s32 0, %v2344
    %v2346 = vrot.slane %v2239, %v2345
    %v2348 = vadd.f32 %v2334, %v2346
    %v2349 = vadd.f32 %v2335, %v2346
    %v2350 = vadd.f32 %v2336, %v2346
    %v2351 = vadd.f32 %v2337, %v2346
    %v2352 = vadd.f32 %v2338, %v2346
    %v2353 = vadd.f32 %v2339, %v2346
    %v2354 = vadd.f32 %v2340, %v2346
    %v2355 = vadd.f32 %v2341, %v2346
    %v2356 = vpack.c.bf16 %v2349, %v2348
    %v2357 = vpack.c.bf16 %v2351, %v2350
    %v2358 = vpack.c.bf16 %v2353, %v2352
    %v2359 = vpack.c.bf16 %v2355, %v2354
    %v2360 = vld [vmem:[#allocation5] sm:$0xff]
    %v2361 = vld [vmem:[#allocation5 + $0x8] sm:$0xff]
    %v2362 = vld [vmem:[#allocation5 + $0x10] sm:$0xff]
    %v2363 = vld [vmem:[#allocation5 + $0x18] sm:$0xff]
    %v2364 = vld [vmem:[#allocation5 + $0x20] sm:$0xff]
    %v2365 = vld [vmem:[#allocation5 + $0x28] sm:$0xff]
    %v2366 = vld [vmem:[#allocation5 + $0x30] sm:$0xff]
    %v2367 = vld [vmem:[#allocation5 + $0x38] sm:$0xff]
    %v2368 = vld [vmem:[#allocation5 + $0x40] sm:$0xff]
    %v2369 = vld [vmem:[#allocation5 + $0x48] sm:$0xff]
    %v2370 = vld [vmem:[#allocation5 + $0x50] sm:$0xff]
    %v2371 = vld [vmem:[#allocation5 + $0x58] sm:$0xff]
    %v2372 = vld [vmem:[#allocation5 + $0x60] sm:$0xff]
    %v2373 = vld [vmem:[#allocation5 + $0x68] sm:$0xff]
    %v2374 = vld [vmem:[#allocation5 + $0x70] sm:$0xff]
    %v2375 = vld [vmem:[#allocation5 + $0x78] sm:$0xff]
    %v2376 = vld [vmem:[#allocation5 + $0x80] sm:$0xff]
    %v2377 = vld [vmem:[#allocation5 + $0x88] sm:$0xff]
    %v2378 = vld [vmem:[#allocation5 + $0x90] sm:$0xff]
    %v2379 = vld [vmem:[#allocation5 + $0x98] sm:$0xff]
    %v2380 = vld [vmem:[#allocation5 + $0xa0] sm:$0xff]
    %v2381 = vld [vmem:[#allocation5 + $0xa8] sm:$0xff]
    %v2382 = vld [vmem:[#allocation5 + $0xb0] sm:$0xff]
    %v2383 = vld [vmem:[#allocation5 + $0xb8] sm:$0xff]
    %v2384 = vld [vmem:[#allocation5 + $0xc0] sm:$0xff]
    %v2385 = vld [vmem:[#allocation5 + $0xc8] sm:$0xff]
    %v2386 = vld [vmem:[#allocation5 + $0xd0] sm:$0xff]
    %v2387 = vld [vmem:[#allocation5 + $0xd8] sm:$0xff]
    %v2388 = vld [vmem:[#allocation5 + $0xe0] sm:$0xff]
    %v2389 = vld [vmem:[#allocation5 + $0xe8] sm:$0xff]
    %v2390 = vld [vmem:[#allocation5 + $0xf0] sm:$0xff]
    %v2391 = vld [vmem:[#allocation5 + $0xf8] sm:$0xff]
    %v2392 = vld [vmem:[%s11] sm:$0xf]
    %v2394 = vlaneseq
    %v2395 = vshrl.u32 %v2394, 7
    %v2396 = vsub.s32 0, %v2395
    %v2397 = vrot.slane %v2392, %v2396
    %v2398 = vlaneseq
    %v2399 = vshrl.u32 %v2398, 7
    %v2400 = vsub.s32 1, %v2399
    %v2401 = vrot.slane %v2392, %v2400
    %v2402 = vlaneseq
    %v2403 = vshrl.u32 %v2402, 7
    %v2404 = vsub.s32 2, %v2403
    %v2405 = vrot.slane %v2392, %v2404
    %v2406 = vlaneseq
    %v2407 = vshrl.u32 %v2406, 7
    %v2408 = vsub.s32 3, %v2407
    %v2409 = vrot.slane %v2392, %v2408
    %v2446 = vunpack.c.l.b16 %v2360
    %v2447 = vunpack.c.h.b16 %v2360
    %v2448 = vunpack.c.l.b16 %v2361
    %v2449 = vunpack.c.h.b16 %v2361
    %v2450 = vunpack.c.l.b16 %v2362
    %v2451 = vunpack.c.h.b16 %v2362
    %v2452 = vunpack.c.l.b16 %v2363
    %v2453 = vunpack.c.h.b16 %v2363
    %v2454 = vunpack.c.l.b16 %v2364
    %v2455 = vunpack.c.h.b16 %v2364
    %v2456 = vunpack.c.l.b16 %v2365
    %v2457 = vunpack.c.h.b16 %v2365
    %v2458 = vunpack.c.l.b16 %v2366
    %v2459 = vunpack.c.h.b16 %v2366
    %v2460 = vunpack.c.l.b16 %v2367
    %v2461 = vunpack.c.h.b16 %v2367
    %v2462 = vunpack.c.l.b16 %v2368
    %v2463 = vunpack.c.h.b16 %v2368
    %v2464 = vunpack.c.l.b16 %v2369
    %v2465 = vunpack.c.h.b16 %v2369
    %v2466 = vunpack.c.l.b16 %v2370
    %v2467 = vunpack.c.h.b16 %v2370
    %v2468 = vunpack.c.l.b16 %v2371
    %v2469 = vunpack.c.h.b16 %v2371
    %v2470 = vunpack.c.l.b16 %v2372
    %v2471 = vunpack.c.h.b16 %v2372
    %v2472 = vunpack.c.l.b16 %v2373
    %v2473 = vunpack.c.h.b16 %v2373
    %v2474 = vunpack.c.l.b16 %v2374
    %v2475 = vunpack.c.h.b16 %v2374
    %v2476 = vunpack.c.l.b16 %v2375
    %v2477 = vunpack.c.h.b16 %v2375
    %v2478 = vunpack.c.l.b16 %v2376
    %v2479 = vunpack.c.h.b16 %v2376
    %v2480 = vunpack.c.l.b16 %v2377
    %v2481 = vunpack.c.h.b16 %v2377
    %v2482 = vunpack.c.l.b16 %v2378
    %v2483 = vunpack.c.h.b16 %v2378
    %v2484 = vunpack.c.l.b16 %v2379
    %v2485 = vunpack.c.h.b16 %v2379
    %v2486 = vunpack.c.l.b16 %v2380
    %v2487 = vunpack.c.h.b16 %v2380
    %v2488 = vunpack.c.l.b16 %v2381
    %v2489 = vunpack.c.h.b16 %v2381
    %v2490 = vunpack.c.l.b16 %v2382
    %v2491 = vunpack.c.h.b16 %v2382
    %v2492 = vunpack.c.l.b16 %v2383
    %v2493 = vunpack.c.h.b16 %v2383
    %v2494 = vunpack.c.l.b16 %v2384
    %v2495 = vunpack.c.h.b16 %v2384
    %v2496 = vunpack.c.l.b16 %v2385
    %v2497 = vunpack.c.h.b16 %v2385
    %v2498 = vunpack.c.l.b16 %v2386
    %v2499 = vunpack.c.h.b16 %v2386
    %v2500 = vunpack.c.l.b16 %v2387
    %v2501 = vunpack.c.h.b16 %v2387
    %v2502 = vunpack.c.l.b16 %v2388
    %v2503 = vunpack.c.h.b16 %v2388
    %v2504 = vunpack.c.l.b16 %v2389
    %v2505 = vunpack.c.h.b16 %v2389
    %v2506 = vunpack.c.l.b16 %v2390
    %v2507 = vunpack.c.h.b16 %v2390
    %v2508 = vunpack.c.l.b16 %v2391
    %v2509 = vunpack.c.h.b16 %v2391
    %v2510 = vpack.c.b16 %v2450, %v2446
    %v2511 = vpack.c.b16 %v2451, %v2447
    %v2512 = vpack.c.b16 %v2452, %v2448
    %v2513 = vpack.c.b16 %v2453, %v2449
    %v2514 = vpack.c.b16 %v2458, %v2454
    %v2515 = vpack.c.b16 %v2459, %v2455
    %v2516 = vpack.c.b16 %v2460, %v2456
    %v2517 = vpack.c.b16 %v2461, %v2457
    %v2518 = vpack.c.b16 %v2466, %v2462
    %v2519 = vpack.c.b16 %v2467, %v2463
    %v2520 = vpack.c.b16 %v2468, %v2464
    %v2521 = vpack.c.b16 %v2469, %v2465
    %v2522 = vpack.c.b16 %v2474, %v2470
    %v2523 = vpack.c.b16 %v2475, %v2471
    %v2524 = vpack.c.b16 %v2476, %v2472
    %v2525 = vpack.c.b16 %v2477, %v2473
    %v2526 = vpack.c.b16 %v2482, %v2478
    %v2527 = vpack.c.b16 %v2483, %v2479
    %v2528 = vpack.c.b16 %v2484, %v2480
    %v2529 = vpack.c.b16 %v2485, %v2481
    %v2530 = vpack.c.b16 %v2490, %v2486
    %v2531 = vpack.c.b16 %v2491, %v2487
    %v2532 = vpack.c.b16 %v2492, %v2488
    %v2533 = vpack.c.b16 %v2493, %v2489
    %v2534 = vpack.c.b16 %v2498, %v2494
    %v2535 = vpack.c.b16 %v2499, %v2495
    %v2536 = vpack.c.b16 %v2500, %v2496
    %v2537 = vpack.c.b16 %v2501, %v2497
    %v2538 = vpack.c.b16 %v2506, %v2502
    %v2539 = vpack.c.b16 %v2507, %v2503
    %v2540 = vpack.c.b16 %v2508, %v2504
    %v2541 = vpack.c.b16 %v2509, %v2505
    %2574 = vmatprep.subr.bf16.mxu0 %v2511
    %2575 = vmatpush1.bf16.msra.mxu0 %v2510
    %2576 = vmatprep.subr.bf16.mxu0 %v2515
    %2577 = vmatpush1.bf16.msra.mxu0 %v2514
    %2578 = vmatprep.subr.bf16.mxu0 %v2519
    %2579 = vmatpush1.bf16.msra.mxu0 %v2518
    %2580 = vmatprep.subr.bf16.mxu0 %v2523
    %2581 = vmatpush1.bf16.msra.mxu0 %v2522
    %2582 = vmatprep.subr.bf16.mxu0 %v2527
    %2583 = vmatpush1.bf16.msra.mxu0 %v2526
    %2584 = vmatprep.subr.bf16.mxu0 %v2531
    %2585 = vmatpush1.bf16.msra.mxu0 %v2530
    %2586 = vmatprep.subr.bf16.mxu0 %v2535
    %2587 = vmatpush1.bf16.msra.mxu0 %v2534
    %2588 = vmatprep.subr.bf16.mxu0 %v2539
    %2589 = vmatpush1.bf16.msra.mxu0 %v2538
    %2590 = vmatprep.subr.bf16.mxu0 0
    %2591 = vmatpush1.bf16.msra.mxu0 0
    %2592 = vmatprep.subr.bf16.mxu0 0
    %2593 = vmatpush1.bf16.msra.mxu0 0
    %2594 = vmatprep.subr.bf16.mxu0 0
    %2595 = vmatpush1.bf16.msra.mxu0 0
    %2596 = vmatprep.subr.bf16.mxu0 0
    %2597 = vmatpush1.bf16.msra.mxu0 0
    %2598 = vmatprep.subr.bf16.mxu0 0
    %2599 = vmatpush1.bf16.msra.mxu0 0
    %2600 = vmatprep.subr.bf16.mxu0 0
    %2601 = vmatpush1.bf16.msra.mxu0 0
    %2602 = vmatprep.subr.bf16.mxu0 0
    %2603 = vmatpush1.bf16.msra.mxu0 0
    %2604 = vmatprep.subr.bf16.mxu0 0
    %2605 = vmatpush1.bf16.msra.mxu0 0
    %2606 = vmatprep.mubr.bf16.mxu0 0
    %2607 = vmatmul.mubr.bf16.gmra.mrb[0].mxu0 %v2356
    %v2608 = vpop.f32.mrb[0].mxu0
    %v2609 = vadd.f32 %v2397, %v2608
    %v2610 = vpop.f32.mrb[0].mxu0
    %v2611 = vadd.f32 %v2401, %v2610
    %v2612 = vpop.f32.mrb[0].mxu0
    %v2613 = vadd.f32 %v2397, %v2612
    %v2614 = vpop.f32.mrb[0].mxu0
    %v2615 = vadd.f32 %v2401, %v2614
    %2616 = vmatprep.mubr.bf16.mxu0 0
    %2617 = vmatmul.mubr.bf16.gmra.mrb[0].mxu0 %v2357
    %v2618 = vpop.f32.mrb[0].mxu0
    %v2619 = vadd.f32 %v2397, %v2618
    %v2620 = vpop.f32.mrb[0].mxu0
    %v2621 = vadd.f32 %v2401, %v2620
    %v2622 = vpop.f32.mrb[0].mxu0
    %v2623 = vadd.f32 %v2397, %v2622
    %v2624 = vpop.f32.mrb[0].mxu0
    %v2625 = vadd.f32 %v2401, %v2624
    %2626 = vmatprep.mubr.bf16.mxu0 0
    %2627 = vmatmul.mubr.bf16.gmra.mrb[0].mxu0 %v2358
    %v2628 = vpop.f32.mrb[0].mxu0
    %v2629 = vadd.f32 %v2397, %v2628
    %v2630 = vpop.f32.mrb[0].mxu0
    %v2631 = vadd.f32 %v2401, %v2630
    %v2632 = vpop.f32.mrb[0].mxu0
    %v2633 = vadd.f32 %v2397, %v2632
    %v2634 = vpop.f32.mrb[0].mxu0
    %v2635 = vadd.f32 %v2401, %v2634
    %2636 = vmatprep.mubr.bf16.mxu0 0
    %2637 = vmatmul.mubr.bf16.gmra.mrb[0].mxu0 %v2359
    %v2638 = vpop.f32.mrb[0].mxu0
    %v2639 = vadd.f32 %v2397, %v2638
    %v2640 = vpop.f32.mrb[0].mxu0
    %v2641 = vadd.f32 %v2401, %v2640
    %v2642 = vpop.f32.mrb[0].mxu0
    %v2643 = vadd.f32 %v2397, %v2642
    %v2644 = vpop.f32.mrb[0].mxu0
    %v2645 = vadd.f32 %v2401, %v2644
    %2646 = vdwg.mxu0
    %2647 = vmatprep.subr.bf16.mxu0 %v2513
    %2648 = vmatpush1.bf16.msra.mxu0 %v2512
    %2649 = vmatprep.subr.bf16.mxu0 %v2517
    %2650 = vmatpush1.bf16.msra.mxu0 %v2516
    %2651 = vmatprep.subr.bf16.mxu0 %v2521
    %2652 = vmatpush1.bf16.msra.mxu0 %v2520
    %2653 = vmatprep.subr.bf16.mxu0 %v2525
    %2654 = vmatpush1.bf16.msra.mxu0 %v2524
    %2655 = vmatprep.subr.bf16.mxu0 %v2529
    %2656 = vmatpush1.bf16.msra.mxu0 %v2528
    %2657 = vmatprep.subr.bf16.mxu0 %v2533
    %2658 = vmatpush1.bf16.msra.mxu0 %v2532
    %2659 = vmatprep.subr.bf16.mxu0 %v2537
    %2660 = vmatpush1.bf16.msra.mxu0 %v2536
    %2661 = vmatprep.subr.bf16.mxu0 %v2541
    %2662 = vmatpush1.bf16.msra.mxu0 %v2540
    %2663 = vmatprep.subr.bf16.mxu0 0
    %2664 = vmatpush1.bf16.msra.mxu0 0
    %2665 = vmatprep.subr.bf16.mxu0 0
    %2666 = vmatpush1.bf16.msra.mxu0 0
    %2667 = vmatprep.subr.bf16.mxu0 0
    %2668 = vmatpush1.bf16.msra.mxu0 0
    %2669 = vmatprep.subr.bf16.mxu0 0
    %2670 = vmatpush1.bf16.msra.mxu0 0
    %2671 = vmatprep.subr.bf16.mxu0 0
    %2672 = vmatpush1.bf16.msra.mxu0 0
    %2673 = vmatprep.subr.bf16.mxu0 0
    %2674 = vmatpush1.bf16.msra.mxu0 0
    %2675 = vmatprep.subr.bf16.mxu0 0
    %2676 = vmatpush1.bf16.msra.mxu0 0
    %2677 = vmatprep.subr.bf16.mxu0 0
    %2678 = vmatpush1.bf16.msra.mxu0 0
    %2679 = vmatprep.mubr.bf16.mxu0 0
    %2680 = vmatmul.mubr.bf16.gmra.mrb[0].mxu0 %v2356
    %v2681 = vpop.f32.mrb[0].mxu0
    %v2682 = vadd.f32 %v2405, %v2681
    %v2683 = vpop.f32.mrb[0].mxu0
    %v2684 = vadd.f32 %v2409, %v2683
    %v2685 = vpop.f32.mrb[0].mxu0
    %v2686 = vadd.f32 %v2405, %v2685
    %v2687 = vpop.f32.mrb[0].mxu0
    %v2688 = vadd.f32 %v2409, %v2687
    %2689 = vmatprep.mubr.bf16.mxu0 0
    %2690 = vmatmul.mubr.bf16.gmra.mrb[0].mxu0 %v2357
    %v2691 = vpop.f32.mrb[0].mxu0
    %v2692 = vadd.f32 %v2405, %v2691
    %v2693 = vpop.f32.mrb[0].mxu0
    %v2694 = vadd.f32 %v2409, %v2693
    %v2695 = vpop.f32.mrb[0].mxu0
    %v2696 = vadd.f32 %v2405, %v2695
    %v2697 = vpop.f32.mrb[0].mxu0
    %v2698 = vadd.f32 %v2409, %v2697
    %2699 = vmatprep.mubr.bf16.mxu0 0
    %2700 = vmatmul.mubr.bf16.gmra.mrb[0].mxu0 %v2358
    %v2701 = vpop.f32.mrb[0].mxu0
    %v2702 = vadd.f32 %v2405, %v2701
    %v2703 = vpop.f32.mrb[0].mxu0
    %v2704 = vadd.f32 %v2409, %v2703
    %v2705 = vpop.f32.mrb[0].mxu0
    %v2706 = vadd.f32 %v2405, %v2705
    %v2707 = vpop.f32.mrb[0].mxu0
    %v2708 = vadd.f32 %v2409, %v2707
    %2709 = vmatprep.mubr.bf16.mxu0 0
    %2710 = vmatmul.mubr.bf16.gmra.mrb[0].mxu0 %v2359
    %v2711 = vpop.f32.mrb[0].mxu0
    %v2712 = vadd.f32 %v2405, %v2711
    %v2713 = vpop.f32.mrb[0].mxu0
    %v2714 = vadd.f32 %v2409, %v2713
    %v2715 = vpop.f32.mrb[0].mxu0
    %v2716 = vadd.f32 %v2405, %v2715
    %v2717 = vpop.f32.mrb[0].mxu0
    %v2718 = vadd.f32 %v2409, %v2717
    %2719 = vdwg.mxu0
    %v2720 = vmax.f32 %v2609, 0.0
    %v2721 = vmax.f32 %v2611, 0.0
    %v2722 = vmax.f32 %v2682, 0.0
    %v2723 = vmax.f32 %v2684, 0.0
    %v2724 = vmax.f32 %v2613, 0.0
    %v2725 = vmax.f32 %v2615, 0.0
    %v2726 = vmax.f32 %v2686, 0.0
    %v2727 = vmax.f32 %v2688, 0.0
    %v2728 = vmax.f32 %v2619, 0.0
    %v2729 = vmax.f32 %v2621, 0.0
    %v2730 = vmax.f32 %v2692, 0.0
    %v2731 = vmax.f32 %v2694, 0.0
    %v2732 = vmax.f32 %v2623, 0.0
    %v2733 = vmax.f32 %v2625, 0.0
    %v2734 = vmax.f32 %v2696, 0.0
    %v2735 = vmax.f32 %v2698, 0.0
    %v2736 = vmax.f32 %v2629, 0.0
    %v2737 = vmax.f32 %v2631, 0.0
    %v2738 = vmax.f32 %v2702, 0.0
    %v2739 = vmax.f32 %v2704, 0.0
    %v2740 = vmax.f32 %v2633, 0.0
    %v2741 = vmax.f32 %v2635, 0.0
    %v2742 = vmax.f32 %v2706, 0.0
    %v2743 = vmax.f32 %v2708, 0.0
    %v2744 = vmax.f32 %v2639, 0.0
    %v2745 = vmax.f32 %v2641, 0.0
    %v2746 = vmax.f32 %v2712, 0.0
    %v2747 = vmax.f32 %v2714, 0.0
    %v2748 = vmax.f32 %v2643, 0.0
    %v2749 = vmax.f32 %v2645, 0.0
    %v2750 = vmax.f32 %v2716, 0.0
    %v2751 = vmax.f32 %v2718, 0.0
    %v2752 = vpack.c.bf16 %v2724, %v2720
    %v2753 = vpack.c.bf16 %v2725, %v2721
    %v2754 = vpack.c.bf16 %v2726, %v2722
    %v2755 = vpack.c.bf16 %v2727, %v2723
    %v2756 = vpack.c.bf16 %v2732, %v2728
    %v2757 = vpack.c.bf16 %v2733, %v2729
    %v2758 = vpack.c.bf16 %v2734, %v2730
    %v2759 = vpack.c.bf16 %v2735, %v2731
    %v2760 = vpack.c.bf16 %v2740, %v2736
    %v2761 = vpack.c.bf16 %v2741, %v2737
    %v2762 = vpack.c.bf16 %v2742, %v2738
    %v2763 = vpack.c.bf16 %v2743, %v2739
    %v2764 = vpack.c.bf16 %v2748, %v2744
    %v2765 = vpack.c.bf16 %v2749, %v2745
    %v2766 = vpack.c.bf16 %v2750, %v2746
    %v2767 = vpack.c.bf16 %v2751, %v2747
    %v2768 = vld [vmem:[#allocation7] sm:$0xf]
    %v2769 = vld [vmem:[#allocation7 + $0x4] sm:$0xf]
    %v2770 = vld [vmem:[#allocation7 + $0x8] sm:$0xf]
    %v2771 = vld [vmem:[#allocation7 + $0xc] sm:$0xf]
    %v2772 = vld [vmem:[#allocation7 + $0x10] sm:$0xf]
    %v2773 = vld [vmem:[#allocation7 + $0x14] sm:$0xf]
    %v2774 = vld [vmem:[#allocation7 + $0x18] sm:$0xf]
    %v2775 = vld [vmem:[#allocation7 + $0x1c] sm:$0xf]
    %v2776 = vld [vmem:[#allocation7 + $0x20] sm:$0xf]
    %v2777 = vld [vmem:[#allocation7 + $0x24] sm:$0xf]
    %v2778 = vld [vmem:[#allocation7 + $0x28] sm:$0xf]
    %v2779 = vld [vmem:[#allocation7 + $0x2c] sm:$0xf]
    %v2780 = vld [vmem:[#allocation7 + $0x30] sm:$0xf]
    %v2781 = vld [vmem:[#allocation7 + $0x34] sm:$0xf]
    %v2782 = vld [vmem:[#allocation7 + $0x38] sm:$0xf]
    %v2783 = vld [vmem:[#allocation7 + $0x3c] sm:$0xf]
    %v2784 = vld [vmem:[#allocation7 + $0x40] sm:$0xf]
    %v2785 = vld [vmem:[#allocation7 + $0x44] sm:$0xf]
    %v2786 = vld [vmem:[#allocation7 + $0x48] sm:$0xf]
    %v2787 = vld [vmem:[#allocation7 + $0x4c] sm:$0xf]
    %v2788 = vld [vmem:[#allocation7 + $0x50] sm:$0xf]
    %v2789 = vld [vmem:[#allocation7 + $0x54] sm:$0xf]
    %v2790 = vld [vmem:[#allocation7 + $0x58] sm:$0xf]
    %v2791 = vld [vmem:[#allocation7 + $0x5c] sm:$0xf]
    %v2792 = vld [vmem:[#allocation7 + $0x60] sm:$0xf]
    %v2793 = vld [vmem:[#allocation7 + $0x64] sm:$0xf]
    %v2794 = vld [vmem:[#allocation7 + $0x68] sm:$0xf]
    %v2795 = vld [vmem:[#allocation7 + $0x6c] sm:$0xf]
    %v2796 = vld [vmem:[#allocation7 + $0x70] sm:$0xf]
    %v2797 = vld [vmem:[#allocation7 + $0x74] sm:$0xf]
    %v2798 = vld [vmem:[#allocation7 + $0x78] sm:$0xf]
    %v2799 = vld [vmem:[#allocation7 + $0x7c] sm:$0xf]
    %v2800 = vld [vmem:[#allocation7 + $0x80] sm:$0xf]
    %v2801 = vld [vmem:[#allocation7 + $0x84] sm:$0xf]
    %v2802 = vld [vmem:[#allocation7 + $0x88] sm:$0xf]
    %v2803 = vld [vmem:[#allocation7 + $0x8c] sm:$0xf]
    %v2804 = vld [vmem:[#allocation7 + $0x90] sm:$0xf]
    %v2805 = vld [vmem:[#allocation7 + $0x94] sm:$0xf]
    %v2806 = vld [vmem:[#allocation7 + $0x98] sm:$0xf]
    %v2807 = vld [vmem:[#allocation7 + $0x9c] sm:$0xf]
    %v2808 = vld [vmem:[#allocation7 + $0xa0] sm:$0xf]
    %v2809 = vld [vmem:[#allocation7 + $0xa4] sm:$0xf]
    %v2810 = vld [vmem:[#allocation7 + $0xa8] sm:$0xf]
    %v2811 = vld [vmem:[#allocation7 + $0xac] sm:$0xf]
    %v2812 = vld [vmem:[#allocation7 + $0xb0] sm:$0xf]
    %v2813 = vld [vmem:[#allocation7 + $0xb4] sm:$0xf]
    %v2814 = vld [vmem:[#allocation7 + $0xb8] sm:$0xf]
    %v2815 = vld [vmem:[#allocation7 + $0xbc] sm:$0xf]
    %v2816 = vld [vmem:[#allocation7 + $0xc0] sm:$0xf]
    %v2817 = vld [vmem:[#allocation7 + $0xc4] sm:$0xf]
    %v2818 = vld [vmem:[#allocation7 + $0xc8] sm:$0xf]
    %v2819 = vld [vmem:[#allocation7 + $0xcc] sm:$0xf]
    %v2820 = vld [vmem:[#allocation7 + $0xd0] sm:$0xf]
    %v2821 = vld [vmem:[#allocation7 + $0xd4] sm:$0xf]
    %v2822 = vld [vmem:[#allocation7 + $0xd8] sm:$0xf]
    %v2823 = vld [vmem:[#allocation7 + $0xdc] sm:$0xf]
    %v2824 = vld [vmem:[#allocation7 + $0xe0] sm:$0xf]
    %v2825 = vld [vmem:[#allocation7 + $0xe4] sm:$0xf]
    %v2826 = vld [vmem:[#allocation7 + $0xe8] sm:$0xf]
    %v2827 = vld [vmem:[#allocation7 + $0xec] sm:$0xf]
    %v2828 = vld [vmem:[#allocation7 + $0xf0] sm:$0xf]
    %v2829 = vld [vmem:[#allocation7 + $0xf4] sm:$0xf]
    %v2830 = vld [vmem:[#allocation7 + $0xf8] sm:$0xf]
    %v2831 = vld [vmem:[#allocation7 + $0xfc] sm:$0xf]
    %v2896 = vunpack.c.l.b16 %v2768
    %v2897 = vunpack.c.l.b16 %v2769
    %v2898 = vunpack.c.l.b16 %v2770
    %v2899 = vunpack.c.l.b16 %v2771
    %v2900 = vunpack.c.l.b16 %v2772
    %v2901 = vunpack.c.l.b16 %v2773
    %v2902 = vunpack.c.l.b16 %v2774
    %v2903 = vunpack.c.l.b16 %v2775
    %v2904 = vunpack.c.l.b16 %v2776
    %v2905 = vunpack.c.l.b16 %v2777
    %v2906 = vunpack.c.l.b16 %v2778
    %v2907 = vunpack.c.l.b16 %v2779
    %v2908 = vunpack.c.l.b16 %v2780
    %v2909 = vunpack.c.l.b16 %v2781
    %v2910 = vunpack.c.l.b16 %v2782
    %v2911 = vunpack.c.l.b16 %v2783
    %v2912 = vunpack.c.l.b16 %v2784
    %v2913 = vunpack.c.l.b16 %v2785
    %v2914 = vunpack.c.l.b16 %v2786
    %v2915 = vunpack.c.l.b16 %v2787
    %v2916 = vunpack.c.l.b16 %v2788
    %v2917 = vunpack.c.l.b16 %v2789
    %v2918 = vunpack.c.l.b16 %v2790
    %v2919 = vunpack.c.l.b16 %v2791
    %v2920 = vunpack.c.l.b16 %v2792
    %v2921 = vunpack.c.l.b16 %v2793
    %v2922 = vunpack.c.l.b16 %v2794
    %v2923 = vunpack.c.l.b16 %v2795
    %v2924 = vunpack.c.l.b16 %v2796
    %v2925 = vunpack.c.l.b16 %v2797
    %v2926 = vunpack.c.l.b16 %v2798
    %v2927 = vunpack.c.l.b16 %v2799
    %v2928 = vunpack.c.l.b16 %v2800
    %v2929 = vunpack.c.l.b16 %v2801
    %v2930 = vunpack.c.l.b16 %v2802
    %v2931 = vunpack.c.l.b16 %v2803
    %v2932 = vunpack.c.l.b16 %v2804
    %v2933 = vunpack.c.l.b16 %v2805
    %v2934 = vunpack.c.l.b16 %v2806
    %v2935 = vunpack.c.l.b16 %v2807
    %v2936 = vunpack.c.l.b16 %v2808
    %v2937 = vunpack.c.l.b16 %v2809
    %v2938 = vunpack.c.l.b16 %v2810
    %v2939 = vunpack.c.l.b16 %v2811
    %v2940 = vunpack.c.l.b16 %v2812
    %v2941 = vunpack.c.l.b16 %v2813
    %v2942 = vunpack.c.l.b16 %v2814
    %v2943 = vunpack.c.l.b16 %v2815
    %v2944 = vunpack.c.l.b16 %v2816
    %v2945 = vunpack.c.l.b16 %v2817
    %v2946 = vunpack.c.l.b16 %v2818
    %v2947 = vunpack.c.l.b16 %v2819
    %v2948 = vunpack.c.l.b16 %v2820
    %v2949 = vunpack.c.l.b16 %v2821
    %v2950 = vunpack.c.l.b16 %v2822
    %v2951 = vunpack.c.l.b16 %v2823
    %v2952 = vunpack.c.l.b16 %v2824
    %v2953 = vunpack.c.l.b16 %v2825
    %v2954 = vunpack.c.l.b16 %v2826
    %v2955 = vunpack.c.l.b16 %v2827
    %v2956 = vunpack.c.l.b16 %v2828
    %v2957 = vunpack.c.l.b16 %v2829
    %v2958 = vunpack.c.l.b16 %v2830
    %v2959 = vunpack.c.l.b16 %v2831
    %v2960 = vpack.c.b16 %v2897, %v2896
    %v2961 = vpack.c.b16 %v2899, %v2898
    %v2962 = vpack.c.b16 %v2901, %v2900
    %v2963 = vpack.c.b16 %v2903, %v2902
    %v2964 = vpack.c.b16 %v2905, %v2904
    %v2965 = vpack.c.b16 %v2907, %v2906
    %v2966 = vpack.c.b16 %v2909, %v2908
    %v2967 = vpack.c.b16 %v2911, %v2910
    %v2968 = vpack.c.b16 %v2913, %v2912
    %v2969 = vpack.c.b16 %v2915, %v2914
    %v2970 = vpack.c.b16 %v2917, %v2916
    %v2971 = vpack.c.b16 %v2919, %v2918
    %v2972 = vpack.c.b16 %v2921, %v2920
    %v2973 = vpack.c.b16 %v2923, %v2922
    %v2974 = vpack.c.b16 %v2925, %v2924
    %v2975 = vpack.c.b16 %v2927, %v2926
    %v2976 = vpack.c.b16 %v2929, %v2928
    %v2977 = vpack.c.b16 %v2931, %v2930
    %v2978 = vpack.c.b16 %v2933, %v2932
    %v2979 = vpack.c.b16 %v2935, %v2934
    %v2980 = vpack.c.b16 %v2937, %v2936
    %v2981 = vpack.c.b16 %v2939, %v2938
    %v2982 = vpack.c.b16 %v2941, %v2940
    %v2983 = vpack.c.b16 %v2943, %v2942
    %v2984 = vpack.c.b16 %v2945, %v2944
    %v2985 = vpack.c.b16 %v2947, %v2946
    %v2986 = vpack.c.b16 %v2949, %v2948
    %v2987 = vpack.c.b16 %v2951, %v2950
    %v2988 = vpack.c.b16 %v2953, %v2952
    %v2989 = vpack.c.b16 %v2955, %v2954
    %v2990 = vpack.c.b16 %v2957, %v2956
    %v2991 = vpack.c.b16 %v2959, %v2958
    %3024 = vmatprep.subr.bf16.mxu0 0
    %3025 = vmatpush1.bf16.msra.mxu0 %v2960
    %3026 = vmatprep.subr.bf16.mxu0 0
    %3027 = vmatpush1.bf16.msra.mxu0 %v2961
    %3028 = vmatprep.subr.bf16.mxu0 0
    %3029 = vmatpush1.bf16.msra.mxu0 %v2962
    %3030 = vmatprep.subr.bf16.mxu0 0
    %3031 = vmatpush1.bf16.msra.mxu0 %v2963
    %3032 = vmatprep.subr.bf16.mxu0 0
    %3033 = vmatpush1.bf16.msra.mxu0 %v2964
    %3034 = vmatprep.subr.bf16.mxu0 0
    %3035 = vmatpush1.bf16.msra.mxu0 %v2965
    %3036 = vmatprep.subr.bf16.mxu0 0
    %3037 = vmatpush1.bf16.msra.mxu0 %v2966
    %3038 = vmatprep.subr.bf16.mxu0 0
    %3039 = vmatpush1.bf16.msra.mxu0 %v2967
    %3040 = vmatprep.subr.bf16.mxu0 0
    %3041 = vmatpush1.bf16.msra.mxu0 %v2968
    %3042 = vmatprep.subr.bf16.mxu0 0
    %3043 = vmatpush1.bf16.msra.mxu0 %v2969
    %3044 = vmatprep.subr.bf16.mxu0 0
    %3045 = vmatpush1.bf16.msra.mxu0 %v2970
    %3046 = vmatprep.subr.bf16.mxu0 0
    %3047 = vmatpush1.bf16.msra.mxu0 %v2971
    %3048 = vmatprep.subr.bf16.mxu0 0
    %3049 = vmatpush1.bf16.msra.mxu0 %v2972
    %3050 = vmatprep.subr.bf16.mxu0 0
    %3051 = vmatpush1.bf16.msra.mxu0 %v2973
    %3052 = vmatprep.subr.bf16.mxu0 0
    %3053 = vmatpush1.bf16.msra.mxu0 %v2974
    %3054 = vmatprep.subr.bf16.mxu0 0
    %3055 = vmatpush1.bf16.msra.mxu0 %v2975
    %3056 = vmatprep.mubr.bf16.mxu0 %v2753
    %3057 = vmatmul.mubr.bf16.gmra.mrb[0].mxu0 %v2752
    %v3058 = vpop.f32.mrb[0].mxu0
    %v3059 = vadd.f32 0.0, %v3058
    %v3060 = vpop.f32.mrb[0].mxu0
    %v3061 = vpop.f32.mrb[0].mxu0
    %v3062 = vadd.f32 0.0, %v3061
    %v3063 = vpop.f32.mrb[0].mxu0
    %3064 = vmatprep.mubr.bf16.mxu0 %v2757
    %3065 = vmatmul.mubr.bf16.gmra.mrb[0].mxu0 %v2756
    %v3066 = vpop.f32.mrb[0].mxu0
    %v3067 = vadd.f32 0.0, %v3066
    %v3068 = vpop.f32.mrb[0].mxu0
    %v3069 = vpop.f32.mrb[0].mxu0
    %v3070 = vadd.f32 0.0, %v3069
    %v3071 = vpop.f32.mrb[0].mxu0
    %3072 = vmatprep.mubr.bf16.mxu0 %v2761
    %3073 = vmatmul.mubr.bf16.gmra.mrb[0].mxu0 %v2760
    %v3074 = vpop.f32.mrb[0].mxu0
    %v3075 = vadd.f32 0.0, %v3074
    %v3076 = vpop.f32.mrb[0].mxu0
    %v3077 = vpop.f32.mrb[0].mxu0
    %v3078 = vadd.f32 0.0, %v3077
    %v3079 = vpop.f32.mrb[0].mxu0
    %3080 = vmatprep.mubr.bf16.mxu0 %v2765
    %3081 = vmatmul.mubr.bf16.gmra.mrb[0].mxu0 %v2764
    %v3082 = vpop.f32.mrb[0].mxu0
    %v3083 = vadd.f32 0.0, %v3082
    %v3084 = vpop.f32.mrb[0].mxu0
    %v3085 = vpop.f32.mrb[0].mxu0
    %v3086 = vadd.f32 0.0, %v3085
    %v3087 = vpop.f32.mrb[0].mxu0
    %3088 = vdwg.mxu0
    %3089 = vmatprep.subr.bf16.mxu0 0
    %3090 = vmatpush1.bf16.msra.mxu0 %v2976
    %3091 = vmatprep.subr.bf16.mxu0 0
    %3092 = vmatpush1.bf16.msra.mxu0 %v2977
    %3093 = vmatprep.subr.bf16.mxu0 0
    %3094 = vmatpush1.bf16.msra.mxu0 %v2978
    %3095 = vmatprep.subr.bf16.mxu0 0
    %3096 = vmatpush1.bf16.msra.mxu0 %v2979
    %3097 = vmatprep.subr.bf16.mxu0 0
    %3098 = vmatpush1.bf16.msra.mxu0 %v2980
    %3099 = vmatprep.subr.bf16.mxu0 0
    %3100 = vmatpush1.bf16.msra.mxu0 %v2981
    %3101 = vmatprep.subr.bf16.mxu0 0
    %3102 = vmatpush1.bf16.msra.mxu0 %v2982
    %3103 = vmatprep.subr.bf16.mxu0 0
    %3104 = vmatpush1.bf16.msra.mxu0 %v2983
    %3105 = vmatprep.subr.bf16.mxu0 0
    %3106 = vmatpush1.bf16.msra.mxu0 %v2984
    %3107 = vmatprep.subr.bf16.mxu0 0
    %3108 = vmatpush1.bf16.msra.mxu0 %v2985
    %3109 = vmatprep.subr.bf16.mxu0 0
    %3110 = vmatpush1.bf16.msra.mxu0 %v2986
    %3111 = vmatprep.subr.bf16.mxu0 0
    %3112 = vmatpush1.bf16.msra.mxu0 %v2987
    %3113 = vmatprep.subr.bf16.mxu0 0
    %3114 = vmatpush1.bf16.msra.mxu0 %v2988
    %3115 = vmatprep.subr.bf16.mxu0 0
    %3116 = vmatpush1.bf16.msra.mxu0 %v2989
    %3117 = vmatprep.subr.bf16.mxu0 0
    %3118 = vmatpush1.bf16.msra.mxu0 %v2990
    %3119 = vmatprep.subr.bf16.mxu0 0
    %3120 = vmatpush1.bf16.msra.mxu0 %v2991
    %3121 = vmatprep.mubr.bf16.mxu0 %v2755
    %3122 = vmatmul.mubr.bf16.gmra.mrb[0].mxu0 %v2754
    %v3123 = vpop.f32.mrb[0].mxu0
    %v3124 = vadd.f32 %v3059, %v3123
    %v3125 = vpop.f32.mrb[0].mxu0
    %v3126 = vpop.f32.mrb[0].mxu0
    %v3127 = vadd.f32 %v3062, %v3126
    %v3128 = vpop.f32.mrb[0].mxu0
    %3129 = vmatprep.mubr.bf16.mxu0 %v2759
    %3130 = vmatmul.mubr.bf16.gmra.mrb[0].mxu0 %v2758
    %v3131 = vpop.f32.mrb[0].mxu0
    %v3132 = vadd.f32 %v3067, %v3131
    %v3133 = vpop.f32.mrb[0].mxu0
    %v3134 = vpop.f32.mrb[0].mxu0
    %v3135 = vadd.f32 %v3070, %v3134
    %v3136 = vpop.f32.mrb[0].mxu0
    %3137 = vmatprep.mubr.bf16.mxu0 %v2763
    %3138 = vmatmul.mubr.bf16.gmra.mrb[0].mxu0 %v2762
    %v3139 = vpop.f32.mrb[0].mxu0
    %v3140 = vadd.f32 %v3075, %v3139
    %v3141 = vpop.f32.mrb[0].mxu0
    %v3142 = vpop.f32.mrb[0].mxu0
    %v3143 = vadd.f32 %v3078, %v3142
    %v3144 = vpop.f32.mrb[0].mxu0
    %3145 = vmatprep.mubr.bf16.mxu0 %v2767
    %3146 = vmatmul.mubr.bf16.gmra.mrb[0].mxu0 %v2766
    %v3147 = vpop.f32.mrb[0].mxu0
    %v3148 = vadd.f32 %v3083, %v3147
    %v3149 = vpop.f32.mrb[0].mxu0
    %v3150 = vpop.f32.mrb[0].mxu0
    %v3151 = vadd.f32 %v3086, %v3150
    %v3152 = vpop.f32.mrb[0].mxu0
    %3153 = vdwg.mxu0
    %v3154 = vadd.f32 %v2230, %v3124
    %v3155 = vadd.f32 %v2231, %v3127
    %v3156 = vadd.f32 %v2232, %v3132
    %v3157 = vadd.f32 %v2233, %v3135
    %v3158 = vadd.f32 %v2234, %v3140
    %v3159 = vadd.f32 %v2235, %v3143
    %v3160 = vadd.f32 %v2236, %v3148
    %v3161 = vadd.f32 %v2237, %v3151
    %v3162 = vld [vmem:[%s13] sm:$0x1]
    %v3164 = vlaneseq
    %v3165 = vshrl.u32 %v3164, 7
    %v3166 = vsub.s32 0, %v3165
    %v3167 = vrot.slane %v3162, %v3166
    %v3169 = vadd.f32 %v3154, %v3167
    %v3170 = vadd.f32 %v3155, %v3167
    %v3171 = vadd.f32 %v3156, %v3167
    %v3172 = vadd.f32 %v3157, %v3167
    %v3173 = vadd.f32 %v3158, %v3167
    %v3174 = vadd.f32 %v3159, %v3167
    %v3175 = vadd.f32 %v3160, %v3167
    %v3176 = vadd.f32 %v3161, %v3167
    %s3177 = scalar_lea.vmem %s3, 1
    %v3178 = vld [vmem:[%s3177] sm:$0x1]
    %s3179 = scalar_lea.vmem %s4, 1
    %v3180 = vld [vmem:[%s3179] sm:$0x1]
    %3181 = vadd.xlane.f32.xlu0 %v3169
    %v3182 = vpop.xlane.xlu0 %3181
    %3183 = vadd.xlane.f32.xlu0 %v3170
    %v3184 = vpop.xlane.xlu0 %3183
    %3185 = vadd.xlane.f32.xlu0 %v3171
    %v3186 = vpop.xlane.xlu0 %3185
    %3187 = vadd.xlane.f32.xlu0 %v3172
    %v3188 = vpop.xlane.xlu0 %3187
    %3189 = vadd.xlane.f32.xlu0 %v3173
    %v3190 = vpop.xlane.xlu0 %3189
    %3191 = vadd.xlane.f32.xlu0 %v3174
    %v3192 = vpop.xlane.xlu0 %3191
    %3193 = vadd.xlane.f32.xlu0 %v3175
    %v3194 = vpop.xlane.xlu0 %3193
    %3195 = vadd.xlane.f32.xlu0 %v3176
    %v3196 = vpop.xlane.xlu0 %3195
    %v3197 = vmul.f32 %v3182, %v392
    %v3198 = vmul.f32 %v3184, %v392
    %v3199 = vmul.f32 %v3186, %v392
    %v3200 = vmul.f32 %v3188, %v392
    %v3201 = vmul.f32 %v3190, %v392
    %v3202 = vmul.f32 %v3192, %v392
    %v3203 = vmul.f32 %v3194, %v392
    %v3204 = vmul.f32 %v3196, %v392
    %v3205 = vsub.f32 %v3169, %v3197
    %v3206 = vsub.f32 %v3170, %v3198
    %v3207 = vsub.f32 %v3171, %v3199
    %v3208 = vsub.f32 %v3172, %v3200
    %v3209 = vsub.f32 %v3173, %v3201
    %v3210 = vsub.f32 %v3174, %v3202
    %v3211 = vsub.f32 %v3175, %v3203
    %v3212 = vsub.f32 %v3176, %v3204
    %v3213 = vmul.f32 %v3205, %v3205
    %v3214 = vmul.f32 %v3206, %v3206
    %v3215 = vmul.f32 %v3207, %v3207
    %v3216 = vmul.f32 %v3208, %v3208
    %v3217 = vmul.f32 %v3209, %v3209
    %v3218 = vmul.f32 %v3210, %v3210
    %v3219 = vmul.f32 %v3211, %v3211
    %v3220 = vmul.f32 %v3212, %v3212
    %3221 = vadd.xlane.f32.xlu0 %v3213
    %v3222 = vpop.xlane.xlu0 %3221
    %3223 = vadd.xlane.f32.xlu0 %v3214
    %v3224 = vpop.xlane.xlu0 %3223
    %3225 = vadd.xlane.f32.xlu0 %v3215
    %v3226 = vpop.xlane.xlu0 %3225
    %3227 = vadd.xlane.f32.xlu0 %v3216
    %v3228 = vpop.xlane.xlu0 %3227
    %3229 = vadd.xlane.f32.xlu0 %v3217
    %v3230 = vpop.xlane.xlu0 %3229
    %3231 = vadd.xlane.f32.xlu0 %v3218
    %v3232 = vpop.xlane.xlu0 %3231
    %3233 = vadd.xlane.f32.xlu0 %v3219
    %v3234 = vpop.xlane.xlu0 %3233
    %3235 = vadd.xlane.f32.xlu0 %v3220
    %v3236 = vpop.xlane.xlu0 %3235
    %v3237 = vmul.f32 %v3222, %v392
    %v3238 = vmul.f32 %v3224, %v392
    %v3239 = vmul.f32 %v3226, %v392
    %v3240 = vmul.f32 %v3228, %v392
    %v3241 = vmul.f32 %v3230, %v392
    %v3242 = vmul.f32 %v3232, %v392
    %v3243 = vmul.f32 %v3234, %v392
    %v3244 = vmul.f32 %v3236, %v392
    %v3245 = vadd.f32 %v3237, 1e-05
    %v3246 = vadd.f32 %v3238, 1e-05
    %v3247 = vadd.f32 %v3239, 1e-05
    %v3248 = vadd.f32 %v3240, 1e-05
    %v3249 = vadd.f32 %v3241, 1e-05
    %v3250 = vadd.f32 %v3242, 1e-05
    %v3251 = vadd.f32 %v3243, 1e-05
    %v3252 = vadd.f32 %v3244, 1e-05
    %v3253 = vrsqrt.pop %v3245
    %v3254 = vrsqrt.pop %v3246
    %v3255 = vrsqrt.pop %v3247
    %v3256 = vrsqrt.pop %v3248
    %v3257 = vrsqrt.pop %v3249
    %v3258 = vrsqrt.pop %v3250
    %v3259 = vrsqrt.pop %v3251
    %v3260 = vrsqrt.pop %v3252
    %v3261 = vmul.f32 %v3205, %v3253
    %v3262 = vmul.f32 %v3206, %v3254
    %v3263 = vmul.f32 %v3207, %v3255
    %v3264 = vmul.f32 %v3208, %v3256
    %v3265 = vmul.f32 %v3209, %v3257
    %v3266 = vmul.f32 %v3210, %v3258
    %v3267 = vmul.f32 %v3211, %v3259
    %v3268 = vmul.f32 %v3212, %v3260
    %v3270 = vlaneseq
    %v3271 = vshrl.u32 %v3270, 7
    %v3272 = vsub.s32 0, %v3271
    %v3273 = vrot.slane %v3178, %v3272
    %v3275 = vmul.f32 %v3261, %v3273
    %v3276 = vmul.f32 %v3262, %v3273
    %v3277 = vmul.f32 %v3263, %v3273
    %v3278 = vmul.f32 %v3264, %v3273
    %v3279 = vmul.f32 %v3265, %v3273
    %v3280 = vmul.f32 %v3266, %v3273
    %v3281 = vmul.f32 %v3267, %v3273
    %v3282 = vmul.f32 %v3268, %v3273
    %v3284 = vlaneseq
    %v3285 = vshrl.u32 %v3284, 7
    %v3286 = vsub.s32 0, %v3285
    %v3287 = vrot.slane %v3180, %v3286
    %v3289 = vadd.f32 %v3275, %v3287
    %v3290 = vadd.f32 %v3276, %v3287
    %v3291 = vadd.f32 %v3277, %v3287
    %v3292 = vadd.f32 %v3278, %v3287
    %v3293 = vadd.f32 %v3279, %v3287
    %v3294 = vadd.f32 %v3280, %v3287
    %v3295 = vadd.f32 %v3281, %v3287
    %v3296 = vadd.f32 %v3282, %v3287
    %v3297 = vpack.c.bf16 %v3290, %v3289
    %v3298 = vpack.c.bf16 %v3292, %v3291
    %v3299 = vpack.c.bf16 %v3294, %v3293
    %v3300 = vpack.c.bf16 %v3296, %v3295
    %s3301 = scalar_lea.vmem [#allocation2], 192
    %v3302 = vld [vmem:[%s3301] sm:$0xff]
    %v3303 = vld [vmem:[%s3301 + $0x8] sm:$0xf]
    %v3304 = vld [vmem:[%s3301 + $0xc] sm:$0xff]
    %v3305 = vld [vmem:[%s3301 + $0x14] sm:$0xf]
    %v3306 = vld [vmem:[%s3301 + $0x18] sm:$0xff]
    %v3307 = vld [vmem:[%s3301 + $0x20] sm:$0xf]
    %v3308 = vld [vmem:[%s3301 + $0x24] sm:$0xff]
    %v3309 = vld [vmem:[%s3301 + $0x2c] sm:$0xf]
    %v3310 = vld [vmem:[%s3301 + $0x30] sm:$0xff]
    %v3311 = vld [vmem:[%s3301 + $0x38] sm:$0xf]
    %v3312 = vld [vmem:[%s3301 + $0x3c] sm:$0xff]
    %v3313 = vld [vmem:[%s3301 + $0x44] sm:$0xf]
    %v3314 = vld [vmem:[%s3301 + $0x48] sm:$0xff]
    %v3315 = vld [vmem:[%s3301 + $0x50] sm:$0xf]
    %v3316 = vld [vmem:[%s3301 + $0x54] sm:$0xff]
    %v3317 = vld [vmem:[%s3301 + $0x5c] sm:$0xf]
    %v3318 = vld [vmem:[%s3301 + $0x60] sm:$0xff]
    %v3319 = vld [vmem:[%s3301 + $0x68] sm:$0xf]
    %v3320 = vld [vmem:[%s3301 + $0x6c] sm:$0xff]
    %v3321 = vld [vmem:[%s3301 + $0x74] sm:$0xf]
    %v3322 = vld [vmem:[%s3301 + $0x78] sm:$0xff]
    %v3323 = vld [vmem:[%s3301 + $0x80] sm:$0xf]
    %v3324 = vld [vmem:[%s3301 + $0x84] sm:$0xff]
    %v3325 = vld [vmem:[%s3301 + $0x8c] sm:$0xf]
    %v3326 = vld [vmem:[%s3301 + $0x90] sm:$0xff]
    %v3327 = vld [vmem:[%s3301 + $0x98] sm:$0xf]
    %v3328 = vld [vmem:[%s3301 + $0x9c] sm:$0xff]
    %v3329 = vld [vmem:[%s3301 + $0xa4] sm:$0xf]
    %v3330 = vld [vmem:[%s3301 + $0xa8] sm:$0xff]
    %v3331 = vld [vmem:[%s3301 + $0xb0] sm:$0xf]
    %v3332 = vld [vmem:[%s3301 + $0xb4] sm:$0xff]
    %v3333 = vld [vmem:[%s3301 + $0xbc] sm:$0xf]
    %v3366 = vunpack.c.l.b16 %v3302
    %v3367 = vunpack.c.h.b16 %v3302
    %v3368 = vunpack.c.l.b16 %v3303
    %v3369 = vunpack.c.l.b16 %v3304
    %v3370 = vunpack.c.h.b16 %v3304
    %v3371 = vunpack.c.l.b16 %v3305
    %v3372 = vunpack.c.l.b16 %v3306
    %v3373 = vunpack.c.h.b16 %v3306
    %v3374 = vunpack.c.l.b16 %v3307
    %v3375 = vunpack.c.l.b16 %v3308
    %v3376 = vunpack.c.h.b16 %v3308
    %v3377 = vunpack.c.l.b16 %v3309
    %v3378 = vunpack.c.l.b16 %v3310
    %v3379 = vunpack.c.h.b16 %v3310
    %v3380 = vunpack.c.l.b16 %v3311
    %v3381 = vunpack.c.l.b16 %v3312
    %v3382 = vunpack.c.h.b16 %v3312
    %v3383 = vunpack.c.l.b16 %v3313
    %v3384 = vunpack.c.l.b16 %v3314
    %v3385 = vunpack.c.h.b16 %v3314
    %v3386 = vunpack.c.l.b16 %v3315
    %v3387 = vunpack.c.l.b16 %v3316
    %v3388 = vunpack.c.h.b16 %v3316
    %v3389 = vunpack.c.l.b16 %v3317
    %v3390 = vunpack.c.l.b16 %v3318
    %v3391 = vunpack.c.h.b16 %v3318
    %v3392 = vunpack.c.l.b16 %v3319
    %v3393 = vunpack.c.l.b16 %v3320
    %v3394 = vunpack.c.h.b16 %v3320
    %v3395 = vunpack.c.l.b16 %v3321
    %v3396 = vunpack.c.l.b16 %v3322
    %v3397 = vunpack.c.h.b16 %v3322
    %v3398 = vunpack.c.l.b16 %v3323
    %v3399 = vunpack.c.l.b16 %v3324
    %v3400 = vunpack.c.h.b16 %v3324
    %v3401 = vunpack.c.l.b16 %v3325
    %v3402 = vunpack.c.l.b16 %v3326
    %v3403 = vunpack.c.h.b16 %v3326
    %v3404 = vunpack.c.l.b16 %v3327
    %v3405 = vunpack.c.l.b16 %v3328
    %v3406 = vunpack.c.h.b16 %v3328
    %v3407 = vunpack.c.l.b16 %v3329
    %v3408 = vunpack.c.l.b16 %v3330
    %v3409 = vunpack.c.h.b16 %v3330
    %v3410 = vunpack.c.l.b16 %v3331
    %v3411 = vunpack.c.l.b16 %v3332
    %v3412 = vunpack.c.h.b16 %v3332
    %v3413 = vunpack.c.l.b16 %v3333
    %v3414 = vpack.c.b16 %v3369, %v3366
    %v3415 = vpack.c.b16 %v3370, %v3367
    %v3416 = vpack.c.b16 %v3371, %v3368
    %v3417 = vpack.c.b16 %v3375, %v3372
    %v3418 = vpack.c.b16 %v3376, %v3373
    %v3419 = vpack.c.b16 %v3377, %v3374
    %v3420 = vpack.c.b16 %v3381, %v3378
    %v3421 = vpack.c.b16 %v3382, %v3379
    %v3422 = vpack.c.b16 %v3383, %v3380
    %v3423 = vpack.c.b16 %v3387, %v3384
    %v3424 = vpack.c.b16 %v3388, %v3385
    %v3425 = vpack.c.b16 %v3389, %v3386
    %v3426 = vpack.c.b16 %v3393, %v3390
    %v3427 = vpack.c.b16 %v3394, %v3391
    %v3428 = vpack.c.b16 %v3395, %v3392
    %v3429 = vpack.c.b16 %v3399, %v3396
    %v3430 = vpack.c.b16 %v3400, %v3397
    %v3431 = vpack.c.b16 %v3401, %v3398
    %v3432 = vpack.c.b16 %v3405, %v3402
    %v3433 = vpack.c.b16 %v3406, %v3403
    %v3434 = vpack.c.b16 %v3407, %v3404
    %v3435 = vpack.c.b16 %v3411, %v3408
    %v3436 = vpack.c.b16 %v3412, %v3409
    %v3437 = vpack.c.b16 %v3413, %v3410
    %3462 = vmatprep.subr.bf16.mxu0 %v3415
    %3463 = vmatpush1.bf16.msra.mxu0 %v3414
    %3464 = vmatprep.subr.bf16.mxu0 %v3418
    %3465 = vmatpush1.bf16.msra.mxu0 %v3417
    %3466 = vmatprep.subr.bf16.mxu0 %v3421
    %3467 = vmatpush1.bf16.msra.mxu0 %v3420
    %3468 = vmatprep.subr.bf16.mxu0 %v3424
    %3469 = vmatpush1.bf16.msra.mxu0 %v3423
    %3470 = vmatprep.subr.bf16.mxu0 %v3427
    %3471 = vmatpush1.bf16.msra.mxu0 %v3426
    %3472 = vmatprep.subr.bf16.mxu0 %v3430
    %3473 = vmatpush1.bf16.msra.mxu0 %v3429
    %3474 = vmatprep.subr.bf16.mxu0 %v3433
    %3475 = vmatpush1.bf16.msra.mxu0 %v3432
    %3476 = vmatprep.subr.bf16.mxu0 %v3436
    %3477 = vmatpush1.bf16.msra.mxu0 %v3435
    %3478 = vmatprep.subr.bf16.mxu0 0
    %3479 = vmatpush1.bf16.msra.mxu0 0
    %3480 = vmatprep.subr.bf16.mxu0 0
    %3481 = vmatpush1.bf16.msra.mxu0 0
    %3482 = vmatprep.subr.bf16.mxu0 0
    %3483 = vmatpush1.bf16.msra.mxu0 0
    %3484 = vmatprep.subr.bf16.mxu0 0
    %3485 = vmatpush1.bf16.msra.mxu0 0
    %3486 = vmatprep.subr.bf16.mxu0 0
    %3487 = vmatpush1.bf16.msra.mxu0 0
    %3488 = vmatprep.subr.bf16.mxu0 0
    %3489 = vmatpush1.bf16.msra.mxu0 0
    %3490 = vmatprep.subr.bf16.mxu0 0
    %3491 = vmatpush1.bf16.msra.mxu0 0
    %3492 = vmatprep.subr.bf16.mxu0 0
    %3493 = vmatpush1.bf16.msra.mxu0 0
    %3494 = vmatprep.mubr.bf16.mxu0 0
    %3495 = vmatmul.mubr.bf16.gmra.mrb[0].mxu0 %v3297
    %v3496 = vpop.f32.mrb[0].mxu0
    %v3497 = vadd.f32 0.0, %v3496
    %v3498 = vpop.f32.mrb[0].mxu0
    %v3499 = vadd.f32 0.0, %v3498
    %v3500 = vpop.f32.mrb[0].mxu0
    %v3501 = vadd.f32 0.0, %v3500
    %v3502 = vpop.f32.mrb[0].mxu0
    %v3503 = vadd.f32 0.0, %v3502
    %3504 = vmatprep.mubr.bf16.mxu0 0
    %3505 = vmatmul.mubr.bf16.gmra.mrb[0].mxu0 %v3298
    %v3506 = vpop.f32.mrb[0].mxu0
    %v3507 = vadd.f32 0.0, %v3506
    %v3508 = vpop.f32.mrb[0].mxu0
    %v3509 = vadd.f32 0.0, %v3508
    %v3510 = vpop.f32.mrb[0].mxu0
    %v3511 = vadd.f32 0.0, %v3510
    %v3512 = vpop.f32.mrb[0].mxu0
    %v3513 = vadd.f32 0.0, %v3512
    %3514 = vmatprep.mubr.bf16.mxu0 0
    %3515 = vmatmul.mubr.bf16.gmra.mrb[0].mxu0 %v3299
    %v3516 = vpop.f32.mrb[0].mxu0
    %v3517 = vadd.f32 0.0, %v3516
    %v3518 = vpop.f32.mrb[0].mxu0
    %v3519 = vadd.f32 0.0, %v3518
    %v3520 = vpop.f32.mrb[0].mxu0
    %v3521 = vadd.f32 0.0, %v3520
    %v3522 = vpop.f32.mrb[0].mxu0
    %v3523 = vadd.f32 0.0, %v3522
    %3524 = vmatprep.mubr.bf16.mxu0 0
    %3525 = vmatmul.mubr.bf16.gmra.mrb[0].mxu0 %v3300
    %v3526 = vpop.f32.mrb[0].mxu0
    %v3527 = vadd.f32 0.0, %v3526
    %v3528 = vpop.f32.mrb[0].mxu0
    %v3529 = vadd.f32 0.0, %v3528
    %v3530 = vpop.f32.mrb[0].mxu0
    %v3531 = vadd.f32 0.0, %v3530
    %v3532 = vpop.f32.mrb[0].mxu0
    %v3533 = vadd.f32 0.0, %v3532
    %3534 = vdwg.mxu0
    %3535 = vmatprep.subr.bf16.mxu0 0
    %3536 = vmatpush1.bf16.msra.mxu0 %v3416
    %3537 = vmatprep.subr.bf16.mxu0 0
    %3538 = vmatpush1.bf16.msra.mxu0 %v3419
    %3539 = vmatprep.subr.bf16.mxu0 0
    %3540 = vmatpush1.bf16.msra.mxu0 %v3422
    %3541 = vmatprep.subr.bf16.mxu0 0
    %3542 = vmatpush1.bf16.msra.mxu0 %v3425
    %3543 = vmatprep.subr.bf16.mxu0 0
    %3544 = vmatpush1.bf16.msra.mxu0 %v3428
    %3545 = vmatprep.subr.bf16.mxu0 0
    %3546 = vmatpush1.bf16.msra.mxu0 %v3431
    %3547 = vmatprep.subr.bf16.mxu0 0
    %3548 = vmatpush1.bf16.msra.mxu0 %v3434
    %3549 = vmatprep.subr.bf16.mxu0 0
    %3550 = vmatpush1.bf16.msra.mxu0 %v3437
    %3551 = vmatprep.subr.bf16.mxu0 0
    %3552 = vmatpush1.bf16.msra.mxu0 0
    %3553 = vmatprep.subr.bf16.mxu0 0
    %3554 = vmatpush1.bf16.msra.mxu0 0
    %3555 = vmatprep.subr.bf16.mxu0 0
    %3556 = vmatpush1.bf16.msra.mxu0 0
    %3557 = vmatprep.subr.bf16.mxu0 0
    %3558 = vmatpush1.bf16.msra.mxu0 0
    %3559 = vmatprep.subr.bf16.mxu0 0
    %3560 = vmatpush1.bf16.msra.mxu0 0
    %3561 = vmatprep.subr.bf16.mxu0 0
    %3562 = vmatpush1.bf16.msra.mxu0 0
    %3563 = vmatprep.subr.bf16.mxu0 0
    %3564 = vmatpush1.bf16.msra.mxu0 0
    %3565 = vmatprep.subr.bf16.mxu0 0
    %3566 = vmatpush1.bf16.msra.mxu0 0
    %3567 = vmatprep.mubr.bf16.mxu0 0
    %3568 = vmatmul.mubr.bf16.gmra.mrb[0].mxu0 %v3297
    %v3569 = vpop.f32.mrb[0].mxu0
    %v3570 = vadd.f32 0.0, %v3569
    %v3571 = vpop.f32.mrb[0].mxu0
    %v3572 = vpop.f32.mrb[0].mxu0
    %v3573 = vadd.f32 0.0, %v3572
    %v3574 = vpop.f32.mrb[0].mxu0
    %3575 = vmatprep.mubr.bf16.mxu0 0
    %3576 = vmatmul.mubr.bf16.gmra.mrb[0].mxu0 %v3298
    %v3577 = vpop.f32.mrb[0].mxu0
    %v3578 = vadd.f32 0.0, %v3577
    %v3579 = vpop.f32.mrb[0].mxu0
    %v3580 = vpop.f32.mrb[0].mxu0
    %v3581 = vadd.f32 0.0, %v3580
    %v3582 = vpop.f32.mrb[0].mxu0
    %3583 = vmatprep.mubr.bf16.mxu0 0
    %3584 = vmatmul.mubr.bf16.gmra.mrb[0].mxu0 %v3299
    %v3585 = vpop.f32.mrb[0].mxu0
    %v3586 = vadd.f32 0.0, %v3585
    %v3587 = vpop.f32.mrb[0].mxu0
    %v3588 = vpop.f32.mrb[0].mxu0
    %v3589 = vadd.f32 0.0, %v3588
    %v3590 = vpop.f32.mrb[0].mxu0
    %3591 = vmatprep.mubr.bf16.mxu0 0
    %3592 = vmatmul.mubr.bf16.gmra.mrb[0].mxu0 %v3300
    %v3593 = vpop.f32.mrb[0].mxu0
    %v3594 = vadd.f32 0.0, %v3593
    %v3595 = vpop.f32.mrb[0].mxu0
    %v3596 = vpop.f32.mrb[0].mxu0
    %v3597 = vadd.f32 0.0, %v3596
    %v3598 = vpop.f32.mrb[0].mxu0
    %3599 = vdwg.mxu0
    %v3600 = vpack.c.bf16 %v3501, %v3497
    %v3601 = vpack.c.bf16 %v3503, %v3499
    %v3602 = vpack.c.bf16 %v3573, %v3570
    %v3603 = vpack.c.bf16 %v3511, %v3507
    %v3604 = vpack.c.bf16 %v3513, %v3509
    %v3605 = vpack.c.bf16 %v3581, %v3578
    %v3606 = vpack.c.bf16 %v3521, %v3517
    %v3607 = vpack.c.bf16 %v3523, %v3519
    %v3608 = vpack.c.bf16 %v3589, %v3586
    %v3609 = vpack.c.bf16 %v3531, %v3527
    %v3610 = vpack.c.bf16 %v3533, %v3529
    %v3611 = vpack.c.bf16 %v3597, %v3594
    %v3613 = vsel %vm807, %v3600, 0
    %v3616 = vsel %vm807, %v3603, 0
    %v3619 = vsel %vm807, %v3606, 0
    %v3622 = vsel %vm807, %v3609, 0
    %v3625 = vsel %vm807, %v3601, 0
    %v3628 = vsel %vm807, %v3604, 0
    %v3631 = vsel %vm807, %v3607, 0
    %v3634 = vsel %vm807, %v3610, 0
    %3636 = vmatprep.subr.bf16.mxu0 0
    %3637 = vmatpush1.bf16.xpose.msra.mxu0 %v3625
    %3638 = vmatprep.subr.bf16.mxu0 0
    %3639 = vmatpush1.bf16.xpose.msra.mxu0 %v3628
    %3640 = vmatprep.subr.bf16.mxu0 0
    %3641 = vmatpush1.bf16.xpose.msra.mxu0 %v3631
    %3642 = vmatprep.subr.bf16.mxu0 0
    %3643 = vmatpush1.bf16.xpose.msra.mxu0 %v3634
    %3644 = vmatprep.subr.bf16.mxu0 0
    %3645 = vmatpush1.bf16.xpose.msra.mxu0 0
    %3646 = vmatprep.subr.bf16.mxu0 0
    %3647 = vmatpush1.bf16.xpose.msra.mxu0 0
    %3648 = vmatprep.subr.bf16.mxu0 0
    %3649 = vmatpush1.bf16.xpose.msra.mxu0 0
    %3650 = vmatprep.subr.bf16.mxu0 0
    %3651 = vmatpush1.bf16.xpose.msra.mxu0 0
    %3652 = vmatprep.subr.bf16.mxu0 0
    %3653 = vmatpush1.bf16.xpose.msra.mxu0 0
    %3654 = vmatprep.subr.bf16.mxu0 0
    %3655 = vmatpush1.bf16.xpose.msra.mxu0 0
    %3656 = vmatprep.subr.bf16.mxu0 0
    %3657 = vmatpush1.bf16.xpose.msra.mxu0 0
    %3658 = vmatprep.subr.bf16.mxu0 0
    %3659 = vmatpush1.bf16.xpose.msra.mxu0 0
    %3660 = vmatprep.subr.bf16.mxu0 0
    %3661 = vmatpush1.bf16.xpose.msra.mxu0 0
    %3662 = vmatprep.subr.bf16.mxu0 0
    %3663 = vmatpush1.bf16.xpose.msra.mxu0 0
    %3664 = vmatprep.subr.bf16.mxu0 0
    %3665 = vmatpush1.bf16.xpose.msra.mxu0 0
    %3666 = vmatprep.subr.bf16.mxu0 0
    %3667 = vmatpush1.bf16.xpose.msra.mxu0 0
    %3668 = vmatprep.mubr.bf16.mxu0 0
    %3669 = vmatmul.mubr.bf16.gmra.mrb[0].mxu0 %v3613
    %v3670 = vpop.f32.mrb[0].mxu0
    %v3671 = vadd.f32 0.0, %v3670
    %v3672 = vpop.f32.mrb[0].mxu0
    %v3673 = vpop.f32.mrb[0].mxu0
    %v3674 = vadd.f32 0.0, %v3673
    %v3675 = vpop.f32.mrb[0].mxu0
    %3676 = vmatprep.mubr.bf16.mxu0 0
    %3677 = vmatmul.mubr.bf16.gmra.mrb[0].mxu0 %v3616
    %v3678 = vpop.f32.mrb[0].mxu0
    %v3679 = vadd.f32 0.0, %v3678
    %v3680 = vpop.f32.mrb[0].mxu0
    %v3681 = vpop.f32.mrb[0].mxu0
    %v3682 = vadd.f32 0.0, %v3681
    %v3683 = vpop.f32.mrb[0].mxu0
    %3684 = vmatprep.mubr.bf16.mxu0 0
    %3685 = vmatmul.mubr.bf16.gmra.mrb[0].mxu0 %v3619
    %v3686 = vpop.f32.mrb[0].mxu0
    %v3687 = vadd.f32 0.0, %v3686
    %v3688 = vpop.f32.mrb[0].mxu0
    %v3689 = vpop.f32.mrb[0].mxu0
    %v3690 = vadd.f32 0.0, %v3689
    %v3691 = vpop.f32.mrb[0].mxu0
    %3692 = vmatprep.mubr.bf16.mxu0 0
    %3693 = vmatmul.mubr.bf16.gmra.mrb[0].mxu0 %v3622
    %v3694 = vpop.f32.mrb[0].mxu0
    %v3695 = vadd.f32 0.0, %v3694
    %v3696 = vpop.f32.mrb[0].mxu0
    %v3697 = vpop.f32.mrb[0].mxu0
    %v3698 = vadd.f32 0.0, %v3697
    %v3699 = vpop.f32.mrb[0].mxu0
    %3700 = vdwg.mxu0
    %v3701 = vmul.f32 %v3671, 0.17677669
    %v3702 = vmul.f32 %v3674, 0.17677669
    %v3703 = vmul.f32 %v3679, 0.17677669
    %v3704 = vmul.f32 %v3682, 0.17677669
    %v3705 = vmul.f32 %v3687, 0.17677669
    %v3706 = vmul.f32 %v3690, 0.17677669
    %v3707 = vmul.f32 %v3695, 0.17677669
    %v3708 = vmul.f32 %v3698, 0.17677669
    %v3709 = vadd.f32 %v3701, %v366
    %v3710 = vadd.f32 %v3702, %v367
    %v3711 = vadd.f32 %v3703, %v368
    %v3712 = vadd.f32 %v3704, %v369
    %v3713 = vadd.f32 %v3705, %v370
    %v3714 = vadd.f32 %v3706, %v371
    %v3715 = vadd.f32 %v3707, %v372
    %v3716 = vadd.f32 %v3708, %v373
    %v3717 = vsel %vm913, %v3709, -inf
    %3718 = vmax.xlane.f32.xlu0 %v3717
    %v3719 = vpop.xlane.xlu0 %3718
    %v3720 = vsel %vm913, %v3710, -inf
    %3721 = vmax.xlane.f32.xlu0 %v3720
    %v3722 = vpop.xlane.xlu0 %3721
    %v3723 = vsel %vm913, %v3711, -inf
    %3724 = vmax.xlane.f32.xlu0 %v3723
    %v3725 = vpop.xlane.xlu0 %3724
    %v3726 = vsel %vm913, %v3712, -inf
    %3727 = vmax.xlane.f32.xlu0 %v3726
    %v3728 = vpop.xlane.xlu0 %3727
    %v3729 = vsel %vm913, %v3713, -inf
    %3730 = vmax.xlane.f32.xlu0 %v3729
    %v3731 = vpop.xlane.xlu0 %3730
    %v3732 = vsel %vm913, %v3714, -inf
    %3733 = vmax.xlane.f32.xlu0 %v3732
    %v3734 = vpop.xlane.xlu0 %3733
    %v3735 = vsel %vm913, %v3715, -inf
    %3736 = vmax.xlane.f32.xlu0 %v3735
    %v3737 = vpop.xlane.xlu0 %3736
    %v3738 = vsel %vm913, %v3716, -inf
    %3739 = vmax.xlane.f32.xlu0 %v3738
    %v3740 = vpop.xlane.xlu0 %3739
    %v3741 = vsub.f32 %v3709, %v3719
    %v3742 = vsub.f32 %v3710, %v3722
    %v3743 = vsub.f32 %v3711, %v3725
    %v3744 = vsub.f32 %v3712, %v3728
    %v3745 = vsub.f32 %v3713, %v3731
    %v3746 = vsub.f32 %v3714, %v3734
    %v3747 = vsub.f32 %v3715, %v3737
    %v3748 = vsub.f32 %v3716, %v3740
    %v3749 = vmul.f32 %v3741, 1.442695
    %v3750 = vpow.pop %v3749
    %v3751 = vmul.f32 %v3742, 1.442695
    %v3752 = vpow.pop %v3751
    %v3753 = vmul.f32 %v3743, 1.442695
    %v3754 = vpow.pop %v3753
    %v3755 = vmul.f32 %v3744, 1.442695
    %v3756 = vpow.pop %v3755
    %v3757 = vmul.f32 %v3745, 1.442695
    %v3758 = vpow.pop %v3757
    %v3759 = vmul.f32 %v3746, 1.442695
    %v3760 = vpow.pop %v3759
    %v3761 = vmul.f32 %v3747, 1.442695
    %v3762 = vpow.pop %v3761
    %v3763 = vmul.f32 %v3748, 1.442695
    %v3764 = vpow.pop %v3763
    %v3765 = vsel %vm913, %v3750, 0.0
    %3766 = vadd.xlane.f32.xlu0 %v3765
    %v3767 = vpop.xlane.xlu0 %3766
    %v3768 = vsel %vm913, %v3752, 0.0
    %3769 = vadd.xlane.f32.xlu0 %v3768
    %v3770 = vpop.xlane.xlu0 %3769
    %v3771 = vsel %vm913, %v3754, 0.0
    %3772 = vadd.xlane.f32.xlu0 %v3771
    %v3773 = vpop.xlane.xlu0 %3772
    %v3774 = vsel %vm913, %v3756, 0.0
    %3775 = vadd.xlane.f32.xlu0 %v3774
    %v3776 = vpop.xlane.xlu0 %3775
    %v3777 = vsel %vm913, %v3758, 0.0
    %3778 = vadd.xlane.f32.xlu0 %v3777
    %v3779 = vpop.xlane.xlu0 %3778
    %v3780 = vsel %vm913, %v3760, 0.0
    %3781 = vadd.xlane.f32.xlu0 %v3780
    %v3782 = vpop.xlane.xlu0 %3781
    %v3783 = vsel %vm913, %v3762, 0.0
    %3784 = vadd.xlane.f32.xlu0 %v3783
    %v3785 = vpop.xlane.xlu0 %3784
    %v3786 = vsel %vm913, %v3764, 0.0
    %3787 = vadd.xlane.f32.xlu0 %v3786
    %v3788 = vpop.xlane.xlu0 %3787
    %v3789 = vrcp.pop %v3767
    %v3790 = vrcp.pop %v3770
    %v3791 = vrcp.pop %v3773
    %v3792 = vrcp.pop %v3776
    %v3793 = vrcp.pop %v3779
    %v3794 = vrcp.pop %v3782
    %v3795 = vrcp.pop %v3785
    %v3796 = vrcp.pop %v3788
    %v3797 = vmul.f32 %v3750, %v3789
    %v3798 = vmul.f32 %v3752, %v3790
    %v3799 = vmul.f32 %v3754, %v3791
    %v3800 = vmul.f32 %v3756, %v3792
    %v3801 = vmul.f32 %v3758, %v3793
    %v3802 = vmul.f32 %v3760, %v3794
    %v3803 = vmul.f32 %v3762, %v3795
    %v3804 = vmul.f32 %v3764, %v3796
    %v3805 = vpack.c.bf16 %v3798, %v3797
    %v3806 = vpack.c.bf16 %v3800, %v3799
    %v3807 = vpack.c.bf16 %v3802, %v3801
    %v3808 = vpack.c.bf16 %v3804, %v3803
    %v3810 = vsel %vm913, %v3805, 0
    %v3813 = vsel %vm913, %v3806, 0
    %v3816 = vsel %vm913, %v3807, 0
    %v3819 = vsel %vm913, %v3808, 0
    %3821 = vmatprep.subr.bf16.mxu0 0
    %3822 = vmatpush1.bf16.msra.mxu0 %v3602
    %3823 = vmatprep.subr.bf16.mxu0 0
    %3824 = vmatpush1.bf16.msra.mxu0 %v3605
    %3825 = vmatprep.subr.bf16.mxu0 0
    %3826 = vmatpush1.bf16.msra.mxu0 %v3608
    %3827 = vmatprep.subr.bf16.mxu0 0
    %3828 = vmatpush1.bf16.msra.mxu0 %v3611
    %3829 = vmatprep.subr.bf16.mxu0 0
    %3830 = vmatpush1.bf16.msra.mxu0 0
    %3831 = vmatprep.subr.bf16.mxu0 0
    %3832 = vmatpush1.bf16.msra.mxu0 0
    %3833 = vmatprep.subr.bf16.mxu0 0
    %3834 = vmatpush1.bf16.msra.mxu0 0
    %3835 = vmatprep.subr.bf16.mxu0 0
    %3836 = vmatpush1.bf16.msra.mxu0 0
    %3837 = vmatprep.subr.bf16.mxu0 0
    %3838 = vmatpush1.bf16.msra.mxu0 0
    %3839 = vmatprep.subr.bf16.mxu0 0
    %3840 = vmatpush1.bf16.msra.mxu0 0
    %3841 = vmatprep.subr.bf16.mxu0 0
    %3842 = vmatpush1.bf16.msra.mxu0 0
    %3843 = vmatprep.subr.bf16.mxu0 0
    %3844 = vmatpush1.bf16.msra.mxu0 0
    %3845 = vmatprep.subr.bf16.mxu0 0
    %3846 = vmatpush1.bf16.msra.mxu0 0
    %3847 = vmatprep.subr.bf16.mxu0 0
    %3848 = vmatpush1.bf16.msra.mxu0 0
    %3849 = vmatprep.subr.bf16.mxu0 0
    %3850 = vmatpush1.bf16.msra.mxu0 0
    %3851 = vmatprep.subr.bf16.mxu0 0
    %3852 = vmatpush1.bf16.msra.mxu0 0
    %3853 = vmatprep.mubr.bf16.mxu0 0
    %3854 = vmatmul.mubr.bf16.gmra.mrb[0].mxu0 %v3810
    %v3855 = vpop.f32.mrb[0].mxu0
    %v3856 = vadd.f32 0.0, %v3855
    %v3857 = vpop.f32.mrb[0].mxu0
    %v3858 = vpop.f32.mrb[0].mxu0
    %v3859 = vadd.f32 0.0, %v3858
    %v3860 = vpop.f32.mrb[0].mxu0
    %3861 = vmatprep.mubr.bf16.mxu0 0
    %3862 = vmatmul.mubr.bf16.gmra.mrb[0].mxu0 %v3813
    %v3863 = vpop.f32.mrb[0].mxu0
    %v3864 = vadd.f32 0.0, %v3863
    %v3865 = vpop.f32.mrb[0].mxu0
    %v3866 = vpop.f32.mrb[0].mxu0
    %v3867 = vadd.f32 0.0, %v3866
    %v3868 = vpop.f32.mrb[0].mxu0
    %3869 = vmatprep.mubr.bf16.mxu0 0
    %3870 = vmatmul.mubr.bf16.gmra.mrb[0].mxu0 %v3816
    %v3871 = vpop.f32.mrb[0].mxu0
    %v3872 = vadd.f32 0.0, %v3871
    %v3873 = vpop.f32.mrb[0].mxu0
    %v3874 = vpop.f32.mrb[0].mxu0
    %v3875 = vadd.f32 0.0, %v3874
    %v3876 = vpop.f32.mrb[0].mxu0
    %3877 = vmatprep.mubr.bf16.mxu0 0
    %3878 = vmatmul.mubr.bf16.gmra.mrb[0].mxu0 %v3819
    %v3879 = vpop.f32.mrb[0].mxu0
    %v3880 = vadd.f32 0.0, %v3879
    %v3881 = vpop.f32.mrb[0].mxu0
    %v3882 = vpop.f32.mrb[0].mxu0
    %v3883 = vadd.f32 0.0, %v3882
    %v3884 = vpop.f32.mrb[0].mxu0
    %3885 = vdwg.mxu0
    %v3886 = vpack.c.bf16 %v3859, %v3856
    %v3887 = vpack.c.bf16 %v3867, %v3864
    %v3888 = vpack.c.bf16 %v3875, %v3872
    %v3889 = vpack.c.bf16 %v3883, %v3880
    %3894 = vrot.lane.b32.xlu0 %v3600, 96
    %v3895 = vpop.permute.xlu0 %3894
    %3896 = vrot.lane.b32.xlu0 %v3603, 96
    %v3897 = vpop.permute.xlu0 %3896
    %3898 = vrot.lane.b32.xlu0 %v3606, 96
    %v3899 = vpop.permute.xlu0 %3898
    %3900 = vrot.lane.b32.xlu0 %v3609, 96
    %v3901 = vpop.permute.xlu0 %3900
    %3906 = vrot.lane.b32.xlu0 %v3601, 96
    %v3907 = vpop.permute.xlu0 %3906
    %3908 = vrot.lane.b32.xlu0 %v3604, 96
    %v3909 = vpop.permute.xlu0 %3908
    %3910 = vrot.lane.b32.xlu0 %v3607, 96
    %v3911 = vpop.permute.xlu0 %3910
    %3912 = vrot.lane.b32.xlu0 %v3610, 96
    %v3913 = vpop.permute.xlu0 %3912
    %v3915 = vsel %vm807, %v3895, 0
    %v3918 = vsel %vm807, %v3897, 0
    %v3921 = vsel %vm807, %v3899, 0
    %v3924 = vsel %vm807, %v3901, 0
    %v3927 = vsel %vm807, %v3907, 0
    %v3930 = vsel %vm807, %v3909, 0
    %v3933 = vsel %vm807, %v3911, 0
    %v3936 = vsel %vm807, %v3913, 0
    %3938 = vmatprep.subr.bf16.mxu0 0
    %3939 = vmatpush1.bf16.xpose.msra.mxu0 %v3927
    %3940 = vmatprep.subr.bf16.mxu0 0
    %3941 = vmatpush1.bf16.xpose.msra.mxu0 %v3930
    %3942 = vmatprep.subr.bf16.mxu0 0
    %3943 = vmatpush1.bf16.xpose.msra.mxu0 %v3933
    %3944 = vmatprep.subr.bf16.mxu0 0
    %3945 = vmatpush1.bf16.xpose.msra.mxu0 %v3936
    %3946 = vmatprep.subr.bf16.mxu0 0
    %3947 = vmatpush1.bf16.xpose.msra.mxu0 0
    %3948 = vmatprep.subr.bf16.mxu0 0
    %3949 = vmatpush1.bf16.xpose.msra.mxu0 0
    %3950 = vmatprep.subr.bf16.mxu0 0
    %3951 = vmatpush1.bf16.xpose.msra.mxu0 0
    %3952 = vmatprep.subr.bf16.mxu0 0
    %3953 = vmatpush1.bf16.xpose.msra.mxu0 0
    %3954 = vmatprep.subr.bf16.mxu0 0
    %3955 = vmatpush1.bf16.xpose.msra.mxu0 0
    %3956 = vmatprep.subr.bf16.mxu0 0
    %3957 = vmatpush1.bf16.xpose.msra.mxu0 0
    %3958 = vmatprep.subr.bf16.mxu0 0
    %3959 = vmatpush1.bf16.xpose.msra.mxu0 0
    %3960 = vmatprep.subr.bf16.mxu0 0
    %3961 = vmatpush1.bf16.xpose.msra.mxu0 0
    %3962 = vmatprep.subr.bf16.mxu0 0
    %3963 = vmatpush1.bf16.xpose.msra.mxu0 0
    %3964 = vmatprep.subr.bf16.mxu0 0
    %3965 = vmatpush1.bf16.xpose.msra.mxu0 0
    %3966 = vmatprep.subr.bf16.mxu0 0
    %3967 = vmatpush1.bf16.xpose.msra.mxu0 0
    %3968 = vmatprep.subr.bf16.mxu0 0
    %3969 = vmatpush1.bf16.xpose.msra.mxu0 0
    %3970 = vmatprep.mubr.bf16.mxu0 0
    %3971 = vmatmul.mubr.bf16.gmra.mrb[0].mxu0 %v3915
    %v3972 = vpop.f32.mrb[0].mxu0
    %v3973 = vadd.f32 0.0, %v3972
    %v3974 = vpop.f32.mrb[0].mxu0
    %v3975 = vpop.f32.mrb[0].mxu0
    %v3976 = vadd.f32 0.0, %v3975
    %v3977 = vpop.f32.mrb[0].mxu0
    %3978 = vmatprep.mubr.bf16.mxu0 0
    %3979 = vmatmul.mubr.bf16.gmra.mrb[0].mxu0 %v3918
    %v3980 = vpop.f32.mrb[0].mxu0
    %v3981 = vadd.f32 0.0, %v3980
    %v3982 = vpop.f32.mrb[0].mxu0
    %v3983 = vpop.f32.mrb[0].mxu0
    %v3984 = vadd.f32 0.0, %v3983
    %v3985 = vpop.f32.mrb[0].mxu0
    %3986 = vmatprep.mubr.bf16.mxu0 0
    %3987 = vmatmul.mubr.bf16.gmra.mrb[0].mxu0 %v3921
    %v3988 = vpop.f32.mrb[0].mxu0
    %v3989 = vadd.f32 0.0, %v3988
    %v3990 = vpop.f32.mrb[0].mxu0
    %v3991 = vpop.f32.mrb[0].mxu0
    %v3992 = vadd.f32 0.0, %v3991
    %v3993 = vpop.f32.mrb[0].mxu0
    %3994 = vmatprep.mubr.bf16.mxu0 0
    %3995 = vmatmul.mubr.bf16.gmra.mrb[0].mxu0 %v3924
    %v3996 = vpop.f32.mrb[0].mxu0
    %v3997 = vadd.f32 0.0, %v3996
    %v3998 = vpop.f32.mrb[0].mxu0
    %v3999 = vpop.f32.mrb[0].mxu0
    %v4000 = vadd.f32 0.0, %v3999
    %v4001 = vpop.f32.mrb[0].mxu0
    %4002 = vdwg.mxu0
    %v4003 = vmul.f32 %v3973, 0.17677669
    %v4004 = vmul.f32 %v3976, 0.17677669
    %v4005 = vmul.f32 %v3981, 0.17677669
    %v4006 = vmul.f32 %v3984, 0.17677669
    %v4007 = vmul.f32 %v3989, 0.17677669
    %v4008 = vmul.f32 %v3992, 0.17677669
    %v4009 = vmul.f32 %v3997, 0.17677669
    %v4010 = vmul.f32 %v4000, 0.17677669
    %v4011 = vadd.f32 %v4003, %v366
    %v4012 = vadd.f32 %v4004, %v367
    %v4013 = vadd.f32 %v4005, %v368
    %v4014 = vadd.f32 %v4006, %v369
    %v4015 = vadd.f32 %v4007, %v370
    %v4016 = vadd.f32 %v4008, %v371
    %v4017 = vadd.f32 %v4009, %v372
    %v4018 = vadd.f32 %v4010, %v373
    %v4019 = vsel %vm913, %v4011, -inf
    %4020 = vmax.xlane.f32.xlu0 %v4019
    %v4021 = vpop.xlane.xlu0 %4020
    %v4022 = vsel %vm913, %v4012, -inf
    %4023 = vmax.xlane.f32.xlu0 %v4022
    %v4024 = vpop.xlane.xlu0 %4023
    %v4025 = vsel %vm913, %v4013, -inf
    %4026 = vmax.xlane.f32.xlu0 %v4025
    %v4027 = vpop.xlane.xlu0 %4026
    %v4028 = vsel %vm913, %v4014, -inf
    %4029 = vmax.xlane.f32.xlu0 %v4028
    %v4030 = vpop.xlane.xlu0 %4029
    %v4031 = vsel %vm913, %v4015, -inf
    %4032 = vmax.xlane.f32.xlu0 %v4031
    %v4033 = vpop.xlane.xlu0 %4032
    %v4034 = vsel %vm913, %v4016, -inf
    %4035 = vmax.xlane.f32.xlu0 %v4034
    %v4036 = vpop.xlane.xlu0 %4035
    %v4037 = vsel %vm913, %v4017, -inf
    %4038 = vmax.xlane.f32.xlu0 %v4037
    %v4039 = vpop.xlane.xlu0 %4038
    %v4040 = vsel %vm913, %v4018, -inf
    %4041 = vmax.xlane.f32.xlu0 %v4040
    %v4042 = vpop.xlane.xlu0 %4041
    %v4043 = vsub.f32 %v4011, %v4021
    %v4044 = vsub.f32 %v4012, %v4024
    %v4045 = vsub.f32 %v4013, %v4027
    %v4046 = vsub.f32 %v4014, %v4030
    %v4047 = vsub.f32 %v4015, %v4033
    %v4048 = vsub.f32 %v4016, %v4036
    %v4049 = vsub.f32 %v4017, %v4039
    %v4050 = vsub.f32 %v4018, %v4042
    %v4051 = vmul.f32 %v4043, 1.442695
    %v4052 = vpow.pop %v4051
    %v4053 = vmul.f32 %v4044, 1.442695
    %v4054 = vpow.pop %v4053
    %v4055 = vmul.f32 %v4045, 1.442695
    %v4056 = vpow.pop %v4055
    %v4057 = vmul.f32 %v4046, 1.442695
    %v4058 = vpow.pop %v4057
    %v4059 = vmul.f32 %v4047, 1.442695
    %v4060 = vpow.pop %v4059
    %v4061 = vmul.f32 %v4048, 1.442695
    %v4062 = vpow.pop %v4061
    %v4063 = vmul.f32 %v4049, 1.442695
    %v4064 = vpow.pop %v4063
    %v4065 = vmul.f32 %v4050, 1.442695
    %v4066 = vpow.pop %v4065
    %v4067 = vsel %vm913, %v4052, 0.0
    %4068 = vadd.xlane.f32.xlu0 %v4067
    %v4069 = vpop.xlane.xlu0 %4068
    %v4070 = vsel %vm913, %v4054, 0.0
    %4071 = vadd.xlane.f32.xlu0 %v4070
    %v4072 = vpop.xlane.xlu0 %4071
    %v4073 = vsel %vm913, %v4056, 0.0
    %4074 = vadd.xlane.f32.xlu0 %v4073
    %v4075 = vpop.xlane.xlu0 %4074
    %v4076 = vsel %vm913, %v4058, 0.0
    %4077 = vadd.xlane.f32.xlu0 %v4076
    %v4078 = vpop.xlane.xlu0 %4077
    %v4079 = vsel %vm913, %v4060, 0.0
    %4080 = vadd.xlane.f32.xlu0 %v4079
    %v4081 = vpop.xlane.xlu0 %4080
    %v4082 = vsel %vm913, %v4062, 0.0
    %4083 = vadd.xlane.f32.xlu0 %v4082
    %v4084 = vpop.xlane.xlu0 %4083
    %v4085 = vsel %vm913, %v4064, 0.0
    %4086 = vadd.xlane.f32.xlu0 %v4085
    %v4087 = vpop.xlane.xlu0 %4086
    %v4088 = vsel %vm913, %v4066, 0.0
    %4089 = vadd.xlane.f32.xlu0 %v4088
    %v4090 = vpop.xlane.xlu0 %4089
    %v4091 = vrcp.pop %v4069
    %v4092 = vrcp.pop %v4072
    %v4093 = vrcp.pop %v4075
    %v4094 = vrcp.pop %v4078
    %v4095 = vrcp.pop %v4081
    %v4096 = vrcp.pop %v4084
    %v4097 = vrcp.pop %v4087
    %v4098 = vrcp.pop %v4090
    %v4099 = vmul.f32 %v4052, %v4091
    %v4100 = vmul.f32 %v4054, %v4092
    %v4101 = vmul.f32 %v4056, %v4093
    %v4102 = vmul.f32 %v4058, %v4094
    %v4103 = vmul.f32 %v4060, %v4095
    %v4104 = vmul.f32 %v4062, %v4096
    %v4105 = vmul.f32 %v4064, %v4097
    %v4106 = vmul.f32 %v4066, %v4098
    %v4107 = vpack.c.bf16 %v4100, %v4099
    %v4108 = vpack.c.bf16 %v4102, %v4101
    %v4109 = vpack.c.bf16 %v4104, %v4103
    %v4110 = vpack.c.bf16 %v4106, %v4105
    %4115 = vrot.lane.b32.xlu0 %v3602, 96
    %v4116 = vpop.permute.xlu0 %4115
    %4117 = vrot.lane.b32.xlu0 %v3605, 96
    %v4118 = vpop.permute.xlu0 %4117
    %4119 = vrot.lane.b32.xlu0 %v3608, 96
    %v4120 = vpop.permute.xlu0 %4119
    %4121 = vrot.lane.b32.xlu0 %v3611, 96
    %v4122 = vpop.permute.xlu0 %4121
    %v4128 = vsel %vm913, %v4107, 0
    %v4131 = vsel %vm913, %v4108, 0
    %v4134 = vsel %vm913, %v4109, 0
    %v4137 = vsel %vm913, %v4110, 0
    %4139 = vmatprep.subr.bf16.mxu0 0
    %4140 = vmatpush1.bf16.msra.mxu0 %v4116
    %4141 = vmatprep.subr.bf16.mxu0 0
    %4142 = vmatpush1.bf16.msra.mxu0 %v4118
    %4143 = vmatprep.subr.bf16.mxu0 0
    %4144 = vmatpush1.bf16.msra.mxu0 %v4120
    %4145 = vmatprep.subr.bf16.mxu0 0
    %4146 = vmatpush1.bf16.msra.mxu0 %v4122
    %4147 = vmatprep.subr.bf16.mxu0 0
    %4148 = vmatpush1.bf16.msra.mxu0 0
    %4149 = vmatprep.subr.bf16.mxu0 0
    %4150 = vmatpush1.bf16.msra.mxu0 0
    %4151 = vmatprep.subr.bf16.mxu0 0
    %4152 = vmatpush1.bf16.msra.mxu0 0
    %4153 = vmatprep.subr.bf16.mxu0 0
    %4154 = vmatpush1.bf16.msra.mxu0 0
    %4155 = vmatprep.subr.bf16.mxu0 0
    %4156 = vmatpush1.bf16.msra.mxu0 0
    %4157 = vmatprep.subr.bf16.mxu0 0
    %4158 = vmatpush1.bf16.msra.mxu0 0
    %4159 = vmatprep.subr.bf16.mxu0 0
    %4160 = vmatpush1.bf16.msra.mxu0 0
    %4161 = vmatprep.subr.bf16.mxu0 0
    %4162 = vmatpush1.bf16.msra.mxu0 0
    %4163 = vmatprep.subr.bf16.mxu0 0
    %4164 = vmatpush1.bf16.msra.mxu0 0
    %4165 = vmatprep.subr.bf16.mxu0 0
    %4166 = vmatpush1.bf16.msra.mxu0 0
    %4167 = vmatprep.subr.bf16.mxu0 0
    %4168 = vmatpush1.bf16.msra.mxu0 0
    %4169 = vmatprep.subr.bf16.mxu0 0
    %4170 = vmatpush1.bf16.msra.mxu0 0
    %4171 = vmatprep.mubr.bf16.mxu0 0
    %4172 = vmatmul.mubr.bf16.gmra.mrb[0].mxu0 %v4128
    %v4173 = vpop.f32.mrb[0].mxu0
    %v4174 = vadd.f32 0.0, %v4173
    %v4175 = vpop.f32.mrb[0].mxu0
    %v4176 = vpop.f32.mrb[0].mxu0
    %v4177 = vadd.f32 0.0, %v4176
    %v4178 = vpop.f32.mrb[0].mxu0
    %4179 = vmatprep.mubr.bf16.mxu0 0
    %4180 = vmatmul.mubr.bf16.gmra.mrb[0].mxu0 %v4131
    %v4181 = vpop.f32.mrb[0].mxu0
    %v4182 = vadd.f32 0.0, %v4181
    %v4183 = vpop.f32.mrb[0].mxu0
    %v4184 = vpop.f32.mrb[0].mxu0
    %v4185 = vadd.f32 0.0, %v4184
    %v4186 = vpop.f32.mrb[0].mxu0
    %4187 = vmatprep.mubr.bf16.mxu0 0
    %4188 = vmatmul.mubr.bf16.gmra.mrb[0].mxu0 %v4134
    %v4189 = vpop.f32.mrb[0].mxu0
    %v4190 = vadd.f32 0.0, %v4189
    %v4191 = vpop.f32.mrb[0].mxu0
    %v4192 = vpop.f32.mrb[0].mxu0
    %v4193 = vadd.f32 0.0, %v4192
    %v4194 = vpop.f32.mrb[0].mxu0
    %4195 = vmatprep.mubr.bf16.mxu0 0
    %4196 = vmatmul.mubr.bf16.gmra.mrb[0].mxu0 %v4137
    %v4197 = vpop.f32.mrb[0].mxu0
    %v4198 = vadd.f32 0.0, %v4197
    %v4199 = vpop.f32.mrb[0].mxu0
    %v4200 = vpop.f32.mrb[0].mxu0
    %v4201 = vadd.f32 0.0, %v4200
    %v4202 = vpop.f32.mrb[0].mxu0
    %4203 = vdwg.mxu0
    %v4204 = vpack.c.bf16 %v4177, %v4174
    %v4205 = vpack.c.bf16 %v4185, %v4182
    %v4206 = vpack.c.bf16 %v4193, %v4190
    %v4207 = vpack.c.bf16 %v4201, %v4198
    %4208 = vrot.lane.b32.xlu0 %v3600, 64
    %v4209 = vpop.permute.xlu0 %4208
    %4210 = vrot.lane.b32.xlu0 %v3603, 64
    %v4211 = vpop.permute.xlu0 %4210
    %4212 = vrot.lane.b32.xlu0 %v3606, 64
    %v4213 = vpop.permute.xlu0 %4212
    %4214 = vrot.lane.b32.xlu0 %v3609, 64
    %v4215 = vpop.permute.xlu0 %4214
    %4216 = vrot.lane.b32.xlu0 %v3601, 64
    %v4217 = vpop.permute.xlu0 %4216
    %4218 = vrot.lane.b32.xlu0 %v3604, 64
    %v4219 = vpop.permute.xlu0 %4218
    %4220 = vrot.lane.b32.xlu0 %v3607, 64
    %v4221 = vpop.permute.xlu0 %4220
    %4222 = vrot.lane.b32.xlu0 %v3610, 64
    %v4223 = vpop.permute.xlu0 %4222
    %v4225 = vsel %vm807, %v4209, 0
    %v4228 = vsel %vm807, %v4211, 0
    %v4231 = vsel %vm807, %v4213, 0
    %v4234 = vsel %vm807, %v4215, 0
    %v4237 = vsel %vm807, %v4217, 0
    %v4240 = vsel %vm807, %v4219, 0
    %v4243 = vsel %vm807, %v4221, 0
    %v4246 = vsel %vm807, %v4223, 0
    %4248 = vmatprep.subr.bf16.mxu0 0
    %4249 = vmatpush1.bf16.xpose.msra.mxu0 %v4237
    %4250 = vmatprep.subr.bf16.mxu0 0
    %4251 = vmatpush1.bf16.xpose.msra.mxu0 %v4240
    %4252 = vmatprep.subr.bf16.mxu0 0
    %4253 = vmatpush1.bf16.xpose.msra.mxu0 %v4243
    %4254 = vmatprep.subr.bf16.mxu0 0
    %4255 = vmatpush1.bf16.xpose.msra.mxu0 %v4246
    %4256 = vmatprep.subr.bf16.mxu0 0
    %4257 = vmatpush1.bf16.xpose.msra.mxu0 0
    %4258 = vmatprep.subr.bf16.mxu0 0
    %4259 = vmatpush1.bf16.xpose.msra.mxu0 0
    %4260 = vmatprep.subr.bf16.mxu0 0
    %4261 = vmatpush1.bf16.xpose.msra.mxu0 0
    %4262 = vmatprep.subr.bf16.mxu0 0
    %4263 = vmatpush1.bf16.xpose.msra.mxu0 0
    %4264 = vmatprep.subr.bf16.mxu0 0
    %4265 = vmatpush1.bf16.xpose.msra.mxu0 0
    %4266 = vmatprep.subr.bf16.mxu0 0
    %4267 = vmatpush1.bf16.xpose.msra.mxu0 0
    %4268 = vmatprep.subr.bf16.mxu0 0
    %4269 = vmatpush1.bf16.xpose.msra.mxu0 0
    %4270 = vmatprep.subr.bf16.mxu0 0
    %4271 = vmatpush1.bf16.xpose.msra.mxu0 0
    %4272 = vmatprep.subr.bf16.mxu0 0
    %4273 = vmatpush1.bf16.xpose.msra.mxu0 0
    %4274 = vmatprep.subr.bf16.mxu0 0
    %4275 = vmatpush1.bf16.xpose.msra.mxu0 0
    %4276 = vmatprep.subr.bf16.mxu0 0
    %4277 = vmatpush1.bf16.xpose.msra.mxu0 0
    %4278 = vmatprep.subr.bf16.mxu0 0
    %4279 = vmatpush1.bf16.xpose.msra.mxu0 0
    %4280 = vmatprep.mubr.bf16.mxu0 0
    %4281 = vmatmul.mubr.bf16.gmra.mrb[0].mxu0 %v4225
    %v4282 = vpop.f32.mrb[0].mxu0
    %v4283 = vadd.f32 0.0, %v4282
    %v4284 = vpop.f32.mrb[0].mxu0
    %v4285 = vpop.f32.mrb[0].mxu0
    %v4286 = vadd.f32 0.0, %v4285
    %v4287 = vpop.f32.mrb[0].mxu0
    %4288 = vmatprep.mubr.bf16.mxu0 0
    %4289 = vmatmul.mubr.bf16.gmra.mrb[0].mxu0 %v4228
    %v4290 = vpop.f32.mrb[0].mxu0
    %v4291 = vadd.f32 0.0, %v4290
    %v4292 = vpop.f32.mrb[0].mxu0
    %v4293 = vpop.f32.mrb[0].mxu0
    %v4294 = vadd.f32 0.0, %v4293
    %v4295 = vpop.f32.mrb[0].mxu0
    %4296 = vmatprep.mubr.bf16.mxu0 0
    %4297 = vmatmul.mubr.bf16.gmra.mrb[0].mxu0 %v4231
    %v4298 = vpop.f32.mrb[0].mxu0
    %v4299 = vadd.f32 0.0, %v4298
    %v4300 = vpop.f32.mrb[0].mxu0
    %v4301 = vpop.f32.mrb[0].mxu0
    %v4302 = vadd.f32 0.0, %v4301
    %v4303 = vpop.f32.mrb[0].mxu0
    %4304 = vmatprep.mubr.bf16.mxu0 0
    %4305 = vmatmul.mubr.bf16.gmra.mrb[0].mxu0 %v4234
    %v4306 = vpop.f32.mrb[0].mxu0
    %v4307 = vadd.f32 0.0, %v4306
    %v4308 = vpop.f32.mrb[0].mxu0
    %v4309 = vpop.f32.mrb[0].mxu0
    %v4310 = vadd.f32 0.0, %v4309
    %v4311 = vpop.f32.mrb[0].mxu0
    %4312 = vdwg.mxu0
    %v4313 = vmul.f32 %v4283, 0.17677669
    %v4314 = vmul.f32 %v4286, 0.17677669
    %v4315 = vmul.f32 %v4291, 0.17677669
    %v4316 = vmul.f32 %v4294, 0.17677669
    %v4317 = vmul.f32 %v4299, 0.17677669
    %v4318 = vmul.f32 %v4302, 0.17677669
    %v4319 = vmul.f32 %v4307, 0.17677669
    %v4320 = vmul.f32 %v4310, 0.17677669
    %v4321 = vadd.f32 %v4313, %v366
    %v4322 = vadd.f32 %v4314, %v367
    %v4323 = vadd.f32 %v4315, %v368
    %v4324 = vadd.f32 %v4316, %v369
    %v4325 = vadd.f32 %v4317, %v370
    %v4326 = vadd.f32 %v4318, %v371
    %v4327 = vadd.f32 %v4319, %v372
    %v4328 = vadd.f32 %v4320, %v373
    %v4329 = vsel %vm913, %v4321, -inf
    %4330 = vmax.xlane.f32.xlu0 %v4329
    %v4331 = vpop.xlane.xlu0 %4330
    %v4332 = vsel %vm913, %v4322, -inf
    %4333 = vmax.xlane.f32.xlu0 %v4332
    %v4334 = vpop.xlane.xlu0 %4333
    %v4335 = vsel %vm913, %v4323, -inf
    %4336 = vmax.xlane.f32.xlu0 %v4335
    %v4337 = vpop.xlane.xlu0 %4336
    %v4338 = vsel %vm913, %v4324, -inf
    %4339 = vmax.xlane.f32.xlu0 %v4338
    %v4340 = vpop.xlane.xlu0 %4339
    %v4341 = vsel %vm913, %v4325, -inf
    %4342 = vmax.xlane.f32.xlu0 %v4341
    %v4343 = vpop.xlane.xlu0 %4342
    %v4344 = vsel %vm913, %v4326, -inf
    %4345 = vmax.xlane.f32.xlu0 %v4344
    %v4346 = vpop.xlane.xlu0 %4345
    %v4347 = vsel %vm913, %v4327, -inf
    %4348 = vmax.xlane.f32.xlu0 %v4347
    %v4349 = vpop.xlane.xlu0 %4348
    %v4350 = vsel %vm913, %v4328, -inf
    %4351 = vmax.xlane.f32.xlu0 %v4350
    %v4352 = vpop.xlane.xlu0 %4351
    %v4353 = vsub.f32 %v4321, %v4331
    %v4354 = vsub.f32 %v4322, %v4334
    %v4355 = vsub.f32 %v4323, %v4337
    %v4356 = vsub.f32 %v4324, %v4340
    %v4357 = vsub.f32 %v4325, %v4343
    %v4358 = vsub.f32 %v4326, %v4346
    %v4359 = vsub.f32 %v4327, %v4349
    %v4360 = vsub.f32 %v4328, %v4352
    %v4361 = vmul.f32 %v4353, 1.442695
    %v4362 = vpow.pop %v4361
    %v4363 = vmul.f32 %v4354, 1.442695
    %v4364 = vpow.pop %v4363
    %v4365 = vmul.f32 %v4355, 1.442695
    %v4366 = vpow.pop %v4365
    %v4367 = vmul.f32 %v4356, 1.442695
    %v4368 = vpow.pop %v4367
    %v4369 = vmul.f32 %v4357, 1.442695
    %v4370 = vpow.pop %v4369
    %v4371 = vmul.f32 %v4358, 1.442695
    %v4372 = vpow.pop %v4371
    %v4373 = vmul.f32 %v4359, 1.442695
    %v4374 = vpow.pop %v4373
    %v4375 = vmul.f32 %v4360, 1.442695
    %v4376 = vpow.pop %v4375
    %v4377 = vsel %vm913, %v4362, 0.0
    %4378 = vadd.xlane.f32.xlu0 %v4377
    %v4379 = vpop.xlane.xlu0 %4378
    %v4380 = vsel %vm913, %v4364, 0.0
    %4381 = vadd.xlane.f32.xlu0 %v4380
    %v4382 = vpop.xlane.xlu0 %4381
    %v4383 = vsel %vm913, %v4366, 0.0
    %4384 = vadd.xlane.f32.xlu0 %v4383
    %v4385 = vpop.xlane.xlu0 %4384
    %v4386 = vsel %vm913, %v4368, 0.0
    %4387 = vadd.xlane.f32.xlu0 %v4386
    %v4388 = vpop.xlane.xlu0 %4387
    %v4389 = vsel %vm913, %v4370, 0.0
    %4390 = vadd.xlane.f32.xlu0 %v4389
    %v4391 = vpop.xlane.xlu0 %4390
    %v4392 = vsel %vm913, %v4372, 0.0
    %4393 = vadd.xlane.f32.xlu0 %v4392
    %v4394 = vpop.xlane.xlu0 %4393
    %v4395 = vsel %vm913, %v4374, 0.0
    %4396 = vadd.xlane.f32.xlu0 %v4395
    %v4397 = vpop.xlane.xlu0 %4396
    %v4398 = vsel %vm913, %v4376, 0.0
    %4399 = vadd.xlane.f32.xlu0 %v4398
    %v4400 = vpop.xlane.xlu0 %4399
    %v4401 = vrcp.pop %v4379
    %v4402 = vrcp.pop %v4382
    %v4403 = vrcp.pop %v4385
    %v4404 = vrcp.pop %v4388
    %v4405 = vrcp.pop %v4391
    %v4406 = vrcp.pop %v4394
    %v4407 = vrcp.pop %v4397
    %v4408 = vrcp.pop %v4400
    %v4409 = vmul.f32 %v4362, %v4401
    %v4410 = vmul.f32 %v4364, %v4402
    %v4411 = vmul.f32 %v4366, %v4403
    %v4412 = vmul.f32 %v4368, %v4404
    %v4413 = vmul.f32 %v4370, %v4405
    %v4414 = vmul.f32 %v4372, %v4406
    %v4415 = vmul.f32 %v4374, %v4407
    %v4416 = vmul.f32 %v4376, %v4408
    %v4417 = vpack.c.bf16 %v4410, %v4409
    %v4418 = vpack.c.bf16 %v4412, %v4411
    %v4419 = vpack.c.bf16 %v4414, %v4413
    %v4420 = vpack.c.bf16 %v4416, %v4415
    %4421 = vrot.lane.b32.xlu0 %v3602, 64
    %v4422 = vpop.permute.xlu0 %4421
    %4423 = vrot.lane.b32.xlu0 %v3605, 64
    %v4424 = vpop.permute.xlu0 %4423
    %4425 = vrot.lane.b32.xlu0 %v3608, 64
    %v4426 = vpop.permute.xlu0 %4425
    %4427 = vrot.lane.b32.xlu0 %v3611, 64
    %v4428 = vpop.permute.xlu0 %4427
    %v4434 = vsel %vm913, %v4417, 0
    %v4437 = vsel %vm913, %v4418, 0
    %v4440 = vsel %vm913, %v4419, 0
    %v4443 = vsel %vm913, %v4420, 0
    %4445 = vmatprep.subr.bf16.mxu0 0
    %4446 = vmatpush1.bf16.msra.mxu0 %v4422
    %4447 = vmatprep.subr.bf16.mxu0 0
    %4448 = vmatpush1.bf16.msra.mxu0 %v4424
    %4449 = vmatprep.subr.bf16.mxu0 0
    %4450 = vmatpush1.bf16.msra.mxu0 %v4426
    %4451 = vmatprep.subr.bf16.mxu0 0
    %4452 = vmatpush1.bf16.msra.mxu0 %v4428
    %4453 = vmatprep.subr.bf16.mxu0 0
    %4454 = vmatpush1.bf16.msra.mxu0 0
    %4455 = vmatprep.subr.bf16.mxu0 0
    %4456 = vmatpush1.bf16.msra.mxu0 0
    %4457 = vmatprep.subr.bf16.mxu0 0
    %4458 = vmatpush1.bf16.msra.mxu0 0
    %4459 = vmatprep.subr.bf16.mxu0 0
    %4460 = vmatpush1.bf16.msra.mxu0 0
    %4461 = vmatprep.subr.bf16.mxu0 0
    %4462 = vmatpush1.bf16.msra.mxu0 0
    %4463 = vmatprep.subr.bf16.mxu0 0
    %4464 = vmatpush1.bf16.msra.mxu0 0
    %4465 = vmatprep.subr.bf16.mxu0 0
    %4466 = vmatpush1.bf16.msra.mxu0 0
    %4467 = vmatprep.subr.bf16.mxu0 0
    %4468 = vmatpush1.bf16.msra.mxu0 0
    %4469 = vmatprep.subr.bf16.mxu0 0
    %4470 = vmatpush1.bf16.msra.mxu0 0
    %4471 = vmatprep.subr.bf16.mxu0 0
    %4472 = vmatpush1.bf16.msra.mxu0 0
    %4473 = vmatprep.subr.bf16.mxu0 0
    %4474 = vmatpush1.bf16.msra.mxu0 0
    %4475 = vmatprep.subr.bf16.mxu0 0
    %4476 = vmatpush1.bf16.msra.mxu0 0
    %4477 = vmatprep.mubr.bf16.mxu0 0
    %4478 = vmatmul.mubr.bf16.gmra.mrb[0].mxu0 %v4434
    %v4479 = vpop.f32.mrb[0].mxu0
    %v4480 = vadd.f32 0.0, %v4479
    %v4481 = vpop.f32.mrb[0].mxu0
    %v4482 = vpop.f32.mrb[0].mxu0
    %v4483 = vadd.f32 0.0, %v4482
    %v4484 = vpop.f32.mrb[0].mxu0
    %4485 = vmatprep.mubr.bf16.mxu0 0
    %4486 = vmatmul.mubr.bf16.gmra.mrb[0].mxu0 %v4437
    %v4487 = vpop.f32.mrb[0].mxu0
    %v4488 = vadd.f32 0.0, %v4487
    %v4489 = vpop.f32.mrb[0].mxu0
    %v4490 = vpop.f32.mrb[0].mxu0
    %v4491 = vadd.f32 0.0, %v4490
    %v4492 = vpop.f32.mrb[0].mxu0
    %4493 = vmatprep.mubr.bf16.mxu0 0
    %4494 = vmatmul.mubr.bf16.gmra.mrb[0].mxu0 %v4440
    %v4495 = vpop.f32.mrb[0].mxu0
    %v4496 = vadd.f32 0.0, %v4495
    %v4497 = vpop.f32.mrb[0].mxu0
    %v4498 = vpop.f32.mrb[0].mxu0
    %v4499 = vadd.f32 0.0, %v4498
    %v4500 = vpop.f32.mrb[0].mxu0
    %4501 = vmatprep.mubr.bf16.mxu0 0
    %4502 = vmatmul.mubr.bf16.gmra.mrb[0].mxu0 %v4443
    %v4503 = vpop.f32.mrb[0].mxu0
    %v4504 = vadd.f32 0.0, %v4503
    %v4505 = vpop.f32.mrb[0].mxu0
    %v4506 = vpop.f32.mrb[0].mxu0
    %v4507 = vadd.f32 0.0, %v4506
    %v4508 = vpop.f32.mrb[0].mxu0
    %4509 = vdwg.mxu0
    %v4510 = vpack.c.bf16 %v4483, %v4480
    %v4511 = vpack.c.bf16 %v4491, %v4488
    %v4512 = vpack.c.bf16 %v4499, %v4496
    %v4513 = vpack.c.bf16 %v4507, %v4504
    %4514 = vrot.lane.b32.xlu0 %v3600, 32
    %v4515 = vpop.permute.xlu0 %4514
    %4516 = vrot.lane.b32.xlu0 %v3603, 32
    %v4517 = vpop.permute.xlu0 %4516
    %4518 = vrot.lane.b32.xlu0 %v3606, 32
    %v4519 = vpop.permute.xlu0 %4518
    %4520 = vrot.lane.b32.xlu0 %v3609, 32
    %v4521 = vpop.permute.xlu0 %4520
    %4522 = vrot.lane.b32.xlu0 %v3601, 32
    %v4523 = vpop.permute.xlu0 %4522
    %4524 = vrot.lane.b32.xlu0 %v3604, 32
    %v4525 = vpop.permute.xlu0 %4524
    %4526 = vrot.lane.b32.xlu0 %v3607, 32
    %v4527 = vpop.permute.xlu0 %4526
    %4528 = vrot.lane.b32.xlu0 %v3610, 32
    %v4529 = vpop.permute.xlu0 %4528
    %v4531 = vsel %vm807, %v4515, 0
    %v4534 = vsel %vm807, %v4517, 0
    %v4537 = vsel %vm807, %v4519, 0
    %v4540 = vsel %vm807, %v4521, 0
    %v4543 = vsel %vm807, %v4523, 0
    %v4546 = vsel %vm807, %v4525, 0
    %v4549 = vsel %vm807, %v4527, 0
    %v4552 = vsel %vm807, %v4529, 0
    %4554 = vmatprep.subr.bf16.mxu0 0
    %4555 = vmatpush1.bf16.xpose.msra.mxu0 %v4543
    %4556 = vmatprep.subr.bf16.mxu0 0
    %4557 = vmatpush1.bf16.xpose.msra.mxu0 %v4546
    %4558 = vmatprep.subr.bf16.mxu0 0
    %4559 = vmatpush1.bf16.xpose.msra.mxu0 %v4549
    %4560 = vmatprep.subr.bf16.mxu0 0
    %4561 = vmatpush1.bf16.xpose.msra.mxu0 %v4552
    %4562 = vmatprep.subr.bf16.mxu0 0
    %4563 = vmatpush1.bf16.xpose.msra.mxu0 0
    %4564 = vmatprep.subr.bf16.mxu0 0
    %4565 = vmatpush1.bf16.xpose.msra.mxu0 0
    %4566 = vmatprep.subr.bf16.mxu0 0
    %4567 = vmatpush1.bf16.xpose.msra.mxu0 0
    %4568 = vmatprep.subr.bf16.mxu0 0
    %4569 = vmatpush1.bf16.xpose.msra.mxu0 0
    %4570 = vmatprep.subr.bf16.mxu0 0
    %4571 = vmatpush1.bf16.xpose.msra.mxu0 0
    %4572 = vmatprep.subr.bf16.mxu0 0
    %4573 = vmatpush1.bf16.xpose.msra.mxu0 0
    %4574 = vmatprep.subr.bf16.mxu0 0
    %4575 = vmatpush1.bf16.xpose.msra.mxu0 0
    %4576 = vmatprep.subr.bf16.mxu0 0
    %4577 = vmatpush1.bf16.xpose.msra.mxu0 0
    %4578 = vmatprep.subr.bf16.mxu0 0
    %4579 = vmatpush1.bf16.xpose.msra.mxu0 0
    %4580 = vmatprep.subr.bf16.mxu0 0
    %4581 = vmatpush1.bf16.xpose.msra.mxu0 0
    %4582 = vmatprep.subr.bf16.mxu0 0
    %4583 = vmatpush1.bf16.xpose.msra.mxu0 0
    %4584 = vmatprep.subr.bf16.mxu0 0
    %4585 = vmatpush1.bf16.xpose.msra.mxu0 0
    %4586 = vmatprep.mubr.bf16.mxu0 0
    %4587 = vmatmul.mubr.bf16.gmra.mrb[0].mxu0 %v4531
    %v4588 = vpop.f32.mrb[0].mxu0
    %v4589 = vadd.f32 0.0, %v4588
    %v4590 = vpop.f32.mrb[0].mxu0
    %v4591 = vpop.f32.mrb[0].mxu0
    %v4592 = vadd.f32 0.0, %v4591
    %v4593 = vpop.f32.mrb[0].mxu0
    %4594 = vmatprep.mubr.bf16.mxu0 0
    %4595 = vmatmul.mubr.bf16.gmra.mrb[0].mxu0 %v4534
    %v4596 = vpop.f32.mrb[0].mxu0
    %v4597 = vadd.f32 0.0, %v4596
    %v4598 = vpop.f32.mrb[0].mxu0
    %v4599 = vpop.f32.mrb[0].mxu0
    %v4600 = vadd.f32 0.0, %v4599
    %v4601 = vpop.f32.mrb[0].mxu0
    %4602 = vmatprep.mubr.bf16.mxu0 0
    %4603 = vmatmul.mubr.bf16.gmra.mrb[0].mxu0 %v4537
    %v4604 = vpop.f32.mrb[0].mxu0
    %v4605 = vadd.f32 0.0, %v4604
    %v4606 = vpop.f32.mrb[0].mxu0
    %v4607 = vpop.f32.mrb[0].mxu0
    %v4608 = vadd.f32 0.0, %v4607
    %v4609 = vpop.f32.mrb[0].mxu0
    %4610 = vmatprep.mubr.bf16.mxu0 0
    %4611 = vmatmul.mubr.bf16.gmra.mrb[0].mxu0 %v4540
    %v4612 = vpop.f32.mrb[0].mxu0
    %v4613 = vadd.f32 0.0, %v4612
    %v4614 = vpop.f32.mrb[0].mxu0
    %v4615 = vpop.f32.mrb[0].mxu0
    %v4616 = vadd.f32 0.0, %v4615
    %v4617 = vpop.f32.mrb[0].mxu0
    %4618 = vdwg.mxu0
    %v4619 = vmul.f32 %v4589, 0.17677669
    %v4620 = vmul.f32 %v4592, 0.17677669
    %v4621 = vmul.f32 %v4597, 0.17677669
    %v4622 = vmul.f32 %v4600, 0.17677669
    %v4623 = vmul.f32 %v4605, 0.17677669
    %v4624 = vmul.f32 %v4608, 0.17677669
    %v4625 = vmul.f32 %v4613, 0.17677669
    %v4626 = vmul.f32 %v4616, 0.17677669
    %v4627 = vadd.f32 %v4619, %v366
    %v4628 = vadd.f32 %v4620, %v367
    %v4629 = vadd.f32 %v4621, %v368
    %v4630 = vadd.f32 %v4622, %v369
    %v4631 = vadd.f32 %v4623, %v370
    %v4632 = vadd.f32 %v4624, %v371
    %v4633 = vadd.f32 %v4625, %v372
    %v4634 = vadd.f32 %v4626, %v373
    %v4635 = vsel %vm913, %v4627, -inf
    %4636 = vmax.xlane.f32.xlu0 %v4635
    %v4637 = vpop.xlane.xlu0 %4636
    %v4638 = vsel %vm913, %v4628, -inf
    %4639 = vmax.xlane.f32.xlu0 %v4638
    %v4640 = vpop.xlane.xlu0 %4639
    %v4641 = vsel %vm913, %v4629, -inf
    %4642 = vmax.xlane.f32.xlu0 %v4641
    %v4643 = vpop.xlane.xlu0 %4642
    %v4644 = vsel %vm913, %v4630, -inf
    %4645 = vmax.xlane.f32.xlu0 %v4644
    %v4646 = vpop.xlane.xlu0 %4645
    %v4647 = vsel %vm913, %v4631, -inf
    %4648 = vmax.xlane.f32.xlu0 %v4647
    %v4649 = vpop.xlane.xlu0 %4648
    %v4650 = vsel %vm913, %v4632, -inf
    %4651 = vmax.xlane.f32.xlu0 %v4650
    %v4652 = vpop.xlane.xlu0 %4651
    %v4653 = vsel %vm913, %v4633, -inf
    %4654 = vmax.xlane.f32.xlu0 %v4653
    %v4655 = vpop.xlane.xlu0 %4654
    %v4656 = vsel %vm913, %v4634, -inf
    %4657 = vmax.xlane.f32.xlu0 %v4656
    %v4658 = vpop.xlane.xlu0 %4657
    %v4659 = vsub.f32 %v4627, %v4637
    %v4660 = vsub.f32 %v4628, %v4640
    %v4661 = vsub.f32 %v4629, %v4643
    %v4662 = vsub.f32 %v4630, %v4646
    %v4663 = vsub.f32 %v4631, %v4649
    %v4664 = vsub.f32 %v4632, %v4652
    %v4665 = vsub.f32 %v4633, %v4655
    %v4666 = vsub.f32 %v4634, %v4658
    %v4667 = vmul.f32 %v4659, 1.442695
    %v4668 = vpow.pop %v4667
    %v4669 = vmul.f32 %v4660, 1.442695
    %v4670 = vpow.pop %v4669
    %v4671 = vmul.f32 %v4661, 1.442695
    %v4672 = vpow.pop %v4671
    %v4673 = vmul.f32 %v4662, 1.442695
    %v4674 = vpow.pop %v4673
    %v4675 = vmul.f32 %v4663, 1.442695
    %v4676 = vpow.pop %v4675
    %v4677 = vmul.f32 %v4664, 1.442695
    %v4678 = vpow.pop %v4677
    %v4679 = vmul.f32 %v4665, 1.442695
    %v4680 = vpow.pop %v4679
    %v4681 = vmul.f32 %v4666, 1.442695
    %v4682 = vpow.pop %v4681
    %v4683 = vsel %vm913, %v4668, 0.0
    %4684 = vadd.xlane.f32.xlu0 %v4683
    %v4685 = vpop.xlane.xlu0 %4684
    %v4686 = vsel %vm913, %v4670, 0.0
    %4687 = vadd.xlane.f32.xlu0 %v4686
    %v4688 = vpop.xlane.xlu0 %4687
    %v4689 = vsel %vm913, %v4672, 0.0
    %4690 = vadd.xlane.f32.xlu0 %v4689
    %v4691 = vpop.xlane.xlu0 %4690
    %v4692 = vsel %vm913, %v4674, 0.0
    %4693 = vadd.xlane.f32.xlu0 %v4692
    %v4694 = vpop.xlane.xlu0 %4693
    %v4695 = vsel %vm913, %v4676, 0.0
    %4696 = vadd.xlane.f32.xlu0 %v4695
    %v4697 = vpop.xlane.xlu0 %4696
    %v4698 = vsel %vm913, %v4678, 0.0
    %4699 = vadd.xlane.f32.xlu0 %v4698
    %v4700 = vpop.xlane.xlu0 %4699
    %v4701 = vsel %vm913, %v4680, 0.0
    %4702 = vadd.xlane.f32.xlu0 %v4701
    %v4703 = vpop.xlane.xlu0 %4702
    %v4704 = vsel %vm913, %v4682, 0.0
    %4705 = vadd.xlane.f32.xlu0 %v4704
    %v4706 = vpop.xlane.xlu0 %4705
    %v4707 = vrcp.pop %v4685
    %v4708 = vrcp.pop %v4688
    %v4709 = vrcp.pop %v4691
    %v4710 = vrcp.pop %v4694
    %v4711 = vrcp.pop %v4697
    %v4712 = vrcp.pop %v4700
    %v4713 = vrcp.pop %v4703
    %v4714 = vrcp.pop %v4706
    %v4715 = vmul.f32 %v4668, %v4707
    %v4716 = vmul.f32 %v4670, %v4708
    %v4717 = vmul.f32 %v4672, %v4709
    %v4718 = vmul.f32 %v4674, %v4710
    %v4719 = vmul.f32 %v4676, %v4711
    %v4720 = vmul.f32 %v4678, %v4712
    %v4721 = vmul.f32 %v4680, %v4713
    %v4722 = vmul.f32 %v4682, %v4714
    %v4723 = vpack.c.bf16 %v4716, %v4715
    %v4724 = vpack.c.bf16 %v4718, %v4717
    %v4725 = vpack.c.bf16 %v4720, %v4719
    %v4726 = vpack.c.bf16 %v4722, %v4721
    %4727 = vrot.lane.b32.xlu0 %v3602, 32
    %v4728 = vpop.permute.xlu0 %4727
    %4729 = vrot.lane.b32.xlu0 %v3605, 32
    %v4730 = vpop.permute.xlu0 %4729
    %4731 = vrot.lane.b32.xlu0 %v3608, 32
    %v4732 = vpop.permute.xlu0 %4731
    %4733 = vrot.lane.b32.xlu0 %v3611, 32
    %v4734 = vpop.permute.xlu0 %4733
    %v4740 = vsel %vm913, %v4723, 0
    %v4743 = vsel %vm913, %v4724, 0
    %v4746 = vsel %vm913, %v4725, 0
    %v4749 = vsel %vm913, %v4726, 0
    %4751 = vmatprep.subr.bf16.mxu0 0
    %4752 = vmatpush1.bf16.msra.mxu0 %v4728
    %4753 = vmatprep.subr.bf16.mxu0 0
    %4754 = vmatpush1.bf16.msra.mxu0 %v4730
    %4755 = vmatprep.subr.bf16.mxu0 0
    %4756 = vmatpush1.bf16.msra.mxu0 %v4732
    %4757 = vmatprep.subr.bf16.mxu0 0
    %4758 = vmatpush1.bf16.msra.mxu0 %v4734
    %4759 = vmatprep.subr.bf16.mxu0 0
    %4760 = vmatpush1.bf16.msra.mxu0 0
    %4761 = vmatprep.subr.bf16.mxu0 0
    %4762 = vmatpush1.bf16.msra.mxu0 0
    %4763 = vmatprep.subr.bf16.mxu0 0
    %4764 = vmatpush1.bf16.msra.mxu0 0
    %4765 = vmatprep.subr.bf16.mxu0 0
    %4766 = vmatpush1.bf16.msra.mxu0 0
    %4767 = vmatprep.subr.bf16.mxu0 0
    %4768 = vmatpush1.bf16.msra.mxu0 0
    %4769 = vmatprep.subr.bf16.mxu0 0
    %4770 = vmatpush1.bf16.msra.mxu0 0
    %4771 = vmatprep.subr.bf16.mxu0 0
    %4772 = vmatpush1.bf16.msra.mxu0 0
    %4773 = vmatprep.subr.bf16.mxu0 0
    %4774 = vmatpush1.bf16.msra.mxu0 0
    %4775 = vmatprep.subr.bf16.mxu0 0
    %4776 = vmatpush1.bf16.msra.mxu0 0
    %4777 = vmatprep.subr.bf16.mxu0 0
    %4778 = vmatpush1.bf16.msra.mxu0 0
    %4779 = vmatprep.subr.bf16.mxu0 0
    %4780 = vmatpush1.bf16.msra.mxu0 0
    %4781 = vmatprep.subr.bf16.mxu0 0
    %4782 = vmatpush1.bf16.msra.mxu0 0
    %4783 = vmatprep.mubr.bf16.mxu0 0
    %4784 = vmatmul.mubr.bf16.gmra.mrb[0].mxu0 %v4740
    %v4785 = vpop.f32.mrb[0].mxu0
    %v4786 = vadd.f32 0.0, %v4785
    %v4787 = vpop.f32.mrb[0].mxu0
    %v4788 = vpop.f32.mrb[0].mxu0
    %v4789 = vadd.f32 0.0, %v4788
    %v4790 = vpop.f32.mrb[0].mxu0
    %4791 = vmatprep.mubr.bf16.mxu0 0
    %4792 = vmatmul.mubr.bf16.gmra.mrb[0].mxu0 %v4743
    %v4793 = vpop.f32.mrb[0].mxu0
    %v4794 = vadd.f32 0.0, %v4793
    %v4795 = vpop.f32.mrb[0].mxu0
    %v4796 = vpop.f32.mrb[0].mxu0
    %v4797 = vadd.f32 0.0, %v4796
    %v4798 = vpop.f32.mrb[0].mxu0
    %4799 = vmatprep.mubr.bf16.mxu0 0
    %4800 = vmatmul.mubr.bf16.gmra.mrb[0].mxu0 %v4746
    %v4801 = vpop.f32.mrb[0].mxu0
    %v4802 = vadd.f32 0.0, %v4801
    %v4803 = vpop.f32.mrb[0].mxu0
    %v4804 = vpop.f32.mrb[0].mxu0
    %v4805 = vadd.f32 0.0, %v4804
    %v4806 = vpop.f32.mrb[0].mxu0
    %4807 = vmatprep.mubr.bf16.mxu0 0
    %4808 = vmatmul.mubr.bf16.gmra.mrb[0].mxu0 %v4749
    %v4809 = vpop.f32.mrb[0].mxu0
    %v4810 = vadd.f32 0.0, %v4809
    %v4811 = vpop.f32.mrb[0].mxu0
    %v4812 = vpop.f32.mrb[0].mxu0
    %v4813 = vadd.f32 0.0, %v4812
    %v4814 = vpop.f32.mrb[0].mxu0
    %4815 = vdwg.mxu0
    %v4816 = vpack.c.bf16 %v4789, %v4786
    %v4817 = vpack.c.bf16 %v4797, %v4794
    %v4818 = vpack.c.bf16 %v4805, %v4802
    %v4819 = vpack.c.bf16 %v4813, %v4810
    %4824 = vrot.lane.b32.xlu0 %v4204, 32
    %v4825 = vpop.permute.xlu0 %4824
    %4826 = vrot.lane.b32.xlu0 %v4205, 32
    %v4827 = vpop.permute.xlu0 %4826
    %4828 = vrot.lane.b32.xlu0 %v4206, 32
    %v4829 = vpop.permute.xlu0 %4828
    %4830 = vrot.lane.b32.xlu0 %v4207, 32
    %v4831 = vpop.permute.xlu0 %4830
    %4836 = vrot.lane.b32.xlu0 %v4510, 64
    %v4837 = vpop.permute.xlu0 %4836
    %4838 = vrot.lane.b32.xlu0 %v4511, 64
    %v4839 = vpop.permute.xlu0 %4838
    %4840 = vrot.lane.b32.xlu0 %v4512, 64
    %v4841 = vpop.permute.xlu0 %4840
    %4842 = vrot.lane.b32.xlu0 %v4513, 64
    %v4843 = vpop.permute.xlu0 %4842
    %4848 = vrot.lane.b32.xlu0 %v4816, 96
    %v4849 = vpop.permute.xlu0 %4848
    %4850 = vrot.lane.b32.xlu0 %v4817, 96
    %v4851 = vpop.permute.xlu0 %4850
    %4852 = vrot.lane.b32.xlu0 %v4818, 96
    %v4853 = vpop.permute.xlu0 %4852
    %4854 = vrot.lane.b32.xlu0 %v4819, 96
    %v4855 = vpop.permute.xlu0 %4854
    %v4858 = vsel %vm807, %v3886, %v4825
    %v4861 = vsel %vm807, %v3887, %v4827
    %v4864 = vsel %vm807, %v3888, %v4829
    %v4867 = vsel %vm807, %v3889, %v4831
    %v4869 = vsel %vm913, %v4858, %v4837
    %v4871 = vsel %vm913, %v4861, %v4839
    %v4873 = vsel %vm913, %v4864, %v4841
    %v4875 = vsel %vm913, %v4867, %v4843
    %v4877 = vsel %vm2073, %v4869, %v4849
    %v4880 = vsel %vm2073, %v4871, %v4851
    %v4883 = vsel %vm2073, %v4873, %v4853
    %v4886 = vsel %vm2073, %v4875, %v4855
    %s4888 = scalar_lea.vmem %s6, 64
    %v4889 = vld [vmem:[%s4888] sm:$0xf]
    %v4890 = vld [vmem:[%s4888 + $0x4] sm:$0xf]
    %v4891 = vld [vmem:[%s4888 + $0x8] sm:$0xf]
    %v4892 = vld [vmem:[%s4888 + $0xc] sm:$0xf]
    %v4893 = vld [vmem:[%s4888 + $0x10] sm:$0xf]
    %v4894 = vld [vmem:[%s4888 + $0x14] sm:$0xf]
    %v4895 = vld [vmem:[%s4888 + $0x18] sm:$0xf]
    %v4896 = vld [vmem:[%s4888 + $0x1c] sm:$0xf]
    %v4897 = vld [vmem:[%s4888 + $0x20] sm:$0xf]
    %v4898 = vld [vmem:[%s4888 + $0x24] sm:$0xf]
    %v4899 = vld [vmem:[%s4888 + $0x28] sm:$0xf]
    %v4900 = vld [vmem:[%s4888 + $0x2c] sm:$0xf]
    %v4901 = vld [vmem:[%s4888 + $0x30] sm:$0xf]
    %v4902 = vld [vmem:[%s4888 + $0x34] sm:$0xf]
    %v4903 = vld [vmem:[%s4888 + $0x38] sm:$0xf]
    %v4904 = vld [vmem:[%s4888 + $0x3c] sm:$0xf]
    %v4921 = vunpack.c.l.b16 %v4889
    %v4922 = vunpack.c.l.b16 %v4890
    %v4923 = vunpack.c.l.b16 %v4891
    %v4924 = vunpack.c.l.b16 %v4892
    %v4925 = vunpack.c.l.b16 %v4893
    %v4926 = vunpack.c.l.b16 %v4894
    %v4927 = vunpack.c.l.b16 %v4895
    %v4928 = vunpack.c.l.b16 %v4896
    %v4929 = vunpack.c.l.b16 %v4897
    %v4930 = vunpack.c.l.b16 %v4898
    %v4931 = vunpack.c.l.b16 %v4899
    %v4932 = vunpack.c.l.b16 %v4900
    %v4933 = vunpack.c.l.b16 %v4901
    %v4934 = vunpack.c.l.b16 %v4902
    %v4935 = vunpack.c.l.b16 %v4903
    %v4936 = vunpack.c.l.b16 %v4904
    %v4937 = vpack.c.b16 %v4922, %v4921
    %v4938 = vpack.c.b16 %v4924, %v4923
    %v4939 = vpack.c.b16 %v4926, %v4925
    %v4940 = vpack.c.b16 %v4928, %v4927
    %v4941 = vpack.c.b16 %v4930, %v4929
    %v4942 = vpack.c.b16 %v4932, %v4931
    %v4943 = vpack.c.b16 %v4934, %v4933
    %v4944 = vpack.c.b16 %v4936, %v4935
    %4953 = vmatprep.subr.bf16.mxu0 0
    %4954 = vmatpush1.bf16.msra.mxu0 %v4937
    %4955 = vmatprep.subr.bf16.mxu0 0
    %4956 = vmatpush1.bf16.msra.mxu0 %v4938
    %4957 = vmatprep.subr.bf16.mxu0 0
    %4958 = vmatpush1.bf16.msra.mxu0 %v4939
    %4959 = vmatprep.subr.bf16.mxu0 0
    %4960 = vmatpush1.bf16.msra.mxu0 %v4940
    %4961 = vmatprep.subr.bf16.mxu0 0
    %4962 = vmatpush1.bf16.msra.mxu0 %v4941
    %4963 = vmatprep.subr.bf16.mxu0 0
    %4964 = vmatpush1.bf16.msra.mxu0 %v4942
    %4965 = vmatprep.subr.bf16.mxu0 0
    %4966 = vmatpush1.bf16.msra.mxu0 %v4943
    %4967 = vmatprep.subr.bf16.mxu0 0
    %4968 = vmatpush1.bf16.msra.mxu0 %v4944
    %4969 = vmatprep.subr.bf16.mxu0 0
    %4970 = vmatpush1.bf16.msra.mxu0 0
    %4971 = vmatprep.subr.bf16.mxu0 0
    %4972 = vmatpush1.bf16.msra.mxu0 0
    %4973 = vmatprep.subr.bf16.mxu0 0
    %4974 = vmatpush1.bf16.msra.mxu0 0
    %4975 = vmatprep.subr.bf16.mxu0 0
    %4976 = vmatpush1.bf16.msra.mxu0 0
    %4977 = vmatprep.subr.bf16.mxu0 0
    %4978 = vmatpush1.bf16.msra.mxu0 0
    %4979 = vmatprep.subr.bf16.mxu0 0
    %4980 = vmatpush1.bf16.msra.mxu0 0
    %4981 = vmatprep.subr.bf16.mxu0 0
    %4982 = vmatpush1.bf16.msra.mxu0 0
    %4983 = vmatprep.subr.bf16.mxu0 0
    %4984 = vmatpush1.bf16.msra.mxu0 0
    %4985 = vmatprep.mubr.bf16.mxu0 0
    %4986 = vmatmul.mubr.bf16.gmra.mrb[0].mxu0 %v4877
    %v4987 = vpop.f32.mrb[0].mxu0
    %v4988 = vadd.f32 0.0, %v4987
    %v4989 = vpop.f32.mrb[0].mxu0
    %v4990 = vpop.f32.mrb[0].mxu0
    %v4991 = vadd.f32 0.0, %v4990
    %v4992 = vpop.f32.mrb[0].mxu0
    %4993 = vmatprep.mubr.bf16.mxu0 0
    %4994 = vmatmul.mubr.bf16.gmra.mrb[0].mxu0 %v4880
    %v4995 = vpop.f32.mrb[0].mxu0
    %v4996 = vadd.f32 0.0, %v4995
    %v4997 = vpop.f32.mrb[0].mxu0
    %v4998 = vpop.f32.mrb[0].mxu0
    %v4999 = vadd.f32 0.0, %v4998
    %v5000 = vpop.f32.mrb[0].mxu0
    %5001 = vmatprep.mubr.bf16.mxu0 0
    %5002 = vmatmul.mubr.bf16.gmra.mrb[0].mxu0 %v4883
    %v5003 = vpop.f32.mrb[0].mxu0
    %v5004 = vadd.f32 0.0, %v5003
    %v5005 = vpop.f32.mrb[0].mxu0
    %v5006 = vpop.f32.mrb[0].mxu0
    %v5007 = vadd.f32 0.0, %v5006
    %v5008 = vpop.f32.mrb[0].mxu0
    %5009 = vmatprep.mubr.bf16.mxu0 0
    %5010 = vmatmul.mubr.bf16.gmra.mrb[0].mxu0 %v4886
    %v5011 = vpop.f32.mrb[0].mxu0
    %v5012 = vadd.f32 0.0, %v5011
    %v5013 = vpop.f32.mrb[0].mxu0
    %v5014 = vpop.f32.mrb[0].mxu0
    %v5015 = vadd.f32 0.0, %v5014
    %v5016 = vpop.f32.mrb[0].mxu0
    %5017 = vdwg.mxu0
    %v5018 = vadd.f32 %v3169, %v4988
    %v5019 = vadd.f32 %v3170, %v4991
    %v5020 = vadd.f32 %v3171, %v4996
    %v5021 = vadd.f32 %v3172, %v4999
    %v5022 = vadd.f32 %v3173, %v5004
    %v5023 = vadd.f32 %v3174, %v5007
    %v5024 = vadd.f32 %v3175, %v5012
    %v5025 = vadd.f32 %v3176, %v5015
    %s5026 = scalar_lea.vmem %s7, 1
    %v5027 = vld [vmem:[%s5026] sm:$0x1]
    %v5029 = vlaneseq
    %v5030 = vshrl.u32 %v5029, 7
    %v5031 = vsub.s32 0, %v5030
    %v5032 = vrot.slane %v5027, %v5031
    %v5034 = vadd.f32 %v5018, %v5032
    %v5035 = vadd.f32 %v5019, %v5032
    %v5036 = vadd.f32 %v5020, %v5032
    %v5037 = vadd.f32 %v5021, %v5032
    %v5038 = vadd.f32 %v5022, %v5032
    %v5039 = vadd.f32 %v5023, %v5032
    %v5040 = vadd.f32 %v5024, %v5032
    %v5041 = vadd.f32 %v5025, %v5032
    %s5042 = scalar_lea.vmem %s8, 1
    %v5043 = vld [vmem:[%s5042] sm:$0x1]
    %s5044 = scalar_lea.vmem %s9, 1
    %v5045 = vld [vmem:[%s5044] sm:$0x1]
    %5046 = vadd.xlane.f32.xlu0 %v5034
    %v5047 = vpop.xlane.xlu0 %5046
    %5048 = vadd.xlane.f32.xlu0 %v5035
    %v5049 = vpop.xlane.xlu0 %5048
    %5050 = vadd.xlane.f32.xlu0 %v5036
    %v5051 = vpop.xlane.xlu0 %5050
    %5052 = vadd.xlane.f32.xlu0 %v5037
    %v5053 = vpop.xlane.xlu0 %5052
    %5054 = vadd.xlane.f32.xlu0 %v5038
    %v5055 = vpop.xlane.xlu0 %5054
    %5056 = vadd.xlane.f32.xlu0 %v5039
    %v5057 = vpop.xlane.xlu0 %5056
    %5058 = vadd.xlane.f32.xlu0 %v5040
    %v5059 = vpop.xlane.xlu0 %5058
    %5060 = vadd.xlane.f32.xlu0 %v5041
    %v5061 = vpop.xlane.xlu0 %5060
    %v5062 = vmul.f32 %v5047, %v392
    %v5063 = vmul.f32 %v5049, %v392
    %v5064 = vmul.f32 %v5051, %v392
    %v5065 = vmul.f32 %v5053, %v392
    %v5066 = vmul.f32 %v5055, %v392
    %v5067 = vmul.f32 %v5057, %v392
    %v5068 = vmul.f32 %v5059, %v392
    %v5069 = vmul.f32 %v5061, %v392
    %v5070 = vsub.f32 %v5034, %v5062
    %v5071 = vsub.f32 %v5035, %v5063
    %v5072 = vsub.f32 %v5036, %v5064
    %v5073 = vsub.f32 %v5037, %v5065
    %v5074 = vsub.f32 %v5038, %v5066
    %v5075 = vsub.f32 %v5039, %v5067
    %v5076 = vsub.f32 %v5040, %v5068
    %v5077 = vsub.f32 %v5041, %v5069
    %v5078 = vmul.f32 %v5070, %v5070
    %v5079 = vmul.f32 %v5071, %v5071
    %v5080 = vmul.f32 %v5072, %v5072
    %v5081 = vmul.f32 %v5073, %v5073
    %v5082 = vmul.f32 %v5074, %v5074
    %v5083 = vmul.f32 %v5075, %v5075
    %v5084 = vmul.f32 %v5076, %v5076
    %v5085 = vmul.f32 %v5077, %v5077
    %5086 = vadd.xlane.f32.xlu0 %v5078
    %v5087 = vpop.xlane.xlu0 %5086
    %5088 = vadd.xlane.f32.xlu0 %v5079
    %v5089 = vpop.xlane.xlu0 %5088
    %5090 = vadd.xlane.f32.xlu0 %v5080
    %v5091 = vpop.xlane.xlu0 %5090
    %5092 = vadd.xlane.f32.xlu0 %v5081
    %v5093 = vpop.xlane.xlu0 %5092
    %5094 = vadd.xlane.f32.xlu0 %v5082
    %v5095 = vpop.xlane.xlu0 %5094
    %5096 = vadd.xlane.f32.xlu0 %v5083
    %v5097 = vpop.xlane.xlu0 %5096
    %5098 = vadd.xlane.f32.xlu0 %v5084
    %v5099 = vpop.xlane.xlu0 %5098
    %5100 = vadd.xlane.f32.xlu0 %v5085
    %v5101 = vpop.xlane.xlu0 %5100
    %v5102 = vmul.f32 %v5087, %v392
    %v5103 = vmul.f32 %v5089, %v392
    %v5104 = vmul.f32 %v5091, %v392
    %v5105 = vmul.f32 %v5093, %v392
    %v5106 = vmul.f32 %v5095, %v392
    %v5107 = vmul.f32 %v5097, %v392
    %v5108 = vmul.f32 %v5099, %v392
    %v5109 = vmul.f32 %v5101, %v392
    %v5110 = vadd.f32 %v5102, 1e-05
    %v5111 = vadd.f32 %v5103, 1e-05
    %v5112 = vadd.f32 %v5104, 1e-05
    %v5113 = vadd.f32 %v5105, 1e-05
    %v5114 = vadd.f32 %v5106, 1e-05
    %v5115 = vadd.f32 %v5107, 1e-05
    %v5116 = vadd.f32 %v5108, 1e-05
    %v5117 = vadd.f32 %v5109, 1e-05
    %v5118 = vrsqrt.pop %v5110
    %v5119 = vrsqrt.pop %v5111
    %v5120 = vrsqrt.pop %v5112
    %v5121 = vrsqrt.pop %v5113
    %v5122 = vrsqrt.pop %v5114
    %v5123 = vrsqrt.pop %v5115
    %v5124 = vrsqrt.pop %v5116
    %v5125 = vrsqrt.pop %v5117
    %v5126 = vmul.f32 %v5070, %v5118
    %v5127 = vmul.f32 %v5071, %v5119
    %v5128 = vmul.f32 %v5072, %v5120
    %v5129 = vmul.f32 %v5073, %v5121
    %v5130 = vmul.f32 %v5074, %v5122
    %v5131 = vmul.f32 %v5075, %v5123
    %v5132 = vmul.f32 %v5076, %v5124
    %v5133 = vmul.f32 %v5077, %v5125
    %v5135 = vlaneseq
    %v5136 = vshrl.u32 %v5135, 7
    %v5137 = vsub.s32 0, %v5136
    %v5138 = vrot.slane %v5043, %v5137
    %v5140 = vmul.f32 %v5126, %v5138
    %v5141 = vmul.f32 %v5127, %v5138
    %v5142 = vmul.f32 %v5128, %v5138
    %v5143 = vmul.f32 %v5129, %v5138
    %v5144 = vmul.f32 %v5130, %v5138
    %v5145 = vmul.f32 %v5131, %v5138
    %v5146 = vmul.f32 %v5132, %v5138
    %v5147 = vmul.f32 %v5133, %v5138
    %v5149 = vlaneseq
    %v5150 = vshrl.u32 %v5149, 7
    %v5151 = vsub.s32 0, %v5150
    %v5152 = vrot.slane %v5045, %v5151
    %v5154 = vadd.f32 %v5140, %v5152
    %v5155 = vadd.f32 %v5141, %v5152
    %v5156 = vadd.f32 %v5142, %v5152
    %v5157 = vadd.f32 %v5143, %v5152
    %v5158 = vadd.f32 %v5144, %v5152
    %v5159 = vadd.f32 %v5145, %v5152
    %v5160 = vadd.f32 %v5146, %v5152
    %v5161 = vadd.f32 %v5147, %v5152
    %v5162 = vpack.c.bf16 %v5155, %v5154
    %v5163 = vpack.c.bf16 %v5157, %v5156
    %v5164 = vpack.c.bf16 %v5159, %v5158
    %v5165 = vpack.c.bf16 %v5161, %v5160
    %s5166 = scalar_lea.vmem [#allocation5], 256
    %v5167 = vld [vmem:[%s5166] sm:$0xff]
    %v5168 = vld [vmem:[%s5166 + $0x8] sm:$0xff]
    %v5169 = vld [vmem:[%s5166 + $0x10] sm:$0xff]
    %v5170 = vld [vmem:[%s5166 + $0x18] sm:$0xff]
    %v5171 = vld [vmem:[%s5166 + $0x20] sm:$0xff]
    %v5172 = vld [vmem:[%s5166 + $0x28] sm:$0xff]
    %v5173 = vld [vmem:[%s5166 + $0x30] sm:$0xff]
    %v5174 = vld [vmem:[%s5166 + $0x38] sm:$0xff]
    %v5175 = vld [vmem:[%s5166 + $0x40] sm:$0xff]
    %v5176 = vld [vmem:[%s5166 + $0x48] sm:$0xff]
    %v5177 = vld [vmem:[%s5166 + $0x50] sm:$0xff]
    %v5178 = vld [vmem:[%s5166 + $0x58] sm:$0xff]
    %v5179 = vld [vmem:[%s5166 + $0x60] sm:$0xff]
    %v5180 = vld [vmem:[%s5166 + $0x68] sm:$0xff]
    %v5181 = vld [vmem:[%s5166 + $0x70] sm:$0xff]
    %v5182 = vld [vmem:[%s5166 + $0x78] sm:$0xff]
    %v5183 = vld [vmem:[%s5166 + $0x80] sm:$0xff]
    %v5184 = vld [vmem:[%s5166 + $0x88] sm:$0xff]
    %v5185 = vld [vmem:[%s5166 + $0x90] sm:$0xff]
    %v5186 = vld [vmem:[%s5166 + $0x98] sm:$0xff]
    %v5187 = vld [vmem:[%s5166 + $0xa0] sm:$0xff]
    %v5188 = vld [vmem:[%s5166 + $0xa8] sm:$0xff]
    %v5189 = vld [vmem:[%s5166 + $0xb0] sm:$0xff]
    %v5190 = vld [vmem:[%s5166 + $0xb8] sm:$0xff]
    %v5191 = vld [vmem:[%s5166 + $0xc0] sm:$0xff]
    %v5192 = vld [vmem:[%s5166 + $0xc8] sm:$0xff]
    %v5193 = vld [vmem:[%s5166 + $0xd0] sm:$0xff]
    %v5194 = vld [vmem:[%s5166 + $0xd8] sm:$0xff]
    %v5195 = vld [vmem:[%s5166 + $0xe0] sm:$0xff]
    %v5196 = vld [vmem:[%s5166 + $0xe8] sm:$0xff]
    %v5197 = vld [vmem:[%s5166 + $0xf0] sm:$0xff]
    %v5198 = vld [vmem:[%s5166 + $0xf8] sm:$0xff]
    %s5199 = scalar_lea.vmem %s11, 4
    %v5200 = vld [vmem:[%s5199] sm:$0xf]
    %v5202 = vlaneseq
    %v5203 = vshrl.u32 %v5202, 7
    %v5204 = vsub.s32 0, %v5203
    %v5205 = vrot.slane %v5200, %v5204
    %v5206 = vlaneseq
    %v5207 = vshrl.u32 %v5206, 7
    %v5208 = vsub.s32 1, %v5207
    %v5209 = vrot.slane %v5200, %v5208
    %v5210 = vlaneseq
    %v5211 = vshrl.u32 %v5210, 7
    %v5212 = vsub.s32 2, %v5211
    %v5213 = vrot.slane %v5200, %v5212
    %v5214 = vlaneseq
    %v5215 = vshrl.u32 %v5214, 7
    %v5216 = vsub.s32 3, %v5215
    %v5217 = vrot.slane %v5200, %v5216
    %v5254 = vunpack.c.l.b16 %v5167
    %v5255 = vunpack.c.h.b16 %v5167
    %v5256 = vunpack.c.l.b16 %v5168
    %v5257 = vunpack.c.h.b16 %v5168
    %v5258 = vunpack.c.l.b16 %v5169
    %v5259 = vunpack.c.h.b16 %v5169
    %v5260 = vunpack.c.l.b16 %v5170
    %v5261 = vunpack.c.h.b16 %v5170
    %v5262 = vunpack.c.l.b16 %v5171
    %v5263 = vunpack.c.h.b16 %v5171
    %v5264 = vunpack.c.l.b16 %v5172
    %v5265 = vunpack.c.h.b16 %v5172
    %v5266 = vunpack.c.l.b16 %v5173
    %v5267 = vunpack.c.h.b16 %v5173
    %v5268 = vunpack.c.l.b16 %v5174
    %v5269 = vunpack.c.h.b16 %v5174
    %v5270 = vunpack.c.l.b16 %v5175
    %v5271 = vunpack.c.h.b16 %v5175
    %v5272 = vunpack.c.l.b16 %v5176
    %v5273 = vunpack.c.h.b16 %v5176
    %v5274 = vunpack.c.l.b16 %v5177
    %v5275 = vunpack.c.h.b16 %v5177
    %v5276 = vunpack.c.l.b16 %v5178
    %v5277 = vunpack.c.h.b16 %v5178
    %v5278 = vunpack.c.l.b16 %v5179
    %v5279 = vunpack.c.h.b16 %v5179
    %v5280 = vunpack.c.l.b16 %v5180
    %v5281 = vunpack.c.h.b16 %v5180
    %v5282 = vunpack.c.l.b16 %v5181
    %v5283 = vunpack.c.h.b16 %v5181
    %v5284 = vunpack.c.l.b16 %v5182
    %v5285 = vunpack.c.h.b16 %v5182
    %v5286 = vunpack.c.l.b16 %v5183
    %v5287 = vunpack.c.h.b16 %v5183
    %v5288 = vunpack.c.l.b16 %v5184
    %v5289 = vunpack.c.h.b16 %v5184
    %v5290 = vunpack.c.l.b16 %v5185
    %v5291 = vunpack.c.h.b16 %v5185
    %v5292 = vunpack.c.l.b16 %v5186
    %v5293 = vunpack.c.h.b16 %v5186
    %v5294 = vunpack.c.l.b16 %v5187
    %v5295 = vunpack.c.h.b16 %v5187
    %v5296 = vunpack.c.l.b16 %v5188
    %v5297 = vunpack.c.h.b16 %v5188
    %v5298 = vunpack.c.l.b16 %v5189
    %v5299 = vunpack.c.h.b16 %v5189
    %v5300 = vunpack.c.l.b16 %v5190
    %v5301 = vunpack.c.h.b16 %v5190
    %v5302 = vunpack.c.l.b16 %v5191
    %v5303 = vunpack.c.h.b16 %v5191
    %v5304 = vunpack.c.l.b16 %v5192
    %v5305 = vunpack.c.h.b16 %v5192
    %v5306 = vunpack.c.l.b16 %v5193
    %v5307 = vunpack.c.h.b16 %v5193
    %v5308 = vunpack.c.l.b16 %v5194
    %v5309 = vunpack.c.h.b16 %v5194
    %v5310 = vunpack.c.l.b16 %v5195
    %v5311 = vunpack.c.h.b16 %v5195
    %v5312 = vunpack.c.l.b16 %v5196
    %v5313 = vunpack.c.h.b16 %v5196
    %v5314 = vunpack.c.l.b16 %v5197
    %v5315 = vunpack.c.h.b16 %v5197
    %v5316 = vunpack.c.l.b16 %v5198
    %v5317 = vunpack.c.h.b16 %v5198
    %v5318 = vpack.c.b16 %v5258, %v5254
    %v5319 = vpack.c.b16 %v5259, %v5255
    %v5320 = vpack.c.b16 %v5260, %v5256
    %v5321 = vpack.c.b16 %v5261, %v5257
    %v5322 = vpack.c.b16 %v5266, %v5262
    %v5323 = vpack.c.b16 %v5267, %v5263
    %v5324 = vpack.c.b16 %v5268, %v5264
    %v5325 = vpack.c.b16 %v5269, %v5265
    %v5326 = vpack.c.b16 %v5274, %v5270
    %v5327 = vpack.c.b16 %v5275, %v5271
    %v5328 = vpack.c.b16 %v5276, %v5272
    %v5329 = vpack.c.b16 %v5277, %v5273
    %v5330 = vpack.c.b16 %v5282, %v5278
    %v5331 = vpack.c.b16 %v5283, %v5279
    %v5332 = vpack.c.b16 %v5284, %v5280
    %v5333 = vpack.c.b16 %v5285, %v5281
    %v5334 = vpack.c.b16 %v5290, %v5286
    %v5335 = vpack.c.b16 %v5291, %v5287
    %v5336 = vpack.c.b16 %v5292, %v5288
    %v5337 = vpack.c.b16 %v5293, %v5289
    %v5338 = vpack.c.b16 %v5298, %v5294
    %v5339 = vpack.c.b16 %v5299, %v5295
    %v5340 = vpack.c.b16 %v5300, %v5296
    %v5341 = vpack.c.b16 %v5301, %v5297
    %v5342 = vpack.c.b16 %v5306, %v5302
    %v5343 = vpack.c.b16 %v5307, %v5303
    %v5344 = vpack.c.b16 %v5308, %v5304
    %v5345 = vpack.c.b16 %v5309, %v5305
    %v5346 = vpack.c.b16 %v5314, %v5310
    %v5347 = vpack.c.b16 %v5315, %v5311
    %v5348 = vpack.c.b16 %v5316, %v5312
    %v5349 = vpack.c.b16 %v5317, %v5313
    %5382 = vmatprep.subr.bf16.mxu0 %v5319
    %5383 = vmatpush1.bf16.msra.mxu0 %v5318
    %5384 = vmatprep.subr.bf16.mxu0 %v5323
    %5385 = vmatpush1.bf16.msra.mxu0 %v5322
    %5386 = vmatprep.subr.bf16.mxu0 %v5327
    %5387 = vmatpush1.bf16.msra.mxu0 %v5326
    %5388 = vmatprep.subr.bf16.mxu0 %v5331
    %5389 = vmatpush1.bf16.msra.mxu0 %v5330
    %5390 = vmatprep.subr.bf16.mxu0 %v5335
    %5391 = vmatpush1.bf16.msra.mxu0 %v5334
    %5392 = vmatprep.subr.bf16.mxu0 %v5339
    %5393 = vmatpush1.bf16.msra.mxu0 %v5338
    %5394 = vmatprep.subr.bf16.mxu0 %v5343
    %5395 = vmatpush1.bf16.msra.mxu0 %v5342
    %5396 = vmatprep.subr.bf16.mxu0 %v5347
    %5397 = vmatpush1.bf16.msra.mxu0 %v5346
    %5398 = vmatprep.subr.bf16.mxu0 0
    %5399 = vmatpush1.bf16.msra.mxu0 0
    %5400 = vmatprep.subr.bf16.mxu0 0
    %5401 = vmatpush1.bf16.msra.mxu0 0
    %5402 = vmatprep.subr.bf16.mxu0 0
    %5403 = vmatpush1.bf16.msra.mxu0 0
    %5404 = vmatprep.subr.bf16.mxu0 0
    %5405 = vmatpush1.bf16.msra.mxu0 0
    %5406 = vmatprep.subr.bf16.mxu0 0
    %5407 = vmatpush1.bf16.msra.mxu0 0
    %5408 = vmatprep.subr.bf16.mxu0 0
    %5409 = vmatpush1.bf16.msra.mxu0 0
    %5410 = vmatprep.subr.bf16.mxu0 0
    %5411 = vmatpush1.bf16.msra.mxu0 0
    %5412 = vmatprep.subr.bf16.mxu0 0
    %5413 = vmatpush1.bf16.msra.mxu0 0
    %5414 = vmatprep.mubr.bf16.mxu0 0
    %5415 = vmatmul.mubr.bf16.gmra.mrb[0].mxu0 %v5162
    %v5416 = vpop.f32.mrb[0].mxu0
    %v5417 = vadd.f32 %v5205, %v5416
    %v5418 = vpop.f32.mrb[0].mxu0
    %v5419 = vadd.f32 %v5209, %v5418
    %v5420 = vpop.f32.mrb[0].mxu0
    %v5421 = vadd.f32 %v5205, %v5420
    %v5422 = vpop.f32.mrb[0].mxu0
    %v5423 = vadd.f32 %v5209, %v5422
    %5424 = vmatprep.mubr.bf16.mxu0 0
    %5425 = vmatmul.mubr.bf16.gmra.mrb[0].mxu0 %v5163
    %v5426 = vpop.f32.mrb[0].mxu0
    %v5427 = vadd.f32 %v5205, %v5426
    %v5428 = vpop.f32.mrb[0].mxu0
    %v5429 = vadd.f32 %v5209, %v5428
    %v5430 = vpop.f32.mrb[0].mxu0
    %v5431 = vadd.f32 %v5205, %v5430
    %v5432 = vpop.f32.mrb[0].mxu0
    %v5433 = vadd.f32 %v5209, %v5432
    %5434 = vmatprep.mubr.bf16.mxu0 0
    %5435 = vmatmul.mubr.bf16.gmra.mrb[0].mxu0 %v5164
    %v5436 = vpop.f32.mrb[0].mxu0
    %v5437 = vadd.f32 %v5205, %v5436
    %v5438 = vpop.f32.mrb[0].mxu0
    %v5439 = vadd.f32 %v5209, %v5438
    %v5440 = vpop.f32.mrb[0].mxu0
    %v5441 = vadd.f32 %v5205, %v5440
    %v5442 = vpop.f32.mrb[0].mxu0
    %v5443 = vadd.f32 %v5209, %v5442
    %5444 = vmatprep.mubr.bf16.mxu0 0
    %5445 = vmatmul.mubr.bf16.gmra.mrb[0].mxu0 %v5165
    %v5446 = vpop.f32.mrb[0].mxu0
    %v5447 = vadd.f32 %v5205, %v5446
    %v5448 = vpop.f32.mrb[0].mxu0
    %v5449 = vadd.f32 %v5209, %v5448
    %v5450 = vpop.f32.mrb[0].mxu0
    %v5451 = vadd.f32 %v5205, %v5450
    %v5452 = vpop.f32.mrb[0].mxu0
    %v5453 = vadd.f32 %v5209, %v5452
    %5454 = vdwg.mxu0
    %5455 = vmatprep.subr.bf16.mxu0 %v5321
    %5456 = vmatpush1.bf16.msra.mxu0 %v5320
    %5457 = vmatprep.subr.bf16.mxu0 %v5325
    %5458 = vmatpush1.bf16.msra.mxu0 %v5324
    %5459 = vmatprep.subr.bf16.mxu0 %v5329
    %5460 = vmatpush1.bf16.msra.mxu0 %v5328
    %5461 = vmatprep.subr.bf16.mxu0 %v5333
    %5462 = vmatpush1.bf16.msra.mxu0 %v5332
    %5463 = vmatprep.subr.bf16.mxu0 %v5337
    %5464 = vmatpush1.bf16.msra.mxu0 %v5336
    %5465 = vmatprep.subr.bf16.mxu0 %v5341
    %5466 = vmatpush1.bf16.msra.mxu0 %v5340
    %5467 = vmatprep.subr.bf16.mxu0 %v5345
    %5468 = vmatpush1.bf16.msra.mxu0 %v5344
    %5469 = vmatprep.subr.bf16.mxu0 %v5349
    %5470 = vmatpush1.bf16.msra.mxu0 %v5348
    %5471 = vmatprep.subr.bf16.mxu0 0
    %5472 = vmatpush1.bf16.msra.mxu0 0
    %5473 = vmatprep.subr.bf16.mxu0 0
    %5474 = vmatpush1.bf16.msra.mxu0 0
    %5475 = vmatprep.subr.bf16.mxu0 0
    %5476 = vmatpush1.bf16.msra.mxu0 0
    %5477 = vmatprep.subr.bf16.mxu0 0
    %5478 = vmatpush1.bf16.msra.mxu0 0
    %5479 = vmatprep.subr.bf16.mxu0 0
    %5480 = vmatpush1.bf16.msra.mxu0 0
    %5481 = vmatprep.subr.bf16.mxu0 0
    %5482 = vmatpush1.bf16.msra.mxu0 0
    %5483 = vmatprep.subr.bf16.mxu0 0
    %5484 = vmatpush1.bf16.msra.mxu0 0
    %5485 = vmatprep.subr.bf16.mxu0 0
    %5486 = vmatpush1.bf16.msra.mxu0 0
    %5487 = vmatprep.mubr.bf16.mxu0 0
    %5488 = vmatmul.mubr.bf16.gmra.mrb[0].mxu0 %v5162
    %v5489 = vpop.f32.mrb[0].mxu0
    %v5490 = vadd.f32 %v5213, %v5489
    %v5491 = vpop.f32.mrb[0].mxu0
    %v5492 = vadd.f32 %v5217, %v5491
    %v5493 = vpop.f32.mrb[0].mxu0
    %v5494 = vadd.f32 %v5213, %v5493
    %v5495 = vpop.f32.mrb[0].mxu0
    %v5496 = vadd.f32 %v5217, %v5495
    %5497 = vmatprep.mubr.bf16.mxu0 0
    %5498 = vmatmul.mubr.bf16.gmra.mrb[0].mxu0 %v5163
    %v5499 = vpop.f32.mrb[0].mxu0
    %v5500 = vadd.f32 %v5213, %v5499
    %v5501 = vpop.f32.mrb[0].mxu0
    %v5502 = vadd.f32 %v5217, %v5501
    %v5503 = vpop.f32.mrb[0].mxu0
    %v5504 = vadd.f32 %v5213, %v5503
    %v5505 = vpop.f32.mrb[0].mxu0
    %v5506 = vadd.f32 %v5217, %v5505
    %5507 = vmatprep.mubr.bf16.mxu0 0
    %5508 = vmatmul.mubr.bf16.gmra.mrb[0].mxu0 %v5164
    %v5509 = vpop.f32.mrb[0].mxu0
    %v5510 = vadd.f32 %v5213, %v5509
    %v5511 = vpop.f32.mrb[0].mxu0
    %v5512 = vadd.f32 %v5217, %v5511
    %v5513 = vpop.f32.mrb[0].mxu0
    %v5514 = vadd.f32 %v5213, %v5513
    %v5515 = vpop.f32.mrb[0].mxu0
    %v5516 = vadd.f32 %v5217, %v5515
    %5517 = vmatprep.mubr.bf16.mxu0 0
    %5518 = vmatmul.mubr.bf16.gmra.mrb[0].mxu0 %v5165
    %v5519 = vpop.f32.mrb[0].mxu0
    %v5520 = vadd.f32 %v5213, %v5519
    %v5521 = vpop.f32.mrb[0].mxu0
    %v5522 = vadd.f32 %v5217, %v5521
    %v5523 = vpop.f32.mrb[0].mxu0
    %v5524 = vadd.f32 %v5213, %v5523
    %v5525 = vpop.f32.mrb[0].mxu0
    %v5526 = vadd.f32 %v5217, %v5525
    %5527 = vdwg.mxu0
    %v5528 = vmax.f32 %v5417, 0.0
    %v5529 = vmax.f32 %v5419, 0.0
    %v5530 = vmax.f32 %v5490, 0.0
    %v5531 = vmax.f32 %v5492, 0.0
    %v5532 = vmax.f32 %v5421, 0.0
    %v5533 = vmax.f32 %v5423, 0.0
    %v5534 = vmax.f32 %v5494, 0.0
    %v5535 = vmax.f32 %v5496, 0.0
    %v5536 = vmax.f32 %v5427, 0.0
    %v5537 = vmax.f32 %v5429, 0.0
    %v5538 = vmax.f32 %v5500, 0.0
    %v5539 = vmax.f32 %v5502, 0.0
    %v5540 = vmax.f32 %v5431, 0.0
    %v5541 = vmax.f32 %v5433, 0.0
    %v5542 = vmax.f32 %v5504, 0.0
    %v5543 = vmax.f32 %v5506, 0.0
    %v5544 = vmax.f32 %v5437, 0.0
    %v5545 = vmax.f32 %v5439, 0.0
    %v5546 = vmax.f32 %v5510, 0.0
    %v5547 = vmax.f32 %v5512, 0.0
    %v5548 = vmax.f32 %v5441, 0.0
    %v5549 = vmax.f32 %v5443, 0.0
    %v5550 = vmax.f32 %v5514, 0.0
    %v5551 = vmax.f32 %v5516, 0.0
    %v5552 = vmax.f32 %v5447, 0.0
    %v5553 = vmax.f32 %v5449, 0.0
    %v5554 = vmax.f32 %v5520, 0.0
    %v5555 = vmax.f32 %v5522, 0.0
    %v5556 = vmax.f32 %v5451, 0.0
    %v5557 = vmax.f32 %v5453, 0.0
    %v5558 = vmax.f32 %v5524, 0.0
    %v5559 = vmax.f32 %v5526, 0.0
    %v5560 = vpack.c.bf16 %v5532, %v5528
    %v5561 = vpack.c.bf16 %v5533, %v5529
    %v5562 = vpack.c.bf16 %v5534, %v5530
    %v5563 = vpack.c.bf16 %v5535, %v5531
    %v5564 = vpack.c.bf16 %v5540, %v5536
    %v5565 = vpack.c.bf16 %v5541, %v5537
    %v5566 = vpack.c.bf16 %v5542, %v5538
    %v5567 = vpack.c.bf16 %v5543, %v5539
    %v5568 = vpack.c.bf16 %v5548, %v5544
    %v5569 = vpack.c.bf16 %v5549, %v5545
    %v5570 = vpack.c.bf16 %v5550, %v5546
    %v5571 = vpack.c.bf16 %v5551, %v5547
    %v5572 = vpack.c.bf16 %v5556, %v5552
    %v5573 = vpack.c.bf16 %v5557, %v5553
    %v5574 = vpack.c.bf16 %v5558, %v5554
    %v5575 = vpack.c.bf16 %v5559, %v5555
    %s5576 = scalar_lea.vmem [#allocation7], 256
    %v5577 = vld [vmem:[%s5576] sm:$0xf]
    %v5578 = vld [vmem:[%s5576 + $0x4] sm:$0xf]
    %v5579 = vld [vmem:[%s5576 + $0x8] sm:$0xf]
    %v5580 = vld [vmem:[%s5576 + $0xc] sm:$0xf]
    %v5581 = vld [vmem:[%s5576 + $0x10] sm:$0xf]
    %v5582 = vld [vmem:[%s5576 + $0x14] sm:$0xf]
    %v5583 = vld [vmem:[%s5576 + $0x18] sm:$0xf]
    %v5584 = vld [vmem:[%s5576 + $0x1c] sm:$0xf]
    %v5585 = vld [vmem:[%s5576 + $0x20] sm:$0xf]
    %v5586 = vld [vmem:[%s5576 + $0x24] sm:$0xf]
    %v5587 = vld [vmem:[%s5576 + $0x28] sm:$0xf]
    %v5588 = vld [vmem:[%s5576 + $0x2c] sm:$0xf]
    %v5589 = vld [vmem:[%s5576 + $0x30] sm:$0xf]
    %v5590 = vld [vmem:[%s5576 + $0x34] sm:$0xf]
    %v5591 = vld [vmem:[%s5576 + $0x38] sm:$0xf]
    %v5592 = vld [vmem:[%s5576 + $0x3c] sm:$0xf]
    %v5593 = vld [vmem:[%s5576 + $0x40] sm:$0xf]
    %v5594 = vld [vmem:[%s5576 + $0x44] sm:$0xf]
    %v5595 = vld [vmem:[%s5576 + $0x48] sm:$0xf]
    %v5596 = vld [vmem:[%s5576 + $0x4c] sm:$0xf]
    %v5597 = vld [vmem:[%s5576 + $0x50] sm:$0xf]
    %v5598 = vld [vmem:[%s5576 + $0x54] sm:$0xf]
    %v5599 = vld [vmem:[%s5576 + $0x58] sm:$0xf]
    %v5600 = vld [vmem:[%s5576 + $0x5c] sm:$0xf]
    %v5601 = vld [vmem:[%s5576 + $0x60] sm:$0xf]
    %v5602 = vld [vmem:[%s5576 + $0x64] sm:$0xf]
    %v5603 = vld [vmem:[%s5576 + $0x68] sm:$0xf]
    %v5604 = vld [vmem:[%s5576 + $0x6c] sm:$0xf]
    %v5605 = vld [vmem:[%s5576 + $0x70] sm:$0xf]
    %v5606 = vld [vmem:[%s5576 + $0x74] sm:$0xf]
    %v5607 = vld [vmem:[%s5576 + $0x78] sm:$0xf]
    %v5608 = vld [vmem:[%s5576 + $0x7c] sm:$0xf]
    %v5609 = vld [vmem:[%s5576 + $0x80] sm:$0xf]
    %v5610 = vld [vmem:[%s5576 + $0x84] sm:$0xf]
    %v5611 = vld [vmem:[%s5576 + $0x88] sm:$0xf]
    %v5612 = vld [vmem:[%s5576 + $0x8c] sm:$0xf]
    %v5613 = vld [vmem:[%s5576 + $0x90] sm:$0xf]
    %v5614 = vld [vmem:[%s5576 + $0x94] sm:$0xf]
    %v5615 = vld [vmem:[%s5576 + $0x98] sm:$0xf]
    %v5616 = vld [vmem:[%s5576 + $0x9c] sm:$0xf]
    %v5617 = vld [vmem:[%s5576 + $0xa0] sm:$0xf]
    %v5618 = vld [vmem:[%s5576 + $0xa4] sm:$0xf]
    %v5619 = vld [vmem:[%s5576 + $0xa8] sm:$0xf]
    %v5620 = vld [vmem:[%s5576 + $0xac] sm:$0xf]
    %v5621 = vld [vmem:[%s5576 + $0xb0] sm:$0xf]
    %v5622 = vld [vmem:[%s5576 + $0xb4] sm:$0xf]
    %v5623 = vld [vmem:[%s5576 + $0xb8] sm:$0xf]
    %v5624 = vld [vmem:[%s5576 + $0xbc] sm:$0xf]
    %v5625 = vld [vmem:[%s5576 + $0xc0] sm:$0xf]
    %v5626 = vld [vmem:[%s5576 + $0xc4] sm:$0xf]
    %v5627 = vld [vmem:[%s5576 + $0xc8] sm:$0xf]
    %v5628 = vld [vmem:[%s5576 + $0xcc] sm:$0xf]
    %v5629 = vld [vmem:[%s5576 + $0xd0] sm:$0xf]
    %v5630 = vld [vmem:[%s5576 + $0xd4] sm:$0xf]
    %v5631 = vld [vmem:[%s5576 + $0xd8] sm:$0xf]
    %v5632 = vld [vmem:[%s5576 + $0xdc] sm:$0xf]
    %v5633 = vld [vmem:[%s5576 + $0xe0] sm:$0xf]
    %v5634 = vld [vmem:[%s5576 + $0xe4] sm:$0xf]
    %v5635 = vld [vmem:[%s5576 + $0xe8] sm:$0xf]
    %v5636 = vld [vmem:[%s5576 + $0xec] sm:$0xf]
    %v5637 = vld [vmem:[%s5576 + $0xf0] sm:$0xf]
    %v5638 = vld [vmem:[%s5576 + $0xf4] sm:$0xf]
    %v5639 = vld [vmem:[%s5576 + $0xf8] sm:$0xf]
    %v5640 = vld [vmem:[%s5576 + $0xfc] sm:$0xf]
    %v5705 = vunpack.c.l.b16 %v5577
    %v5706 = vunpack.c.l.b16 %v5578
    %v5707 = vunpack.c.l.b16 %v5579
    %v5708 = vunpack.c.l.b16 %v5580
    %v5709 = vunpack.c.l.b16 %v5581
    %v5710 = vunpack.c.l.b16 %v5582
    %v5711 = vunpack.c.l.b16 %v5583
    %v5712 = vunpack.c.l.b16 %v5584
    %v5713 = vunpack.c.l.b16 %v5585
    %v5714 = vunpack.c.l.b16 %v5586
    %v5715 = vunpack.c.l.b16 %v5587
    %v5716 = vunpack.c.l.b16 %v5588
    %v5717 = vunpack.c.l.b16 %v5589
    %v5718 = vunpack.c.l.b16 %v5590
    %v5719 = vunpack.c.l.b16 %v5591
    %v5720 = vunpack.c.l.b16 %v5592
    %v5721 = vunpack.c.l.b16 %v5593
    %v5722 = vunpack.c.l.b16 %v5594
    %v5723 = vunpack.c.l.b16 %v5595
    %v5724 = vunpack.c.l.b16 %v5596
    %v5725 = vunpack.c.l.b16 %v5597
    %v5726 = vunpack.c.l.b16 %v5598
    %v5727 = vunpack.c.l.b16 %v5599
    %v5728 = vunpack.c.l.b16 %v5600
    %v5729 = vunpack.c.l.b16 %v5601
    %v5730 = vunpack.c.l.b16 %v5602
    %v5731 = vunpack.c.l.b16 %v5603
    %v5732 = vunpack.c.l.b16 %v5604
    %v5733 = vunpack.c.l.b16 %v5605
    %v5734 = vunpack.c.l.b16 %v5606
    %v5735 = vunpack.c.l.b16 %v5607
    %v5736 = vunpack.c.l.b16 %v5608
    %v5737 = vunpack.c.l.b16 %v5609
    %v5738 = vunpack.c.l.b16 %v5610
    %v5739 = vunpack.c.l.b16 %v5611
    %v5740 = vunpack.c.l.b16 %v5612
    %v5741 = vunpack.c.l.b16 %v5613
    %v5742 = vunpack.c.l.b16 %v5614
    %v5743 = vunpack.c.l.b16 %v5615
    %v5744 = vunpack.c.l.b16 %v5616
    %v5745 = vunpack.c.l.b16 %v5617
    %v5746 = vunpack.c.l.b16 %v5618
    %v5747 = vunpack.c.l.b16 %v5619
    %v5748 = vunpack.c.l.b16 %v5620
    %v5749 = vunpack.c.l.b16 %v5621
    %v5750 = vunpack.c.l.b16 %v5622
    %v5751 = vunpack.c.l.b16 %v5623
    %v5752 = vunpack.c.l.b16 %v5624
    %v5753 = vunpack.c.l.b16 %v5625
    %v5754 = vunpack.c.l.b16 %v5626
    %v5755 = vunpack.c.l.b16 %v5627
    %v5756 = vunpack.c.l.b16 %v5628
    %v5757 = vunpack.c.l.b16 %v5629
    %v5758 = vunpack.c.l.b16 %v5630
    %v5759 = vunpack.c.l.b16 %v5631
    %v5760 = vunpack.c.l.b16 %v5632
    %v5761 = vunpack.c.l.b16 %v5633
    %v5762 = vunpack.c.l.b16 %v5634
    %v5763 = vunpack.c.l.b16 %v5635
    %v5764 = vunpack.c.l.b16 %v5636
    %v5765 = vunpack.c.l.b16 %v5637
    %v5766 = vunpack.c.l.b16 %v5638
    %v5767 = vunpack.c.l.b16 %v5639
    %v5768 = vunpack.c.l.b16 %v5640
    %v5769 = vpack.c.b16 %v5706, %v5705
    %v5770 = vpack.c.b16 %v5708, %v5707
    %v5771 = vpack.c.b16 %v5710, %v5709
    %v5772 = vpack.c.b16 %v5712, %v5711
    %v5773 = vpack.c.b16 %v5714, %v5713
    %v5774 = vpack.c.b16 %v5716, %v5715
    %v5775 = vpack.c.b16 %v5718, %v5717
    %v5776 = vpack.c.b16 %v5720, %v5719
    %v5777 = vpack.c.b16 %v5722, %v5721
    %v5778 = vpack.c.b16 %v5724, %v5723
    %v5779 = vpack.c.b16 %v5726, %v5725
    %v5780 = vpack.c.b16 %v5728, %v5727
    %v5781 = vpack.c.b16 %v5730, %v5729
    %v5782 = vpack.c.b16 %v5732, %v5731
    %v5783 = vpack.c.b16 %v5734, %v5733
    %v5784 = vpack.c.b16 %v5736, %v5735
    %v5785 = vpack.c.b16 %v5738, %v5737
    %v5786 = vpack.c.b16 %v5740, %v5739
    %v5787 = vpack.c.b16 %v5742, %v5741
    %v5788 = vpack.c.b16 %v5744, %v5743
    %v5789 = vpack.c.b16 %v5746, %v5745
    %v5790 = vpack.c.b16 %v5748, %v5747
    %v5791 = vpack.c.b16 %v5750, %v5749
    %v5792 = vpack.c.b16 %v5752, %v5751
    %v5793 = vpack.c.b16 %v5754, %v5753
    %v5794 = vpack.c.b16 %v5756, %v5755
    %v5795 = vpack.c.b16 %v5758, %v5757
    %v5796 = vpack.c.b16 %v5760, %v5759
    %v5797 = vpack.c.b16 %v5762, %v5761
    %v5798 = vpack.c.b16 %v5764, %v5763
    %v5799 = vpack.c.b16 %v5766, %v5765
    %v5800 = vpack.c.b16 %v5768, %v5767
    %5833 = vmatprep.subr.bf16.mxu0 0
    %5834 = vmatpush1.bf16.msra.mxu0 %v5769
    %5835 = vmatprep.subr.bf16.mxu0 0
    %5836 = vmatpush1.bf16.msra.mxu0 %v5770
    %5837 = vmatprep.subr.bf16.mxu0 0
    %5838 = vmatpush1.bf16.msra.mxu0 %v5771
    %5839 = vmatprep.subr.bf16.mxu0 0
    %5840 = vmatpush1.bf16.msra.mxu0 %v5772
    %5841 = vmatprep.subr.bf16.mxu0 0
    %5842 = vmatpush1.bf16.msra.mxu0 %v5773
    %5843 = vmatprep.subr.bf16.mxu0 0
    %5844 = vmatpush1.bf16.msra.mxu0 %v5774
    %5845 = vmatprep.subr.bf16.mxu0 0
    %5846 = vmatpush1.bf16.msra.mxu0 %v5775
    %5847 = vmatprep.subr.bf16.mxu0 0
    %5848 = vmatpush1.bf16.msra.mxu0 %v5776
    %5849 = vmatprep.subr.bf16.mxu0 0
    %5850 = vmatpush1.bf16.msra.mxu0 %v5777
    %5851 = vmatprep.subr.bf16.mxu0 0
    %5852 = vmatpush1.bf16.msra.mxu0 %v5778
    %5853 = vmatprep.subr.bf16.mxu0 0
    %5854 = vmatpush1.bf16.msra.mxu0 %v5779
    %5855 = vmatprep.subr.bf16.mxu0 0
    %5856 = vmatpush1.bf16.msra.mxu0 %v5780
    %5857 = vmatprep.subr.bf16.mxu0 0
    %5858 = vmatpush1.bf16.msra.mxu0 %v5781
    %5859 = vmatprep.subr.bf16.mxu0 0
    %5860 = vmatpush1.bf16.msra.mxu0 %v5782
    %5861 = vmatprep.subr.bf16.mxu0 0
    %5862 = vmatpush1.bf16.msra.mxu0 %v5783
    %5863 = vmatprep.subr.bf16.mxu0 0
    %5864 = vmatpush1.bf16.msra.mxu0 %v5784
    %5865 = vmatprep.mubr.bf16.mxu0 %v5561
    %5866 = vmatmul.mubr.bf16.gmra.mrb[0].mxu0 %v5560
    %v5867 = vpop.f32.mrb[0].mxu0
    %v5868 = vadd.f32 0.0, %v5867
    %v5869 = vpop.f32.mrb[0].mxu0
    %v5870 = vpop.f32.mrb[0].mxu0
    %v5871 = vadd.f32 0.0, %v5870
    %v5872 = vpop.f32.mrb[0].mxu0
    %5873 = vmatprep.mubr.bf16.mxu0 %v5565
    %5874 = vmatmul.mubr.bf16.gmra.mrb[0].mxu0 %v5564
    %v5875 = vpop.f32.mrb[0].mxu0
    %v5876 = vadd.f32 0.0, %v5875
    %v5877 = vpop.f32.mrb[0].mxu0
    %v5878 = vpop.f32.mrb[0].mxu0
    %v5879 = vadd.f32 0.0, %v5878
    %v5880 = vpop.f32.mrb[0].mxu0
    %5881 = vmatprep.mubr.bf16.mxu0 %v5569
    %5882 = vmatmul.mubr.bf16.gmra.mrb[0].mxu0 %v5568
    %v5883 = vpop.f32.mrb[0].mxu0
    %v5884 = vadd.f32 0.0, %v5883
    %v5885 = vpop.f32.mrb[0].mxu0
    %v5886 = vpop.f32.mrb[0].mxu0
    %v5887 = vadd.f32 0.0, %v5886
    %v5888 = vpop.f32.mrb[0].mxu0
    %5889 = vmatprep.mubr.bf16.mxu0 %v5573
    %5890 = vmatmul.mubr.bf16.gmra.mrb[0].mxu0 %v5572
    %v5891 = vpop.f32.mrb[0].mxu0
    %v5892 = vadd.f32 0.0, %v5891
    %v5893 = vpop.f32.mrb[0].mxu0
    %v5894 = vpop.f32.mrb[0].mxu0
    %v5895 = vadd.f32 0.0, %v5894
    %v5896 = vpop.f32.mrb[0].mxu0
    %5897 = vdwg.mxu0
    %5898 = vmatprep.subr.bf16.mxu0 0
    %5899 = vmatpush1.bf16.msra.mxu0 %v5785
    %5900 = vmatprep.subr.bf16.mxu0 0
    %5901 = vmatpush1.bf16.msra.mxu0 %v5786
    %5902 = vmatprep.subr.bf16.mxu0 0
    %5903 = vmatpush1.bf16.msra.mxu0 %v5787
    %5904 = vmatprep.subr.bf16.mxu0 0
    %5905 = vmatpush1.bf16.msra.mxu0 %v5788
    %5906 = vmatprep.subr.bf16.mxu0 0
    %5907 = vmatpush1.bf16.msra.mxu0 %v5789
    %5908 = vmatprep.subr.bf16.mxu0 0
    %5909 = vmatpush1.bf16.msra.mxu0 %v5790
    %5910 = vmatprep.subr.bf16.mxu0 0
    %5911 = vmatpush1.bf16.msra.mxu0 %v5791
    %5912 = vmatprep.subr.bf16.mxu0 0
    %5913 = vmatpush1.bf16.msra.mxu0 %v5792
    %5914 = vmatprep.subr.bf16.mxu0 0
    %5915 = vmatpush1.bf16.msra.mxu0 %v5793
    %5916 = vmatprep.subr.bf16.mxu0 0
    %5917 = vmatpush1.bf16.msra.mxu0 %v5794
    %5918 = vmatprep.subr.bf16.mxu0 0
    %5919 = vmatpush1.bf16.msra.mxu0 %v5795
    %5920 = vmatprep.subr.bf16.mxu0 0
    %5921 = vmatpush1.bf16.msra.mxu0 %v5796
    %5922 = vmatprep.subr.bf16.mxu0 0
    %5923 = vmatpush1.bf16.msra.mxu0 %v5797
    %5924 = vmatprep.subr.bf16.mxu0 0
    %5925 = vmatpush1.bf16.msra.mxu0 %v5798
    %5926 = vmatprep.subr.bf16.mxu0 0
    %5927 = vmatpush1.bf16.msra.mxu0 %v5799
    %5928 = vmatprep.subr.bf16.mxu0 0
    %5929 = vmatpush1.bf16.msra.mxu0 %v5800
    %5930 = vmatprep.mubr.bf16.mxu0 %v5563
    %5931 = vmatmul.mubr.bf16.gmra.mrb[0].mxu0 %v5562
    %v5932 = vpop.f32.mrb[0].mxu0
    %v5933 = vadd.f32 %v5868, %v5932
    %v5934 = vpop.f32.mrb[0].mxu0
    %v5935 = vpop.f32.mrb[0].mxu0
    %v5936 = vadd.f32 %v5871, %v5935
    %v5937 = vpop.f32.mrb[0].mxu0
    %5938 = vmatprep.mubr.bf16.mxu0 %v5567
    %5939 = vmatmul.mubr.bf16.gmra.mrb[0].mxu0 %v5566
    %v5940 = vpop.f32.mrb[0].mxu0
    %v5941 = vadd.f32 %v5876, %v5940
    %v5942 = vpop.f32.mrb[0].mxu0
    %v5943 = vpop.f32.mrb[0].mxu0
    %v5944 = vadd.f32 %v5879, %v5943
    %v5945 = vpop.f32.mrb[0].mxu0
    %5946 = vmatprep.mubr.bf16.mxu0 %v5571
    %5947 = vmatmul.mubr.bf16.gmra.mrb[0].mxu0 %v5570
    %v5948 = vpop.f32.mrb[0].mxu0
    %v5949 = vadd.f32 %v5884, %v5948
    %v5950 = vpop.f32.mrb[0].mxu0
    %v5951 = vpop.f32.mrb[0].mxu0
    %v5952 = vadd.f32 %v5887, %v5951
    %v5953 = vpop.f32.mrb[0].mxu0
    %5954 = vmatprep.mubr.bf16.mxu0 %v5575
    %5955 = vmatmul.mubr.bf16.gmra.mrb[0].mxu0 %v5574
    %v5956 = vpop.f32.mrb[0].mxu0
    %v5957 = vadd.f32 %v5892, %v5956
    %v5958 = vpop.f32.mrb[0].mxu0
    %v5959 = vpop.f32.mrb[0].mxu0
    %v5960 = vadd.f32 %v5895, %v5959
    %v5961 = vpop.f32.mrb[0].mxu0
    %5962 = vdwg.mxu0
    %v5963 = vadd.f32 %v5034, %v5933
    %v5964 = vadd.f32 %v5035, %v5936
    %v5965 = vadd.f32 %v5036, %v5941
    %v5966 = vadd.f32 %v5037, %v5944
    %v5967 = vadd.f32 %v5038, %v5949
    %v5968 = vadd.f32 %v5039, %v5952
    %v5969 = vadd.f32 %v5040, %v5957
    %v5970 = vadd.f32 %v5041, %v5960
    %s5971 = scalar_lea.vmem %s13, 1
    %v5972 = vld [vmem:[%s5971] sm:$0x1]
    %v5974 = vlaneseq
    %v5975 = vshrl.u32 %v5974, 7
    %v5976 = vsub.s32 0, %v5975
    %v5977 = vrot.slane %v5972, %v5976
    %v5979 = vadd.f32 %v5963, %v5977
    %v5980 = vadd.f32 %v5964, %v5977
    %v5981 = vadd.f32 %v5965, %v5977
    %v5982 = vadd.f32 %v5966, %v5977
    %v5983 = vadd.f32 %v5967, %v5977
    %v5984 = vadd.f32 %v5968, %v5977
    %v5985 = vadd.f32 %v5969, %v5977
    %v5986 = vadd.f32 %v5970, %v5977
    %v5987 = vld [vmem:[%s14] sm:$0x1]
    %v5988 = vld [vmem:[%s15] sm:$0x1]
    %5989 = vadd.xlane.f32.xlu0 %v5979
    %v5990 = vpop.xlane.xlu0 %5989
    %5991 = vadd.xlane.f32.xlu0 %v5980
    %v5992 = vpop.xlane.xlu0 %5991
    %5993 = vadd.xlane.f32.xlu0 %v5981
    %v5994 = vpop.xlane.xlu0 %5993
    %5995 = vadd.xlane.f32.xlu0 %v5982
    %v5996 = vpop.xlane.xlu0 %5995
    %5997 = vadd.xlane.f32.xlu0 %v5983
    %v5998 = vpop.xlane.xlu0 %5997
    %5999 = vadd.xlane.f32.xlu0 %v5984
    %v6000 = vpop.xlane.xlu0 %5999
    %6001 = vadd.xlane.f32.xlu0 %v5985
    %v6002 = vpop.xlane.xlu0 %6001
    %6003 = vadd.xlane.f32.xlu0 %v5986
    %v6004 = vpop.xlane.xlu0 %6003
    %v6005 = vmul.f32 %v5990, %v392
    %v6006 = vmul.f32 %v5992, %v392
    %v6007 = vmul.f32 %v5994, %v392
    %v6008 = vmul.f32 %v5996, %v392
    %v6009 = vmul.f32 %v5998, %v392
    %v6010 = vmul.f32 %v6000, %v392
    %v6011 = vmul.f32 %v6002, %v392
    %v6012 = vmul.f32 %v6004, %v392
    %v6013 = vsub.f32 %v5979, %v6005
    %v6014 = vsub.f32 %v5980, %v6006
    %v6015 = vsub.f32 %v5981, %v6007
    %v6016 = vsub.f32 %v5982, %v6008
    %v6017 = vsub.f32 %v5983, %v6009
    %v6018 = vsub.f32 %v5984, %v6010
    %v6019 = vsub.f32 %v5985, %v6011
    %v6020 = vsub.f32 %v5986, %v6012
    %v6021 = vmul.f32 %v6013, %v6013
    %v6022 = vmul.f32 %v6014, %v6014
    %v6023 = vmul.f32 %v6015, %v6015
    %v6024 = vmul.f32 %v6016, %v6016
    %v6025 = vmul.f32 %v6017, %v6017
    %v6026 = vmul.f32 %v6018, %v6018
    %v6027 = vmul.f32 %v6019, %v6019
    %v6028 = vmul.f32 %v6020, %v6020
    %6029 = vadd.xlane.f32.xlu0 %v6021
    %v6030 = vpop.xlane.xlu0 %6029
    %6031 = vadd.xlane.f32.xlu0 %v6022
    %v6032 = vpop.xlane.xlu0 %6031
    %6033 = vadd.xlane.f32.xlu0 %v6023
    %v6034 = vpop.xlane.xlu0 %6033
    %6035 = vadd.xlane.f32.xlu0 %v6024
    %v6036 = vpop.xlane.xlu0 %6035
    %6037 = vadd.xlane.f32.xlu0 %v6025
    %v6038 = vpop.xlane.xlu0 %6037
    %6039 = vadd.xlane.f32.xlu0 %v6026
    %v6040 = vpop.xlane.xlu0 %6039
    %6041 = vadd.xlane.f32.xlu0 %v6027
    %v6042 = vpop.xlane.xlu0 %6041
    %6043 = vadd.xlane.f32.xlu0 %v6028
    %v6044 = vpop.xlane.xlu0 %6043
    %v6045 = vmul.f32 %v6030, %v392
    %v6046 = vmul.f32 %v6032, %v392
    %v6047 = vmul.f32 %v6034, %v392
    %v6048 = vmul.f32 %v6036, %v392
    %v6049 = vmul.f32 %v6038, %v392
    %v6050 = vmul.f32 %v6040, %v392
    %v6051 = vmul.f32 %v6042, %v392
    %v6052 = vmul.f32 %v6044, %v392
    %v6053 = vadd.f32 %v6045, 1e-05
    %v6054 = vadd.f32 %v6046, 1e-05
    %v6055 = vadd.f32 %v6047, 1e-05
    %v6056 = vadd.f32 %v6048, 1e-05
    %v6057 = vadd.f32 %v6049, 1e-05
    %v6058 = vadd.f32 %v6050, 1e-05
    %v6059 = vadd.f32 %v6051, 1e-05
    %v6060 = vadd.f32 %v6052, 1e-05
    %v6061 = vrsqrt.pop %v6053
    %v6062 = vrsqrt.pop %v6054
    %v6063 = vrsqrt.pop %v6055
    %v6064 = vrsqrt.pop %v6056
    %v6065 = vrsqrt.pop %v6057
    %v6066 = vrsqrt.pop %v6058
    %v6067 = vrsqrt.pop %v6059
    %v6068 = vrsqrt.pop %v6060
    %v6069 = vmul.f32 %v6013, %v6061
    %v6070 = vmul.f32 %v6014, %v6062
    %v6071 = vmul.f32 %v6015, %v6063
    %v6072 = vmul.f32 %v6016, %v6064
    %v6073 = vmul.f32 %v6017, %v6065
    %v6074 = vmul.f32 %v6018, %v6066
    %v6075 = vmul.f32 %v6019, %v6067
    %v6076 = vmul.f32 %v6020, %v6068
    %v6078 = vlaneseq
    %v6079 = vshrl.u32 %v6078, 7
    %v6080 = vsub.s32 0, %v6079
    %v6081 = vrot.slane %v5987, %v6080
    %v6083 = vmul.f32 %v6069, %v6081
    %v6084 = vmul.f32 %v6070, %v6081
    %v6085 = vmul.f32 %v6071, %v6081
    %v6086 = vmul.f32 %v6072, %v6081
    %v6087 = vmul.f32 %v6073, %v6081
    %v6088 = vmul.f32 %v6074, %v6081
    %v6089 = vmul.f32 %v6075, %v6081
    %v6090 = vmul.f32 %v6076, %v6081
    %v6092 = vlaneseq
    %v6093 = vshrl.u32 %v6092, 7
    %v6094 = vsub.s32 0, %v6093
    %v6095 = vrot.slane %v5988, %v6094
    %v6097 = vadd.f32 %v6083, %v6095
    %v6098 = vadd.f32 %v6084, %v6095
    %v6099 = vadd.f32 %v6085, %v6095
    %v6100 = vadd.f32 %v6086, %v6095
    %v6101 = vadd.f32 %v6087, %v6095
    %v6102 = vadd.f32 %v6088, %v6095
    %v6103 = vadd.f32 %v6089, %v6095
    %v6104 = vadd.f32 %v6090, %v6095
    %v6105 = vpack.c.bf16 %v6098, %v6097
    %v6106 = vpack.c.bf16 %v6100, %v6099
    %v6107 = vpack.c.bf16 %v6102, %v6101
    %v6108 = vpack.c.bf16 %v6104, %v6103
    %v6109 = vld [vmem:[#allocation8] sm:$0xf]
    %v6110 = vld [vmem:[#allocation8 + $0x4] sm:$0xf]
    %v6111 = vld [vmem:[#allocation8 + $0x8] sm:$0xf]
    %v6112 = vld [vmem:[#allocation8 + $0xc] sm:$0xf]
    %v6113 = vld [vmem:[#allocation8 + $0x10] sm:$0xf]
    %v6114 = vld [vmem:[#allocation8 + $0x14] sm:$0xf]
    %v6115 = vld [vmem:[#allocation8 + $0x18] sm:$0xf]
    %v6116 = vld [vmem:[#allocation8 + $0x1c] sm:$0xf]
    %v6117 = vld [vmem:[#allocation8 + $0x20] sm:$0xf]
    %v6118 = vld [vmem:[#allocation8 + $0x24] sm:$0xf]
    %v6119 = vld [vmem:[#allocation8 + $0x28] sm:$0xf]
    %v6120 = vld [vmem:[#allocation8 + $0x2c] sm:$0xf]
    %v6121 = vld [vmem:[#allocation8 + $0x30] sm:$0xf]
    %v6122 = vld [vmem:[#allocation8 + $0x34] sm:$0xf]
    %v6123 = vld [vmem:[#allocation8 + $0x38] sm:$0xf]
    %v6124 = vld [vmem:[#allocation8 + $0x3c] sm:$0xf]
    %v6125 = vld [vmem:[%s17] sm:$0x1]
    %v6127 = vlaneseq
    %v6128 = vshrl.u32 %v6127, 7
    %v6129 = vsub.s32 0, %v6128
    %v6130 = vrot.slane %v6125, %v6129
    %v6148 = vunpack.c.l.b16 %v6109
    %v6149 = vunpack.c.l.b16 %v6110
    %v6150 = vunpack.c.l.b16 %v6111
    %v6151 = vunpack.c.l.b16 %v6112
    %v6152 = vunpack.c.l.b16 %v6113
    %v6153 = vunpack.c.l.b16 %v6114
    %v6154 = vunpack.c.l.b16 %v6115
    %v6155 = vunpack.c.l.b16 %v6116
    %v6156 = vunpack.c.l.b16 %v6117
    %v6157 = vunpack.c.l.b16 %v6118
    %v6158 = vunpack.c.l.b16 %v6119
    %v6159 = vunpack.c.l.b16 %v6120
    %v6160 = vunpack.c.l.b16 %v6121
    %v6161 = vunpack.c.l.b16 %v6122
    %v6162 = vunpack.c.l.b16 %v6123
    %v6163 = vunpack.c.l.b16 %v6124
    %v6164 = vpack.c.b16 %v6149, %v6148
    %v6165 = vpack.c.b16 %v6151, %v6150
    %v6166 = vpack.c.b16 %v6153, %v6152
    %v6167 = vpack.c.b16 %v6155, %v6154
    %v6168 = vpack.c.b16 %v6157, %v6156
    %v6169 = vpack.c.b16 %v6159, %v6158
    %v6170 = vpack.c.b16 %v6161, %v6160
    %v6171 = vpack.c.b16 %v6163, %v6162
    %6180 = vmatprep.subr.bf16.mxu0 0
    %6181 = vmatpush1.bf16.msra.mxu0 %v6164
    %6182 = vmatprep.subr.bf16.mxu0 0
    %6183 = vmatpush1.bf16.msra.mxu0 %v6165
    %6184 = vmatprep.subr.bf16.mxu0 0
    %6185 = vmatpush1.bf16.msra.mxu0 %v6166
    %6186 = vmatprep.subr.bf16.mxu0 0
    %6187 = vmatpush1.bf16.msra.mxu0 %v6167
    %6188 = vmatprep.subr.bf16.mxu0 0
    %6189 = vmatpush1.bf16.msra.mxu0 %v6168
    %6190 = vmatprep.subr.bf16.mxu0 0
    %6191 = vmatpush1.bf16.msra.mxu0 %v6169
    %6192 = vmatprep.subr.bf16.mxu0 0
    %6193 = vmatpush1.bf16.msra.mxu0 %v6170
    %6194 = vmatprep.subr.bf16.mxu0 0
    %6195 = vmatpush1.bf16.msra.mxu0 %v6171
    %6196 = vmatprep.subr.bf16.mxu0 0
    %6197 = vmatpush1.bf16.msra.mxu0 0
    %6198 = vmatprep.subr.bf16.mxu0 0
    %6199 = vmatpush1.bf16.msra.mxu0 0
    %6200 = vmatprep.subr.bf16.mxu0 0
    %6201 = vmatpush1.bf16.msra.mxu0 0
    %6202 = vmatprep.subr.bf16.mxu0 0
    %6203 = vmatpush1.bf16.msra.mxu0 0
    %6204 = vmatprep.subr.bf16.mxu0 0
    %6205 = vmatpush1.bf16.msra.mxu0 0
    %6206 = vmatprep.subr.bf16.mxu0 0
    %6207 = vmatpush1.bf16.msra.mxu0 0
    %6208 = vmatprep.subr.bf16.mxu0 0
    %6209 = vmatpush1.bf16.msra.mxu0 0
    %6210 = vmatprep.subr.bf16.mxu0 0
    %6211 = vmatpush1.bf16.msra.mxu0 0
    %6212 = vmatprep.mubr.bf16.mxu0 0
    %6213 = vmatmul.mubr.bf16.gmra.mrb[0].mxu0 %v6105
    %v6214 = vpop.f32.mrb[0].mxu0
    %v6215 = vadd.f32 %v6130, %v6214
    %v6216 = vpop.f32.mrb[0].mxu0
    %v6217 = vpop.f32.mrb[0].mxu0
    %v6218 = vadd.f32 %v6130, %v6217
    %v6219 = vpop.f32.mrb[0].mxu0
    %6220 = vmatprep.mubr.bf16.mxu0 0
    %6221 = vmatmul.mubr.bf16.gmra.mrb[0].mxu0 %v6106
    %v6222 = vpop.f32.mrb[0].mxu0
    %v6223 = vadd.f32 %v6130, %v6222
    %v6224 = vpop.f32.mrb[0].mxu0
    %v6225 = vpop.f32.mrb[0].mxu0
    %v6226 = vadd.f32 %v6130, %v6225
    %v6227 = vpop.f32.mrb[0].mxu0
    %6228 = vmatprep.mubr.bf16.mxu0 0
    %6229 = vmatmul.mubr.bf16.gmra.mrb[0].mxu0 %v6107
    %v6230 = vpop.f32.mrb[0].mxu0
    %v6231 = vadd.f32 %v6130, %v6230
    %v6232 = vpop.f32.mrb[0].mxu0
    %v6233 = vpop.f32.mrb[0].mxu0
    %v6234 = vadd.f32 %v6130, %v6233
    %v6235 = vpop.f32.mrb[0].mxu0
    %6236 = vmatprep.mubr.bf16.mxu0 0
    %6237 = vmatmul.mubr.bf16.gmra.mrb[0].mxu0 %v6108
    %v6238 = vpop.f32.mrb[0].mxu0
    %v6239 = vadd.f32 %v6130, %v6238
    %v6240 = vpop.f32.mrb[0].mxu0
    %v6241 = vpop.f32.mrb[0].mxu0
    %v6242 = vadd.f32 %v6130, %v6241
    %v6243 = vpop.f32.mrb[0].mxu0
    %6244 = vdwg.mxu0
    %6245 = vst [vmem:[#allocation10] sm:$0xff] %v6215
    %6246 = vst [vmem:[#allocation10 + $0x8] sm:$0xff] %v6218
    %6247 = vst [vmem:[#allocation10 + $0x10] sm:$0xff] %v6223
    %6248 = vst [vmem:[#allocation10 + $0x18] sm:$0xff] %v6226
    %6249 = vst [vmem:[#allocation10 + $0x20] sm:$0xff] %v6231
    %6250 = vst [vmem:[#allocation10 + $0x28] sm:$0xff] %v6234
    %6251 = vst [vmem:[#allocation10 + $0x30] sm:$0xff] %v6239
    %6252 = vst [vmem:[#allocation10 + $0x38] sm:$0xff] %v6242
    // Predicated region
    $region90: #{gpt_forward.1} parent=1 // pred_check
      _
    $region91: #{gpt_forward.1} parent=1 // pred_check_branch
      %6254 = sbr.rel (0) target = $region93
    $region92: #{gpt_forward.1} parent=1 // pred_region
      %s6256 = ssub.s32 1024, 1024
      %6257 = vsyncadd [#allocation4], %s6256
      %s6258 = sshll.u32 [#allocation10], 4
      %s6259 = int_to_ptr.vmem [resolvable:$true] %s6258
      %6264 = dma.vmem_to_hbm [thread:$0]  %s6259, 1024, %s18, [#allocation4], 128, 128, 8
    $region93: #{gpt_forward.1} parent=1 // pred_fallthru
      _
    // Predicated region
    $region94: #{gpt_forward.1} parent=1 // pred_check
      _
    $region95: #{gpt_forward.1} parent=1 // pred_check_branch
      %6266 = sbr.rel (0) target = $region97
    $region96: #{gpt_forward.1} parent=1 // pred_region
      %6267 = dma.done [#allocation4], 1024
    $region97: #{gpt_forward.1} parent=1 // pred_fallthru
      _
    %6268 = vsyncpa [#allocation3], 1
    %6269 = vsyncpa [#allocation6], 1
    %6270 = vsyncpa [#allocation9], 1
    %6271 = vsyncpa [#allocation4], 1

</llo_original>
